<compile_context>
chip_gen: v7x
topology: tpu7x:2x2x1
jax: 0.10.0
libtpu: 0.0.40
codegen_flags: <defaults>
</compile_context>

<pallas_src>
import functools

import jax
import jax.numpy as jnp
from jax.experimental import pallas as pl
from jax.experimental.pallas import tpu as pltpu

NP = 128          # lane-padded output width for every matmul (unmasked stores)
N_ACTIONS = 2     # dim_output in the PyTorch module
BN_EPS = 1e-5


def _round_up(x, m):
    return ((x + m - 1) // m) * m


# ----------------------------- Pallas kernels ------------------------------

def _conv_bn_relu_kernel(p_ref, w_ref, g_ref, b_ref, o_ref, *, inv_m, eps):
    """o = relu(batchnorm(p @ w)) — fused conv-as-matmul + BN(batch stats) + ReLU.

    p:(Mp,Kp) bf16 im2col patches (zero-padded rows/cols), w:(Kp,128) bf16,
    g/b:(1,128) f32 BN gamma/beta, o:(Mp,128) bf16.  inv_m = 1/real_M; the zero
    padded rows/columns contribute nothing to the channel sums so the batch
    statistics stay exact.  Conv bias is omitted: it cancels inside BN.
    """
    acc = jnp.dot(p_ref[...], w_ref[...], preferred_element_type=jnp.float32)
    mean = jnp.sum(acc, axis=0, keepdims=True) * inv_m
    var = jnp.maximum(
        jnp.sum(acc * acc, axis=0, keepdims=True) * inv_m - mean * mean, 0.0)
    scale = g_ref[...] * jax.lax.rsqrt(var + eps)
    shift = b_ref[...] - mean * scale
    o_ref[...] = jnp.maximum(acc * scale + shift, 0.0).astype(o_ref.dtype)


def _fc_heads_kernel(x_ref, w1_ref, b1_ref, wh_ref, bh_ref, o_ref, *, n_actions):
    """Fused fc1+ReLU and both heads (fc2 || fc3 packed into 128 lanes).

    Output columns [0, n_actions) = softmax(fc2 logits); column n_actions is the
    fc3 state value; remaining padded lanes carry zeros (sliced off outside).
    """
    h = jnp.dot(x_ref[...], w1_ref[...], preferred_element_type=jnp.float32) + b1_ref[...]
    h = jnp.maximum(h, 0.0)
    z = jnp.dot(h.astype(wh_ref.dtype), wh_ref[...],
                preferred_element_type=jnp.float32) + bh_ref[...]
    col = jax.lax.broadcasted_iota(jnp.int32, z.shape, 1)
    is_logit = col < n_actions
    zl = jnp.where(is_logit, z, jnp.float32(-1e30))
    m = jnp.max(zl, axis=-1, keepdims=True)
    e = jnp.exp(zl - m)
    probs = e * pl.reciprocal(jnp.sum(e, axis=-1, keepdims=True), approx=True)
    o_ref[...] = jnp.where(is_logit, probs, z)


# ------------------------------ Pallas wrappers -----------------------------

def _one_shot(kernel, inputs, out_shape):
    """Single-grid-step pallas_call: every operand is one full-array VMEM block."""
    return pl.pallas_call(
        kernel,
        out_shape=out_shape,
        grid=(1,),
        in_specs=[pl.BlockSpec(x.shape, lambda i: (0, 0)) for x in inputs],
        out_specs=pl.BlockSpec(out_shape.shape, lambda i: (0, 0)),
        compiler_params=pltpu.CompilerParams(dimension_semantics=("arbitrary",)),
    )(*inputs)


def _im2col_nhwc(x, k, stride):
    """NHWC im2col.  Rows: (N, Ho, Wo); columns: (ki, kj, Cin)."""
    n, h, w, c = x.shape
    ho = (h - k) // stride + 1
    wo = (w - k) // stride + 1
    cols = []
    for i in range(k):
        for j in range(k):
            cols.append(x[:, i:i + stride * (ho - 1) + 1:stride,
                          j:j + stride * (wo - 1) + 1:stride, :])
    p = jnp.stack(cols, axis=3).reshape(n * ho * wo, k * k * c)
    return p, (n, ho, wo)


def conv_bn_relu(x_nhwc, wm, gamma, beta, cout, k=5, stride=2):
    """Conv2d(stride, valid) + BatchNorm(batch stats) + ReLU, one pallas_call.

    Returns a bf16 NHWC activation (next consumer is always a bf16 matmul)."""
    p, (n, ho, wo) = _im2col_nhwc(x_nhwc, k, stride)
    m, kk = p.shape
    kp = wm.shape[0]
    mp = _round_up(m, 16)    # sublane-pair alignment for the bf16 output store
    p = jnp.pad(p.astype(jnp.bfloat16), ((0, mp - m), (0, kp - kk)))
    out = _one_shot(
        functools.partial(_conv_bn_relu_kernel, inv_m=1.0 / m, eps=BN_EPS),
        [p, wm, gamma, beta],
        jax.ShapeDtypeStruct((mp, NP), jnp.bfloat16),
    )
    return out[:m, :cout].reshape(n, ho, wo, cout)


def fc_heads(flat, w1, b1, wh, bh):
    """fc1 + ReLU + fused (softmax head, value head), one pallas_call."""
    m, kf = flat.shape
    kfp = w1.shape[0]        # fc1 contraction dim pre-padded to a multiple of 128
    mp = _round_up(m, 16)
    x = jnp.pad(flat.astype(jnp.bfloat16), ((0, mp - m), (0, kfp - kf)))
    out = _one_shot(
        functools.partial(_fc_heads_kernel, n_actions=N_ACTIONS),
        [x, w1, b1, wh, bh],
        jax.ShapeDtypeStruct((mp, NP), jnp.float32),
    )
    return out[:m, :N_ACTIONS], out[:m, N_ACTIONS:N_ACTIONS + 1]


# ------------------------------ Policy forward ------------------------------

def init_params(key):
    """Raw parameters in PyTorch layout.  Conv biases are omitted: they are
    mathematically inert (cancelled by the following BatchNorm)."""
    ks = jax.random.split(key, 8)
    f32 = jnp.float32

    def w_init(k, shape, scale=0.05):
        return (scale * jax.random.normal(k, shape)).astype(f32)

    return {
        "w1": w_init(ks[0], (16, 4, 5, 5)),  "g1": jnp.ones((16,), f32), "be1": jnp.zeros((16,), f32),
        "w2": w_init(ks[1], (32, 16, 5, 5)), "g2": jnp.ones((32,), f32), "be2": jnp.zeros((32,), f32),
        "w3": w_init(ks[2], (32, 32, 5, 5)), "g3": jnp.ones((32,), f32), "be3": jnp.zeros((32,), f32),
        "wf1": w_init(ks[3], (1568, 256)), "bf1": w_init(ks[4], (256,)),
        "wf2": w_init(ks[5], (256, 2)), "bf2": jnp.zeros((2,), f32),
        "wf3": w_init(ks[6], (256, 1)), "bf3": jnp.zeros((1,), f32),
    }


def prepare_params(raw):
    """One-time conversion of raw (PyTorch-layout) params to kernel-ready form."""
    bf16, f32 = jnp.bfloat16, jnp.float32

    def conv_w(w):
        cout, cin, k, _ = w.shape
        kk = k * k * cin
        wm = jnp.transpose(w, (2, 3, 1, 0)).reshape(kk, cout)     # rows = (ki,kj,cin)
        wm = jnp.pad(wm, ((0, _round_up(kk, 128) - kk), (0, NP - cout)))
        return wm.astype(bf16)

    def chan_vec(v):
        return jnp.pad(v, (0, NP - v.shape[0])).reshape(1, NP).astype(f32)

    # fc1 rows permuted from NCHW flatten order (c,h,w) to NHWC order (h,w,c)
    # so the forward pass never needs an activation transpose before flattening.
    # Rows are then zero-padded 1568 -> 1664 (multiple of 128) for aligned MXU K.
    kf = raw["wf1"].shape[0]
    wf1 = raw["wf1"].reshape(32, 7, 7, 256).transpose(1, 2, 0, 3).reshape(kf, 256)
    wf1 = jnp.pad(wf1, ((0, _round_up(kf, 128) - kf), (0, 0)))
    # fused heads: [fc2 | fc3] packed and lane-padded to 128 columns
    wh = jnp.concatenate([raw["wf2"], raw["wf3"]], axis=1)
    bh = jnp.concatenate([raw["bf2"], raw["bf3"]], axis=0)

    return {
        "w1": conv_w(raw["w1"]), "g1": chan_vec(raw["g1"]), "be1": chan_vec(raw["be1"]),
        "w2": conv_w(raw["w2"]), "g2": chan_vec(raw["g2"]), "be2": chan_vec(raw["be2"]),
        "w3": conv_w(raw["w3"]), "g3": chan_vec(raw["g3"]), "be3": chan_vec(raw["be3"]),
        "wf1": wf1.astype(bf16),
        "bf1": raw["bf1"].reshape(1, 256).astype(f32),
        "wh": jnp.pad(wh, ((0, 0), (0, NP - wh.shape[1]))).astype(bf16),
        "bh": jnp.pad(bh, (0, NP - bh.shape[0])).reshape(1, NP).astype(f32),
    }


def policy_forward(x, params):
    """Returns (action_probs (N,2), state_values (N,1)), matching Policy.forward."""
    # one-time NCHW -> NHWC; cast to bf16 up front so every im2col / matmul
    # operand (and every inter-layer activation) moves half the HBM bytes.
    h = jnp.transpose(x, (0, 2, 3, 1)).astype(jnp.bfloat16)
    h = conv_bn_relu(h, params["w1"], params["g1"], params["be1"], cout=16)
    h = conv_bn_relu(h, params["w2"], params["g2"], params["be2"], cout=32)
    h = conv_bn_relu(h, params["w3"], params["g3"], params["be3"], cout=32)   # (N,7,7,32)
    flat = h.reshape(h.shape[0], -1)  # NHWC flatten; fc1 rows were pre-permuted to match
    return fc_heads(flat, params["wf1"], params["bf1"], params["wh"], params["bh"])

# TODO(synk): select_action (Categorical sampling / log_prob bookkeeping) is host-side
# RL glue, not part of the forward pass, and is not implemented as a kernel.


if __name__ == "__main__":
    key = jax.random.PRNGKey(0)
    pkey, xkey = jax.random.split(key)
    params = prepare_params(init_params(pkey))
    # Smallest shape consistent with the module: fc1 expects 1568 = 32*7*7,
    # which implies an 80x80 input (standard Pong preprocessing). batch=2.
    x = jax.random.normal(xkey, (2, 4, 80, 80), dtype=jnp.float32)

    probs, values = jax.jit(policy_forward)(x, params)
    probs = jax.block_until_ready(probs)
    values = jax.block_until_ready(values)

    assert probs.shape == (2, 2) and values.shape == (2, 1)
    assert bool(jnp.all(jnp.isfinite(probs))) and bool(jnp.all(jnp.isfinite(values)))
    # softmax rows sum to 1 (loose tolerance: approx EUP reciprocal in the epilogue)
    assert bool(jnp.all(jnp.abs(jnp.sum(probs, axis=1) - 1.0) < 1e-2))
    print("KERNEL_OK")
</pallas_src>

<mosaic_0001>
module attributes {stable_mosaic.version = 11 : i64} {
  func.func @_conv_bn_relu_kernel(%arg0: i32, %arg1: memref<2896x128xbf16, #tpu.memory_space<vmem>>, %arg2: memref<128x128xbf16, #tpu.memory_space<vmem>>, %arg3: memref<1x128xf32, #tpu.memory_space<vmem>>, %arg4: memref<1x128xf32, #tpu.memory_space<vmem>>, %arg5: memref<2896x128xbf16, #tpu.memory_space<vmem>>) attributes {dimension_semantics = [#tpu.dimension_semantics<arbitrary>], iteration_bounds = array<i64: 1>, scalar_prefetch = 0 : i64, scratch_operands = 0 : i64, tpu.core_type = #tpu.core_type<tc>, window_params = [{pipeline_mode = #tpu.pipeline_mode<synchronous>, transform_indices = @transform_0, window_bounds = array<i64: 2896, 128>}, {pipeline_mode = #tpu.pipeline_mode<synchronous>, transform_indices = @transform_1, window_bounds = array<i64: 128, 128>}, {pipeline_mode = #tpu.pipeline_mode<synchronous>, transform_indices = @transform_2, window_bounds = array<i64: 1, 128>}, {pipeline_mode = #tpu.pipeline_mode<synchronous>, transform_indices = @transform_3, window_bounds = array<i64: 1, 128>}, {pipeline_mode = #tpu.pipeline_mode<synchronous>, transform_indices = @transform_4, window_bounds = array<i64: 2896, 128>}]} {
    %c0 = arith.constant 0 : index
    %c0_0 = arith.constant 0 : index
    %0 = vector.load %arg1[%c0, %c0_0] : memref<2896x128xbf16, #tpu.memory_space<vmem>>, vector<2896x128xbf16>
    %c0_1 = arith.constant 0 : index
    %c0_2 = arith.constant 0 : index
    %1 = vector.load %arg2[%c0_1, %c0_2] : memref<128x128xbf16, #tpu.memory_space<vmem>>, vector<128x128xbf16>
    %cst = arith.constant dense<0.000000e+00> : vector<2896x128xf32>
    %2 = tpu.matmul %0, %1, %cst {dimension_numbers = #tpu.dot_dimension_numbers<[1], [0], [0], [1], [0, 0, 1, 1], [], []>} : vector<2896x128xbf16>, vector<128x128xbf16>, vector<2896x128xf32> -> vector<2896x128xf32>
    %cst_3 = arith.constant dense<0.000000e+00> : vector<128xf32>
    %3 = vector.multi_reduction <add>, %2, %cst_3 [0] : vector<2896x128xf32> to vector<128xf32>
    %4 = vector.shape_cast %3 : vector<128xf32> to vector<1x128xf32>
    %cst_4 = arith.constant 3.46260378E-4 : f32
    %5 = vector.broadcast %cst_4 : f32 to vector<1x128xf32>
    %6 = arith.mulf %4, %5 : vector<1x128xf32>
    %7 = arith.mulf %2, %2 : vector<2896x128xf32>
    %cst_5 = arith.constant dense<0.000000e+00> : vector<128xf32>
    %8 = vector.multi_reduction <add>, %7, %cst_5 [0] : vector<2896x128xf32> to vector<128xf32>
    %9 = vector.shape_cast %8 : vector<128xf32> to vector<1x128xf32>
    %cst_6 = arith.constant 3.46260378E-4 : f32
    %10 = vector.broadcast %cst_6 : f32 to vector<1x128xf32>
    %11 = arith.mulf %9, %10 : vector<1x128xf32>
    %12 = arith.mulf %6, %6 : vector<1x128xf32>
    %13 = arith.subf %11, %12 : vector<1x128xf32>
    %cst_7 = arith.constant 0.000000e+00 : f32
    %14 = vector.broadcast %cst_7 : f32 to vector<1x128xf32>
    %15 = arith.maximumf %13, %14 : vector<1x128xf32>
    %c0_8 = arith.constant 0 : index
    %c0_9 = arith.constant 0 : index
    %16 = vector.load %arg3[%c0_8, %c0_9] : memref<1x128xf32, #tpu.memory_space<vmem>>, vector<1x128xf32>
    %cst_10 = arith.constant 9.99999974E-6 : f32
    %17 = vector.broadcast %cst_10 : f32 to vector<1x128xf32>
    %18 = arith.addf %15, %17 : vector<1x128xf32>
    %19 = math.rsqrt %18 : vector<1x128xf32>
    %20 = arith.mulf %16, %19 : vector<1x128xf32>
    %c0_11 = arith.constant 0 : index
    %c0_12 = arith.constant 0 : index
    %21 = vector.load %arg4[%c0_11, %c0_12] : memref<1x128xf32, #tpu.memory_space<vmem>>, vector<1x128xf32>
    %22 = arith.mulf %6, %20 : vector<1x128xf32>
    %23 = arith.subf %21, %22 : vector<1x128xf32>
    %24 = vector.broadcast %20 : vector<1x128xf32> to vector<2896x128xf32>
    %25 = arith.mulf %2, %24 : vector<2896x128xf32>
    %26 = vector.broadcast %23 : vector<1x128xf32> to vector<2896x128xf32>
    %27 = arith.addf %25, %26 : vector<2896x128xf32>
    %cst_13 = arith.constant 0.000000e+00 : f32
    %28 = vector.broadcast %cst_13 : f32 to vector<2896x128xf32>
    %29 = arith.maximumf %27, %28 : vector<2896x128xf32>
    %30 = arith.truncf %29 : vector<2896x128xf32> to vector<2896x128xbf16>
    %c0_14 = arith.constant 0 : index
    %c0_15 = arith.constant 0 : index
    %31 = vector.load %arg5[%c0_14, %c0_15] : memref<2896x128xbf16, #tpu.memory_space<vmem>>, vector<2896x128xbf16>
    tpu.vector_store %arg5[%c0_14, %c0_15], %30 {strides = array<i32>} : memref<2896x128xbf16, #tpu.memory_space<vmem>>, vector<2896x128xbf16>,
    return
  }
  func.func @transform_0(%arg0: i32) -> (i32, i32) {
    %c0_i32 = arith.constant 0 : i32
    %c0_i32_0 = arith.constant 0 : i32
    %c0_i32_1 = arith.constant 0 : i32
    return %c0_i32, %c0_i32_0 : i32, i32
  }
  func.func @transform_1(%arg0: i32) -> (i32, i32) {
    %c0_i32 = arith.constant 0 : i32
    %c0_i32_0 = arith.constant 0 : i32
    %c0_i32_1 = arith.constant 0 : i32
    return %c0_i32, %c0_i32_0 : i32, i32
  }
  func.func @transform_2(%arg0: i32) -> (i32, i32) {
    %c0_i32 = arith.constant 0 : i32
    %c0_i32_0 = arith.constant 0 : i32
    %c0_i32_1 = arith.constant 0 : i32
    return %c0_i32, %c0_i32_0 : i32, i32
  }
  func.func @transform_3(%arg0: i32) -> (i32, i32) {
    %c0_i32 = arith.constant 0 : i32
    %c0_i32_0 = arith.constant 0 : i32
    %c0_i32_1 = arith.constant 0 : i32
    return %c0_i32, %c0_i32_0 : i32, i32
  }
  func.func @transform_4(%arg0: i32) -> (i32, i32) {
    %c0_i32 = arith.constant 0 : i32
    %c0_i32_0 = arith.constant 0 : i32
    %c0_i32_1 = arith.constant 0 : i32
    return %c0_i32, %c0_i32_0 : i32, i32
  }
}

module attributes {stable_mosaic.version = 11 : i64} {
  func.func @_conv_bn_relu_kernel(%arg0: i32, %arg1: memref<592x512xbf16, #tpu.memory_space<vmem>>, %arg2: memref<512x128xbf16, #tpu.memory_space<vmem>>, %arg3: memref<1x128xf32, #tpu.memory_space<vmem>>, %arg4: memref<1x128xf32, #tpu.memory_space<vmem>>, %arg5: memref<592x128xbf16, #tpu.memory_space<vmem>>) attributes {dimension_semantics = [#tpu.dimension_semantics<arbitrary>], iteration_bounds = array<i64: 1>, scalar_prefetch = 0 : i64, scratch_operands = 0 : i64, tpu.core_type = #tpu.core_type<tc>, window_params = [{pipeline_mode = #tpu.pipeline_mode<synchronous>, transform_indices = @transform_0, window_bounds = array<i64: 592, 512>}, {pipeline_mode = #tpu.pipeline_mode<synchronous>, transform_indices = @transform_1, window_bounds = array<i64: 512, 128>}, {pipeline_mode = #tpu.pipeline_mode<synchronous>, transform_indices = @transform_2, window_bounds = array<i64: 1, 128>}, {pipeline_mode = #tpu.pipeline_mode<synchronous>, transform_indices = @transform_3, window_bounds = array<i64: 1, 128>}, {pipeline_mode = #tpu.pipeline_mode<synchronous>, transform_indices = @transform_4, window_bounds = array<i64: 592, 128>}]} {
    %c0 = arith.constant 0 : index
    %c0_0 = arith.constant 0 : index
    %0 = vector.load %arg1[%c0, %c0_0] : memref<592x512xbf16, #tpu.memory_space<vmem>>, vector<592x512xbf16>
    %c0_1 = arith.constant 0 : index
    %c0_2 = arith.constant 0 : index
    %1 = vector.load %arg2[%c0_1, %c0_2] : memref<512x128xbf16, #tpu.memory_space<vmem>>, vector<512x128xbf16>
    %cst = arith.constant dense<0.000000e+00> : vector<592x128xf32>
    %2 = tpu.matmul %0, %1, %cst {dimension_numbers = #tpu.dot_dimension_numbers<[1], [0], [0], [1], [0, 0, 1, 1], [], []>} : vector<592x512xbf16>, vector<512x128xbf16>, vector<592x128xf32> -> vector<592x128xf32>
    %cst_3 = arith.constant dense<0.000000e+00> : vector<128xf32>
    %3 = vector.multi_reduction <add>, %2, %cst_3 [0] : vector<592x128xf32> to vector<128xf32>
    %4 = vector.shape_cast %3 : vector<128xf32> to vector<1x128xf32>
    %cst_4 = arith.constant 0.00173010386 : f32
    %5 = vector.broadcast %cst_4 : f32 to vector<1x128xf32>
    %6 = arith.mulf %4, %5 : vector<1x128xf32>
    %7 = arith.mulf %2, %2 : vector<592x128xf32>
    %cst_5 = arith.constant dense<0.000000e+00> : vector<128xf32>
    %8 = vector.multi_reduction <add>, %7, %cst_5 [0] : vector<592x128xf32> to vector<128xf32>
    %9 = vector.shape_cast %8 : vector<128xf32> to vector<1x128xf32>
    %cst_6 = arith.constant 0.00173010386 : f32
    %10 = vector.broadcast %cst_6 : f32 to vector<1x128xf32>
    %11 = arith.mulf %9, %10 : vector<1x128xf32>
    %12 = arith.mulf %6, %6 : vector<1x128xf32>
    %13 = arith.subf %11, %12 : vector<1x128xf32>
    %cst_7 = arith.constant 0.000000e+00 : f32
    %14 = vector.broadcast %cst_7 : f32 to vector<1x128xf32>
    %15 = arith.maximumf %13, %14 : vector<1x128xf32>
    %c0_8 = arith.constant 0 : index
    %c0_9 = arith.constant 0 : index
    %16 = vector.load %arg3[%c0_8, %c0_9] : memref<1x128xf32, #tpu.memory_space<vmem>>, vector<1x128xf32>
    %cst_10 = arith.constant 9.99999974E-6 : f32
    %17 = vector.broadcast %cst_10 : f32 to vector<1x128xf32>
    %18 = arith.addf %15, %17 : vector<1x128xf32>
    %19 = math.rsqrt %18 : vector<1x128xf32>
    %20 = arith.mulf %16, %19 : vector<1x128xf32>
    %c0_11 = arith.constant 0 : index
    %c0_12 = arith.constant 0 : index
    %21 = vector.load %arg4[%c0_11, %c0_12] : memref<1x128xf32, #tpu.memory_space<vmem>>, vector<1x128xf32>
    %22 = arith.mulf %6, %20 : vector<1x128xf32>
    %23 = arith.subf %21, %22 : vector<1x128xf32>
    %24 = vector.broadcast %20 : vector<1x128xf32> to vector<592x128xf32>
    %25 = arith.mulf %2, %24 : vector<592x128xf32>
    %26 = vector.broadcast %23 : vector<1x128xf32> to vector<592x128xf32>
    %27 = arith.addf %25, %26 : vector<592x128xf32>
    %cst_13 = arith.constant 0.000000e+00 : f32
    %28 = vector.broadcast %cst_13 : f32 to vector<592x128xf32>
    %29 = arith.maximumf %27, %28 : vector<592x128xf32>
    %30 = arith.truncf %29 : vector<592x128xf32> to vector<592x128xbf16>
    %c0_14 = arith.constant 0 : index
    %c0_15 = arith.constant 0 : index
    %31 = vector.load %arg5[%c0_14, %c0_15] : memref<592x128xbf16, #tpu.memory_space<vmem>>, vector<592x128xbf16>
    tpu.vector_store %arg5[%c0_14, %c0_15], %30 {strides = array<i32>} : memref<592x128xbf16, #tpu.memory_space<vmem>>, vector<592x128xbf16>,
    return
  }
  func.func @transform_0(%arg0: i32) -> (i32, i32) {
    %c0_i32 = arith.constant 0 : i32
    %c0_i32_0 = arith.constant 0 : i32
    %c0_i32_1 = arith.constant 0 : i32
    return %c0_i32, %c0_i32_0 : i32, i32
  }
  func.func @transform_1(%arg0: i32) -> (i32, i32) {
    %c0_i32 = arith.constant 0 : i32
    %c0_i32_0 = arith.constant 0 : i32
    %c0_i32_1 = arith.constant 0 : i32
    return %c0_i32, %c0_i32_0 : i32, i32
  }
  func.func @transform_2(%arg0: i32) -> (i32, i32) {
    %c0_i32 = arith.constant 0 : i32
    %c0_i32_0 = arith.constant 0 : i32
    %c0_i32_1 = arith.constant 0 : i32
    return %c0_i32, %c0_i32_0 : i32, i32
  }
  func.func @transform_3(%arg0: i32) -> (i32, i32) {
    %c0_i32 = arith.constant 0 : i32
    %c0_i32_0 = arith.constant 0 : i32
    %c0_i32_1 = arith.constant 0 : i32
    return %c0_i32, %c0_i32_0 : i32, i32
  }
  func.func @transform_4(%arg0: i32) -> (i32, i32) {
    %c0_i32 = arith.constant 0 : i32
    %c0_i32_0 = arith.constant 0 : i32
    %c0_i32_1 = arith.constant 0 : i32
    return %c0_i32, %c0_i32_0 : i32, i32
  }
}

module attributes {stable_mosaic.version = 11 : i64} {
  func.func @_conv_bn_relu_kernel(%arg0: i32, %arg1: memref<112x896xbf16, #tpu.memory_space<vmem>>, %arg2: memref<896x128xbf16, #tpu.memory_space<vmem>>, %arg3: memref<1x128xf32, #tpu.memory_space<vmem>>, %arg4: memref<1x128xf32, #tpu.memory_space<vmem>>, %arg5: memref<112x128xbf16, #tpu.memory_space<vmem>>) attributes {dimension_semantics = [#tpu.dimension_semantics<arbitrary>], iteration_bounds = array<i64: 1>, scalar_prefetch = 0 : i64, scratch_operands = 0 : i64, tpu.core_type = #tpu.core_type<tc>, window_params = [{pipeline_mode = #tpu.pipeline_mode<synchronous>, transform_indices = @transform_0, window_bounds = array<i64: 112, 896>}, {pipeline_mode = #tpu.pipeline_mode<synchronous>, transform_indices = @transform_1, window_bounds = array<i64: 896, 128>}, {pipeline_mode = #tpu.pipeline_mode<synchronous>, transform_indices = @transform_2, window_bounds = array<i64: 1, 128>}, {pipeline_mode = #tpu.pipeline_mode<synchronous>, transform_indices = @transform_3, window_bounds = array<i64: 1, 128>}, {pipeline_mode = #tpu.pipeline_mode<synchronous>, transform_indices = @transform_4, window_bounds = array<i64: 112, 128>}]} {
    %c0 = arith.constant 0 : index
    %c0_0 = arith.constant 0 : index
    %0 = vector.load %arg1[%c0, %c0_0] : memref<112x896xbf16, #tpu.memory_space<vmem>>, vector<112x896xbf16>
    %c0_1 = arith.constant 0 : index
    %c0_2 = arith.constant 0 : index
    %1 = vector.load %arg2[%c0_1, %c0_2] : memref<896x128xbf16, #tpu.memory_space<vmem>>, vector<896x128xbf16>
    %cst = arith.constant dense<0.000000e+00> : vector<112x128xf32>
    %2 = tpu.matmul %0, %1, %cst {dimension_numbers = #tpu.dot_dimension_numbers<[1], [0], [0], [1], [0, 0, 1, 1], [], []>} : vector<112x896xbf16>, vector<896x128xbf16>, vector<112x128xf32> -> vector<112x128xf32>
    %cst_3 = arith.constant dense<0.000000e+00> : vector<128xf32>
    %3 = vector.multi_reduction <add>, %2, %cst_3 [0] : vector<112x128xf32> to vector<128xf32>
    %4 = vector.shape_cast %3 : vector<128xf32> to vector<1x128xf32>
    %cst_4 = arith.constant 0.0102040814 : f32
    %5 = vector.broadcast %cst_4 : f32 to vector<1x128xf32>
    %6 = arith.mulf %4, %5 : vector<1x128xf32>
    %7 = arith.mulf %2, %2 : vector<112x128xf32>
    %cst_5 = arith.constant dense<0.000000e+00> : vector<128xf32>
    %8 = vector.multi_reduction <add>, %7, %cst_5 [0] : vector<112x128xf32> to vector<128xf32>
    %9 = vector.shape_cast %8 : vector<128xf32> to vector<1x128xf32>
    %cst_6 = arith.constant 0.0102040814 : f32
    %10 = vector.broadcast %cst_6 : f32 to vector<1x128xf32>
    %11 = arith.mulf %9, %10 : vector<1x128xf32>
    %12 = arith.mulf %6, %6 : vector<1x128xf32>
    %13 = arith.subf %11, %12 : vector<1x128xf32>
    %cst_7 = arith.constant 0.000000e+00 : f32
    %14 = vector.broadcast %cst_7 : f32 to vector<1x128xf32>
    %15 = arith.maximumf %13, %14 : vector<1x128xf32>
    %c0_8 = arith.constant 0 : index
    %c0_9 = arith.constant 0 : index
    %16 = vector.load %arg3[%c0_8, %c0_9] : memref<1x128xf32, #tpu.memory_space<vmem>>, vector<1x128xf32>
    %cst_10 = arith.constant 9.99999974E-6 : f32
    %17 = vector.broadcast %cst_10 : f32 to vector<1x128xf32>
    %18 = arith.addf %15, %17 : vector<1x128xf32>
    %19 = math.rsqrt %18 : vector<1x128xf32>
    %20 = arith.mulf %16, %19 : vector<1x128xf32>
    %c0_11 = arith.constant 0 : index
    %c0_12 = arith.constant 0 : index
    %21 = vector.load %arg4[%c0_11, %c0_12] : memref<1x128xf32, #tpu.memory_space<vmem>>, vector<1x128xf32>
    %22 = arith.mulf %6, %20 : vector<1x128xf32>
    %23 = arith.subf %21, %22 : vector<1x128xf32>
    %24 = vector.broadcast %20 : vector<1x128xf32> to vector<112x128xf32>
    %25 = arith.mulf %2, %24 : vector<112x128xf32>
    %26 = vector.broadcast %23 : vector<1x128xf32> to vector<112x128xf32>
    %27 = arith.addf %25, %26 : vector<112x128xf32>
    %cst_13 = arith.constant 0.000000e+00 : f32
    %28 = vector.broadcast %cst_13 : f32 to vector<112x128xf32>
    %29 = arith.maximumf %27, %28 : vector<112x128xf32>
    %30 = arith.truncf %29 : vector<112x128xf32> to vector<112x128xbf16>
    %c0_14 = arith.constant 0 : index
    %c0_15 = arith.constant 0 : index
    %31 = vector.load %arg5[%c0_14, %c0_15] : memref<112x128xbf16, #tpu.memory_space<vmem>>, vector<112x128xbf16>
    tpu.vector_store %arg5[%c0_14, %c0_15], %30 {strides = array<i32>} : memref<112x128xbf16, #tpu.memory_space<vmem>>, vector<112x128xbf16>,
    return
  }
  func.func @transform_0(%arg0: i32) -> (i32, i32) {
    %c0_i32 = arith.constant 0 : i32
    %c0_i32_0 = arith.constant 0 : i32
    %c0_i32_1 = arith.constant 0 : i32
    return %c0_i32, %c0_i32_0 : i32, i32
  }
  func.func @transform_1(%arg0: i32) -> (i32, i32) {
    %c0_i32 = arith.constant 0 : i32
    %c0_i32_0 = arith.constant 0 : i32
    %c0_i32_1 = arith.constant 0 : i32
    return %c0_i32, %c0_i32_0 : i32, i32
  }
  func.func @transform_2(%arg0: i32) -> (i32, i32) {
    %c0_i32 = arith.constant 0 : i32
    %c0_i32_0 = arith.constant 0 : i32
    %c0_i32_1 = arith.constant 0 : i32
    return %c0_i32, %c0_i32_0 : i32, i32
  }
  func.func @transform_3(%arg0: i32) -> (i32, i32) {
    %c0_i32 = arith.constant 0 : i32
    %c0_i32_0 = arith.constant 0 : i32
    %c0_i32_1 = arith.constant 0 : i32
    return %c0_i32, %c0_i32_0 : i32, i32
  }
  func.func @transform_4(%arg0: i32) -> (i32, i32) {
    %c0_i32 = arith.constant 0 : i32
    %c0_i32_0 = arith.constant 0 : i32
    %c0_i32_1 = arith.constant 0 : i32
    return %c0_i32, %c0_i32_0 : i32, i32
  }
}

module attributes {stable_mosaic.version = 11 : i64} {
  func.func @_fc_heads_kernel(%arg0: i32, %arg1: memref<16x1664xbf16, #tpu.memory_space<vmem>>, %arg2: memref<1664x256xbf16, #tpu.memory_space<vmem>>, %arg3: memref<1x256xf32, #tpu.memory_space<vmem>>, %arg4: memref<256x128xbf16, #tpu.memory_space<vmem>>, %arg5: memref<1x128xf32, #tpu.memory_space<vmem>>, %arg6: memref<16x128xf32, #tpu.memory_space<vmem>>) attributes {dimension_semantics = [#tpu.dimension_semantics<arbitrary>], iteration_bounds = array<i64: 1>, scalar_prefetch = 0 : i64, scratch_operands = 0 : i64, tpu.core_type = #tpu.core_type<tc>, window_params = [{pipeline_mode = #tpu.pipeline_mode<synchronous>, transform_indices = @transform_0, window_bounds = array<i64: 16, 1664>}, {pipeline_mode = #tpu.pipeline_mode<synchronous>, transform_indices = @transform_1, window_bounds = array<i64: 1664, 256>}, {pipeline_mode = #tpu.pipeline_mode<synchronous>, transform_indices = @transform_2, window_bounds = array<i64: 1, 256>}, {pipeline_mode = #tpu.pipeline_mode<synchronous>, transform_indices = @transform_3, window_bounds = array<i64: 256, 128>}, {pipeline_mode = #tpu.pipeline_mode<synchronous>, transform_indices = @transform_4, window_bounds = array<i64: 1, 128>}, {pipeline_mode = #tpu.pipeline_mode<synchronous>, transform_indices = @transform_5, window_bounds = array<i64: 16, 128>}]} {
    %c0 = arith.constant 0 : index
    %c0_0 = arith.constant 0 : index
    %0 = vector.load %arg1[%c0, %c0_0] : memref<16x1664xbf16, #tpu.memory_space<vmem>>, vector<16x1664xbf16>
    %c0_1 = arith.constant 0 : index
    %c0_2 = arith.constant 0 : index
    %1 = vector.load %arg2[%c0_1, %c0_2] : memref<1664x256xbf16, #tpu.memory_space<vmem>>, vector<1664x256xbf16>
    %cst = arith.constant dense<0.000000e+00> : vector<16x256xf32>
    %2 = tpu.matmul %0, %1, %cst {dimension_numbers = #tpu.dot_dimension_numbers<[1], [0], [0], [1], [0, 0, 1, 1], [], []>} : vector<16x1664xbf16>, vector<1664x256xbf16>, vector<16x256xf32> -> vector<16x256xf32>
    %c0_3 = arith.constant 0 : index
    %c0_4 = arith.constant 0 : index
    %3 = vector.load %arg3[%c0_3, %c0_4] : memref<1x256xf32, #tpu.memory_space<vmem>>, vector<1x256xf32>
    %4 = vector.broadcast %3 : vector<1x256xf32> to vector<16x256xf32>
    %5 = arith.addf %2, %4 : vector<16x256xf32>
    %cst_5 = arith.constant 0.000000e+00 : f32
    %6 = vector.broadcast %cst_5 : f32 to vector<16x256xf32>
    %7 = arith.maximumf %5, %6 : vector<16x256xf32>
    %8 = arith.truncf %7 : vector<16x256xf32> to vector<16x256xbf16>
    %c0_6 = arith.constant 0 : index
    %c0_7 = arith.constant 0 : index
    %9 = vector.load %arg4[%c0_6, %c0_7] : memref<256x128xbf16, #tpu.memory_space<vmem>>, vector<256x128xbf16>
    %cst_8 = arith.constant dense<0.000000e+00> : vector<16x128xf32>
    %10 = tpu.matmul %8, %9, %cst_8 {dimension_numbers = #tpu.dot_dimension_numbers<[1], [0], [0], [1], [0, 0, 1, 1], [], []>} : vector<16x256xbf16>, vector<256x128xbf16>, vector<16x128xf32> -> vector<16x128xf32>
    %c0_9 = arith.constant 0 : index
    %c0_10 = arith.constant 0 : index
    %11 = vector.load %arg5[%c0_9, %c0_10] : memref<1x128xf32, #tpu.memory_space<vmem>>, vector<1x128xf32>
    %12 = vector.broadcast %11 : vector<1x128xf32> to vector<16x128xf32>
    %13 = arith.addf %10, %12 : vector<16x128xf32>
    %14 = tpu.iota {dimensions = array<i32: 1>} : vector<16x128xi32>
    %c2_i32 = arith.constant 2 : i32
    %15 = vector.broadcast %c2_i32 : i32 to vector<16x128xi32>
    %16 = arith.cmpi slt, %14, %15 : vector<16x128xi32>
    %cst_11 = arith.constant -1.000000e+30 : f32
    %17 = vector.broadcast %cst_11 : f32 to vector<16x128xf32>
    %18 = arith.select %16, %13, %17 : vector<16x128xi1>, vector<16x128xf32>
    %cst_12 = arith.constant dense<0xFF800000> : vector<16xf32>
    %19 = vector.multi_reduction <maximumf>, %18, %cst_12 [1] : vector<16x128xf32> to vector<16xf32>
    %20 = vector.shape_cast %19 : vector<16xf32> to vector<16x1xf32>
    %21 = vector.broadcast %20 : vector<16x1xf32> to vector<16x128xf32>
    %22 = arith.subf %18, %21 : vector<16x128xf32>
    %23 = math.exp %22 : vector<16x128xf32>
    %cst_13 = arith.constant dense<0.000000e+00> : vector<16xf32>
    %24 = vector.multi_reduction <add>, %23, %cst_13 [1] : vector<16x128xf32> to vector<16xf32>
    %25 = vector.shape_cast %24 : vector<16xf32> to vector<16x1xf32>
    %26 = tpu.reciprocal %25 {approx = true} : vector<16x1xf32> -> vector<16x1xf32>
    %27 = vector.broadcast %26 : vector<16x1xf32> to vector<16x128xf32>
    %28 = arith.mulf %23, %27 : vector<16x128xf32>
    %29 = arith.select %16, %28, %13 : vector<16x128xi1>, vector<16x128xf32>
    %c0_14 = arith.constant 0 : index
    %c0_15 = arith.constant 0 : index
    %30 = vector.load %arg6[%c0_14, %c0_15] : memref<16x128xf32, #tpu.memory_space<vmem>>, vector<16x128xf32>
    tpu.vector_store %arg6[%c0_14, %c0_15], %29 {strides = array<i32>} : memref<16x128xf32, #tpu.memory_space<vmem>>, vector<16x128xf32>,
    return
  }
  func.func @transform_0(%arg0: i32) -> (i32, i32) {
    %c0_i32 = arith.constant 0 : i32
    %c0_i32_0 = arith.constant 0 : i32
    %c0_i32_1 = arith.constant 0 : i32
    return %c0_i32, %c0_i32_0 : i32, i32
  }
  func.func @transform_1(%arg0: i32) -> (i32, i32) {
    %c0_i32 = arith.constant 0 : i32
    %c0_i32_0 = arith.constant 0 : i32
    %c0_i32_1 = arith.constant 0 : i32
    return %c0_i32, %c0_i32_0 : i32, i32
  }
  func.func @transform_2(%arg0: i32) -> (i32, i32) {
    %c0_i32 = arith.constant 0 : i32
    %c0_i32_0 = arith.constant 0 : i32
    %c0_i32_1 = arith.constant 0 : i32
    return %c0_i32, %c0_i32_0 : i32, i32
  }
  func.func @transform_3(%arg0: i32) -> (i32, i32) {
    %c0_i32 = arith.constant 0 : i32
    %c0_i32_0 = arith.constant 0 : i32
    %c0_i32_1 = arith.constant 0 : i32
    return %c0_i32, %c0_i32_0 : i32, i32
  }
  func.func @transform_4(%arg0: i32) -> (i32, i32) {
    %c0_i32 = arith.constant 0 : i32
    %c0_i32_0 = arith.constant 0 : i32
    %c0_i32_1 = arith.constant 0 : i32
    return %c0_i32, %c0_i32_0 : i32, i32
  }
  func.func @transform_5(%arg0: i32) -> (i32, i32) {
    %c0_i32 = arith.constant 0 : i32
    %c0_i32_0 = arith.constant 0 : i32
    %c0_i32_1 = arith.constant 0 : i32
    return %c0_i32, %c0_i32_0 : i32, i32
  }
}

</mosaic_0001>

<llo_original>
// kernel: policy_forward.4
$region0: #{policy_forward.4}
  #allocation0 [shape = 'u32[]', space=smem, size = 0x4, offset = 0x4, fixed_abs, tag = 'smem constant byte address 0x4 - core index']
  #allocation1 [shape = 'u32[144,128]{1,0:T(1,128)}', space=vmem, size = 0x12000, scoped, tag = 'internal scratch']
  %s0 = inlined_call_operand.vmem [shape: bf16[2896,128], index: 0, kind: input, shape index: {}]
  %s1 = inlined_call_operand.vmem [shape: bf16[128,128], index: 1, kind: input, shape index: {}]
  %s2 = inlined_call_operand.vmem [shape: f32[1,128], index: 2, kind: input, shape index: {}]
  %s3 = inlined_call_operand.vmem [shape: f32[1,128], index: 3, kind: input, shape index: {}]
  %s4 = inlined_call_operand.vmem [shape: bf16[2896,128], index: 4, kind: output, shape index: {}]
  %s5 = sld [smem:[#allocation0]]
  $region26: #{policy_forward.4} parent=0
    _
  %s7 = ssub.s32 1, %s5
  %s8 = scalar_select 0, %s7, %s5
  // Predicated region
  $region2: #{policy_forward.4} parent=0 // pred_check
    _
  $region3: #{policy_forward.4} parent=0 // pred_check_branch
    %10 = sbr.rel (0) target = $region5
  $region4: #{policy_forward.4} parent=0 // pred_region
    _
  $region5: #{policy_forward.4} parent=0 // pred_fallthru
    _
  // Predicated region
  $region6: #{policy_forward.4} parent=0 // pred_check
    _
  $region7: #{policy_forward.4} parent=0 // pred_check_branch
    %12 = sbr.rel (0) target = $region9
  $region8: #{policy_forward.4} parent=0 // pred_region
    _
  $region9: #{policy_forward.4} parent=0 // pred_fallthru
    _
  // Predicated region
  $region10: #{policy_forward.4} parent=0 // pred_check
    _
  $region11: #{policy_forward.4} parent=0 // pred_check_branch
    %14 = sbr.rel (0) target = $region13
  $region12: #{policy_forward.4} parent=0 // pred_region
    _
  $region13: #{policy_forward.4} parent=0 // pred_fallthru
    _
  // Predicated region
  $region14: #{policy_forward.4} parent=0 // pred_check
    _
  $region15: #{policy_forward.4} parent=0 // pred_check_branch
    %16 = sbr.rel (0) target = $region17
  $region16: #{policy_forward.4} parent=0 // pred_region
    _
  $region17: #{policy_forward.4} parent=0 // pred_fallthru
    _
  %v18 = vld [vmem:[%s0] sm:$0xf]
  %v19 = vld [vmem:[%s0 + $0x4] sm:$0xf]
  %v20 = vld [vmem:[%s0 + $0x8] sm:$0xf]
  %v21 = vld [vmem:[%s0 + $0xc] sm:$0xf]
  %v22 = vld [vmem:[%s0 + $0x10] sm:$0xf]
  %v23 = vld [vmem:[%s0 + $0x14] sm:$0xf]
  %v24 = vld [vmem:[%s0 + $0x18] sm:$0xf]
  %v25 = vld [vmem:[%s0 + $0x1c] sm:$0xf]
  %v26 = vld [vmem:[%s0 + $0x20] sm:$0xf]
  %v27 = vld [vmem:[%s0 + $0x24] sm:$0xf]
  %v28 = vld [vmem:[%s0 + $0x28] sm:$0xf]
  %v29 = vld [vmem:[%s0 + $0x2c] sm:$0xf]
  %v30 = vld [vmem:[%s0 + $0x30] sm:$0xf]
  %v31 = vld [vmem:[%s0 + $0x34] sm:$0xf]
  %v32 = vld [vmem:[%s0 + $0x38] sm:$0xf]
  %v33 = vld [vmem:[%s0 + $0x3c] sm:$0xf]
  %v34 = vld [vmem:[%s0 + $0x40] sm:$0xf]
  %v35 = vld [vmem:[%s0 + $0x44] sm:$0xf]
  %v36 = vld [vmem:[%s0 + $0x48] sm:$0xf]
  %v37 = vld [vmem:[%s0 + $0x4c] sm:$0xf]
  %v38 = vld [vmem:[%s0 + $0x50] sm:$0xf]
  %v39 = vld [vmem:[%s0 + $0x54] sm:$0xf]
  %v40 = vld [vmem:[%s0 + $0x58] sm:$0xf]
  %v41 = vld [vmem:[%s0 + $0x5c] sm:$0xf]
  %v42 = vld [vmem:[%s0 + $0x60] sm:$0xf]
  %v43 = vld [vmem:[%s0 + $0x64] sm:$0xf]
  %v44 = vld [vmem:[%s0 + $0x68] sm:$0xf]
  %v45 = vld [vmem:[%s0 + $0x6c] sm:$0xf]
  %v46 = vld [vmem:[%s0 + $0x70] sm:$0xf]
  %v47 = vld [vmem:[%s0 + $0x74] sm:$0xf]
  %v48 = vld [vmem:[%s0 + $0x78] sm:$0xf]
  %v49 = vld [vmem:[%s0 + $0x7c] sm:$0xf]
  %v50 = vld [vmem:[%s0 + $0x80] sm:$0xf]
  %v51 = vld [vmem:[%s0 + $0x84] sm:$0xf]
  %v52 = vld [vmem:[%s0 + $0x88] sm:$0xf]
  %v53 = vld [vmem:[%s0 + $0x8c] sm:$0xf]
  %v54 = vld [vmem:[%s0 + $0x90] sm:$0xf]
  %v55 = vld [vmem:[%s0 + $0x94] sm:$0xf]
  %v56 = vld [vmem:[%s0 + $0x98] sm:$0xf]
  %v57 = vld [vmem:[%s0 + $0x9c] sm:$0xf]
  %v58 = vld [vmem:[%s0 + $0xa0] sm:$0xf]
  %v59 = vld [vmem:[%s0 + $0xa4] sm:$0xf]
  %v60 = vld [vmem:[%s0 + $0xa8] sm:$0xf]
  %v61 = vld [vmem:[%s0 + $0xac] sm:$0xf]
  %v62 = vld [vmem:[%s0 + $0xb0] sm:$0xf]
  %v63 = vld [vmem:[%s0 + $0xb4] sm:$0xf]
  %v64 = vld [vmem:[%s0 + $0xb8] sm:$0xf]
  %v65 = vld [vmem:[%s0 + $0xbc] sm:$0xf]
  %v66 = vld [vmem:[%s0 + $0xc0] sm:$0xf]
  %v67 = vld [vmem:[%s0 + $0xc4] sm:$0xf]
  %v68 = vld [vmem:[%s0 + $0xc8] sm:$0xf]
  %v69 = vld [vmem:[%s0 + $0xcc] sm:$0xf]
  %v70 = vld [vmem:[%s0 + $0xd0] sm:$0xf]
  %v71 = vld [vmem:[%s0 + $0xd4] sm:$0xf]
  %v72 = vld [vmem:[%s0 + $0xd8] sm:$0xf]
  %v73 = vld [vmem:[%s0 + $0xdc] sm:$0xf]
  %v74 = vld [vmem:[%s0 + $0xe0] sm:$0xf]
  %v75 = vld [vmem:[%s0 + $0xe4] sm:$0xf]
  %v76 = vld [vmem:[%s0 + $0xe8] sm:$0xf]
  %v77 = vld [vmem:[%s0 + $0xec] sm:$0xf]
  %v78 = vld [vmem:[%s0 + $0xf0] sm:$0xf]
  %v79 = vld [vmem:[%s0 + $0xf4] sm:$0xf]
  %v80 = vld [vmem:[%s0 + $0xf8] sm:$0xf]
  %v81 = vld [vmem:[%s0 + $0xfc] sm:$0xf]
  %v82 = vld [vmem:[%s0 + $0x100] sm:$0xf]
  %v83 = vld [vmem:[%s0 + $0x104] sm:$0xf]
  %v84 = vld [vmem:[%s0 + $0x108] sm:$0xf]
  %v85 = vld [vmem:[%s0 + $0x10c] sm:$0xf]
  %v86 = vld [vmem:[%s0 + $0x110] sm:$0xf]
  %v87 = vld [vmem:[%s0 + $0x114] sm:$0xf]
  %v88 = vld [vmem:[%s0 + $0x118] sm:$0xf]
  %v89 = vld [vmem:[%s0 + $0x11c] sm:$0xf]
  %v90 = vld [vmem:[%s0 + $0x120] sm:$0xf]
  %v91 = vld [vmem:[%s0 + $0x124] sm:$0xf]
  %v92 = vld [vmem:[%s0 + $0x128] sm:$0xf]
  %v93 = vld [vmem:[%s0 + $0x12c] sm:$0xf]
  %v94 = vld [vmem:[%s0 + $0x130] sm:$0xf]
  %v95 = vld [vmem:[%s0 + $0x134] sm:$0xf]
  %v96 = vld [vmem:[%s0 + $0x138] sm:$0xf]
  %v97 = vld [vmem:[%s0 + $0x13c] sm:$0xf]
  %v98 = vld [vmem:[%s0 + $0x140] sm:$0xf]
  %v99 = vld [vmem:[%s0 + $0x144] sm:$0xf]
  %v100 = vld [vmem:[%s0 + $0x148] sm:$0xf]
  %v101 = vld [vmem:[%s0 + $0x14c] sm:$0xf]
  %v102 = vld [vmem:[%s0 + $0x150] sm:$0xf]
  %v103 = vld [vmem:[%s0 + $0x154] sm:$0xf]
  %v104 = vld [vmem:[%s0 + $0x158] sm:$0xf]
  %v105 = vld [vmem:[%s0 + $0x15c] sm:$0xf]
  %v106 = vld [vmem:[%s0 + $0x160] sm:$0xf]
  %v107 = vld [vmem:[%s0 + $0x164] sm:$0xf]
  %v108 = vld [vmem:[%s0 + $0x168] sm:$0xf]
  %v109 = vld [vmem:[%s0 + $0x16c] sm:$0xf]
  %v110 = vld [vmem:[%s0 + $0x170] sm:$0xf]
  %v111 = vld [vmem:[%s0 + $0x174] sm:$0xf]
  %v112 = vld [vmem:[%s0 + $0x178] sm:$0xf]
  %v113 = vld [vmem:[%s0 + $0x17c] sm:$0xf]
  %v114 = vld [vmem:[%s0 + $0x180] sm:$0xf]
  %v115 = vld [vmem:[%s0 + $0x184] sm:$0xf]
  %v116 = vld [vmem:[%s0 + $0x188] sm:$0xf]
  %v117 = vld [vmem:[%s0 + $0x18c] sm:$0xf]
  %v118 = vld [vmem:[%s0 + $0x190] sm:$0xf]
  %v119 = vld [vmem:[%s0 + $0x194] sm:$0xf]
  %v120 = vld [vmem:[%s0 + $0x198] sm:$0xf]
  %v121 = vld [vmem:[%s0 + $0x19c] sm:$0xf]
  %v122 = vld [vmem:[%s0 + $0x1a0] sm:$0xf]
  %v123 = vld [vmem:[%s0 + $0x1a4] sm:$0xf]
  %v124 = vld [vmem:[%s0 + $0x1a8] sm:$0xf]
  %v125 = vld [vmem:[%s0 + $0x1ac] sm:$0xf]
  %v126 = vld [vmem:[%s0 + $0x1b0] sm:$0xf]
  %v127 = vld [vmem:[%s0 + $0x1b4] sm:$0xf]
  %v128 = vld [vmem:[%s0 + $0x1b8] sm:$0xf]
  %v129 = vld [vmem:[%s0 + $0x1bc] sm:$0xf]
  %v130 = vld [vmem:[%s0 + $0x1c0] sm:$0xf]
  %v131 = vld [vmem:[%s0 + $0x1c4] sm:$0xf]
  %v132 = vld [vmem:[%s0 + $0x1c8] sm:$0xf]
  %v133 = vld [vmem:[%s0 + $0x1cc] sm:$0xf]
  %v134 = vld [vmem:[%s0 + $0x1d0] sm:$0xf]
  %v135 = vld [vmem:[%s0 + $0x1d4] sm:$0xf]
  %v136 = vld [vmem:[%s0 + $0x1d8] sm:$0xf]
  %v137 = vld [vmem:[%s0 + $0x1dc] sm:$0xf]
  %v138 = vld [vmem:[%s0 + $0x1e0] sm:$0xf]
  %v139 = vld [vmem:[%s0 + $0x1e4] sm:$0xf]
  %v140 = vld [vmem:[%s0 + $0x1e8] sm:$0xf]
  %v141 = vld [vmem:[%s0 + $0x1ec] sm:$0xf]
  %v142 = vld [vmem:[%s0 + $0x1f0] sm:$0xf]
  %v143 = vld [vmem:[%s0 + $0x1f4] sm:$0xf]
  %v144 = vld [vmem:[%s0 + $0x1f8] sm:$0xf]
  %v145 = vld [vmem:[%s0 + $0x1fc] sm:$0xf]
  %v146 = vld [vmem:[%s0 + $0x200] sm:$0xf]
  %v147 = vld [vmem:[%s0 + $0x204] sm:$0xf]
  %v148 = vld [vmem:[%s0 + $0x208] sm:$0xf]
  %v149 = vld [vmem:[%s0 + $0x20c] sm:$0xf]
  %v150 = vld [vmem:[%s0 + $0x210] sm:$0xf]
  %v151 = vld [vmem:[%s0 + $0x214] sm:$0xf]
  %v152 = vld [vmem:[%s0 + $0x218] sm:$0xf]
  %v153 = vld [vmem:[%s0 + $0x21c] sm:$0xf]
  %v154 = vld [vmem:[%s0 + $0x220] sm:$0xf]
  %v155 = vld [vmem:[%s0 + $0x224] sm:$0xf]
  %v156 = vld [vmem:[%s0 + $0x228] sm:$0xf]
  %v157 = vld [vmem:[%s0 + $0x22c] sm:$0xf]
  %v158 = vld [vmem:[%s0 + $0x230] sm:$0xf]
  %v159 = vld [vmem:[%s0 + $0x234] sm:$0xf]
  %v160 = vld [vmem:[%s0 + $0x238] sm:$0xf]
  %v161 = vld [vmem:[%s0 + $0x23c] sm:$0xf]
  %v162 = vld [vmem:[%s0 + $0x240] sm:$0xf]
  %v163 = vld [vmem:[%s0 + $0x244] sm:$0xf]
  %v164 = vld [vmem:[%s0 + $0x248] sm:$0xf]
  %v165 = vld [vmem:[%s0 + $0x24c] sm:$0xf]
  %v166 = vld [vmem:[%s0 + $0x250] sm:$0xf]
  %v167 = vld [vmem:[%s0 + $0x254] sm:$0xf]
  %v168 = vld [vmem:[%s0 + $0x258] sm:$0xf]
  %v169 = vld [vmem:[%s0 + $0x25c] sm:$0xf]
  %v170 = vld [vmem:[%s0 + $0x260] sm:$0xf]
  %v171 = vld [vmem:[%s0 + $0x264] sm:$0xf]
  %v172 = vld [vmem:[%s0 + $0x268] sm:$0xf]
  %v173 = vld [vmem:[%s0 + $0x26c] sm:$0xf]
  %v174 = vld [vmem:[%s0 + $0x270] sm:$0xf]
  %v175 = vld [vmem:[%s0 + $0x274] sm:$0xf]
  %v176 = vld [vmem:[%s0 + $0x278] sm:$0xf]
  %v177 = vld [vmem:[%s0 + $0x27c] sm:$0xf]
  %v178 = vld [vmem:[%s0 + $0x280] sm:$0xf]
  %v179 = vld [vmem:[%s0 + $0x284] sm:$0xf]
  %v180 = vld [vmem:[%s0 + $0x288] sm:$0xf]
  %v181 = vld [vmem:[%s0 + $0x28c] sm:$0xf]
  %v182 = vld [vmem:[%s0 + $0x290] sm:$0xf]
  %v183 = vld [vmem:[%s0 + $0x294] sm:$0xf]
  %v184 = vld [vmem:[%s0 + $0x298] sm:$0xf]
  %v185 = vld [vmem:[%s0 + $0x29c] sm:$0xf]
  %v186 = vld [vmem:[%s0 + $0x2a0] sm:$0xf]
  %v187 = vld [vmem:[%s0 + $0x2a4] sm:$0xf]
  %v188 = vld [vmem:[%s0 + $0x2a8] sm:$0xf]
  %v189 = vld [vmem:[%s0 + $0x2ac] sm:$0xf]
  %v190 = vld [vmem:[%s0 + $0x2b0] sm:$0xf]
  %v191 = vld [vmem:[%s0 + $0x2b4] sm:$0xf]
  %v192 = vld [vmem:[%s0 + $0x2b8] sm:$0xf]
  %v193 = vld [vmem:[%s0 + $0x2bc] sm:$0xf]
  %v194 = vld [vmem:[%s0 + $0x2c0] sm:$0xf]
  %v195 = vld [vmem:[%s0 + $0x2c4] sm:$0xf]
  %v196 = vld [vmem:[%s0 + $0x2c8] sm:$0xf]
  %v197 = vld [vmem:[%s0 + $0x2cc] sm:$0xf]
  %v198 = vld [vmem:[%s0 + $0x2d0] sm:$0xf]
  %v199 = vld [vmem:[%s0 + $0x2d4] sm:$0xf]
  %v200 = vld [vmem:[%s0 + $0x2d8] sm:$0xf]
  %v201 = vld [vmem:[%s0 + $0x2dc] sm:$0xf]
  %v202 = vld [vmem:[%s0 + $0x2e0] sm:$0xf]
  %v203 = vld [vmem:[%s0 + $0x2e4] sm:$0xf]
  %v204 = vld [vmem:[%s0 + $0x2e8] sm:$0xf]
  %v205 = vld [vmem:[%s0 + $0x2ec] sm:$0xf]
  %v206 = vld [vmem:[%s0 + $0x2f0] sm:$0xf]
  %v207 = vld [vmem:[%s0 + $0x2f4] sm:$0xf]
  %v208 = vld [vmem:[%s0 + $0x2f8] sm:$0xf]
  %v209 = vld [vmem:[%s0 + $0x2fc] sm:$0xf]
  %v210 = vld [vmem:[%s0 + $0x300] sm:$0xf]
  %v211 = vld [vmem:[%s0 + $0x304] sm:$0xf]
  %v212 = vld [vmem:[%s0 + $0x308] sm:$0xf]
  %v213 = vld [vmem:[%s0 + $0x30c] sm:$0xf]
  %v214 = vld [vmem:[%s0 + $0x310] sm:$0xf]
  %v215 = vld [vmem:[%s0 + $0x314] sm:$0xf]
  %v216 = vld [vmem:[%s0 + $0x318] sm:$0xf]
  %v217 = vld [vmem:[%s0 + $0x31c] sm:$0xf]
  %v218 = vld [vmem:[%s0 + $0x320] sm:$0xf]
  %v219 = vld [vmem:[%s0 + $0x324] sm:$0xf]
  %v220 = vld [vmem:[%s0 + $0x328] sm:$0xf]
  %v221 = vld [vmem:[%s0 + $0x32c] sm:$0xf]
  %v222 = vld [vmem:[%s0 + $0x330] sm:$0xf]
  %v223 = vld [vmem:[%s0 + $0x334] sm:$0xf]
  %v224 = vld [vmem:[%s0 + $0x338] sm:$0xf]
  %v225 = vld [vmem:[%s0 + $0x33c] sm:$0xf]
  %v226 = vld [vmem:[%s0 + $0x340] sm:$0xf]
  %v227 = vld [vmem:[%s0 + $0x344] sm:$0xf]
  %v228 = vld [vmem:[%s0 + $0x348] sm:$0xf]
  %v229 = vld [vmem:[%s0 + $0x34c] sm:$0xf]
  %v230 = vld [vmem:[%s0 + $0x350] sm:$0xf]
  %v231 = vld [vmem:[%s0 + $0x354] sm:$0xf]
  %v232 = vld [vmem:[%s0 + $0x358] sm:$0xf]
  %v233 = vld [vmem:[%s0 + $0x35c] sm:$0xf]
  %v234 = vld [vmem:[%s0 + $0x360] sm:$0xf]
  %v235 = vld [vmem:[%s0 + $0x364] sm:$0xf]
  %v236 = vld [vmem:[%s0 + $0x368] sm:$0xf]
  %v237 = vld [vmem:[%s0 + $0x36c] sm:$0xf]
  %v238 = vld [vmem:[%s0 + $0x370] sm:$0xf]
  %v239 = vld [vmem:[%s0 + $0x374] sm:$0xf]
  %v240 = vld [vmem:[%s0 + $0x378] sm:$0xf]
  %v241 = vld [vmem:[%s0 + $0x37c] sm:$0xf]
  %v242 = vld [vmem:[%s0 + $0x380] sm:$0xf]
  %v243 = vld [vmem:[%s0 + $0x384] sm:$0xf]
  %v244 = vld [vmem:[%s0 + $0x388] sm:$0xf]
  %v245 = vld [vmem:[%s0 + $0x38c] sm:$0xf]
  %v246 = vld [vmem:[%s0 + $0x390] sm:$0xf]
  %v247 = vld [vmem:[%s0 + $0x394] sm:$0xf]
  %v248 = vld [vmem:[%s0 + $0x398] sm:$0xf]
  %v249 = vld [vmem:[%s0 + $0x39c] sm:$0xf]
  %v250 = vld [vmem:[%s0 + $0x3a0] sm:$0xf]
  %v251 = vld [vmem:[%s0 + $0x3a4] sm:$0xf]
  %v252 = vld [vmem:[%s0 + $0x3a8] sm:$0xf]
  %v253 = vld [vmem:[%s0 + $0x3ac] sm:$0xf]
  %v254 = vld [vmem:[%s0 + $0x3b0] sm:$0xf]
  %v255 = vld [vmem:[%s0 + $0x3b4] sm:$0xf]
  %v256 = vld [vmem:[%s0 + $0x3b8] sm:$0xf]
  %v257 = vld [vmem:[%s0 + $0x3bc] sm:$0xf]
  %v258 = vld [vmem:[%s0 + $0x3c0] sm:$0xf]
  %v259 = vld [vmem:[%s0 + $0x3c4] sm:$0xf]
  %v260 = vld [vmem:[%s0 + $0x3c8] sm:$0xf]
  %v261 = vld [vmem:[%s0 + $0x3cc] sm:$0xf]
  %v262 = vld [vmem:[%s0 + $0x3d0] sm:$0xf]
  %v263 = vld [vmem:[%s0 + $0x3d4] sm:$0xf]
  %v264 = vld [vmem:[%s0 + $0x3d8] sm:$0xf]
  %v265 = vld [vmem:[%s0 + $0x3dc] sm:$0xf]
  %v266 = vld [vmem:[%s0 + $0x3e0] sm:$0xf]
  %v267 = vld [vmem:[%s0 + $0x3e4] sm:$0xf]
  %v268 = vld [vmem:[%s0 + $0x3e8] sm:$0xf]
  %v269 = vld [vmem:[%s0 + $0x3ec] sm:$0xf]
  %v270 = vld [vmem:[%s0 + $0x3f0] sm:$0xf]
  %v271 = vld [vmem:[%s0 + $0x3f4] sm:$0xf]
  %v272 = vld [vmem:[%s0 + $0x3f8] sm:$0xf]
  %v273 = vld [vmem:[%s0 + $0x3fc] sm:$0xf]
  %v274 = vld [vmem:[%s0 + $0x400] sm:$0xf]
  %v275 = vld [vmem:[%s0 + $0x404] sm:$0xf]
  %v276 = vld [vmem:[%s0 + $0x408] sm:$0xf]
  %v277 = vld [vmem:[%s0 + $0x40c] sm:$0xf]
  %v278 = vld [vmem:[%s0 + $0x410] sm:$0xf]
  %v279 = vld [vmem:[%s0 + $0x414] sm:$0xf]
  %v280 = vld [vmem:[%s0 + $0x418] sm:$0xf]
  %v281 = vld [vmem:[%s0 + $0x41c] sm:$0xf]
  %v282 = vld [vmem:[%s0 + $0x420] sm:$0xf]
  %v283 = vld [vmem:[%s0 + $0x424] sm:$0xf]
  %v284 = vld [vmem:[%s0 + $0x428] sm:$0xf]
  %v285 = vld [vmem:[%s0 + $0x42c] sm:$0xf]
  %v286 = vld [vmem:[%s0 + $0x430] sm:$0xf]
  %v287 = vld [vmem:[%s0 + $0x434] sm:$0xf]
  %v288 = vld [vmem:[%s0 + $0x438] sm:$0xf]
  %v289 = vld [vmem:[%s0 + $0x43c] sm:$0xf]
  %v290 = vld [vmem:[%s0 + $0x440] sm:$0xf]
  %v291 = vld [vmem:[%s0 + $0x444] sm:$0xf]
  %v292 = vld [vmem:[%s0 + $0x448] sm:$0xf]
  %v293 = vld [vmem:[%s0 + $0x44c] sm:$0xf]
  %v294 = vld [vmem:[%s0 + $0x450] sm:$0xf]
  %v295 = vld [vmem:[%s0 + $0x454] sm:$0xf]
  %v296 = vld [vmem:[%s0 + $0x458] sm:$0xf]
  %v297 = vld [vmem:[%s0 + $0x45c] sm:$0xf]
  %v298 = vld [vmem:[%s0 + $0x460] sm:$0xf]
  %v299 = vld [vmem:[%s0 + $0x464] sm:$0xf]
  %v300 = vld [vmem:[%s0 + $0x468] sm:$0xf]
  %v301 = vld [vmem:[%s0 + $0x46c] sm:$0xf]
  %v302 = vld [vmem:[%s0 + $0x470] sm:$0xf]
  %v303 = vld [vmem:[%s0 + $0x474] sm:$0xf]
  %v304 = vld [vmem:[%s0 + $0x478] sm:$0xf]
  %v305 = vld [vmem:[%s0 + $0x47c] sm:$0xf]
  %v306 = vld [vmem:[%s0 + $0x480] sm:$0xf]
  %v307 = vld [vmem:[%s0 + $0x484] sm:$0xf]
  %v308 = vld [vmem:[%s0 + $0x488] sm:$0xf]
  %v309 = vld [vmem:[%s0 + $0x48c] sm:$0xf]
  %v310 = vld [vmem:[%s0 + $0x490] sm:$0xf]
  %v311 = vld [vmem:[%s0 + $0x494] sm:$0xf]
  %v312 = vld [vmem:[%s0 + $0x498] sm:$0xf]
  %v313 = vld [vmem:[%s0 + $0x49c] sm:$0xf]
  %v314 = vld [vmem:[%s0 + $0x4a0] sm:$0xf]
  %v315 = vld [vmem:[%s0 + $0x4a4] sm:$0xf]
  %v316 = vld [vmem:[%s0 + $0x4a8] sm:$0xf]
  %v317 = vld [vmem:[%s0 + $0x4ac] sm:$0xf]
  %v318 = vld [vmem:[%s0 + $0x4b0] sm:$0xf]
  %v319 = vld [vmem:[%s0 + $0x4b4] sm:$0xf]
  %v320 = vld [vmem:[%s0 + $0x4b8] sm:$0xf]
  %v321 = vld [vmem:[%s0 + $0x4bc] sm:$0xf]
  %v322 = vld [vmem:[%s0 + $0x4c0] sm:$0xf]
  %v323 = vld [vmem:[%s0 + $0x4c4] sm:$0xf]
  %v324 = vld [vmem:[%s0 + $0x4c8] sm:$0xf]
  %v325 = vld [vmem:[%s0 + $0x4cc] sm:$0xf]
  %v326 = vld [vmem:[%s0 + $0x4d0] sm:$0xf]
  %v327 = vld [vmem:[%s0 + $0x4d4] sm:$0xf]
  %v328 = vld [vmem:[%s0 + $0x4d8] sm:$0xf]
  %v329 = vld [vmem:[%s0 + $0x4dc] sm:$0xf]
  %v330 = vld [vmem:[%s0 + $0x4e0] sm:$0xf]
  %v331 = vld [vmem:[%s0 + $0x4e4] sm:$0xf]
  %v332 = vld [vmem:[%s0 + $0x4e8] sm:$0xf]
  %v333 = vld [vmem:[%s0 + $0x4ec] sm:$0xf]
  %v334 = vld [vmem:[%s0 + $0x4f0] sm:$0xf]
  %v335 = vld [vmem:[%s0 + $0x4f4] sm:$0xf]
  %v336 = vld [vmem:[%s0 + $0x4f8] sm:$0xf]
  %v337 = vld [vmem:[%s0 + $0x4fc] sm:$0xf]
  %v338 = vld [vmem:[%s0 + $0x500] sm:$0xf]
  %v339 = vld [vmem:[%s0 + $0x504] sm:$0xf]
  %v340 = vld [vmem:[%s0 + $0x508] sm:$0xf]
  %v341 = vld [vmem:[%s0 + $0x50c] sm:$0xf]
  %v342 = vld [vmem:[%s0 + $0x510] sm:$0xf]
  %v343 = vld [vmem:[%s0 + $0x514] sm:$0xf]
  %v344 = vld [vmem:[%s0 + $0x518] sm:$0xf]
  %v345 = vld [vmem:[%s0 + $0x51c] sm:$0xf]
  %v346 = vld [vmem:[%s0 + $0x520] sm:$0xf]
  %v347 = vld [vmem:[%s0 + $0x524] sm:$0xf]
  %v348 = vld [vmem:[%s0 + $0x528] sm:$0xf]
  %v349 = vld [vmem:[%s0 + $0x52c] sm:$0xf]
  %v350 = vld [vmem:[%s0 + $0x530] sm:$0xf]
  %v351 = vld [vmem:[%s0 + $0x534] sm:$0xf]
  %v352 = vld [vmem:[%s0 + $0x538] sm:$0xf]
  %v353 = vld [vmem:[%s0 + $0x53c] sm:$0xf]
  %v354 = vld [vmem:[%s0 + $0x540] sm:$0xf]
  %v355 = vld [vmem:[%s0 + $0x544] sm:$0xf]
  %v356 = vld [vmem:[%s0 + $0x548] sm:$0xf]
  %v357 = vld [vmem:[%s0 + $0x54c] sm:$0xf]
  %v358 = vld [vmem:[%s0 + $0x550] sm:$0xf]
  %v359 = vld [vmem:[%s0 + $0x554] sm:$0xf]
  %v360 = vld [vmem:[%s0 + $0x558] sm:$0xf]
  %v361 = vld [vmem:[%s0 + $0x55c] sm:$0xf]
  %v362 = vld [vmem:[%s0 + $0x560] sm:$0xf]
  %v363 = vld [vmem:[%s0 + $0x564] sm:$0xf]
  %v364 = vld [vmem:[%s0 + $0x568] sm:$0xf]
  %v365 = vld [vmem:[%s0 + $0x56c] sm:$0xf]
  %v366 = vld [vmem:[%s0 + $0x570] sm:$0xf]
  %v367 = vld [vmem:[%s0 + $0x574] sm:$0xf]
  %v368 = vld [vmem:[%s0 + $0x578] sm:$0xf]
  %v369 = vld [vmem:[%s0 + $0x57c] sm:$0xf]
  %v370 = vld [vmem:[%s0 + $0x580] sm:$0xf]
  %v371 = vld [vmem:[%s0 + $0x584] sm:$0xf]
  %v372 = vld [vmem:[%s0 + $0x588] sm:$0xf]
  %v373 = vld [vmem:[%s0 + $0x58c] sm:$0xf]
  %v374 = vld [vmem:[%s0 + $0x590] sm:$0xf]
  %v375 = vld [vmem:[%s0 + $0x594] sm:$0xf]
  %v376 = vld [vmem:[%s0 + $0x598] sm:$0xf]
  %v377 = vld [vmem:[%s0 + $0x59c] sm:$0xf]
  %v378 = vld [vmem:[%s0 + $0x5a0] sm:$0xf]
  %v379 = vld [vmem:[%s0 + $0x5a4] sm:$0xf]
  %v380 = vld [vmem:[%s1] sm:$0xf]
  %v381 = vld [vmem:[%s1 + $0x4] sm:$0xf]
  %v382 = vld [vmem:[%s1 + $0x8] sm:$0xf]
  %v383 = vld [vmem:[%s1 + $0xc] sm:$0xf]
  %v384 = vld [vmem:[%s1 + $0x10] sm:$0xf]
  %v385 = vld [vmem:[%s1 + $0x14] sm:$0xf]
  %v386 = vld [vmem:[%s1 + $0x18] sm:$0xf]
  %v387 = vld [vmem:[%s1 + $0x1c] sm:$0xf]
  %v388 = vld [vmem:[%s1 + $0x20] sm:$0xf]
  %v389 = vld [vmem:[%s1 + $0x24] sm:$0xf]
  %v390 = vld [vmem:[%s1 + $0x28] sm:$0xf]
  %v391 = vld [vmem:[%s1 + $0x2c] sm:$0xf]
  %v392 = vld [vmem:[%s1 + $0x30] sm:$0xf]
  %v393 = vld [vmem:[%s1 + $0x34] sm:$0xf]
  %v394 = vld [vmem:[%s1 + $0x38] sm:$0xf]
  %v395 = vld [vmem:[%s1 + $0x3c] sm:$0xf]
  %v758 = vunpack.c.l.b16 %v18
  %v759 = vunpack.c.l.b16 %v19
  %v760 = vunpack.c.l.b16 %v20
  %v761 = vunpack.c.l.b16 %v21
  %v762 = vunpack.c.l.b16 %v22
  %v763 = vunpack.c.l.b16 %v23
  %v764 = vunpack.c.l.b16 %v24
  %v765 = vunpack.c.l.b16 %v25
  %v766 = vunpack.c.l.b16 %v26
  %v767 = vunpack.c.l.b16 %v27
  %v768 = vunpack.c.l.b16 %v28
  %v769 = vunpack.c.l.b16 %v29
  %v770 = vunpack.c.l.b16 %v30
  %v771 = vunpack.c.l.b16 %v31
  %v772 = vunpack.c.l.b16 %v32
  %v773 = vunpack.c.l.b16 %v33
  %v774 = vunpack.c.l.b16 %v34
  %v775 = vunpack.c.l.b16 %v35
  %v776 = vunpack.c.l.b16 %v36
  %v777 = vunpack.c.l.b16 %v37
  %v778 = vunpack.c.l.b16 %v38
  %v779 = vunpack.c.l.b16 %v39
  %v780 = vunpack.c.l.b16 %v40
  %v781 = vunpack.c.l.b16 %v41
  %v782 = vunpack.c.l.b16 %v42
  %v783 = vunpack.c.l.b16 %v43
  %v784 = vunpack.c.l.b16 %v44
  %v785 = vunpack.c.l.b16 %v45
  %v786 = vunpack.c.l.b16 %v46
  %v787 = vunpack.c.l.b16 %v47
  %v788 = vunpack.c.l.b16 %v48
  %v789 = vunpack.c.l.b16 %v49
  %v790 = vunpack.c.l.b16 %v50
  %v791 = vunpack.c.l.b16 %v51
  %v792 = vunpack.c.l.b16 %v52
  %v793 = vunpack.c.l.b16 %v53
  %v794 = vunpack.c.l.b16 %v54
  %v795 = vunpack.c.l.b16 %v55
  %v796 = vunpack.c.l.b16 %v56
  %v797 = vunpack.c.l.b16 %v57
  %v798 = vunpack.c.l.b16 %v58
  %v799 = vunpack.c.l.b16 %v59
  %v800 = vunpack.c.l.b16 %v60
  %v801 = vunpack.c.l.b16 %v61
  %v802 = vunpack.c.l.b16 %v62
  %v803 = vunpack.c.l.b16 %v63
  %v804 = vunpack.c.l.b16 %v64
  %v805 = vunpack.c.l.b16 %v65
  %v806 = vunpack.c.l.b16 %v66
  %v807 = vunpack.c.l.b16 %v67
  %v808 = vunpack.c.l.b16 %v68
  %v809 = vunpack.c.l.b16 %v69
  %v810 = vunpack.c.l.b16 %v70
  %v811 = vunpack.c.l.b16 %v71
  %v812 = vunpack.c.l.b16 %v72
  %v813 = vunpack.c.l.b16 %v73
  %v814 = vunpack.c.l.b16 %v74
  %v815 = vunpack.c.l.b16 %v75
  %v816 = vunpack.c.l.b16 %v76
  %v817 = vunpack.c.l.b16 %v77
  %v818 = vunpack.c.l.b16 %v78
  %v819 = vunpack.c.l.b16 %v79
  %v820 = vunpack.c.l.b16 %v80
  %v821 = vunpack.c.l.b16 %v81
  %v822 = vunpack.c.l.b16 %v82
  %v823 = vunpack.c.l.b16 %v83
  %v824 = vunpack.c.l.b16 %v84
  %v825 = vunpack.c.l.b16 %v85
  %v826 = vunpack.c.l.b16 %v86
  %v827 = vunpack.c.l.b16 %v87
  %v828 = vunpack.c.l.b16 %v88
  %v829 = vunpack.c.l.b16 %v89
  %v830 = vunpack.c.l.b16 %v90
  %v831 = vunpack.c.l.b16 %v91
  %v832 = vunpack.c.l.b16 %v92
  %v833 = vunpack.c.l.b16 %v93
  %v834 = vunpack.c.l.b16 %v94
  %v835 = vunpack.c.l.b16 %v95
  %v836 = vunpack.c.l.b16 %v96
  %v837 = vunpack.c.l.b16 %v97
  %v838 = vunpack.c.l.b16 %v98
  %v839 = vunpack.c.l.b16 %v99
  %v840 = vunpack.c.l.b16 %v100
  %v841 = vunpack.c.l.b16 %v101
  %v842 = vunpack.c.l.b16 %v102
  %v843 = vunpack.c.l.b16 %v103
  %v844 = vunpack.c.l.b16 %v104
  %v845 = vunpack.c.l.b16 %v105
  %v846 = vunpack.c.l.b16 %v106
  %v847 = vunpack.c.l.b16 %v107
  %v848 = vunpack.c.l.b16 %v108
  %v849 = vunpack.c.l.b16 %v109
  %v850 = vunpack.c.l.b16 %v110
  %v851 = vunpack.c.l.b16 %v111
  %v852 = vunpack.c.l.b16 %v112
  %v853 = vunpack.c.l.b16 %v113
  %v854 = vunpack.c.l.b16 %v114
  %v855 = vunpack.c.l.b16 %v115
  %v856 = vunpack.c.l.b16 %v116
  %v857 = vunpack.c.l.b16 %v117
  %v858 = vunpack.c.l.b16 %v118
  %v859 = vunpack.c.l.b16 %v119
  %v860 = vunpack.c.l.b16 %v120
  %v861 = vunpack.c.l.b16 %v121
  %v862 = vunpack.c.l.b16 %v122
  %v863 = vunpack.c.l.b16 %v123
  %v864 = vunpack.c.l.b16 %v124
  %v865 = vunpack.c.l.b16 %v125
  %v866 = vunpack.c.l.b16 %v126
  %v867 = vunpack.c.l.b16 %v127
  %v868 = vunpack.c.l.b16 %v128
  %v869 = vunpack.c.l.b16 %v129
  %v870 = vunpack.c.l.b16 %v130
  %v871 = vunpack.c.l.b16 %v131
  %v872 = vunpack.c.l.b16 %v132
  %v873 = vunpack.c.l.b16 %v133
  %v874 = vunpack.c.l.b16 %v134
  %v875 = vunpack.c.l.b16 %v135
  %v876 = vunpack.c.l.b16 %v136
  %v877 = vunpack.c.l.b16 %v137
  %v878 = vunpack.c.l.b16 %v138
  %v879 = vunpack.c.l.b16 %v139
  %v880 = vunpack.c.l.b16 %v140
  %v881 = vunpack.c.l.b16 %v141
  %v882 = vunpack.c.l.b16 %v142
  %v883 = vunpack.c.l.b16 %v143
  %v884 = vunpack.c.l.b16 %v144
  %v885 = vunpack.c.l.b16 %v145
  %v886 = vunpack.c.l.b16 %v146
  %v887 = vunpack.c.l.b16 %v147
  %v888 = vunpack.c.l.b16 %v148
  %v889 = vunpack.c.l.b16 %v149
  %v890 = vunpack.c.l.b16 %v150
  %v891 = vunpack.c.l.b16 %v151
  %v892 = vunpack.c.l.b16 %v152
  %v893 = vunpack.c.l.b16 %v153
  %v894 = vunpack.c.l.b16 %v154
  %v895 = vunpack.c.l.b16 %v155
  %v896 = vunpack.c.l.b16 %v156
  %v897 = vunpack.c.l.b16 %v157
  %v898 = vunpack.c.l.b16 %v158
  %v899 = vunpack.c.l.b16 %v159
  %v900 = vunpack.c.l.b16 %v160
  %v901 = vunpack.c.l.b16 %v161
  %v902 = vunpack.c.l.b16 %v162
  %v903 = vunpack.c.l.b16 %v163
  %v904 = vunpack.c.l.b16 %v164
  %v905 = vunpack.c.l.b16 %v165
  %v906 = vunpack.c.l.b16 %v166
  %v907 = vunpack.c.l.b16 %v167
  %v908 = vunpack.c.l.b16 %v168
  %v909 = vunpack.c.l.b16 %v169
  %v910 = vunpack.c.l.b16 %v170
  %v911 = vunpack.c.l.b16 %v171
  %v912 = vunpack.c.l.b16 %v172
  %v913 = vunpack.c.l.b16 %v173
  %v914 = vunpack.c.l.b16 %v174
  %v915 = vunpack.c.l.b16 %v175
  %v916 = vunpack.c.l.b16 %v176
  %v917 = vunpack.c.l.b16 %v177
  %v918 = vunpack.c.l.b16 %v178
  %v919 = vunpack.c.l.b16 %v179
  %v920 = vunpack.c.l.b16 %v180
  %v921 = vunpack.c.l.b16 %v181
  %v922 = vunpack.c.l.b16 %v182
  %v923 = vunpack.c.l.b16 %v183
  %v924 = vunpack.c.l.b16 %v184
  %v925 = vunpack.c.l.b16 %v185
  %v926 = vunpack.c.l.b16 %v186
  %v927 = vunpack.c.l.b16 %v187
  %v928 = vunpack.c.l.b16 %v188
  %v929 = vunpack.c.l.b16 %v189
  %v930 = vunpack.c.l.b16 %v190
  %v931 = vunpack.c.l.b16 %v191
  %v932 = vunpack.c.l.b16 %v192
  %v933 = vunpack.c.l.b16 %v193
  %v934 = vunpack.c.l.b16 %v194
  %v935 = vunpack.c.l.b16 %v195
  %v936 = vunpack.c.l.b16 %v196
  %v937 = vunpack.c.l.b16 %v197
  %v938 = vunpack.c.l.b16 %v198
  %v939 = vunpack.c.l.b16 %v199
  %v940 = vunpack.c.l.b16 %v200
  %v941 = vunpack.c.l.b16 %v201
  %v942 = vunpack.c.l.b16 %v202
  %v943 = vunpack.c.l.b16 %v203
  %v944 = vunpack.c.l.b16 %v204
  %v945 = vunpack.c.l.b16 %v205
  %v946 = vunpack.c.l.b16 %v206
  %v947 = vunpack.c.l.b16 %v207
  %v948 = vunpack.c.l.b16 %v208
  %v949 = vunpack.c.l.b16 %v209
  %v950 = vunpack.c.l.b16 %v210
  %v951 = vunpack.c.l.b16 %v211
  %v952 = vunpack.c.l.b16 %v212
  %v953 = vunpack.c.l.b16 %v213
  %v954 = vunpack.c.l.b16 %v214
  %v955 = vunpack.c.l.b16 %v215
  %v956 = vunpack.c.l.b16 %v216
  %v957 = vunpack.c.l.b16 %v217
  %v958 = vunpack.c.l.b16 %v218
  %v959 = vunpack.c.l.b16 %v219
  %v960 = vunpack.c.l.b16 %v220
  %v961 = vunpack.c.l.b16 %v221
  %v962 = vunpack.c.l.b16 %v222
  %v963 = vunpack.c.l.b16 %v223
  %v964 = vunpack.c.l.b16 %v224
  %v965 = vunpack.c.l.b16 %v225
  %v966 = vunpack.c.l.b16 %v226
  %v967 = vunpack.c.l.b16 %v227
  %v968 = vunpack.c.l.b16 %v228
  %v969 = vunpack.c.l.b16 %v229
  %v970 = vunpack.c.l.b16 %v230
  %v971 = vunpack.c.l.b16 %v231
  %v972 = vunpack.c.l.b16 %v232
  %v973 = vunpack.c.l.b16 %v233
  %v974 = vunpack.c.l.b16 %v234
  %v975 = vunpack.c.l.b16 %v235
  %v976 = vunpack.c.l.b16 %v236
  %v977 = vunpack.c.l.b16 %v237
  %v978 = vunpack.c.l.b16 %v238
  %v979 = vunpack.c.l.b16 %v239
  %v980 = vunpack.c.l.b16 %v240
  %v981 = vunpack.c.l.b16 %v241
  %v982 = vunpack.c.l.b16 %v242
  %v983 = vunpack.c.l.b16 %v243
  %v984 = vunpack.c.l.b16 %v244
  %v985 = vunpack.c.l.b16 %v245
  %v986 = vunpack.c.l.b16 %v246
  %v987 = vunpack.c.l.b16 %v247
  %v988 = vunpack.c.l.b16 %v248
  %v989 = vunpack.c.l.b16 %v249
  %v990 = vunpack.c.l.b16 %v250
  %v991 = vunpack.c.l.b16 %v251
  %v992 = vunpack.c.l.b16 %v252
  %v993 = vunpack.c.l.b16 %v253
  %v994 = vunpack.c.l.b16 %v254
  %v995 = vunpack.c.l.b16 %v255
  %v996 = vunpack.c.l.b16 %v256
  %v997 = vunpack.c.l.b16 %v257
  %v998 = vunpack.c.l.b16 %v258
  %v999 = vunpack.c.l.b16 %v259
  %v1000 = vunpack.c.l.b16 %v260
  %v1001 = vunpack.c.l.b16 %v261
  %v1002 = vunpack.c.l.b16 %v262
  %v1003 = vunpack.c.l.b16 %v263
  %v1004 = vunpack.c.l.b16 %v264
  %v1005 = vunpack.c.l.b16 %v265
  %v1006 = vunpack.c.l.b16 %v266
  %v1007 = vunpack.c.l.b16 %v267
  %v1008 = vunpack.c.l.b16 %v268
  %v1009 = vunpack.c.l.b16 %v269
  %v1010 = vunpack.c.l.b16 %v270
  %v1011 = vunpack.c.l.b16 %v271
  %v1012 = vunpack.c.l.b16 %v272
  %v1013 = vunpack.c.l.b16 %v273
  %v1014 = vunpack.c.l.b16 %v274
  %v1015 = vunpack.c.l.b16 %v275
  %v1016 = vunpack.c.l.b16 %v276
  %v1017 = vunpack.c.l.b16 %v277
  %v1018 = vunpack.c.l.b16 %v278
  %v1019 = vunpack.c.l.b16 %v279
  %v1020 = vunpack.c.l.b16 %v280
  %v1021 = vunpack.c.l.b16 %v281
  %v1022 = vunpack.c.l.b16 %v282
  %v1023 = vunpack.c.l.b16 %v283
  %v1024 = vunpack.c.l.b16 %v284
  %v1025 = vunpack.c.l.b16 %v285
  %v1026 = vunpack.c.l.b16 %v286
  %v1027 = vunpack.c.l.b16 %v287
  %v1028 = vunpack.c.l.b16 %v288
  %v1029 = vunpack.c.l.b16 %v289
  %v1030 = vunpack.c.l.b16 %v290
  %v1031 = vunpack.c.l.b16 %v291
  %v1032 = vunpack.c.l.b16 %v292
  %v1033 = vunpack.c.l.b16 %v293
  %v1034 = vunpack.c.l.b16 %v294
  %v1035 = vunpack.c.l.b16 %v295
  %v1036 = vunpack.c.l.b16 %v296
  %v1037 = vunpack.c.l.b16 %v297
  %v1038 = vunpack.c.l.b16 %v298
  %v1039 = vunpack.c.l.b16 %v299
  %v1040 = vunpack.c.l.b16 %v300
  %v1041 = vunpack.c.l.b16 %v301
  %v1042 = vunpack.c.l.b16 %v302
  %v1043 = vunpack.c.l.b16 %v303
  %v1044 = vunpack.c.l.b16 %v304
  %v1045 = vunpack.c.l.b16 %v305
  %v1046 = vunpack.c.l.b16 %v306
  %v1047 = vunpack.c.l.b16 %v307
  %v1048 = vunpack.c.l.b16 %v308
  %v1049 = vunpack.c.l.b16 %v309
  %v1050 = vunpack.c.l.b16 %v310
  %v1051 = vunpack.c.l.b16 %v311
  %v1052 = vunpack.c.l.b16 %v312
  %v1053 = vunpack.c.l.b16 %v313
  %v1054 = vunpack.c.l.b16 %v314
  %v1055 = vunpack.c.l.b16 %v315
  %v1056 = vunpack.c.l.b16 %v316
  %v1057 = vunpack.c.l.b16 %v317
  %v1058 = vunpack.c.l.b16 %v318
  %v1059 = vunpack.c.l.b16 %v319
  %v1060 = vunpack.c.l.b16 %v320
  %v1061 = vunpack.c.l.b16 %v321
  %v1062 = vunpack.c.l.b16 %v322
  %v1063 = vunpack.c.l.b16 %v323
  %v1064 = vunpack.c.l.b16 %v324
  %v1065 = vunpack.c.l.b16 %v325
  %v1066 = vunpack.c.l.b16 %v326
  %v1067 = vunpack.c.l.b16 %v327
  %v1068 = vunpack.c.l.b16 %v328
  %v1069 = vunpack.c.l.b16 %v329
  %v1070 = vunpack.c.l.b16 %v330
  %v1071 = vunpack.c.l.b16 %v331
  %v1072 = vunpack.c.l.b16 %v332
  %v1073 = vunpack.c.l.b16 %v333
  %v1074 = vunpack.c.l.b16 %v334
  %v1075 = vunpack.c.l.b16 %v335
  %v1076 = vunpack.c.l.b16 %v336
  %v1077 = vunpack.c.l.b16 %v337
  %v1078 = vunpack.c.l.b16 %v338
  %v1079 = vunpack.c.l.b16 %v339
  %v1080 = vunpack.c.l.b16 %v340
  %v1081 = vunpack.c.l.b16 %v341
  %v1082 = vunpack.c.l.b16 %v342
  %v1083 = vunpack.c.l.b16 %v343
  %v1084 = vunpack.c.l.b16 %v344
  %v1085 = vunpack.c.l.b16 %v345
  %v1086 = vunpack.c.l.b16 %v346
  %v1087 = vunpack.c.l.b16 %v347
  %v1088 = vunpack.c.l.b16 %v348
  %v1089 = vunpack.c.l.b16 %v349
  %v1090 = vunpack.c.l.b16 %v350
  %v1091 = vunpack.c.l.b16 %v351
  %v1092 = vunpack.c.l.b16 %v352
  %v1093 = vunpack.c.l.b16 %v353
  %v1094 = vunpack.c.l.b16 %v354
  %v1095 = vunpack.c.l.b16 %v355
  %v1096 = vunpack.c.l.b16 %v356
  %v1097 = vunpack.c.l.b16 %v357
  %v1098 = vunpack.c.l.b16 %v358
  %v1099 = vunpack.c.l.b16 %v359
  %v1100 = vunpack.c.l.b16 %v360
  %v1101 = vunpack.c.l.b16 %v361
  %v1102 = vunpack.c.l.b16 %v362
  %v1103 = vunpack.c.l.b16 %v363
  %v1104 = vunpack.c.l.b16 %v364
  %v1105 = vunpack.c.l.b16 %v365
  %v1106 = vunpack.c.l.b16 %v366
  %v1107 = vunpack.c.l.b16 %v367
  %v1108 = vunpack.c.l.b16 %v368
  %v1109 = vunpack.c.l.b16 %v369
  %v1110 = vunpack.c.l.b16 %v370
  %v1111 = vunpack.c.l.b16 %v371
  %v1112 = vunpack.c.l.b16 %v372
  %v1113 = vunpack.c.l.b16 %v373
  %v1114 = vunpack.c.l.b16 %v374
  %v1115 = vunpack.c.l.b16 %v375
  %v1116 = vunpack.c.l.b16 %v376
  %v1117 = vunpack.c.l.b16 %v377
  %v1118 = vunpack.c.l.b16 %v378
  %v1119 = vunpack.c.l.b16 %v379
  %v1120 = vpack.c.b16 %v759, %v758
  %v1121 = vpack.c.b16 %v761, %v760
  %v1122 = vpack.c.b16 %v763, %v762
  %v1123 = vpack.c.b16 %v765, %v764
  %v1124 = vpack.c.b16 %v767, %v766
  %v1125 = vpack.c.b16 %v769, %v768
  %v1126 = vpack.c.b16 %v771, %v770
  %v1127 = vpack.c.b16 %v773, %v772
  %v1128 = vpack.c.b16 %v775, %v774
  %v1129 = vpack.c.b16 %v777, %v776
  %v1130 = vpack.c.b16 %v779, %v778
  %v1131 = vpack.c.b16 %v781, %v780
  %v1132 = vpack.c.b16 %v783, %v782
  %v1133 = vpack.c.b16 %v785, %v784
  %v1134 = vpack.c.b16 %v787, %v786
  %v1135 = vpack.c.b16 %v789, %v788
  %v1136 = vpack.c.b16 %v791, %v790
  %v1137 = vpack.c.b16 %v793, %v792
  %v1138 = vpack.c.b16 %v795, %v794
  %v1139 = vpack.c.b16 %v797, %v796
  %v1140 = vpack.c.b16 %v799, %v798
  %v1141 = vpack.c.b16 %v801, %v800
  %v1142 = vpack.c.b16 %v803, %v802
  %v1143 = vpack.c.b16 %v805, %v804
  %v1144 = vpack.c.b16 %v807, %v806
  %v1145 = vpack.c.b16 %v809, %v808
  %v1146 = vpack.c.b16 %v811, %v810
  %v1147 = vpack.c.b16 %v813, %v812
  %v1148 = vpack.c.b16 %v815, %v814
  %v1149 = vpack.c.b16 %v817, %v816
  %v1150 = vpack.c.b16 %v819, %v818
  %v1151 = vpack.c.b16 %v821, %v820
  %v1152 = vpack.c.b16 %v823, %v822
  %v1153 = vpack.c.b16 %v825, %v824
  %v1154 = vpack.c.b16 %v827, %v826
  %v1155 = vpack.c.b16 %v829, %v828
  %v1156 = vpack.c.b16 %v831, %v830
  %v1157 = vpack.c.b16 %v833, %v832
  %v1158 = vpack.c.b16 %v835, %v834
  %v1159 = vpack.c.b16 %v837, %v836
  %v1160 = vpack.c.b16 %v839, %v838
  %v1161 = vpack.c.b16 %v841, %v840
  %v1162 = vpack.c.b16 %v843, %v842
  %v1163 = vpack.c.b16 %v845, %v844
  %v1164 = vpack.c.b16 %v847, %v846
  %v1165 = vpack.c.b16 %v849, %v848
  %v1166 = vpack.c.b16 %v851, %v850
  %v1167 = vpack.c.b16 %v853, %v852
  %v1168 = vpack.c.b16 %v855, %v854
  %v1169 = vpack.c.b16 %v857, %v856
  %v1170 = vpack.c.b16 %v859, %v858
  %v1171 = vpack.c.b16 %v861, %v860
  %v1172 = vpack.c.b16 %v863, %v862
  %v1173 = vpack.c.b16 %v865, %v864
  %v1174 = vpack.c.b16 %v867, %v866
  %v1175 = vpack.c.b16 %v869, %v868
  %v1176 = vpack.c.b16 %v871, %v870
  %v1177 = vpack.c.b16 %v873, %v872
  %v1178 = vpack.c.b16 %v875, %v874
  %v1179 = vpack.c.b16 %v877, %v876
  %v1180 = vpack.c.b16 %v879, %v878
  %v1181 = vpack.c.b16 %v881, %v880
  %v1182 = vpack.c.b16 %v883, %v882
  %v1183 = vpack.c.b16 %v885, %v884
  %v1184 = vpack.c.b16 %v887, %v886
  %v1185 = vpack.c.b16 %v889, %v888
  %v1186 = vpack.c.b16 %v891, %v890
  %v1187 = vpack.c.b16 %v893, %v892
  %v1188 = vpack.c.b16 %v895, %v894
  %v1189 = vpack.c.b16 %v897, %v896
  %v1190 = vpack.c.b16 %v899, %v898
  %v1191 = vpack.c.b16 %v901, %v900
  %v1192 = vpack.c.b16 %v903, %v902
  %v1193 = vpack.c.b16 %v905, %v904
  %v1194 = vpack.c.b16 %v907, %v906
  %v1195 = vpack.c.b16 %v909, %v908
  %v1196 = vpack.c.b16 %v911, %v910
  %v1197 = vpack.c.b16 %v913, %v912
  %v1198 = vpack.c.b16 %v915, %v914
  %v1199 = vpack.c.b16 %v917, %v916
  %v1200 = vpack.c.b16 %v919, %v918
  %v1201 = vpack.c.b16 %v921, %v920
  %v1202 = vpack.c.b16 %v923, %v922
  %v1203 = vpack.c.b16 %v925, %v924
  %v1204 = vpack.c.b16 %v927, %v926
  %v1205 = vpack.c.b16 %v929, %v928
  %v1206 = vpack.c.b16 %v931, %v930
  %v1207 = vpack.c.b16 %v933, %v932
  %v1208 = vpack.c.b16 %v935, %v934
  %v1209 = vpack.c.b16 %v937, %v936
  %v1210 = vpack.c.b16 %v939, %v938
  %v1211 = vpack.c.b16 %v941, %v940
  %v1212 = vpack.c.b16 %v943, %v942
  %v1213 = vpack.c.b16 %v945, %v944
  %v1214 = vpack.c.b16 %v947, %v946
  %v1215 = vpack.c.b16 %v949, %v948
  %v1216 = vpack.c.b16 %v951, %v950
  %v1217 = vpack.c.b16 %v953, %v952
  %v1218 = vpack.c.b16 %v955, %v954
  %v1219 = vpack.c.b16 %v957, %v956
  %v1220 = vpack.c.b16 %v959, %v958
  %v1221 = vpack.c.b16 %v961, %v960
  %v1222 = vpack.c.b16 %v963, %v962
  %v1223 = vpack.c.b16 %v965, %v964
  %v1224 = vpack.c.b16 %v967, %v966
  %v1225 = vpack.c.b16 %v969, %v968
  %v1226 = vpack.c.b16 %v971, %v970
  %v1227 = vpack.c.b16 %v973, %v972
  %v1228 = vpack.c.b16 %v975, %v974
  %v1229 = vpack.c.b16 %v977, %v976
  %v1230 = vpack.c.b16 %v979, %v978
  %v1231 = vpack.c.b16 %v981, %v980
  %v1232 = vpack.c.b16 %v983, %v982
  %v1233 = vpack.c.b16 %v985, %v984
  %v1234 = vpack.c.b16 %v987, %v986
  %v1235 = vpack.c.b16 %v989, %v988
  %v1236 = vpack.c.b16 %v991, %v990
  %v1237 = vpack.c.b16 %v993, %v992
  %v1238 = vpack.c.b16 %v995, %v994
  %v1239 = vpack.c.b16 %v997, %v996
  %v1240 = vpack.c.b16 %v999, %v998
  %v1241 = vpack.c.b16 %v1001, %v1000
  %v1242 = vpack.c.b16 %v1003, %v1002
  %v1243 = vpack.c.b16 %v1005, %v1004
  %v1244 = vpack.c.b16 %v1007, %v1006
  %v1245 = vpack.c.b16 %v1009, %v1008
  %v1246 = vpack.c.b16 %v1011, %v1010
  %v1247 = vpack.c.b16 %v1013, %v1012
  %v1248 = vpack.c.b16 %v1015, %v1014
  %v1249 = vpack.c.b16 %v1017, %v1016
  %v1250 = vpack.c.b16 %v1019, %v1018
  %v1251 = vpack.c.b16 %v1021, %v1020
  %v1252 = vpack.c.b16 %v1023, %v1022
  %v1253 = vpack.c.b16 %v1025, %v1024
  %v1254 = vpack.c.b16 %v1027, %v1026
  %v1255 = vpack.c.b16 %v1029, %v1028
  %v1256 = vpack.c.b16 %v1031, %v1030
  %v1257 = vpack.c.b16 %v1033, %v1032
  %v1258 = vpack.c.b16 %v1035, %v1034
  %v1259 = vpack.c.b16 %v1037, %v1036
  %v1260 = vpack.c.b16 %v1039, %v1038
  %v1261 = vpack.c.b16 %v1041, %v1040
  %v1262 = vpack.c.b16 %v1043, %v1042
  %v1263 = vpack.c.b16 %v1045, %v1044
  %v1264 = vpack.c.b16 %v1047, %v1046
  %v1265 = vpack.c.b16 %v1049, %v1048
  %v1266 = vpack.c.b16 %v1051, %v1050
  %v1267 = vpack.c.b16 %v1053, %v1052
  %v1268 = vpack.c.b16 %v1055, %v1054
  %v1269 = vpack.c.b16 %v1057, %v1056
  %v1270 = vpack.c.b16 %v1059, %v1058
  %v1271 = vpack.c.b16 %v1061, %v1060
  %v1272 = vpack.c.b16 %v1063, %v1062
  %v1273 = vpack.c.b16 %v1065, %v1064
  %v1274 = vpack.c.b16 %v1067, %v1066
  %v1275 = vpack.c.b16 %v1069, %v1068
  %v1276 = vpack.c.b16 %v1071, %v1070
  %v1277 = vpack.c.b16 %v1073, %v1072
  %v1278 = vpack.c.b16 %v1075, %v1074
  %v1279 = vpack.c.b16 %v1077, %v1076
  %v1280 = vpack.c.b16 %v1079, %v1078
  %v1281 = vpack.c.b16 %v1081, %v1080
  %v1282 = vpack.c.b16 %v1083, %v1082
  %v1283 = vpack.c.b16 %v1085, %v1084
  %v1284 = vpack.c.b16 %v1087, %v1086
  %v1285 = vpack.c.b16 %v1089, %v1088
  %v1286 = vpack.c.b16 %v1091, %v1090
  %v1287 = vpack.c.b16 %v1093, %v1092
  %v1288 = vpack.c.b16 %v1095, %v1094
  %v1289 = vpack.c.b16 %v1097, %v1096
  %v1290 = vpack.c.b16 %v1099, %v1098
  %v1291 = vpack.c.b16 %v1101, %v1100
  %v1292 = vpack.c.b16 %v1103, %v1102
  %v1293 = vpack.c.b16 %v1105, %v1104
  %v1294 = vpack.c.b16 %v1107, %v1106
  %v1295 = vpack.c.b16 %v1109, %v1108
  %v1296 = vpack.c.b16 %v1111, %v1110
  %v1297 = vpack.c.b16 %v1113, %v1112
  %v1298 = vpack.c.b16 %v1115, %v1114
  %v1299 = vpack.c.b16 %v1117, %v1116
  %v1300 = vpack.c.b16 %v1119, %v1118
  %v1498 = vunpack.c.l.b16 %v380
  %v1499 = vunpack.c.l.b16 %v381
  %v1500 = vunpack.c.l.b16 %v382
  %v1501 = vunpack.c.l.b16 %v383
  %v1502 = vunpack.c.l.b16 %v384
  %v1503 = vunpack.c.l.b16 %v385
  %v1504 = vunpack.c.l.b16 %v386
  %v1505 = vunpack.c.l.b16 %v387
  %v1506 = vunpack.c.l.b16 %v388
  %v1507 = vunpack.c.l.b16 %v389
  %v1508 = vunpack.c.l.b16 %v390
  %v1509 = vunpack.c.l.b16 %v391
  %v1510 = vunpack.c.l.b16 %v392
  %v1511 = vunpack.c.l.b16 %v393
  %v1512 = vunpack.c.l.b16 %v394
  %v1513 = vunpack.c.l.b16 %v395
  %v1514 = vpack.c.b16 %v1499, %v1498
  %v1515 = vpack.c.b16 %v1501, %v1500
  %v1516 = vpack.c.b16 %v1503, %v1502
  %v1517 = vpack.c.b16 %v1505, %v1504
  %v1518 = vpack.c.b16 %v1507, %v1506
  %v1519 = vpack.c.b16 %v1509, %v1508
  %v1520 = vpack.c.b16 %v1511, %v1510
  %v1521 = vpack.c.b16 %v1513, %v1512
  %1530 = vmatprep.subr.bf16.mxu0 0
  %1531 = vmatpush1.bf16.msra.mxu0 %v1514
  %1532 = vmatprep.subr.bf16.mxu0 0
  %1533 = vmatpush1.bf16.msra.mxu0 %v1515
  %1534 = vmatprep.subr.bf16.mxu0 0
  %1535 = vmatpush1.bf16.msra.mxu0 %v1516
  %1536 = vmatprep.subr.bf16.mxu0 0
  %1537 = vmatpush1.bf16.msra.mxu0 %v1517
  %1538 = vmatprep.subr.bf16.mxu0 0
  %1539 = vmatpush1.bf16.msra.mxu0 %v1518
  %1540 = vmatprep.subr.bf16.mxu0 0
  %1541 = vmatpush1.bf16.msra.mxu0 %v1519
  %1542 = vmatprep.subr.bf16.mxu0 0
  %1543 = vmatpush1.bf16.msra.mxu0 %v1520
  %1544 = vmatprep.subr.bf16.mxu0 0
  %1545 = vmatpush1.bf16.msra.mxu0 %v1521
  %1546 = vmatprep.subr.bf16.mxu0 0
  %1547 = vmatpush1.bf16.msra.mxu0 0
  %1548 = vmatprep.subr.bf16.mxu0 0
  %1549 = vmatpush1.bf16.msra.mxu0 0
  %1550 = vmatprep.subr.bf16.mxu0 0
  %1551 = vmatpush1.bf16.msra.mxu0 0
  %1552 = vmatprep.subr.bf16.mxu0 0
  %1553 = vmatpush1.bf16.msra.mxu0 0
  %1554 = vmatprep.subr.bf16.mxu0 0
  %1555 = vmatpush1.bf16.msra.mxu0 0
  %1556 = vmatprep.subr.bf16.mxu0 0
  %1557 = vmatpush1.bf16.msra.mxu0 0
  %1558 = vmatprep.subr.bf16.mxu0 0
  %1559 = vmatpush1.bf16.msra.mxu0 0
  %1560 = vmatprep.subr.bf16.mxu0 0
  %1561 = vmatpush1.bf16.msra.mxu0 0
  %1562 = vmatprep.mubr.bf16.mxu0 0
  %1563 = vmatmul.mubr.bf16.gmra.mrb[0].mxu0 %v1120
  %v1564 = vpop.f32.mrb[0].mxu0
  %v1565 = vadd.f32 0.0, %v1564
  %v1566 = vpop.f32.mrb[0].mxu0
  %v1567 = vpop.f32.mrb[0].mxu0
  %v1568 = vadd.f32 0.0, %v1567
  %v1569 = vpop.f32.mrb[0].mxu0
  %1570 = vmatprep.mubr.bf16.mxu0 0
  %1571 = vmatmul.mubr.bf16.gmra.mrb[0].mxu0 %v1121
  %v1572 = vpop.f32.mrb[0].mxu0
  %v1573 = vadd.f32 0.0, %v1572
  %v1574 = vpop.f32.mrb[0].mxu0
  %v1575 = vpop.f32.mrb[0].mxu0
  %v1576 = vadd.f32 0.0, %v1575
  %v1577 = vpop.f32.mrb[0].mxu0
  %1578 = vmatprep.mubr.bf16.mxu0 0
  %1579 = vmatmul.mubr.bf16.gmra.mrb[0].mxu0 %v1122
  %v1580 = vpop.f32.mrb[0].mxu0
  %v1581 = vadd.f32 0.0, %v1580
  %v1582 = vpop.f32.mrb[0].mxu0
  %v1583 = vpop.f32.mrb[0].mxu0
  %v1584 = vadd.f32 0.0, %v1583
  %v1585 = vpop.f32.mrb[0].mxu0
  %1586 = vmatprep.mubr.bf16.mxu0 0
  %1587 = vmatmul.mubr.bf16.gmra.mrb[0].mxu0 %v1123
  %v1588 = vpop.f32.mrb[0].mxu0
  %v1589 = vadd.f32 0.0, %v1588
  %v1590 = vpop.f32.mrb[0].mxu0
  %v1591 = vpop.f32.mrb[0].mxu0
  %v1592 = vadd.f32 0.0, %v1591
  %v1593 = vpop.f32.mrb[0].mxu0
  %1594 = vmatprep.mubr.bf16.mxu0 0
  %1595 = vmatmul.mubr.bf16.gmra.mrb[0].mxu0 %v1124
  %v1596 = vpop.f32.mrb[0].mxu0
  %v1597 = vadd.f32 0.0, %v1596
  %v1598 = vpop.f32.mrb[0].mxu0
  %v1599 = vpop.f32.mrb[0].mxu0
  %v1600 = vadd.f32 0.0, %v1599
  %v1601 = vpop.f32.mrb[0].mxu0
  %1602 = vmatprep.mubr.bf16.mxu0 0
  %1603 = vmatmul.mubr.bf16.gmra.mrb[0].mxu0 %v1125
  %v1604 = vpop.f32.mrb[0].mxu0
  %v1605 = vadd.f32 0.0, %v1604
  %v1606 = vpop.f32.mrb[0].mxu0
  %v1607 = vpop.f32.mrb[0].mxu0
  %v1608 = vadd.f32 0.0, %v1607
  %v1609 = vpop.f32.mrb[0].mxu0
  %1610 = vmatprep.mubr.bf16.mxu0 0
  %1611 = vmatmul.mubr.bf16.gmra.mrb[0].mxu0 %v1126
  %v1612 = vpop.f32.mrb[0].mxu0
  %v1613 = vadd.f32 0.0, %v1612
  %v1614 = vpop.f32.mrb[0].mxu0
  %v1615 = vpop.f32.mrb[0].mxu0
  %v1616 = vadd.f32 0.0, %v1615
  %v1617 = vpop.f32.mrb[0].mxu0
  %1618 = vmatprep.mubr.bf16.mxu0 0
  %1619 = vmatmul.mubr.bf16.gmra.mrb[0].mxu0 %v1127
  %v1620 = vpop.f32.mrb[0].mxu0
  %v1621 = vadd.f32 0.0, %v1620
  %v1622 = vpop.f32.mrb[0].mxu0
  %v1623 = vpop.f32.mrb[0].mxu0
  %v1624 = vadd.f32 0.0, %v1623
  %v1625 = vpop.f32.mrb[0].mxu0
  %1626 = vmatprep.mubr.bf16.mxu0 0
  %1627 = vmatmul.mubr.bf16.gmra.mrb[0].mxu0 %v1128
  %v1628 = vpop.f32.mrb[0].mxu0
  %v1629 = vadd.f32 0.0, %v1628
  %v1630 = vpop.f32.mrb[0].mxu0
  %v1631 = vpop.f32.mrb[0].mxu0
  %v1632 = vadd.f32 0.0, %v1631
  %v1633 = vpop.f32.mrb[0].mxu0
  %1634 = vmatprep.mubr.bf16.mxu0 0
  %1635 = vmatmul.mubr.bf16.gmra.mrb[0].mxu0 %v1129
  %v1636 = vpop.f32.mrb[0].mxu0
  %v1637 = vadd.f32 0.0, %v1636
  %v1638 = vpop.f32.mrb[0].mxu0
  %v1639 = vpop.f32.mrb[0].mxu0
  %v1640 = vadd.f32 0.0, %v1639
  %v1641 = vpop.f32.mrb[0].mxu0
  %1642 = vmatprep.mubr.bf16.mxu0 0
  %1643 = vmatmul.mubr.bf16.gmra.mrb[0].mxu0 %v1130
  %v1644 = vpop.f32.mrb[0].mxu0
  %v1645 = vadd.f32 0.0, %v1644
  %v1646 = vpop.f32.mrb[0].mxu0
  %v1647 = vpop.f32.mrb[0].mxu0
  %v1648 = vadd.f32 0.0, %v1647
  %v1649 = vpop.f32.mrb[0].mxu0
  %1650 = vmatprep.mubr.bf16.mxu0 0
  %1651 = vmatmul.mubr.bf16.gmra.mrb[0].mxu0 %v1131
  %v1652 = vpop.f32.mrb[0].mxu0
  %v1653 = vadd.f32 0.0, %v1652
  %v1654 = vpop.f32.mrb[0].mxu0
  %v1655 = vpop.f32.mrb[0].mxu0
  %v1656 = vadd.f32 0.0, %v1655
  %v1657 = vpop.f32.mrb[0].mxu0
  %1658 = vmatprep.mubr.bf16.mxu0 0
  %1659 = vmatmul.mubr.bf16.gmra.mrb[0].mxu0 %v1132
  %v1660 = vpop.f32.mrb[0].mxu0
  %v1661 = vadd.f32 0.0, %v1660
  %v1662 = vpop.f32.mrb[0].mxu0
  %v1663 = vpop.f32.mrb[0].mxu0
  %v1664 = vadd.f32 0.0, %v1663
  %v1665 = vpop.f32.mrb[0].mxu0
  %1666 = vmatprep.mubr.bf16.mxu0 0
  %1667 = vmatmul.mubr.bf16.gmra.mrb[0].mxu0 %v1133
  %v1668 = vpop.f32.mrb[0].mxu0
  %v1669 = vadd.f32 0.0, %v1668
  %v1670 = vpop.f32.mrb[0].mxu0
  %v1671 = vpop.f32.mrb[0].mxu0
  %v1672 = vadd.f32 0.0, %v1671
  %v1673 = vpop.f32.mrb[0].mxu0
  %1674 = vmatprep.mubr.bf16.mxu0 0
  %1675 = vmatmul.mubr.bf16.gmra.mrb[0].mxu0 %v1134
  %v1676 = vpop.f32.mrb[0].mxu0
  %v1677 = vadd.f32 0.0, %v1676
  %v1678 = vpop.f32.mrb[0].mxu0
  %v1679 = vpop.f32.mrb[0].mxu0
  %v1680 = vadd.f32 0.0, %v1679
  %v1681 = vpop.f32.mrb[0].mxu0
  %1682 = vmatprep.mubr.bf16.mxu0 0
  %1683 = vmatmul.mubr.bf16.gmra.mrb[0].mxu0 %v1135
  %v1684 = vpop.f32.mrb[0].mxu0
  %v1685 = vadd.f32 0.0, %v1684
  %v1686 = vpop.f32.mrb[0].mxu0
  %v1687 = vpop.f32.mrb[0].mxu0
  %v1688 = vadd.f32 0.0, %v1687
  %v1689 = vpop.f32.mrb[0].mxu0
  %1690 = vmatprep.mubr.bf16.mxu0 0
  %1691 = vmatmul.mubr.bf16.gmra.mrb[0].mxu0 %v1136
  %v1692 = vpop.f32.mrb[0].mxu0
  %v1693 = vadd.f32 0.0, %v1692
  %v1694 = vpop.f32.mrb[0].mxu0
  %v1695 = vpop.f32.mrb[0].mxu0
  %v1696 = vadd.f32 0.0, %v1695
  %v1697 = vpop.f32.mrb[0].mxu0
  %1698 = vmatprep.mubr.bf16.mxu0 0
  %1699 = vmatmul.mubr.bf16.gmra.mrb[0].mxu0 %v1137
  %v1700 = vpop.f32.mrb[0].mxu0
  %v1701 = vadd.f32 0.0, %v1700
  %v1702 = vpop.f32.mrb[0].mxu0
  %v1703 = vpop.f32.mrb[0].mxu0
  %v1704 = vadd.f32 0.0, %v1703
  %v1705 = vpop.f32.mrb[0].mxu0
  %1706 = vmatprep.mubr.bf16.mxu0 0
  %1707 = vmatmul.mubr.bf16.gmra.mrb[0].mxu0 %v1138
  %v1708 = vpop.f32.mrb[0].mxu0
  %v1709 = vadd.f32 0.0, %v1708
  %v1710 = vpop.f32.mrb[0].mxu0
  %v1711 = vpop.f32.mrb[0].mxu0
  %v1712 = vadd.f32 0.0, %v1711
  %v1713 = vpop.f32.mrb[0].mxu0
  %1714 = vmatprep.mubr.bf16.mxu0 0
  %1715 = vmatmul.mubr.bf16.gmra.mrb[0].mxu0 %v1139
  %v1716 = vpop.f32.mrb[0].mxu0
  %v1717 = vadd.f32 0.0, %v1716
  %v1718 = vpop.f32.mrb[0].mxu0
  %v1719 = vpop.f32.mrb[0].mxu0
  %v1720 = vadd.f32 0.0, %v1719
  %v1721 = vpop.f32.mrb[0].mxu0
  %1722 = vmatprep.mubr.bf16.mxu0 0
  %1723 = vmatmul.mubr.bf16.gmra.mrb[0].mxu0 %v1140
  %v1724 = vpop.f32.mrb[0].mxu0
  %v1725 = vadd.f32 0.0, %v1724
  %v1726 = vpop.f32.mrb[0].mxu0
  %v1727 = vpop.f32.mrb[0].mxu0
  %v1728 = vadd.f32 0.0, %v1727
  %v1729 = vpop.f32.mrb[0].mxu0
  %1730 = vmatprep.mubr.bf16.mxu0 0
  %1731 = vmatmul.mubr.bf16.gmra.mrb[0].mxu0 %v1141
  %v1732 = vpop.f32.mrb[0].mxu0
  %v1733 = vadd.f32 0.0, %v1732
  %v1734 = vpop.f32.mrb[0].mxu0
  %v1735 = vpop.f32.mrb[0].mxu0
  %v1736 = vadd.f32 0.0, %v1735
  %v1737 = vpop.f32.mrb[0].mxu0
  %1738 = vmatprep.mubr.bf16.mxu0 0
  %1739 = vmatmul.mubr.bf16.gmra.mrb[0].mxu0 %v1142
  %v1740 = vpop.f32.mrb[0].mxu0
  %v1741 = vadd.f32 0.0, %v1740
  %v1742 = vpop.f32.mrb[0].mxu0
  %v1743 = vpop.f32.mrb[0].mxu0
  %v1744 = vadd.f32 0.0, %v1743
  %v1745 = vpop.f32.mrb[0].mxu0
  %1746 = vmatprep.mubr.bf16.mxu0 0
  %1747 = vmatmul.mubr.bf16.gmra.mrb[0].mxu0 %v1143
  %v1748 = vpop.f32.mrb[0].mxu0
  %v1749 = vadd.f32 0.0, %v1748
  %v1750 = vpop.f32.mrb[0].mxu0
  %v1751 = vpop.f32.mrb[0].mxu0
  %v1752 = vadd.f32 0.0, %v1751
  %v1753 = vpop.f32.mrb[0].mxu0
  %1754 = vmatprep.mubr.bf16.mxu0 0
  %1755 = vmatmul.mubr.bf16.gmra.mrb[0].mxu0 %v1144
  %v1756 = vpop.f32.mrb[0].mxu0
  %v1757 = vadd.f32 0.0, %v1756
  %v1758 = vpop.f32.mrb[0].mxu0
  %v1759 = vpop.f32.mrb[0].mxu0
  %v1760 = vadd.f32 0.0, %v1759
  %v1761 = vpop.f32.mrb[0].mxu0
  %1762 = vmatprep.mubr.bf16.mxu0 0
  %1763 = vmatmul.mubr.bf16.gmra.mrb[0].mxu0 %v1145
  %v1764 = vpop.f32.mrb[0].mxu0
  %v1765 = vadd.f32 0.0, %v1764
  %v1766 = vpop.f32.mrb[0].mxu0
  %v1767 = vpop.f32.mrb[0].mxu0
  %v1768 = vadd.f32 0.0, %v1767
  %v1769 = vpop.f32.mrb[0].mxu0
  %1770 = vmatprep.mubr.bf16.mxu0 0
  %1771 = vmatmul.mubr.bf16.gmra.mrb[0].mxu0 %v1146
  %v1772 = vpop.f32.mrb[0].mxu0
  %v1773 = vadd.f32 0.0, %v1772
  %v1774 = vpop.f32.mrb[0].mxu0
  %v1775 = vpop.f32.mrb[0].mxu0
  %v1776 = vadd.f32 0.0, %v1775
  %v1777 = vpop.f32.mrb[0].mxu0
  %1778 = vmatprep.mubr.bf16.mxu0 0
  %1779 = vmatmul.mubr.bf16.gmra.mrb[0].mxu0 %v1147
  %v1780 = vpop.f32.mrb[0].mxu0
  %v1781 = vadd.f32 0.0, %v1780
  %v1782 = vpop.f32.mrb[0].mxu0
  %v1783 = vpop.f32.mrb[0].mxu0
  %v1784 = vadd.f32 0.0, %v1783
  %v1785 = vpop.f32.mrb[0].mxu0
  %1786 = vmatprep.mubr.bf16.mxu0 0
  %1787 = vmatmul.mubr.bf16.gmra.mrb[0].mxu0 %v1148
  %v1788 = vpop.f32.mrb[0].mxu0
  %v1789 = vadd.f32 0.0, %v1788
  %v1790 = vpop.f32.mrb[0].mxu0
  %v1791 = vpop.f32.mrb[0].mxu0
  %v1792 = vadd.f32 0.0, %v1791
  %v1793 = vpop.f32.mrb[0].mxu0
  %1794 = vmatprep.mubr.bf16.mxu0 0
  %1795 = vmatmul.mubr.bf16.gmra.mrb[0].mxu0 %v1149
  %v1796 = vpop.f32.mrb[0].mxu0
  %v1797 = vadd.f32 0.0, %v1796
  %v1798 = vpop.f32.mrb[0].mxu0
  %v1799 = vpop.f32.mrb[0].mxu0
  %v1800 = vadd.f32 0.0, %v1799
  %v1801 = vpop.f32.mrb[0].mxu0
  %1802 = vmatprep.mubr.bf16.mxu0 0
  %1803 = vmatmul.mubr.bf16.gmra.mrb[0].mxu0 %v1150
  %v1804 = vpop.f32.mrb[0].mxu0
  %v1805 = vadd.f32 0.0, %v1804
  %v1806 = vpop.f32.mrb[0].mxu0
  %v1807 = vpop.f32.mrb[0].mxu0
  %v1808 = vadd.f32 0.0, %v1807
  %v1809 = vpop.f32.mrb[0].mxu0
  %1810 = vmatprep.mubr.bf16.mxu0 0
  %1811 = vmatmul.mubr.bf16.gmra.mrb[0].mxu0 %v1151
  %v1812 = vpop.f32.mrb[0].mxu0
  %v1813 = vadd.f32 0.0, %v1812
  %v1814 = vpop.f32.mrb[0].mxu0
  %v1815 = vpop.f32.mrb[0].mxu0
  %v1816 = vadd.f32 0.0, %v1815
  %v1817 = vpop.f32.mrb[0].mxu0
  %1818 = vmatprep.mubr.bf16.mxu0 0
  %1819 = vmatmul.mubr.bf16.gmra.mrb[0].mxu0 %v1152
  %v1820 = vpop.f32.mrb[0].mxu0
  %v1821 = vadd.f32 0.0, %v1820
  %v1822 = vpop.f32.mrb[0].mxu0
  %v1823 = vpop.f32.mrb[0].mxu0
  %v1824 = vadd.f32 0.0, %v1823
  %v1825 = vpop.f32.mrb[0].mxu0
  %1826 = vmatprep.mubr.bf16.mxu0 0
  %1827 = vmatmul.mubr.bf16.gmra.mrb[0].mxu0 %v1153
  %v1828 = vpop.f32.mrb[0].mxu0
  %v1829 = vadd.f32 0.0, %v1828
  %v1830 = vpop.f32.mrb[0].mxu0
  %v1831 = vpop.f32.mrb[0].mxu0
  %v1832 = vadd.f32 0.0, %v1831
  %v1833 = vpop.f32.mrb[0].mxu0
  %1834 = vmatprep.mubr.bf16.mxu0 0
  %1835 = vmatmul.mubr.bf16.gmra.mrb[0].mxu0 %v1154
  %v1836 = vpop.f32.mrb[0].mxu0
  %v1837 = vadd.f32 0.0, %v1836
  %v1838 = vpop.f32.mrb[0].mxu0
  %v1839 = vpop.f32.mrb[0].mxu0
  %v1840 = vadd.f32 0.0, %v1839
  %v1841 = vpop.f32.mrb[0].mxu0
  %1842 = vmatprep.mubr.bf16.mxu0 0
  %1843 = vmatmul.mubr.bf16.gmra.mrb[0].mxu0 %v1155
  %v1844 = vpop.f32.mrb[0].mxu0
  %v1845 = vadd.f32 0.0, %v1844
  %v1846 = vpop.f32.mrb[0].mxu0
  %v1847 = vpop.f32.mrb[0].mxu0
  %v1848 = vadd.f32 0.0, %v1847
  %v1849 = vpop.f32.mrb[0].mxu0
  %1850 = vmatprep.mubr.bf16.mxu0 0
  %1851 = vmatmul.mubr.bf16.gmra.mrb[0].mxu0 %v1156
  %v1852 = vpop.f32.mrb[0].mxu0
  %v1853 = vadd.f32 0.0, %v1852
  %v1854 = vpop.f32.mrb[0].mxu0
  %v1855 = vpop.f32.mrb[0].mxu0
  %v1856 = vadd.f32 0.0, %v1855
  %v1857 = vpop.f32.mrb[0].mxu0
  %1858 = vmatprep.mubr.bf16.mxu0 0
  %1859 = vmatmul.mubr.bf16.gmra.mrb[0].mxu0 %v1157
  %v1860 = vpop.f32.mrb[0].mxu0
  %v1861 = vadd.f32 0.0, %v1860
  %v1862 = vpop.f32.mrb[0].mxu0
  %v1863 = vpop.f32.mrb[0].mxu0
  %v1864 = vadd.f32 0.0, %v1863
  %v1865 = vpop.f32.mrb[0].mxu0
  %1866 = vmatprep.mubr.bf16.mxu0 0
  %1867 = vmatmul.mubr.bf16.gmra.mrb[0].mxu0 %v1158
  %v1868 = vpop.f32.mrb[0].mxu0
  %v1869 = vadd.f32 0.0, %v1868
  %v1870 = vpop.f32.mrb[0].mxu0
  %v1871 = vpop.f32.mrb[0].mxu0
  %v1872 = vadd.f32 0.0, %v1871
  %v1873 = vpop.f32.mrb[0].mxu0
  %1874 = vmatprep.mubr.bf16.mxu0 0
  %1875 = vmatmul.mubr.bf16.gmra.mrb[0].mxu0 %v1159
  %v1876 = vpop.f32.mrb[0].mxu0
  %v1877 = vadd.f32 0.0, %v1876
  %v1878 = vpop.f32.mrb[0].mxu0
  %v1879 = vpop.f32.mrb[0].mxu0
  %v1880 = vadd.f32 0.0, %v1879
  %v1881 = vpop.f32.mrb[0].mxu0
  %1882 = vmatprep.mubr.bf16.mxu0 0
  %1883 = vmatmul.mubr.bf16.gmra.mrb[0].mxu0 %v1160
  %v1884 = vpop.f32.mrb[0].mxu0
  %v1885 = vadd.f32 0.0, %v1884
  %v1886 = vpop.f32.mrb[0].mxu0
  %v1887 = vpop.f32.mrb[0].mxu0
  %v1888 = vadd.f32 0.0, %v1887
  %v1889 = vpop.f32.mrb[0].mxu0
  %1890 = vmatprep.mubr.bf16.mxu0 0
  %1891 = vmatmul.mubr.bf16.gmra.mrb[0].mxu0 %v1161
  %v1892 = vpop.f32.mrb[0].mxu0
  %v1893 = vadd.f32 0.0, %v1892
  %v1894 = vpop.f32.mrb[0].mxu0
  %v1895 = vpop.f32.mrb[0].mxu0
  %v1896 = vadd.f32 0.0, %v1895
  %v1897 = vpop.f32.mrb[0].mxu0
  %1898 = vmatprep.mubr.bf16.mxu0 0
  %1899 = vmatmul.mubr.bf16.gmra.mrb[0].mxu0 %v1162
  %v1900 = vpop.f32.mrb[0].mxu0
  %v1901 = vadd.f32 0.0, %v1900
  %v1902 = vpop.f32.mrb[0].mxu0
  %v1903 = vpop.f32.mrb[0].mxu0
  %v1904 = vadd.f32 0.0, %v1903
  %v1905 = vpop.f32.mrb[0].mxu0
  %1906 = vmatprep.mubr.bf16.mxu0 0
  %1907 = vmatmul.mubr.bf16.gmra.mrb[0].mxu0 %v1163
  %v1908 = vpop.f32.mrb[0].mxu0
  %v1909 = vadd.f32 0.0, %v1908
  %v1910 = vpop.f32.mrb[0].mxu0
  %v1911 = vpop.f32.mrb[0].mxu0
  %v1912 = vadd.f32 0.0, %v1911
  %v1913 = vpop.f32.mrb[0].mxu0
  %1914 = vmatprep.mubr.bf16.mxu0 0
  %1915 = vmatmul.mubr.bf16.gmra.mrb[0].mxu0 %v1164
  %v1916 = vpop.f32.mrb[0].mxu0
  %v1917 = vadd.f32 0.0, %v1916
  %v1918 = vpop.f32.mrb[0].mxu0
  %v1919 = vpop.f32.mrb[0].mxu0
  %v1920 = vadd.f32 0.0, %v1919
  %v1921 = vpop.f32.mrb[0].mxu0
  %1922 = vmatprep.mubr.bf16.mxu0 0
  %1923 = vmatmul.mubr.bf16.gmra.mrb[0].mxu0 %v1165
  %v1924 = vpop.f32.mrb[0].mxu0
  %v1925 = vadd.f32 0.0, %v1924
  %v1926 = vpop.f32.mrb[0].mxu0
  %v1927 = vpop.f32.mrb[0].mxu0
  %v1928 = vadd.f32 0.0, %v1927
  %v1929 = vpop.f32.mrb[0].mxu0
  %1930 = vmatprep.mubr.bf16.mxu0 0
  %1931 = vmatmul.mubr.bf16.gmra.mrb[0].mxu0 %v1166
  %v1932 = vpop.f32.mrb[0].mxu0
  %v1933 = vadd.f32 0.0, %v1932
  %v1934 = vpop.f32.mrb[0].mxu0
  %v1935 = vpop.f32.mrb[0].mxu0
  %v1936 = vadd.f32 0.0, %v1935
  %v1937 = vpop.f32.mrb[0].mxu0
  %1938 = vmatprep.mubr.bf16.mxu0 0
  %1939 = vmatmul.mubr.bf16.gmra.mrb[0].mxu0 %v1167
  %v1940 = vpop.f32.mrb[0].mxu0
  %v1941 = vadd.f32 0.0, %v1940
  %v1942 = vpop.f32.mrb[0].mxu0
  %v1943 = vpop.f32.mrb[0].mxu0
  %v1944 = vadd.f32 0.0, %v1943
  %v1945 = vpop.f32.mrb[0].mxu0
  %1946 = vmatprep.mubr.bf16.mxu0 0
  %1947 = vmatmul.mubr.bf16.gmra.mrb[0].mxu0 %v1168
  %v1948 = vpop.f32.mrb[0].mxu0
  %v1949 = vadd.f32 0.0, %v1948
  %v1950 = vpop.f32.mrb[0].mxu0
  %v1951 = vpop.f32.mrb[0].mxu0
  %v1952 = vadd.f32 0.0, %v1951
  %v1953 = vpop.f32.mrb[0].mxu0
  %1954 = vmatprep.mubr.bf16.mxu0 0
  %1955 = vmatmul.mubr.bf16.gmra.mrb[0].mxu0 %v1169
  %v1956 = vpop.f32.mrb[0].mxu0
  %v1957 = vadd.f32 0.0, %v1956
  %v1958 = vpop.f32.mrb[0].mxu0
  %v1959 = vpop.f32.mrb[0].mxu0
  %v1960 = vadd.f32 0.0, %v1959
  %v1961 = vpop.f32.mrb[0].mxu0
  %1962 = vmatprep.mubr.bf16.mxu0 0
  %1963 = vmatmul.mubr.bf16.gmra.mrb[0].mxu0 %v1170
  %v1964 = vpop.f32.mrb[0].mxu0
  %v1965 = vadd.f32 0.0, %v1964
  %v1966 = vpop.f32.mrb[0].mxu0
  %v1967 = vpop.f32.mrb[0].mxu0
  %v1968 = vadd.f32 0.0, %v1967
  %v1969 = vpop.f32.mrb[0].mxu0
  %1970 = vmatprep.mubr.bf16.mxu0 0
  %1971 = vmatmul.mubr.bf16.gmra.mrb[0].mxu0 %v1171
  %v1972 = vpop.f32.mrb[0].mxu0
  %v1973 = vadd.f32 0.0, %v1972
  %v1974 = vpop.f32.mrb[0].mxu0
  %v1975 = vpop.f32.mrb[0].mxu0
  %v1976 = vadd.f32 0.0, %v1975
  %v1977 = vpop.f32.mrb[0].mxu0
  %1978 = vmatprep.mubr.bf16.mxu0 0
  %1979 = vmatmul.mubr.bf16.gmra.mrb[0].mxu0 %v1172
  %v1980 = vpop.f32.mrb[0].mxu0
  %v1981 = vadd.f32 0.0, %v1980
  %v1982 = vpop.f32.mrb[0].mxu0
  %v1983 = vpop.f32.mrb[0].mxu0
  %v1984 = vadd.f32 0.0, %v1983
  %v1985 = vpop.f32.mrb[0].mxu0
  %1986 = vmatprep.mubr.bf16.mxu0 0
  %1987 = vmatmul.mubr.bf16.gmra.mrb[0].mxu0 %v1173
  %v1988 = vpop.f32.mrb[0].mxu0
  %v1989 = vadd.f32 0.0, %v1988
  %v1990 = vpop.f32.mrb[0].mxu0
  %v1991 = vpop.f32.mrb[0].mxu0
  %v1992 = vadd.f32 0.0, %v1991
  %v1993 = vpop.f32.mrb[0].mxu0
  %1994 = vmatprep.mubr.bf16.mxu0 0
  %1995 = vmatmul.mubr.bf16.gmra.mrb[0].mxu0 %v1174
  %v1996 = vpop.f32.mrb[0].mxu0
  %v1997 = vadd.f32 0.0, %v1996
  %v1998 = vpop.f32.mrb[0].mxu0
  %v1999 = vpop.f32.mrb[0].mxu0
  %v2000 = vadd.f32 0.0, %v1999
  %v2001 = vpop.f32.mrb[0].mxu0
  %2002 = vmatprep.mubr.bf16.mxu0 0
  %2003 = vmatmul.mubr.bf16.gmra.mrb[0].mxu0 %v1175
  %v2004 = vpop.f32.mrb[0].mxu0
  %v2005 = vadd.f32 0.0, %v2004
  %v2006 = vpop.f32.mrb[0].mxu0
  %v2007 = vpop.f32.mrb[0].mxu0
  %v2008 = vadd.f32 0.0, %v2007
  %v2009 = vpop.f32.mrb[0].mxu0
  %2010 = vmatprep.mubr.bf16.mxu0 0
  %2011 = vmatmul.mubr.bf16.gmra.mrb[0].mxu0 %v1176
  %v2012 = vpop.f32.mrb[0].mxu0
  %v2013 = vadd.f32 0.0, %v2012
  %v2014 = vpop.f32.mrb[0].mxu0
  %v2015 = vpop.f32.mrb[0].mxu0
  %v2016 = vadd.f32 0.0, %v2015
  %v2017 = vpop.f32.mrb[0].mxu0
  %2018 = vmatprep.mubr.bf16.mxu0 0
  %2019 = vmatmul.mubr.bf16.gmra.mrb[0].mxu0 %v1177
  %v2020 = vpop.f32.mrb[0].mxu0
  %v2021 = vadd.f32 0.0, %v2020
  %v2022 = vpop.f32.mrb[0].mxu0
  %v2023 = vpop.f32.mrb[0].mxu0
  %v2024 = vadd.f32 0.0, %v2023
  %v2025 = vpop.f32.mrb[0].mxu0
  %2026 = vmatprep.mubr.bf16.mxu0 0
  %2027 = vmatmul.mubr.bf16.gmra.mrb[0].mxu0 %v1178
  %v2028 = vpop.f32.mrb[0].mxu0
  %v2029 = vadd.f32 0.0, %v2028
  %v2030 = vpop.f32.mrb[0].mxu0
  %v2031 = vpop.f32.mrb[0].mxu0
  %v2032 = vadd.f32 0.0, %v2031
  %v2033 = vpop.f32.mrb[0].mxu0
  %2034 = vmatprep.mubr.bf16.mxu0 0
  %2035 = vmatmul.mubr.bf16.gmra.mrb[0].mxu0 %v1179
  %v2036 = vpop.f32.mrb[0].mxu0
  %v2037 = vadd.f32 0.0, %v2036
  %v2038 = vpop.f32.mrb[0].mxu0
  %v2039 = vpop.f32.mrb[0].mxu0
  %v2040 = vadd.f32 0.0, %v2039
  %v2041 = vpop.f32.mrb[0].mxu0
  %2042 = vmatprep.mubr.bf16.mxu0 0
  %2043 = vmatmul.mubr.bf16.gmra.mrb[0].mxu0 %v1180
  %v2044 = vpop.f32.mrb[0].mxu0
  %v2045 = vadd.f32 0.0, %v2044
  %v2046 = vpop.f32.mrb[0].mxu0
  %v2047 = vpop.f32.mrb[0].mxu0
  %v2048 = vadd.f32 0.0, %v2047
  %v2049 = vpop.f32.mrb[0].mxu0
  %2050 = vmatprep.mubr.bf16.mxu0 0
  %2051 = vmatmul.mubr.bf16.gmra.mrb[0].mxu0 %v1181
  %v2052 = vpop.f32.mrb[0].mxu0
  %v2053 = vadd.f32 0.0, %v2052
  %v2054 = vpop.f32.mrb[0].mxu0
  %v2055 = vpop.f32.mrb[0].mxu0
  %v2056 = vadd.f32 0.0, %v2055
  %v2057 = vpop.f32.mrb[0].mxu0
  %2058 = vmatprep.mubr.bf16.mxu0 0
  %2059 = vmatmul.mubr.bf16.gmra.mrb[0].mxu0 %v1182
  %v2060 = vpop.f32.mrb[0].mxu0
  %v2061 = vadd.f32 0.0, %v2060
  %v2062 = vpop.f32.mrb[0].mxu0
  %v2063 = vpop.f32.mrb[0].mxu0
  %v2064 = vadd.f32 0.0, %v2063
  %v2065 = vpop.f32.mrb[0].mxu0
  %2066 = vmatprep.mubr.bf16.mxu0 0
  %2067 = vmatmul.mubr.bf16.gmra.mrb[0].mxu0 %v1183
  %v2068 = vpop.f32.mrb[0].mxu0
  %v2069 = vadd.f32 0.0, %v2068
  %v2070 = vpop.f32.mrb[0].mxu0
  %v2071 = vpop.f32.mrb[0].mxu0
  %v2072 = vadd.f32 0.0, %v2071
  %v2073 = vpop.f32.mrb[0].mxu0
  %2074 = vmatprep.mubr.bf16.mxu0 0
  %2075 = vmatmul.mubr.bf16.gmra.mrb[0].mxu0 %v1184
  %v2076 = vpop.f32.mrb[0].mxu0
  %v2077 = vadd.f32 0.0, %v2076
  %v2078 = vpop.f32.mrb[0].mxu0
  %v2079 = vpop.f32.mrb[0].mxu0
  %v2080 = vadd.f32 0.0, %v2079
  %v2081 = vpop.f32.mrb[0].mxu0
  %2082 = vmatprep.mubr.bf16.mxu0 0
  %2083 = vmatmul.mubr.bf16.gmra.mrb[0].mxu0 %v1185
  %v2084 = vpop.f32.mrb[0].mxu0
  %v2085 = vadd.f32 0.0, %v2084
  %v2086 = vpop.f32.mrb[0].mxu0
  %v2087 = vpop.f32.mrb[0].mxu0
  %v2088 = vadd.f32 0.0, %v2087
  %v2089 = vpop.f32.mrb[0].mxu0
  %2090 = vmatprep.mubr.bf16.mxu0 0
  %2091 = vmatmul.mubr.bf16.gmra.mrb[0].mxu0 %v1186
  %v2092 = vpop.f32.mrb[0].mxu0
  %v2093 = vadd.f32 0.0, %v2092
  %v2094 = vpop.f32.mrb[0].mxu0
  %v2095 = vpop.f32.mrb[0].mxu0
  %v2096 = vadd.f32 0.0, %v2095
  %v2097 = vpop.f32.mrb[0].mxu0
  %2098 = vmatprep.mubr.bf16.mxu0 0
  %2099 = vmatmul.mubr.bf16.gmra.mrb[0].mxu0 %v1187
  %v2100 = vpop.f32.mrb[0].mxu0
  %v2101 = vadd.f32 0.0, %v2100
  %v2102 = vpop.f32.mrb[0].mxu0
  %v2103 = vpop.f32.mrb[0].mxu0
  %v2104 = vadd.f32 0.0, %v2103
  %v2105 = vpop.f32.mrb[0].mxu0
  %2106 = vmatprep.mubr.bf16.mxu0 0
  %2107 = vmatmul.mubr.bf16.gmra.mrb[0].mxu0 %v1188
  %v2108 = vpop.f32.mrb[0].mxu0
  %v2109 = vadd.f32 0.0, %v2108
  %v2110 = vpop.f32.mrb[0].mxu0
  %v2111 = vpop.f32.mrb[0].mxu0
  %v2112 = vadd.f32 0.0, %v2111
  %v2113 = vpop.f32.mrb[0].mxu0
  %2114 = vmatprep.mubr.bf16.mxu0 0
  %2115 = vmatmul.mubr.bf16.gmra.mrb[0].mxu0 %v1189
  %v2116 = vpop.f32.mrb[0].mxu0
  %v2117 = vadd.f32 0.0, %v2116
  %v2118 = vpop.f32.mrb[0].mxu0
  %v2119 = vpop.f32.mrb[0].mxu0
  %v2120 = vadd.f32 0.0, %v2119
  %v2121 = vpop.f32.mrb[0].mxu0
  %2122 = vmatprep.mubr.bf16.mxu0 0
  %2123 = vmatmul.mubr.bf16.gmra.mrb[0].mxu0 %v1190
  %v2124 = vpop.f32.mrb[0].mxu0
  %v2125 = vadd.f32 0.0, %v2124
  %v2126 = vpop.f32.mrb[0].mxu0
  %v2127 = vpop.f32.mrb[0].mxu0
  %v2128 = vadd.f32 0.0, %v2127
  %v2129 = vpop.f32.mrb[0].mxu0
  %2130 = vmatprep.mubr.bf16.mxu0 0
  %2131 = vmatmul.mubr.bf16.gmra.mrb[0].mxu0 %v1191
  %v2132 = vpop.f32.mrb[0].mxu0
  %v2133 = vadd.f32 0.0, %v2132
  %v2134 = vpop.f32.mrb[0].mxu0
  %v2135 = vpop.f32.mrb[0].mxu0
  %v2136 = vadd.f32 0.0, %v2135
  %v2137 = vpop.f32.mrb[0].mxu0
  %2138 = vmatprep.mubr.bf16.mxu0 0
  %2139 = vmatmul.mubr.bf16.gmra.mrb[0].mxu0 %v1192
  %v2140 = vpop.f32.mrb[0].mxu0
  %v2141 = vadd.f32 0.0, %v2140
  %v2142 = vpop.f32.mrb[0].mxu0
  %v2143 = vpop.f32.mrb[0].mxu0
  %v2144 = vadd.f32 0.0, %v2143
  %v2145 = vpop.f32.mrb[0].mxu0
  %2146 = vmatprep.mubr.bf16.mxu0 0
  %2147 = vmatmul.mubr.bf16.gmra.mrb[0].mxu0 %v1193
  %v2148 = vpop.f32.mrb[0].mxu0
  %v2149 = vadd.f32 0.0, %v2148
  %v2150 = vpop.f32.mrb[0].mxu0
  %v2151 = vpop.f32.mrb[0].mxu0
  %v2152 = vadd.f32 0.0, %v2151
  %v2153 = vpop.f32.mrb[0].mxu0
  %2154 = vmatprep.mubr.bf16.mxu0 0
  %2155 = vmatmul.mubr.bf16.gmra.mrb[0].mxu0 %v1194
  %v2156 = vpop.f32.mrb[0].mxu0
  %v2157 = vadd.f32 0.0, %v2156
  %v2158 = vpop.f32.mrb[0].mxu0
  %v2159 = vpop.f32.mrb[0].mxu0
  %v2160 = vadd.f32 0.0, %v2159
  %v2161 = vpop.f32.mrb[0].mxu0
  %2162 = vmatprep.mubr.bf16.mxu0 0
  %2163 = vmatmul.mubr.bf16.gmra.mrb[0].mxu0 %v1195
  %v2164 = vpop.f32.mrb[0].mxu0
  %v2165 = vadd.f32 0.0, %v2164
  %v2166 = vpop.f32.mrb[0].mxu0
  %v2167 = vpop.f32.mrb[0].mxu0
  %v2168 = vadd.f32 0.0, %v2167
  %v2169 = vpop.f32.mrb[0].mxu0
  %2170 = vmatprep.mubr.bf16.mxu0 0
  %2171 = vmatmul.mubr.bf16.gmra.mrb[0].mxu0 %v1196
  %v2172 = vpop.f32.mrb[0].mxu0
  %v2173 = vadd.f32 0.0, %v2172
  %v2174 = vpop.f32.mrb[0].mxu0
  %v2175 = vpop.f32.mrb[0].mxu0
  %v2176 = vadd.f32 0.0, %v2175
  %v2177 = vpop.f32.mrb[0].mxu0
  %2178 = vmatprep.mubr.bf16.mxu0 0
  %2179 = vmatmul.mubr.bf16.gmra.mrb[0].mxu0 %v1197
  %v2180 = vpop.f32.mrb[0].mxu0
  %v2181 = vadd.f32 0.0, %v2180
  %v2182 = vpop.f32.mrb[0].mxu0
  %v2183 = vpop.f32.mrb[0].mxu0
  %v2184 = vadd.f32 0.0, %v2183
  %v2185 = vpop.f32.mrb[0].mxu0
  %2186 = vmatprep.mubr.bf16.mxu0 0
  %2187 = vmatmul.mubr.bf16.gmra.mrb[0].mxu0 %v1198
  %v2188 = vpop.f32.mrb[0].mxu0
  %v2189 = vadd.f32 0.0, %v2188
  %v2190 = vpop.f32.mrb[0].mxu0
  %v2191 = vpop.f32.mrb[0].mxu0
  %v2192 = vadd.f32 0.0, %v2191
  %v2193 = vpop.f32.mrb[0].mxu0
  %2194 = vmatprep.mubr.bf16.mxu0 0
  %2195 = vmatmul.mubr.bf16.gmra.mrb[0].mxu0 %v1199
  %v2196 = vpop.f32.mrb[0].mxu0
  %v2197 = vadd.f32 0.0, %v2196
  %v2198 = vpop.f32.mrb[0].mxu0
  %v2199 = vpop.f32.mrb[0].mxu0
  %v2200 = vadd.f32 0.0, %v2199
  %v2201 = vpop.f32.mrb[0].mxu0
  %2202 = vmatprep.mubr.bf16.mxu0 0
  %2203 = vmatmul.mubr.bf16.gmra.mrb[0].mxu0 %v1200
  %v2204 = vpop.f32.mrb[0].mxu0
  %v2205 = vadd.f32 0.0, %v2204
  %v2206 = vpop.f32.mrb[0].mxu0
  %v2207 = vpop.f32.mrb[0].mxu0
  %v2208 = vadd.f32 0.0, %v2207
  %v2209 = vpop.f32.mrb[0].mxu0
  %2210 = vmatprep.mubr.bf16.mxu0 0
  %2211 = vmatmul.mubr.bf16.gmra.mrb[0].mxu0 %v1201
  %v2212 = vpop.f32.mrb[0].mxu0
  %v2213 = vadd.f32 0.0, %v2212
  %v2214 = vpop.f32.mrb[0].mxu0
  %v2215 = vpop.f32.mrb[0].mxu0
  %v2216 = vadd.f32 0.0, %v2215
  %v2217 = vpop.f32.mrb[0].mxu0
  %2218 = vmatprep.mubr.bf16.mxu0 0
  %2219 = vmatmul.mubr.bf16.gmra.mrb[0].mxu0 %v1202
  %v2220 = vpop.f32.mrb[0].mxu0
  %v2221 = vadd.f32 0.0, %v2220
  %v2222 = vpop.f32.mrb[0].mxu0
  %v2223 = vpop.f32.mrb[0].mxu0
  %v2224 = vadd.f32 0.0, %v2223
  %v2225 = vpop.f32.mrb[0].mxu0
  %2226 = vmatprep.mubr.bf16.mxu0 0
  %2227 = vmatmul.mubr.bf16.gmra.mrb[0].mxu0 %v1203
  %v2228 = vpop.f32.mrb[0].mxu0
  %v2229 = vadd.f32 0.0, %v2228
  %v2230 = vpop.f32.mrb[0].mxu0
  %v2231 = vpop.f32.mrb[0].mxu0
  %v2232 = vadd.f32 0.0, %v2231
  %v2233 = vpop.f32.mrb[0].mxu0
  %2234 = vmatprep.mubr.bf16.mxu0 0
  %2235 = vmatmul.mubr.bf16.gmra.mrb[0].mxu0 %v1204
  %v2236 = vpop.f32.mrb[0].mxu0
  %v2237 = vadd.f32 0.0, %v2236
  %v2238 = vpop.f32.mrb[0].mxu0
  %v2239 = vpop.f32.mrb[0].mxu0
  %v2240 = vadd.f32 0.0, %v2239
  %v2241 = vpop.f32.mrb[0].mxu0
  %2242 = vmatprep.mubr.bf16.mxu0 0
  %2243 = vmatmul.mubr.bf16.gmra.mrb[0].mxu0 %v1205
  %v2244 = vpop.f32.mrb[0].mxu0
  %v2245 = vadd.f32 0.0, %v2244
  %v2246 = vpop.f32.mrb[0].mxu0
  %v2247 = vpop.f32.mrb[0].mxu0
  %v2248 = vadd.f32 0.0, %v2247
  %v2249 = vpop.f32.mrb[0].mxu0
  %2250 = vmatprep.mubr.bf16.mxu0 0
  %2251 = vmatmul.mubr.bf16.gmra.mrb[0].mxu0 %v1206
  %v2252 = vpop.f32.mrb[0].mxu0
  %v2253 = vadd.f32 0.0, %v2252
  %v2254 = vpop.f32.mrb[0].mxu0
  %v2255 = vpop.f32.mrb[0].mxu0
  %v2256 = vadd.f32 0.0, %v2255
  %v2257 = vpop.f32.mrb[0].mxu0
  %2258 = vmatprep.mubr.bf16.mxu0 0
  %2259 = vmatmul.mubr.bf16.gmra.mrb[0].mxu0 %v1207
  %v2260 = vpop.f32.mrb[0].mxu0
  %v2261 = vadd.f32 0.0, %v2260
  %v2262 = vpop.f32.mrb[0].mxu0
  %v2263 = vpop.f32.mrb[0].mxu0
  %v2264 = vadd.f32 0.0, %v2263
  %v2265 = vpop.f32.mrb[0].mxu0
  %2266 = vmatprep.mubr.bf16.mxu0 0
  %2267 = vmatmul.mubr.bf16.gmra.mrb[0].mxu0 %v1208
  %v2268 = vpop.f32.mrb[0].mxu0
  %v2269 = vadd.f32 0.0, %v2268
  %v2270 = vpop.f32.mrb[0].mxu0
  %v2271 = vpop.f32.mrb[0].mxu0
  %v2272 = vadd.f32 0.0, %v2271
  %v2273 = vpop.f32.mrb[0].mxu0
  %2274 = vmatprep.mubr.bf16.mxu0 0
  %2275 = vmatmul.mubr.bf16.gmra.mrb[0].mxu0 %v1209
  %v2276 = vpop.f32.mrb[0].mxu0
  %v2277 = vadd.f32 0.0, %v2276
  %v2278 = vpop.f32.mrb[0].mxu0
  %v2279 = vpop.f32.mrb[0].mxu0
  %v2280 = vadd.f32 0.0, %v2279
  %v2281 = vpop.f32.mrb[0].mxu0
  %2282 = vmatprep.mubr.bf16.mxu0 0
  %2283 = vmatmul.mubr.bf16.gmra.mrb[0].mxu0 %v1210
  %v2284 = vpop.f32.mrb[0].mxu0
  %v2285 = vadd.f32 0.0, %v2284
  %v2286 = vpop.f32.mrb[0].mxu0
  %v2287 = vpop.f32.mrb[0].mxu0
  %v2288 = vadd.f32 0.0, %v2287
  %v2289 = vpop.f32.mrb[0].mxu0
  %2290 = vmatprep.mubr.bf16.mxu0 0
  %2291 = vmatmul.mubr.bf16.gmra.mrb[0].mxu0 %v1211
  %v2292 = vpop.f32.mrb[0].mxu0
  %v2293 = vadd.f32 0.0, %v2292
  %v2294 = vpop.f32.mrb[0].mxu0
  %v2295 = vpop.f32.mrb[0].mxu0
  %v2296 = vadd.f32 0.0, %v2295
  %v2297 = vpop.f32.mrb[0].mxu0
  %2298 = vmatprep.mubr.bf16.mxu0 0
  %2299 = vmatmul.mubr.bf16.gmra.mrb[0].mxu0 %v1212
  %v2300 = vpop.f32.mrb[0].mxu0
  %v2301 = vadd.f32 0.0, %v2300
  %v2302 = vpop.f32.mrb[0].mxu0
  %v2303 = vpop.f32.mrb[0].mxu0
  %v2304 = vadd.f32 0.0, %v2303
  %v2305 = vpop.f32.mrb[0].mxu0
  %2306 = vmatprep.mubr.bf16.mxu0 0
  %2307 = vmatmul.mubr.bf16.gmra.mrb[0].mxu0 %v1213
  %v2308 = vpop.f32.mrb[0].mxu0
  %v2309 = vadd.f32 0.0, %v2308
  %v2310 = vpop.f32.mrb[0].mxu0
  %v2311 = vpop.f32.mrb[0].mxu0
  %v2312 = vadd.f32 0.0, %v2311
  %v2313 = vpop.f32.mrb[0].mxu0
  %2314 = vmatprep.mubr.bf16.mxu0 0
  %2315 = vmatmul.mubr.bf16.gmra.mrb[0].mxu0 %v1214
  %v2316 = vpop.f32.mrb[0].mxu0
  %v2317 = vadd.f32 0.0, %v2316
  %v2318 = vpop.f32.mrb[0].mxu0
  %v2319 = vpop.f32.mrb[0].mxu0
  %v2320 = vadd.f32 0.0, %v2319
  %v2321 = vpop.f32.mrb[0].mxu0
  %2322 = vmatprep.mubr.bf16.mxu0 0
  %2323 = vmatmul.mubr.bf16.gmra.mrb[0].mxu0 %v1215
  %v2324 = vpop.f32.mrb[0].mxu0
  %v2325 = vadd.f32 0.0, %v2324
  %v2326 = vpop.f32.mrb[0].mxu0
  %v2327 = vpop.f32.mrb[0].mxu0
  %v2328 = vadd.f32 0.0, %v2327
  %v2329 = vpop.f32.mrb[0].mxu0
  %2330 = vmatprep.mubr.bf16.mxu0 0
  %2331 = vmatmul.mubr.bf16.gmra.mrb[0].mxu0 %v1216
  %v2332 = vpop.f32.mrb[0].mxu0
  %v2333 = vadd.f32 0.0, %v2332
  %v2334 = vpop.f32.mrb[0].mxu0
  %v2335 = vpop.f32.mrb[0].mxu0
  %v2336 = vadd.f32 0.0, %v2335
  %v2337 = vpop.f32.mrb[0].mxu0
  %2338 = vmatprep.mubr.bf16.mxu0 0
  %2339 = vmatmul.mubr.bf16.gmra.mrb[0].mxu0 %v1217
  %v2340 = vpop.f32.mrb[0].mxu0
  %v2341 = vadd.f32 0.0, %v2340
  %v2342 = vpop.f32.mrb[0].mxu0
  %v2343 = vpop.f32.mrb[0].mxu0
  %v2344 = vadd.f32 0.0, %v2343
  %v2345 = vpop.f32.mrb[0].mxu0
  %2346 = vmatprep.mubr.bf16.mxu0 0
  %2347 = vmatmul.mubr.bf16.gmra.mrb[0].mxu0 %v1218
  %v2348 = vpop.f32.mrb[0].mxu0
  %v2349 = vadd.f32 0.0, %v2348
  %v2350 = vpop.f32.mrb[0].mxu0
  %v2351 = vpop.f32.mrb[0].mxu0
  %v2352 = vadd.f32 0.0, %v2351
  %v2353 = vpop.f32.mrb[0].mxu0
  %2354 = vmatprep.mubr.bf16.mxu0 0
  %2355 = vmatmul.mubr.bf16.gmra.mrb[0].mxu0 %v1219
  %v2356 = vpop.f32.mrb[0].mxu0
  %v2357 = vadd.f32 0.0, %v2356
  %v2358 = vpop.f32.mrb[0].mxu0
  %v2359 = vpop.f32.mrb[0].mxu0
  %v2360 = vadd.f32 0.0, %v2359
  %v2361 = vpop.f32.mrb[0].mxu0
  %2362 = vmatprep.mubr.bf16.mxu0 0
  %2363 = vmatmul.mubr.bf16.gmra.mrb[0].mxu0 %v1220
  %v2364 = vpop.f32.mrb[0].mxu0
  %v2365 = vadd.f32 0.0, %v2364
  %v2366 = vpop.f32.mrb[0].mxu0
  %v2367 = vpop.f32.mrb[0].mxu0
  %v2368 = vadd.f32 0.0, %v2367
  %v2369 = vpop.f32.mrb[0].mxu0
  %2370 = vmatprep.mubr.bf16.mxu0 0
  %2371 = vmatmul.mubr.bf16.gmra.mrb[0].mxu0 %v1221
  %v2372 = vpop.f32.mrb[0].mxu0
  %v2373 = vadd.f32 0.0, %v2372
  %v2374 = vpop.f32.mrb[0].mxu0
  %v2375 = vpop.f32.mrb[0].mxu0
  %v2376 = vadd.f32 0.0, %v2375
  %v2377 = vpop.f32.mrb[0].mxu0
  %2378 = vmatprep.mubr.bf16.mxu0 0
  %2379 = vmatmul.mubr.bf16.gmra.mrb[0].mxu0 %v1222
  %v2380 = vpop.f32.mrb[0].mxu0
  %v2381 = vadd.f32 0.0, %v2380
  %v2382 = vpop.f32.mrb[0].mxu0
  %v2383 = vpop.f32.mrb[0].mxu0
  %v2384 = vadd.f32 0.0, %v2383
  %v2385 = vpop.f32.mrb[0].mxu0
  %2386 = vmatprep.mubr.bf16.mxu0 0
  %2387 = vmatmul.mubr.bf16.gmra.mrb[0].mxu0 %v1223
  %v2388 = vpop.f32.mrb[0].mxu0
  %v2389 = vadd.f32 0.0, %v2388
  %v2390 = vpop.f32.mrb[0].mxu0
  %v2391 = vpop.f32.mrb[0].mxu0
  %v2392 = vadd.f32 0.0, %v2391
  %v2393 = vpop.f32.mrb[0].mxu0
  %2394 = vmatprep.mubr.bf16.mxu0 0
  %2395 = vmatmul.mubr.bf16.gmra.mrb[0].mxu0 %v1224
  %v2396 = vpop.f32.mrb[0].mxu0
  %v2397 = vadd.f32 0.0, %v2396
  %v2398 = vpop.f32.mrb[0].mxu0
  %v2399 = vpop.f32.mrb[0].mxu0
  %v2400 = vadd.f32 0.0, %v2399
  %v2401 = vpop.f32.mrb[0].mxu0
  %2402 = vmatprep.mubr.bf16.mxu0 0
  %2403 = vmatmul.mubr.bf16.gmra.mrb[0].mxu0 %v1225
  %v2404 = vpop.f32.mrb[0].mxu0
  %v2405 = vadd.f32 0.0, %v2404
  %v2406 = vpop.f32.mrb[0].mxu0
  %v2407 = vpop.f32.mrb[0].mxu0
  %v2408 = vadd.f32 0.0, %v2407
  %v2409 = vpop.f32.mrb[0].mxu0
  %2410 = vmatprep.mubr.bf16.mxu0 0
  %2411 = vmatmul.mubr.bf16.gmra.mrb[0].mxu0 %v1226
  %v2412 = vpop.f32.mrb[0].mxu0
  %v2413 = vadd.f32 0.0, %v2412
  %v2414 = vpop.f32.mrb[0].mxu0
  %v2415 = vpop.f32.mrb[0].mxu0
  %v2416 = vadd.f32 0.0, %v2415
  %v2417 = vpop.f32.mrb[0].mxu0
  %2418 = vmatprep.mubr.bf16.mxu0 0
  %2419 = vmatmul.mubr.bf16.gmra.mrb[0].mxu0 %v1227
  %v2420 = vpop.f32.mrb[0].mxu0
  %v2421 = vadd.f32 0.0, %v2420
  %v2422 = vpop.f32.mrb[0].mxu0
  %v2423 = vpop.f32.mrb[0].mxu0
  %v2424 = vadd.f32 0.0, %v2423
  %v2425 = vpop.f32.mrb[0].mxu0
  %2426 = vmatprep.mubr.bf16.mxu0 0
  %2427 = vmatmul.mubr.bf16.gmra.mrb[0].mxu0 %v1228
  %v2428 = vpop.f32.mrb[0].mxu0
  %v2429 = vadd.f32 0.0, %v2428
  %v2430 = vpop.f32.mrb[0].mxu0
  %v2431 = vpop.f32.mrb[0].mxu0
  %v2432 = vadd.f32 0.0, %v2431
  %v2433 = vpop.f32.mrb[0].mxu0
  %2434 = vmatprep.mubr.bf16.mxu0 0
  %2435 = vmatmul.mubr.bf16.gmra.mrb[0].mxu0 %v1229
  %v2436 = vpop.f32.mrb[0].mxu0
  %v2437 = vadd.f32 0.0, %v2436
  %v2438 = vpop.f32.mrb[0].mxu0
  %v2439 = vpop.f32.mrb[0].mxu0
  %v2440 = vadd.f32 0.0, %v2439
  %v2441 = vpop.f32.mrb[0].mxu0
  %2442 = vmatprep.mubr.bf16.mxu0 0
  %2443 = vmatmul.mubr.bf16.gmra.mrb[0].mxu0 %v1230
  %v2444 = vpop.f32.mrb[0].mxu0
  %v2445 = vadd.f32 0.0, %v2444
  %v2446 = vpop.f32.mrb[0].mxu0
  %v2447 = vpop.f32.mrb[0].mxu0
  %v2448 = vadd.f32 0.0, %v2447
  %v2449 = vpop.f32.mrb[0].mxu0
  %2450 = vmatprep.mubr.bf16.mxu0 0
  %2451 = vmatmul.mubr.bf16.gmra.mrb[0].mxu0 %v1231
  %v2452 = vpop.f32.mrb[0].mxu0
  %v2453 = vadd.f32 0.0, %v2452
  %v2454 = vpop.f32.mrb[0].mxu0
  %v2455 = vpop.f32.mrb[0].mxu0
  %v2456 = vadd.f32 0.0, %v2455
  %v2457 = vpop.f32.mrb[0].mxu0
  %2458 = vmatprep.mubr.bf16.mxu0 0
  %2459 = vmatmul.mubr.bf16.gmra.mrb[0].mxu0 %v1232
  %v2460 = vpop.f32.mrb[0].mxu0
  %v2461 = vadd.f32 0.0, %v2460
  %v2462 = vpop.f32.mrb[0].mxu0
  %v2463 = vpop.f32.mrb[0].mxu0
  %v2464 = vadd.f32 0.0, %v2463
  %v2465 = vpop.f32.mrb[0].mxu0
  %2466 = vmatprep.mubr.bf16.mxu0 0
  %2467 = vmatmul.mubr.bf16.gmra.mrb[0].mxu0 %v1233
  %v2468 = vpop.f32.mrb[0].mxu0
  %v2469 = vadd.f32 0.0, %v2468
  %v2470 = vpop.f32.mrb[0].mxu0
  %v2471 = vpop.f32.mrb[0].mxu0
  %v2472 = vadd.f32 0.0, %v2471
  %v2473 = vpop.f32.mrb[0].mxu0
  %2474 = vmatprep.mubr.bf16.mxu0 0
  %2475 = vmatmul.mubr.bf16.gmra.mrb[0].mxu0 %v1234
  %v2476 = vpop.f32.mrb[0].mxu0
  %v2477 = vadd.f32 0.0, %v2476
  %v2478 = vpop.f32.mrb[0].mxu0
  %v2479 = vpop.f32.mrb[0].mxu0
  %v2480 = vadd.f32 0.0, %v2479
  %v2481 = vpop.f32.mrb[0].mxu0
  %2482 = vmatprep.mubr.bf16.mxu0 0
  %2483 = vmatmul.mubr.bf16.gmra.mrb[0].mxu0 %v1235
  %v2484 = vpop.f32.mrb[0].mxu0
  %v2485 = vadd.f32 0.0, %v2484
  %v2486 = vpop.f32.mrb[0].mxu0
  %v2487 = vpop.f32.mrb[0].mxu0
  %v2488 = vadd.f32 0.0, %v2487
  %v2489 = vpop.f32.mrb[0].mxu0
  %2490 = vmatprep.mubr.bf16.mxu0 0
  %2491 = vmatmul.mubr.bf16.gmra.mrb[0].mxu0 %v1236
  %v2492 = vpop.f32.mrb[0].mxu0
  %v2493 = vadd.f32 0.0, %v2492
  %v2494 = vpop.f32.mrb[0].mxu0
  %v2495 = vpop.f32.mrb[0].mxu0
  %v2496 = vadd.f32 0.0, %v2495
  %v2497 = vpop.f32.mrb[0].mxu0
  %2498 = vmatprep.mubr.bf16.mxu0 0
  %2499 = vmatmul.mubr.bf16.gmra.mrb[0].mxu0 %v1237
  %v2500 = vpop.f32.mrb[0].mxu0
  %v2501 = vadd.f32 0.0, %v2500
  %v2502 = vpop.f32.mrb[0].mxu0
  %v2503 = vpop.f32.mrb[0].mxu0
  %v2504 = vadd.f32 0.0, %v2503
  %v2505 = vpop.f32.mrb[0].mxu0
  %2506 = vmatprep.mubr.bf16.mxu0 0
  %2507 = vmatmul.mubr.bf16.gmra.mrb[0].mxu0 %v1238
  %v2508 = vpop.f32.mrb[0].mxu0
  %v2509 = vadd.f32 0.0, %v2508
  %v2510 = vpop.f32.mrb[0].mxu0
  %v2511 = vpop.f32.mrb[0].mxu0
  %v2512 = vadd.f32 0.0, %v2511
  %v2513 = vpop.f32.mrb[0].mxu0
  %2514 = vmatprep.mubr.bf16.mxu0 0
  %2515 = vmatmul.mubr.bf16.gmra.mrb[0].mxu0 %v1239
  %v2516 = vpop.f32.mrb[0].mxu0
  %v2517 = vadd.f32 0.0, %v2516
  %v2518 = vpop.f32.mrb[0].mxu0
  %v2519 = vpop.f32.mrb[0].mxu0
  %v2520 = vadd.f32 0.0, %v2519
  %v2521 = vpop.f32.mrb[0].mxu0
  %2522 = vmatprep.mubr.bf16.mxu0 0
  %2523 = vmatmul.mubr.bf16.gmra.mrb[0].mxu0 %v1240
  %v2524 = vpop.f32.mrb[0].mxu0
  %v2525 = vadd.f32 0.0, %v2524
  %v2526 = vpop.f32.mrb[0].mxu0
  %v2527 = vpop.f32.mrb[0].mxu0
  %v2528 = vadd.f32 0.0, %v2527
  %v2529 = vpop.f32.mrb[0].mxu0
  %2530 = vmatprep.mubr.bf16.mxu0 0
  %2531 = vmatmul.mubr.bf16.gmra.mrb[0].mxu0 %v1241
  %v2532 = vpop.f32.mrb[0].mxu0
  %v2533 = vadd.f32 0.0, %v2532
  %v2534 = vpop.f32.mrb[0].mxu0
  %v2535 = vpop.f32.mrb[0].mxu0
  %v2536 = vadd.f32 0.0, %v2535
  %v2537 = vpop.f32.mrb[0].mxu0
  %2538 = vmatprep.mubr.bf16.mxu0 0
  %2539 = vmatmul.mubr.bf16.gmra.mrb[0].mxu0 %v1242
  %v2540 = vpop.f32.mrb[0].mxu0
  %v2541 = vadd.f32 0.0, %v2540
  %v2542 = vpop.f32.mrb[0].mxu0
  %v2543 = vpop.f32.mrb[0].mxu0
  %v2544 = vadd.f32 0.0, %v2543
  %v2545 = vpop.f32.mrb[0].mxu0
  %2546 = vmatprep.mubr.bf16.mxu0 0
  %2547 = vmatmul.mubr.bf16.gmra.mrb[0].mxu0 %v1243
  %v2548 = vpop.f32.mrb[0].mxu0
  %v2549 = vadd.f32 0.0, %v2548
  %v2550 = vpop.f32.mrb[0].mxu0
  %v2551 = vpop.f32.mrb[0].mxu0
  %v2552 = vadd.f32 0.0, %v2551
  %v2553 = vpop.f32.mrb[0].mxu0
  %2554 = vmatprep.mubr.bf16.mxu0 0
  %2555 = vmatmul.mubr.bf16.gmra.mrb[0].mxu0 %v1244
  %v2556 = vpop.f32.mrb[0].mxu0
  %v2557 = vadd.f32 0.0, %v2556
  %v2558 = vpop.f32.mrb[0].mxu0
  %v2559 = vpop.f32.mrb[0].mxu0
  %v2560 = vadd.f32 0.0, %v2559
  %v2561 = vpop.f32.mrb[0].mxu0
  %2562 = vmatprep.mubr.bf16.mxu0 0
  %2563 = vmatmul.mubr.bf16.gmra.mrb[0].mxu0 %v1245
  %v2564 = vpop.f32.mrb[0].mxu0
  %v2565 = vadd.f32 0.0, %v2564
  %v2566 = vpop.f32.mrb[0].mxu0
  %v2567 = vpop.f32.mrb[0].mxu0
  %v2568 = vadd.f32 0.0, %v2567
  %v2569 = vpop.f32.mrb[0].mxu0
  %2570 = vmatprep.mubr.bf16.mxu0 0
  %2571 = vmatmul.mubr.bf16.gmra.mrb[0].mxu0 %v1246
  %v2572 = vpop.f32.mrb[0].mxu0
  %v2573 = vadd.f32 0.0, %v2572
  %v2574 = vpop.f32.mrb[0].mxu0
  %v2575 = vpop.f32.mrb[0].mxu0
  %v2576 = vadd.f32 0.0, %v2575
  %v2577 = vpop.f32.mrb[0].mxu0
  %2578 = vmatprep.mubr.bf16.mxu0 0
  %2579 = vmatmul.mubr.bf16.gmra.mrb[0].mxu0 %v1247
  %v2580 = vpop.f32.mrb[0].mxu0
  %v2581 = vadd.f32 0.0, %v2580
  %v2582 = vpop.f32.mrb[0].mxu0
  %v2583 = vpop.f32.mrb[0].mxu0
  %v2584 = vadd.f32 0.0, %v2583
  %v2585 = vpop.f32.mrb[0].mxu0
  %2586 = vmatprep.mubr.bf16.mxu0 0
  %2587 = vmatmul.mubr.bf16.gmra.mrb[0].mxu0 %v1248
  %v2588 = vpop.f32.mrb[0].mxu0
  %v2589 = vadd.f32 0.0, %v2588
  %v2590 = vpop.f32.mrb[0].mxu0
  %v2591 = vpop.f32.mrb[0].mxu0
  %v2592 = vadd.f32 0.0, %v2591
  %v2593 = vpop.f32.mrb[0].mxu0
  %2594 = vmatprep.mubr.bf16.mxu0 0
  %2595 = vmatmul.mubr.bf16.gmra.mrb[0].mxu0 %v1249
  %v2596 = vpop.f32.mrb[0].mxu0
  %v2597 = vadd.f32 0.0, %v2596
  %v2598 = vpop.f32.mrb[0].mxu0
  %v2599 = vpop.f32.mrb[0].mxu0
  %v2600 = vadd.f32 0.0, %v2599
  %v2601 = vpop.f32.mrb[0].mxu0
  %2602 = vmatprep.mubr.bf16.mxu0 0
  %2603 = vmatmul.mubr.bf16.gmra.mrb[0].mxu0 %v1250
  %v2604 = vpop.f32.mrb[0].mxu0
  %v2605 = vadd.f32 0.0, %v2604
  %v2606 = vpop.f32.mrb[0].mxu0
  %v2607 = vpop.f32.mrb[0].mxu0
  %v2608 = vadd.f32 0.0, %v2607
  %v2609 = vpop.f32.mrb[0].mxu0
  %2610 = vmatprep.mubr.bf16.mxu0 0
  %2611 = vmatmul.mubr.bf16.gmra.mrb[0].mxu0 %v1251
  %v2612 = vpop.f32.mrb[0].mxu0
  %v2613 = vadd.f32 0.0, %v2612
  %v2614 = vpop.f32.mrb[0].mxu0
  %v2615 = vpop.f32.mrb[0].mxu0
  %v2616 = vadd.f32 0.0, %v2615
  %v2617 = vpop.f32.mrb[0].mxu0
  %2618 = vmatprep.mubr.bf16.mxu0 0
  %2619 = vmatmul.mubr.bf16.gmra.mrb[0].mxu0 %v1252
  %v2620 = vpop.f32.mrb[0].mxu0
  %v2621 = vadd.f32 0.0, %v2620
  %v2622 = vpop.f32.mrb[0].mxu0
  %v2623 = vpop.f32.mrb[0].mxu0
  %v2624 = vadd.f32 0.0, %v2623
  %v2625 = vpop.f32.mrb[0].mxu0
  %2626 = vmatprep.mubr.bf16.mxu0 0
  %2627 = vmatmul.mubr.bf16.gmra.mrb[0].mxu0 %v1253
  %v2628 = vpop.f32.mrb[0].mxu0
  %v2629 = vadd.f32 0.0, %v2628
  %v2630 = vpop.f32.mrb[0].mxu0
  %v2631 = vpop.f32.mrb[0].mxu0
  %v2632 = vadd.f32 0.0, %v2631
  %v2633 = vpop.f32.mrb[0].mxu0
  %2634 = vmatprep.mubr.bf16.mxu0 0
  %2635 = vmatmul.mubr.bf16.gmra.mrb[0].mxu0 %v1254
  %v2636 = vpop.f32.mrb[0].mxu0
  %v2637 = vadd.f32 0.0, %v2636
  %v2638 = vpop.f32.mrb[0].mxu0
  %v2639 = vpop.f32.mrb[0].mxu0
  %v2640 = vadd.f32 0.0, %v2639
  %v2641 = vpop.f32.mrb[0].mxu0
  %2642 = vmatprep.mubr.bf16.mxu0 0
  %2643 = vmatmul.mubr.bf16.gmra.mrb[0].mxu0 %v1255
  %v2644 = vpop.f32.mrb[0].mxu0
  %v2645 = vadd.f32 0.0, %v2644
  %v2646 = vpop.f32.mrb[0].mxu0
  %v2647 = vpop.f32.mrb[0].mxu0
  %v2648 = vadd.f32 0.0, %v2647
  %v2649 = vpop.f32.mrb[0].mxu0
  %2650 = vmatprep.mubr.bf16.mxu0 0
  %2651 = vmatmul.mubr.bf16.gmra.mrb[0].mxu0 %v1256
  %v2652 = vpop.f32.mrb[0].mxu0
  %v2653 = vadd.f32 0.0, %v2652
  %v2654 = vpop.f32.mrb[0].mxu0
  %v2655 = vpop.f32.mrb[0].mxu0
  %v2656 = vadd.f32 0.0, %v2655
  %v2657 = vpop.f32.mrb[0].mxu0
  %2658 = vmatprep.mubr.bf16.mxu0 0
  %2659 = vmatmul.mubr.bf16.gmra.mrb[0].mxu0 %v1257
  %v2660 = vpop.f32.mrb[0].mxu0
  %v2661 = vadd.f32 0.0, %v2660
  %v2662 = vpop.f32.mrb[0].mxu0
  %v2663 = vpop.f32.mrb[0].mxu0
  %v2664 = vadd.f32 0.0, %v2663
  %v2665 = vpop.f32.mrb[0].mxu0
  %2666 = vmatprep.mubr.bf16.mxu0 0
  %2667 = vmatmul.mubr.bf16.gmra.mrb[0].mxu0 %v1258
  %v2668 = vpop.f32.mrb[0].mxu0
  %v2669 = vadd.f32 0.0, %v2668
  %v2670 = vpop.f32.mrb[0].mxu0
  %v2671 = vpop.f32.mrb[0].mxu0
  %v2672 = vadd.f32 0.0, %v2671
  %v2673 = vpop.f32.mrb[0].mxu0
  %2674 = vmatprep.mubr.bf16.mxu0 0
  %2675 = vmatmul.mubr.bf16.gmra.mrb[0].mxu0 %v1259
  %v2676 = vpop.f32.mrb[0].mxu0
  %v2677 = vadd.f32 0.0, %v2676
  %v2678 = vpop.f32.mrb[0].mxu0
  %v2679 = vpop.f32.mrb[0].mxu0
  %v2680 = vadd.f32 0.0, %v2679
  %v2681 = vpop.f32.mrb[0].mxu0
  %2682 = vmatprep.mubr.bf16.mxu0 0
  %2683 = vmatmul.mubr.bf16.gmra.mrb[0].mxu0 %v1260
  %v2684 = vpop.f32.mrb[0].mxu0
  %v2685 = vadd.f32 0.0, %v2684
  %v2686 = vpop.f32.mrb[0].mxu0
  %v2687 = vpop.f32.mrb[0].mxu0
  %v2688 = vadd.f32 0.0, %v2687
  %v2689 = vpop.f32.mrb[0].mxu0
  %2690 = vmatprep.mubr.bf16.mxu0 0
  %2691 = vmatmul.mubr.bf16.gmra.mrb[0].mxu0 %v1261
  %v2692 = vpop.f32.mrb[0].mxu0
  %v2693 = vadd.f32 0.0, %v2692
  %v2694 = vpop.f32.mrb[0].mxu0
  %v2695 = vpop.f32.mrb[0].mxu0
  %v2696 = vadd.f32 0.0, %v2695
  %v2697 = vpop.f32.mrb[0].mxu0
  %2698 = vmatprep.mubr.bf16.mxu0 0
  %2699 = vmatmul.mubr.bf16.gmra.mrb[0].mxu0 %v1262
  %v2700 = vpop.f32.mrb[0].mxu0
  %v2701 = vadd.f32 0.0, %v2700
  %v2702 = vpop.f32.mrb[0].mxu0
  %v2703 = vpop.f32.mrb[0].mxu0
  %v2704 = vadd.f32 0.0, %v2703
  %v2705 = vpop.f32.mrb[0].mxu0
  %2706 = vmatprep.mubr.bf16.mxu0 0
  %2707 = vmatmul.mubr.bf16.gmra.mrb[0].mxu0 %v1263
  %v2708 = vpop.f32.mrb[0].mxu0
  %v2709 = vadd.f32 0.0, %v2708
  %v2710 = vpop.f32.mrb[0].mxu0
  %v2711 = vpop.f32.mrb[0].mxu0
  %v2712 = vadd.f32 0.0, %v2711
  %v2713 = vpop.f32.mrb[0].mxu0
  %2714 = vmatprep.mubr.bf16.mxu0 0
  %2715 = vmatmul.mubr.bf16.gmra.mrb[0].mxu0 %v1264
  %v2716 = vpop.f32.mrb[0].mxu0
  %v2717 = vadd.f32 0.0, %v2716
  %v2718 = vpop.f32.mrb[0].mxu0
  %v2719 = vpop.f32.mrb[0].mxu0
  %v2720 = vadd.f32 0.0, %v2719
  %v2721 = vpop.f32.mrb[0].mxu0
  %2722 = vmatprep.mubr.bf16.mxu0 0
  %2723 = vmatmul.mubr.bf16.gmra.mrb[0].mxu0 %v1265
  %v2724 = vpop.f32.mrb[0].mxu0
  %v2725 = vadd.f32 0.0, %v2724
  %v2726 = vpop.f32.mrb[0].mxu0
  %v2727 = vpop.f32.mrb[0].mxu0
  %v2728 = vadd.f32 0.0, %v2727
  %v2729 = vpop.f32.mrb[0].mxu0
  %2730 = vmatprep.mubr.bf16.mxu0 0
  %2731 = vmatmul.mubr.bf16.gmra.mrb[0].mxu0 %v1266
  %v2732 = vpop.f32.mrb[0].mxu0
  %v2733 = vadd.f32 0.0, %v2732
  %v2734 = vpop.f32.mrb[0].mxu0
  %v2735 = vpop.f32.mrb[0].mxu0
  %v2736 = vadd.f32 0.0, %v2735
  %v2737 = vpop.f32.mrb[0].mxu0
  %2738 = vmatprep.mubr.bf16.mxu0 0
  %2739 = vmatmul.mubr.bf16.gmra.mrb[0].mxu0 %v1267
  %v2740 = vpop.f32.mrb[0].mxu0
  %v2741 = vadd.f32 0.0, %v2740
  %v2742 = vpop.f32.mrb[0].mxu0
  %v2743 = vpop.f32.mrb[0].mxu0
  %v2744 = vadd.f32 0.0, %v2743
  %v2745 = vpop.f32.mrb[0].mxu0
  %2746 = vmatprep.mubr.bf16.mxu0 0
  %2747 = vmatmul.mubr.bf16.gmra.mrb[0].mxu0 %v1268
  %v2748 = vpop.f32.mrb[0].mxu0
  %v2749 = vadd.f32 0.0, %v2748
  %v2750 = vpop.f32.mrb[0].mxu0
  %v2751 = vpop.f32.mrb[0].mxu0
  %v2752 = vadd.f32 0.0, %v2751
  %v2753 = vpop.f32.mrb[0].mxu0
  %2754 = vmatprep.mubr.bf16.mxu0 0
  %2755 = vmatmul.mubr.bf16.gmra.mrb[0].mxu0 %v1269
  %v2756 = vpop.f32.mrb[0].mxu0
  %v2757 = vadd.f32 0.0, %v2756
  %v2758 = vpop.f32.mrb[0].mxu0
  %v2759 = vpop.f32.mrb[0].mxu0
  %v2760 = vadd.f32 0.0, %v2759
  %v2761 = vpop.f32.mrb[0].mxu0
  %2762 = vmatprep.mubr.bf16.mxu0 0
  %2763 = vmatmul.mubr.bf16.gmra.mrb[0].mxu0 %v1270
  %v2764 = vpop.f32.mrb[0].mxu0
  %v2765 = vadd.f32 0.0, %v2764
  %v2766 = vpop.f32.mrb[0].mxu0
  %v2767 = vpop.f32.mrb[0].mxu0
  %v2768 = vadd.f32 0.0, %v2767
  %v2769 = vpop.f32.mrb[0].mxu0
  %2770 = vmatprep.mubr.bf16.mxu0 0
  %2771 = vmatmul.mubr.bf16.gmra.mrb[0].mxu0 %v1271
  %v2772 = vpop.f32.mrb[0].mxu0
  %v2773 = vadd.f32 0.0, %v2772
  %v2774 = vpop.f32.mrb[0].mxu0
  %v2775 = vpop.f32.mrb[0].mxu0
  %v2776 = vadd.f32 0.0, %v2775
  %v2777 = vpop.f32.mrb[0].mxu0
  %2778 = vmatprep.mubr.bf16.mxu0 0
  %2779 = vmatmul.mubr.bf16.gmra.mrb[0].mxu0 %v1272
  %v2780 = vpop.f32.mrb[0].mxu0
  %v2781 = vadd.f32 0.0, %v2780
  %v2782 = vpop.f32.mrb[0].mxu0
  %v2783 = vpop.f32.mrb[0].mxu0
  %v2784 = vadd.f32 0.0, %v2783
  %v2785 = vpop.f32.mrb[0].mxu0
  %2786 = vmatprep.mubr.bf16.mxu0 0
  %2787 = vmatmul.mubr.bf16.gmra.mrb[0].mxu0 %v1273
  %v2788 = vpop.f32.mrb[0].mxu0
  %v2789 = vadd.f32 0.0, %v2788
  %v2790 = vpop.f32.mrb[0].mxu0
  %v2791 = vpop.f32.mrb[0].mxu0
  %v2792 = vadd.f32 0.0, %v2791
  %v2793 = vpop.f32.mrb[0].mxu0
  %2794 = vmatprep.mubr.bf16.mxu0 0
  %2795 = vmatmul.mubr.bf16.gmra.mrb[0].mxu0 %v1274
  %v2796 = vpop.f32.mrb[0].mxu0
  %v2797 = vadd.f32 0.0, %v2796
  %v2798 = vpop.f32.mrb[0].mxu0
  %v2799 = vpop.f32.mrb[0].mxu0
  %v2800 = vadd.f32 0.0, %v2799
  %v2801 = vpop.f32.mrb[0].mxu0
  %2802 = vmatprep.mubr.bf16.mxu0 0
  %2803 = vmatmul.mubr.bf16.gmra.mrb[0].mxu0 %v1275
  %v2804 = vpop.f32.mrb[0].mxu0
  %v2805 = vadd.f32 0.0, %v2804
  %v2806 = vpop.f32.mrb[0].mxu0
  %v2807 = vpop.f32.mrb[0].mxu0
  %v2808 = vadd.f32 0.0, %v2807
  %v2809 = vpop.f32.mrb[0].mxu0
  %2810 = vmatprep.mubr.bf16.mxu0 0
  %2811 = vmatmul.mubr.bf16.gmra.mrb[0].mxu0 %v1276
  %v2812 = vpop.f32.mrb[0].mxu0
  %v2813 = vadd.f32 0.0, %v2812
  %v2814 = vpop.f32.mrb[0].mxu0
  %v2815 = vpop.f32.mrb[0].mxu0
  %v2816 = vadd.f32 0.0, %v2815
  %v2817 = vpop.f32.mrb[0].mxu0
  %2818 = vmatprep.mubr.bf16.mxu0 0
  %2819 = vmatmul.mubr.bf16.gmra.mrb[0].mxu0 %v1277
  %v2820 = vpop.f32.mrb[0].mxu0
  %v2821 = vadd.f32 0.0, %v2820
  %v2822 = vpop.f32.mrb[0].mxu0
  %v2823 = vpop.f32.mrb[0].mxu0
  %v2824 = vadd.f32 0.0, %v2823
  %v2825 = vpop.f32.mrb[0].mxu0
  %2826 = vmatprep.mubr.bf16.mxu0 0
  %2827 = vmatmul.mubr.bf16.gmra.mrb[0].mxu0 %v1278
  %v2828 = vpop.f32.mrb[0].mxu0
  %v2829 = vadd.f32 0.0, %v2828
  %v2830 = vpop.f32.mrb[0].mxu0
  %v2831 = vpop.f32.mrb[0].mxu0
  %v2832 = vadd.f32 0.0, %v2831
  %v2833 = vpop.f32.mrb[0].mxu0
  %2834 = vmatprep.mubr.bf16.mxu0 0
  %2835 = vmatmul.mubr.bf16.gmra.mrb[0].mxu0 %v1279
  %v2836 = vpop.f32.mrb[0].mxu0
  %v2837 = vadd.f32 0.0, %v2836
  %v2838 = vpop.f32.mrb[0].mxu0
  %v2839 = vpop.f32.mrb[0].mxu0
  %v2840 = vadd.f32 0.0, %v2839
  %v2841 = vpop.f32.mrb[0].mxu0
  %2842 = vmatprep.mubr.bf16.mxu0 0
  %2843 = vmatmul.mubr.bf16.gmra.mrb[0].mxu0 %v1280
  %v2844 = vpop.f32.mrb[0].mxu0
  %v2845 = vadd.f32 0.0, %v2844
  %v2846 = vpop.f32.mrb[0].mxu0
  %v2847 = vpop.f32.mrb[0].mxu0
  %v2848 = vadd.f32 0.0, %v2847
  %v2849 = vpop.f32.mrb[0].mxu0
  %2850 = vmatprep.mubr.bf16.mxu0 0
  %2851 = vmatmul.mubr.bf16.gmra.mrb[0].mxu0 %v1281
  %v2852 = vpop.f32.mrb[0].mxu0
  %v2853 = vadd.f32 0.0, %v2852
  %v2854 = vpop.f32.mrb[0].mxu0
  %v2855 = vpop.f32.mrb[0].mxu0
  %v2856 = vadd.f32 0.0, %v2855
  %v2857 = vpop.f32.mrb[0].mxu0
  %2858 = vmatprep.mubr.bf16.mxu0 0
  %2859 = vmatmul.mubr.bf16.gmra.mrb[0].mxu0 %v1282
  %v2860 = vpop.f32.mrb[0].mxu0
  %v2861 = vadd.f32 0.0, %v2860
  %v2862 = vpop.f32.mrb[0].mxu0
  %v2863 = vpop.f32.mrb[0].mxu0
  %v2864 = vadd.f32 0.0, %v2863
  %v2865 = vpop.f32.mrb[0].mxu0
  %2866 = vmatprep.mubr.bf16.mxu0 0
  %2867 = vmatmul.mubr.bf16.gmra.mrb[0].mxu0 %v1283
  %v2868 = vpop.f32.mrb[0].mxu0
  %v2869 = vadd.f32 0.0, %v2868
  %v2870 = vpop.f32.mrb[0].mxu0
  %v2871 = vpop.f32.mrb[0].mxu0
  %v2872 = vadd.f32 0.0, %v2871
  %v2873 = vpop.f32.mrb[0].mxu0
  %2874 = vmatprep.mubr.bf16.mxu0 0
  %2875 = vmatmul.mubr.bf16.gmra.mrb[0].mxu0 %v1284
  %v2876 = vpop.f32.mrb[0].mxu0
  %v2877 = vadd.f32 0.0, %v2876
  %v2878 = vpop.f32.mrb[0].mxu0
  %v2879 = vpop.f32.mrb[0].mxu0
  %v2880 = vadd.f32 0.0, %v2879
  %v2881 = vpop.f32.mrb[0].mxu0
  %2882 = vmatprep.mubr.bf16.mxu0 0
  %2883 = vmatmul.mubr.bf16.gmra.mrb[0].mxu0 %v1285
  %v2884 = vpop.f32.mrb[0].mxu0
  %v2885 = vadd.f32 0.0, %v2884
  %v2886 = vpop.f32.mrb[0].mxu0
  %v2887 = vpop.f32.mrb[0].mxu0
  %v2888 = vadd.f32 0.0, %v2887
  %v2889 = vpop.f32.mrb[0].mxu0
  %2890 = vmatprep.mubr.bf16.mxu0 0
  %2891 = vmatmul.mubr.bf16.gmra.mrb[0].mxu0 %v1286
  %v2892 = vpop.f32.mrb[0].mxu0
  %v2893 = vadd.f32 0.0, %v2892
  %v2894 = vpop.f32.mrb[0].mxu0
  %v2895 = vpop.f32.mrb[0].mxu0
  %v2896 = vadd.f32 0.0, %v2895
  %v2897 = vpop.f32.mrb[0].mxu0
  %2898 = vmatprep.mubr.bf16.mxu0 0
  %2899 = vmatmul.mubr.bf16.gmra.mrb[0].mxu0 %v1287
  %v2900 = vpop.f32.mrb[0].mxu0
  %v2901 = vadd.f32 0.0, %v2900
  %v2902 = vpop.f32.mrb[0].mxu0
  %v2903 = vpop.f32.mrb[0].mxu0
  %v2904 = vadd.f32 0.0, %v2903
  %v2905 = vpop.f32.mrb[0].mxu0
  %2906 = vmatprep.mubr.bf16.mxu0 0
  %2907 = vmatmul.mubr.bf16.gmra.mrb[0].mxu0 %v1288
  %v2908 = vpop.f32.mrb[0].mxu0
  %v2909 = vadd.f32 0.0, %v2908
  %v2910 = vpop.f32.mrb[0].mxu0
  %v2911 = vpop.f32.mrb[0].mxu0
  %v2912 = vadd.f32 0.0, %v2911
  %v2913 = vpop.f32.mrb[0].mxu0
  %2914 = vmatprep.mubr.bf16.mxu0 0
  %2915 = vmatmul.mubr.bf16.gmra.mrb[0].mxu0 %v1289
  %v2916 = vpop.f32.mrb[0].mxu0
  %v2917 = vadd.f32 0.0, %v2916
  %v2918 = vpop.f32.mrb[0].mxu0
  %v2919 = vpop.f32.mrb[0].mxu0
  %v2920 = vadd.f32 0.0, %v2919
  %v2921 = vpop.f32.mrb[0].mxu0
  %2922 = vmatprep.mubr.bf16.mxu0 0
  %2923 = vmatmul.mubr.bf16.gmra.mrb[0].mxu0 %v1290
  %v2924 = vpop.f32.mrb[0].mxu0
  %v2925 = vadd.f32 0.0, %v2924
  %v2926 = vpop.f32.mrb[0].mxu0
  %v2927 = vpop.f32.mrb[0].mxu0
  %v2928 = vadd.f32 0.0, %v2927
  %v2929 = vpop.f32.mrb[0].mxu0
  %2930 = vmatprep.mubr.bf16.mxu0 0
  %2931 = vmatmul.mubr.bf16.gmra.mrb[0].mxu0 %v1291
  %v2932 = vpop.f32.mrb[0].mxu0
  %v2933 = vadd.f32 0.0, %v2932
  %v2934 = vpop.f32.mrb[0].mxu0
  %v2935 = vpop.f32.mrb[0].mxu0
  %v2936 = vadd.f32 0.0, %v2935
  %v2937 = vpop.f32.mrb[0].mxu0
  %2938 = vmatprep.mubr.bf16.mxu0 0
  %2939 = vmatmul.mubr.bf16.gmra.mrb[0].mxu0 %v1292
  %v2940 = vpop.f32.mrb[0].mxu0
  %v2941 = vadd.f32 0.0, %v2940
  %v2942 = vpop.f32.mrb[0].mxu0
  %v2943 = vpop.f32.mrb[0].mxu0
  %v2944 = vadd.f32 0.0, %v2943
  %v2945 = vpop.f32.mrb[0].mxu0
  %2946 = vmatprep.mubr.bf16.mxu0 0
  %2947 = vmatmul.mubr.bf16.gmra.mrb[0].mxu0 %v1293
  %v2948 = vpop.f32.mrb[0].mxu0
  %v2949 = vadd.f32 0.0, %v2948
  %v2950 = vpop.f32.mrb[0].mxu0
  %v2951 = vpop.f32.mrb[0].mxu0
  %v2952 = vadd.f32 0.0, %v2951
  %v2953 = vpop.f32.mrb[0].mxu0
  %2954 = vmatprep.mubr.bf16.mxu0 0
  %2955 = vmatmul.mubr.bf16.gmra.mrb[0].mxu0 %v1294
  %v2956 = vpop.f32.mrb[0].mxu0
  %v2957 = vadd.f32 0.0, %v2956
  %v2958 = vpop.f32.mrb[0].mxu0
  %v2959 = vpop.f32.mrb[0].mxu0
  %v2960 = vadd.f32 0.0, %v2959
  %v2961 = vpop.f32.mrb[0].mxu0
  %2962 = vmatprep.mubr.bf16.mxu0 0
  %2963 = vmatmul.mubr.bf16.gmra.mrb[0].mxu0 %v1295
  %v2964 = vpop.f32.mrb[0].mxu0
  %v2965 = vadd.f32 0.0, %v2964
  %v2966 = vpop.f32.mrb[0].mxu0
  %v2967 = vpop.f32.mrb[0].mxu0
  %v2968 = vadd.f32 0.0, %v2967
  %v2969 = vpop.f32.mrb[0].mxu0
  %2970 = vmatprep.mubr.bf16.mxu0 0
  %2971 = vmatmul.mubr.bf16.gmra.mrb[0].mxu0 %v1296
  %v2972 = vpop.f32.mrb[0].mxu0
  %v2973 = vadd.f32 0.0, %v2972
  %v2974 = vpop.f32.mrb[0].mxu0
  %v2975 = vpop.f32.mrb[0].mxu0
  %v2976 = vadd.f32 0.0, %v2975
  %v2977 = vpop.f32.mrb[0].mxu0
  %2978 = vmatprep.mubr.bf16.mxu0 0
  %2979 = vmatmul.mubr.bf16.gmra.mrb[0].mxu0 %v1297
  %v2980 = vpop.f32.mrb[0].mxu0
  %v2981 = vadd.f32 0.0, %v2980
  %v2982 = vpop.f32.mrb[0].mxu0
  %v2983 = vpop.f32.mrb[0].mxu0
  %v2984 = vadd.f32 0.0, %v2983
  %v2985 = vpop.f32.mrb[0].mxu0
  %2986 = vmatprep.mubr.bf16.mxu0 0
  %2987 = vmatmul.mubr.bf16.gmra.mrb[0].mxu0 %v1298
  %v2988 = vpop.f32.mrb[0].mxu0
  %v2989 = vadd.f32 0.0, %v2988
  %v2990 = vpop.f32.mrb[0].mxu0
  %v2991 = vpop.f32.mrb[0].mxu0
  %v2992 = vadd.f32 0.0, %v2991
  %v2993 = vpop.f32.mrb[0].mxu0
  %2994 = vmatprep.mubr.bf16.mxu0 0
  %2995 = vmatmul.mubr.bf16.gmra.mrb[0].mxu0 %v1299
  %v2996 = vpop.f32.mrb[0].mxu0
  %v2997 = vadd.f32 0.0, %v2996
  %v2998 = vpop.f32.mrb[0].mxu0
  %v2999 = vpop.f32.mrb[0].mxu0
  %v3000 = vadd.f32 0.0, %v2999
  %v3001 = vpop.f32.mrb[0].mxu0
  %3002 = vmatprep.mubr.bf16.mxu0 0
  %3003 = vmatmul.mubr.bf16.gmra.mrb[0].mxu0 %v1300
  %v3004 = vpop.f32.mrb[0].mxu0
  %v3005 = vadd.f32 0.0, %v3004
  %v3006 = vpop.f32.mrb[0].mxu0
  %v3007 = vpop.f32.mrb[0].mxu0
  %v3008 = vadd.f32 0.0, %v3007
  %v3009 = vpop.f32.mrb[0].mxu0
  %3010 = vdwg.mxu0
  %v3011 = vadd.f32 %v1565, %v1568
  %v3012 = vadd.f32 %v3011, %v1573
  %v3013 = vadd.f32 %v3012, %v1576
  %v3014 = vadd.f32 %v3013, %v1581
  %v3015 = vadd.f32 %v3014, %v1584
  %v3016 = vadd.f32 %v3015, %v1589
  %v3017 = vadd.f32 %v3016, %v1592
  %v3018 = vadd.f32 %v3017, %v1597
  %v3019 = vadd.f32 %v3018, %v1600
  %v3020 = vadd.f32 %v3019, %v1605
  %v3021 = vadd.f32 %v3020, %v1608
  %v3022 = vadd.f32 %v3021, %v1613
  %v3023 = vadd.f32 %v3022, %v1616
  %v3024 = vadd.f32 %v3023, %v1621
  %v3025 = vadd.f32 %v3024, %v1624
  %v3026 = vadd.f32 %v3025, %v1629
  %v3027 = vadd.f32 %v3026, %v1632
  %v3028 = vadd.f32 %v3027, %v1637
  %v3029 = vadd.f32 %v3028, %v1640
  %v3030 = vadd.f32 %v3029, %v1645
  %v3031 = vadd.f32 %v3030, %v1648
  %v3032 = vadd.f32 %v3031, %v1653
  %v3033 = vadd.f32 %v3032, %v1656
  %v3034 = vadd.f32 %v3033, %v1661
  %v3035 = vadd.f32 %v3034, %v1664
  %v3036 = vadd.f32 %v3035, %v1669
  %v3037 = vadd.f32 %v3036, %v1672
  %v3038 = vadd.f32 %v3037, %v1677
  %v3039 = vadd.f32 %v3038, %v1680
  %v3040 = vadd.f32 %v3039, %v1685
  %v3041 = vadd.f32 %v3040, %v1688
  %v3042 = vadd.f32 %v3041, %v1693
  %v3043 = vadd.f32 %v3042, %v1696
  %v3044 = vadd.f32 %v3043, %v1701
  %v3045 = vadd.f32 %v3044, %v1704
  %v3046 = vadd.f32 %v3045, %v1709
  %v3047 = vadd.f32 %v3046, %v1712
  %v3048 = vadd.f32 %v3047, %v1717
  %v3049 = vadd.f32 %v3048, %v1720
  %v3050 = vadd.f32 %v3049, %v1725
  %v3051 = vadd.f32 %v3050, %v1728
  %v3052 = vadd.f32 %v3051, %v1733
  %v3053 = vadd.f32 %v3052, %v1736
  %v3054 = vadd.f32 %v3053, %v1741
  %v3055 = vadd.f32 %v3054, %v1744
  %v3056 = vadd.f32 %v3055, %v1749
  %v3057 = vadd.f32 %v3056, %v1752
  %v3058 = vadd.f32 %v3057, %v1757
  %v3059 = vadd.f32 %v3058, %v1760
  %v3060 = vadd.f32 %v3059, %v1765
  %v3061 = vadd.f32 %v3060, %v1768
  %v3062 = vadd.f32 %v3061, %v1773
  %v3063 = vadd.f32 %v3062, %v1776
  %v3064 = vadd.f32 %v3063, %v1781
  %v3065 = vadd.f32 %v3064, %v1784
  %v3066 = vadd.f32 %v3065, %v1789
  %v3067 = vadd.f32 %v3066, %v1792
  %v3068 = vadd.f32 %v3067, %v1797
  %v3069 = vadd.f32 %v3068, %v1800
  %v3070 = vadd.f32 %v3069, %v1805
  %v3071 = vadd.f32 %v3070, %v1808
  %v3072 = vadd.f32 %v3071, %v1813
  %v3073 = vadd.f32 %v3072, %v1816
  %v3074 = vadd.f32 %v3073, %v1821
  %v3075 = vadd.f32 %v3074, %v1824
  %v3076 = vadd.f32 %v3075, %v1829
  %v3077 = vadd.f32 %v3076, %v1832
  %v3078 = vadd.f32 %v3077, %v1837
  %v3079 = vadd.f32 %v3078, %v1840
  %v3080 = vadd.f32 %v3079, %v1845
  %v3081 = vadd.f32 %v3080, %v1848
  %v3082 = vadd.f32 %v3081, %v1853
  %v3083 = vadd.f32 %v3082, %v1856
  %v3084 = vadd.f32 %v3083, %v1861
  %v3085 = vadd.f32 %v3084, %v1864
  %v3086 = vadd.f32 %v3085, %v1869
  %v3087 = vadd.f32 %v3086, %v1872
  %v3088 = vadd.f32 %v3087, %v1877
  %v3089 = vadd.f32 %v3088, %v1880
  %v3090 = vadd.f32 %v3089, %v1885
  %v3091 = vadd.f32 %v3090, %v1888
  %v3092 = vadd.f32 %v3091, %v1893
  %v3093 = vadd.f32 %v3092, %v1896
  %v3094 = vadd.f32 %v3093, %v1901
  %v3095 = vadd.f32 %v3094, %v1904
  %v3096 = vadd.f32 %v3095, %v1909
  %v3097 = vadd.f32 %v3096, %v1912
  %v3098 = vadd.f32 %v3097, %v1917
  %v3099 = vadd.f32 %v3098, %v1920
  %v3100 = vadd.f32 %v3099, %v1925
  %v3101 = vadd.f32 %v3100, %v1928
  %v3102 = vadd.f32 %v3101, %v1933
  %v3103 = vadd.f32 %v3102, %v1936
  %v3104 = vadd.f32 %v3103, %v1941
  %v3105 = vadd.f32 %v3104, %v1944
  %v3106 = vadd.f32 %v3105, %v1949
  %v3107 = vadd.f32 %v3106, %v1952
  %v3108 = vadd.f32 %v3107, %v1957
  %v3109 = vadd.f32 %v3108, %v1960
  %v3110 = vadd.f32 %v3109, %v1965
  %v3111 = vadd.f32 %v3110, %v1968
  %v3112 = vadd.f32 %v3111, %v1973
  %v3113 = vadd.f32 %v3112, %v1976
  %v3114 = vadd.f32 %v3113, %v1981
  %v3115 = vadd.f32 %v3114, %v1984
  %v3116 = vadd.f32 %v3115, %v1989
  %v3117 = vadd.f32 %v3116, %v1992
  %v3118 = vadd.f32 %v3117, %v1997
  %v3119 = vadd.f32 %v3118, %v2000
  %v3120 = vadd.f32 %v3119, %v2005
  %v3121 = vadd.f32 %v3120, %v2008
  %v3122 = vadd.f32 %v3121, %v2013
  %v3123 = vadd.f32 %v3122, %v2016
  %v3124 = vadd.f32 %v3123, %v2021
  %v3125 = vadd.f32 %v3124, %v2024
  %v3126 = vadd.f32 %v3125, %v2029
  %v3127 = vadd.f32 %v3126, %v2032
  %v3128 = vadd.f32 %v3127, %v2037
  %v3129 = vadd.f32 %v3128, %v2040
  %v3130 = vadd.f32 %v3129, %v2045
  %v3131 = vadd.f32 %v3130, %v2048
  %v3132 = vadd.f32 %v3131, %v2053
  %v3133 = vadd.f32 %v3132, %v2056
  %v3134 = vadd.f32 %v3133, %v2061
  %v3135 = vadd.f32 %v3134, %v2064
  %v3136 = vadd.f32 %v3135, %v2069
  %v3137 = vadd.f32 %v3136, %v2072
  %v3138 = vadd.f32 %v3137, %v2077
  %v3139 = vadd.f32 %v3138, %v2080
  %v3140 = vadd.f32 %v3139, %v2085
  %v3141 = vadd.f32 %v3140, %v2088
  %v3142 = vadd.f32 %v3141, %v2093
  %v3143 = vadd.f32 %v3142, %v2096
  %v3144 = vadd.f32 %v3143, %v2101
  %v3145 = vadd.f32 %v3144, %v2104
  %v3146 = vadd.f32 %v3145, %v2109
  %v3147 = vadd.f32 %v3146, %v2112
  %v3148 = vadd.f32 %v3147, %v2117
  %v3149 = vadd.f32 %v3148, %v2120
  %v3150 = vadd.f32 %v3149, %v2125
  %v3151 = vadd.f32 %v3150, %v2128
  %v3152 = vadd.f32 %v3151, %v2133
  %v3153 = vadd.f32 %v3152, %v2136
  %v3154 = vadd.f32 %v3153, %v2141
  %v3155 = vadd.f32 %v3154, %v2144
  %v3156 = vadd.f32 %v3155, %v2149
  %v3157 = vadd.f32 %v3156, %v2152
  %v3158 = vadd.f32 %v3157, %v2157
  %v3159 = vadd.f32 %v3158, %v2160
  %v3160 = vadd.f32 %v3159, %v2165
  %v3161 = vadd.f32 %v3160, %v2168
  %v3162 = vadd.f32 %v3161, %v2173
  %v3163 = vadd.f32 %v3162, %v2176
  %v3164 = vadd.f32 %v3163, %v2181
  %v3165 = vadd.f32 %v3164, %v2184
  %v3166 = vadd.f32 %v3165, %v2189
  %v3167 = vadd.f32 %v3166, %v2192
  %v3168 = vadd.f32 %v3167, %v2197
  %v3169 = vadd.f32 %v3168, %v2200
  %v3170 = vadd.f32 %v3169, %v2205
  %v3171 = vadd.f32 %v3170, %v2208
  %v3172 = vadd.f32 %v3171, %v2213
  %v3173 = vadd.f32 %v3172, %v2216
  %v3174 = vadd.f32 %v3173, %v2221
  %v3175 = vadd.f32 %v3174, %v2224
  %v3176 = vadd.f32 %v3175, %v2229
  %v3177 = vadd.f32 %v3176, %v2232
  %v3178 = vadd.f32 %v3177, %v2237
  %v3179 = vadd.f32 %v3178, %v2240
  %v3180 = vadd.f32 %v3179, %v2245
  %v3181 = vadd.f32 %v3180, %v2248
  %v3182 = vadd.f32 %v3181, %v2253
  %v3183 = vadd.f32 %v3182, %v2256
  %v3184 = vadd.f32 %v3183, %v2261
  %v3185 = vadd.f32 %v3184, %v2264
  %v3186 = vadd.f32 %v3185, %v2269
  %v3187 = vadd.f32 %v3186, %v2272
  %v3188 = vadd.f32 %v3187, %v2277
  %v3189 = vadd.f32 %v3188, %v2280
  %v3190 = vadd.f32 %v3189, %v2285
  %v3191 = vadd.f32 %v3190, %v2288
  %v3192 = vadd.f32 %v3191, %v2293
  %v3193 = vadd.f32 %v3192, %v2296
  %v3194 = vadd.f32 %v3193, %v2301
  %v3195 = vadd.f32 %v3194, %v2304
  %v3196 = vadd.f32 %v3195, %v2309
  %v3197 = vadd.f32 %v3196, %v2312
  %v3198 = vadd.f32 %v3197, %v2317
  %v3199 = vadd.f32 %v3198, %v2320
  %v3200 = vadd.f32 %v3199, %v2325
  %v3201 = vadd.f32 %v3200, %v2328
  %v3202 = vadd.f32 %v3201, %v2333
  %v3203 = vadd.f32 %v3202, %v2336
  %v3204 = vadd.f32 %v3203, %v2341
  %v3205 = vadd.f32 %v3204, %v2344
  %v3206 = vadd.f32 %v3205, %v2349
  %v3207 = vadd.f32 %v3206, %v2352
  %v3208 = vadd.f32 %v3207, %v2357
  %v3209 = vadd.f32 %v3208, %v2360
  %v3210 = vadd.f32 %v3209, %v2365
  %v3211 = vadd.f32 %v3210, %v2368
  %v3212 = vadd.f32 %v3211, %v2373
  %v3213 = vadd.f32 %v3212, %v2376
  %v3214 = vadd.f32 %v3213, %v2381
  %v3215 = vadd.f32 %v3214, %v2384
  %v3216 = vadd.f32 %v3215, %v2389
  %v3217 = vadd.f32 %v3216, %v2392
  %v3218 = vadd.f32 %v3217, %v2397
  %v3219 = vadd.f32 %v3218, %v2400
  %v3220 = vadd.f32 %v3219, %v2405
  %v3221 = vadd.f32 %v3220, %v2408
  %v3222 = vadd.f32 %v3221, %v2413
  %v3223 = vadd.f32 %v3222, %v2416
  %v3224 = vadd.f32 %v3223, %v2421
  %v3225 = vadd.f32 %v3224, %v2424
  %v3226 = vadd.f32 %v3225, %v2429
  %v3227 = vadd.f32 %v3226, %v2432
  %v3228 = vadd.f32 %v3227, %v2437
  %v3229 = vadd.f32 %v3228, %v2440
  %v3230 = vadd.f32 %v3229, %v2445
  %v3231 = vadd.f32 %v3230, %v2448
  %v3232 = vadd.f32 %v3231, %v2453
  %v3233 = vadd.f32 %v3232, %v2456
  %v3234 = vadd.f32 %v3233, %v2461
  %v3235 = vadd.f32 %v3234, %v2464
  %v3236 = vadd.f32 %v3235, %v2469
  %v3237 = vadd.f32 %v3236, %v2472
  %v3238 = vadd.f32 %v3237, %v2477
  %v3239 = vadd.f32 %v3238, %v2480
  %v3240 = vadd.f32 %v3239, %v2485
  %v3241 = vadd.f32 %v3240, %v2488
  %v3242 = vadd.f32 %v3241, %v2493
  %v3243 = vadd.f32 %v3242, %v2496
  %v3244 = vadd.f32 %v3243, %v2501
  %v3245 = vadd.f32 %v3244, %v2504
  %v3246 = vadd.f32 %v3245, %v2509
  %v3247 = vadd.f32 %v3246, %v2512
  %v3248 = vadd.f32 %v3247, %v2517
  %v3249 = vadd.f32 %v3248, %v2520
  %v3250 = vadd.f32 %v3249, %v2525
  %v3251 = vadd.f32 %v3250, %v2528
  %v3252 = vadd.f32 %v3251, %v2533
  %v3253 = vadd.f32 %v3252, %v2536
  %v3254 = vadd.f32 %v3253, %v2541
  %v3255 = vadd.f32 %v3254, %v2544
  %v3256 = vadd.f32 %v3255, %v2549
  %v3257 = vadd.f32 %v3256, %v2552
  %v3258 = vadd.f32 %v3257, %v2557
  %v3259 = vadd.f32 %v3258, %v2560
  %v3260 = vadd.f32 %v3259, %v2565
  %v3261 = vadd.f32 %v3260, %v2568
  %v3262 = vadd.f32 %v3261, %v2573
  %v3263 = vadd.f32 %v3262, %v2576
  %v3264 = vadd.f32 %v3263, %v2581
  %v3265 = vadd.f32 %v3264, %v2584
  %v3266 = vadd.f32 %v3265, %v2589
  %v3267 = vadd.f32 %v3266, %v2592
  %v3268 = vadd.f32 %v3267, %v2597
  %v3269 = vadd.f32 %v3268, %v2600
  %v3270 = vadd.f32 %v3269, %v2605
  %v3271 = vadd.f32 %v3270, %v2608
  %v3272 = vadd.f32 %v3271, %v2613
  %v3273 = vadd.f32 %v3272, %v2616
  %v3274 = vadd.f32 %v3273, %v2621
  %v3275 = vadd.f32 %v3274, %v2624
  %v3276 = vadd.f32 %v3275, %v2629
  %v3277 = vadd.f32 %v3276, %v2632
  %v3278 = vadd.f32 %v3277, %v2637
  %v3279 = vadd.f32 %v3278, %v2640
  %v3280 = vadd.f32 %v3279, %v2645
  %v3281 = vadd.f32 %v3280, %v2648
  %v3282 = vadd.f32 %v3281, %v2653
  %v3283 = vadd.f32 %v3282, %v2656
  %v3284 = vadd.f32 %v3283, %v2661
  %v3285 = vadd.f32 %v3284, %v2664
  %v3286 = vadd.f32 %v3285, %v2669
  %v3287 = vadd.f32 %v3286, %v2672
  %v3288 = vadd.f32 %v3287, %v2677
  %v3289 = vadd.f32 %v3288, %v2680
  %v3290 = vadd.f32 %v3289, %v2685
  %v3291 = vadd.f32 %v3290, %v2688
  %v3292 = vadd.f32 %v3291, %v2693
  %v3293 = vadd.f32 %v3292, %v2696
  %v3294 = vadd.f32 %v3293, %v2701
  %v3295 = vadd.f32 %v3294, %v2704
  %v3296 = vadd.f32 %v3295, %v2709
  %v3297 = vadd.f32 %v3296, %v2712
  %v3298 = vadd.f32 %v3297, %v2717
  %v3299 = vadd.f32 %v3298, %v2720
  %v3300 = vadd.f32 %v3299, %v2725
  %v3301 = vadd.f32 %v3300, %v2728
  %v3302 = vadd.f32 %v3301, %v2733
  %v3303 = vadd.f32 %v3302, %v2736
  %v3304 = vadd.f32 %v3303, %v2741
  %v3305 = vadd.f32 %v3304, %v2744
  %v3306 = vadd.f32 %v3305, %v2749
  %v3307 = vadd.f32 %v3306, %v2752
  %v3308 = vadd.f32 %v3307, %v2757
  %v3309 = vadd.f32 %v3308, %v2760
  %v3310 = vadd.f32 %v3309, %v2765
  %v3311 = vadd.f32 %v3310, %v2768
  %v3312 = vadd.f32 %v3311, %v2773
  %v3313 = vadd.f32 %v3312, %v2776
  %v3314 = vadd.f32 %v3313, %v2781
  %v3315 = vadd.f32 %v3314, %v2784
  %v3316 = vadd.f32 %v3315, %v2789
  %v3317 = vadd.f32 %v3316, %v2792
  %v3318 = vadd.f32 %v3317, %v2797
  %v3319 = vadd.f32 %v3318, %v2800
  %v3320 = vadd.f32 %v3319, %v2805
  %v3321 = vadd.f32 %v3320, %v2808
  %v3322 = vadd.f32 %v3321, %v2813
  %v3323 = vadd.f32 %v3322, %v2816
  %v3324 = vadd.f32 %v3323, %v2821
  %v3325 = vadd.f32 %v3324, %v2824
  %v3326 = vadd.f32 %v3325, %v2829
  %v3327 = vadd.f32 %v3326, %v2832
  %v3328 = vadd.f32 %v3327, %v2837
  %v3329 = vadd.f32 %v3328, %v2840
  %v3330 = vadd.f32 %v3329, %v2845
  %v3331 = vadd.f32 %v3330, %v2848
  %v3332 = vadd.f32 %v3331, %v2853
  %v3333 = vadd.f32 %v3332, %v2856
  %v3334 = vadd.f32 %v3333, %v2861
  %v3335 = vadd.f32 %v3334, %v2864
  %v3336 = vadd.f32 %v3335, %v2869
  %v3337 = vadd.f32 %v3336, %v2872
  %v3338 = vadd.f32 %v3337, %v2877
  %v3339 = vadd.f32 %v3338, %v2880
  %v3340 = vadd.f32 %v3339, %v2885
  %v3341 = vadd.f32 %v3340, %v2888
  %v3342 = vadd.f32 %v3341, %v2893
  %v3343 = vadd.f32 %v3342, %v2896
  %v3344 = vadd.f32 %v3343, %v2901
  %v3345 = vadd.f32 %v3344, %v2904
  %v3346 = vadd.f32 %v3345, %v2909
  %v3347 = vadd.f32 %v3346, %v2912
  %v3348 = vadd.f32 %v3347, %v2917
  %v3349 = vadd.f32 %v3348, %v2920
  %v3350 = vadd.f32 %v3349, %v2925
  %v3351 = vadd.f32 %v3350, %v2928
  %v3352 = vadd.f32 %v3351, %v2933
  %v3353 = vadd.f32 %v3352, %v2936
  %v3354 = vadd.f32 %v3353, %v2941
  %v3355 = vadd.f32 %v3354, %v2944
  %v3356 = vadd.f32 %v3355, %v2949
  %v3357 = vadd.f32 %v3356, %v2952
  %v3358 = vadd.f32 %v3357, %v2957
  %v3359 = vadd.f32 %v3358, %v2960
  %v3360 = vadd.f32 %v3359, %v2965
  %v3361 = vadd.f32 %v3360, %v2968
  %v3362 = vadd.f32 %v3361, %v2973
  %v3363 = vadd.f32 %v3362, %v2976
  %v3364 = vadd.f32 %v3363, %v2981
  %v3365 = vadd.f32 %v3364, %v2984
  %v3366 = vadd.f32 %v3365, %v2989
  %v3367 = vadd.f32 %v3366, %v2992
  %v3368 = vadd.f32 %v3367, %v2997
  %v3369 = vadd.f32 %v3368, %v3000
  %v3370 = vadd.f32 %v3369, %v3005
  %v3371 = vadd.f32 %v3370, %v3008
  %v3372 = vrot.slane %v3371, 4
  %v3373 = vadd.f32 %v3371, %v3372
  %v3374 = vrot.slane %v3373, 2
  %v3375 = vadd.f32 %v3373, %v3374
  %v3376 = vrot.slane %v3375, 1
  %v3377 = vadd.f32 %v3375, %v3376
  %v3378 = vmul.f32 %v3377, 0.00034626038
  %v3379 = vmul.f32 %v1565, %v1565
  %v3380 = vmul.f32 %v1568, %v1568
  %v3381 = vmul.f32 %v1573, %v1573
  %v3382 = vmul.f32 %v1576, %v1576
  %v3383 = vmul.f32 %v1581, %v1581
  %v3384 = vmul.f32 %v1584, %v1584
  %v3385 = vmul.f32 %v1589, %v1589
  %v3386 = vmul.f32 %v1592, %v1592
  %v3387 = vmul.f32 %v1597, %v1597
  %v3388 = vmul.f32 %v1600, %v1600
  %v3389 = vmul.f32 %v1605, %v1605
  %v3390 = vmul.f32 %v1608, %v1608
  %v3391 = vmul.f32 %v1613, %v1613
  %v3392 = vmul.f32 %v1616, %v1616
  %v3393 = vmul.f32 %v1621, %v1621
  %v3394 = vmul.f32 %v1624, %v1624
  %v3395 = vmul.f32 %v1629, %v1629
  %v3396 = vmul.f32 %v1632, %v1632
  %v3397 = vmul.f32 %v1637, %v1637
  %v3398 = vmul.f32 %v1640, %v1640
  %v3399 = vmul.f32 %v1645, %v1645
  %v3400 = vmul.f32 %v1648, %v1648
  %v3401 = vmul.f32 %v1653, %v1653
  %v3402 = vmul.f32 %v1656, %v1656
  %v3403 = vmul.f32 %v1661, %v1661
  %v3404 = vmul.f32 %v1664, %v1664
  %v3405 = vmul.f32 %v1669, %v1669
  %v3406 = vmul.f32 %v1672, %v1672
  %v3407 = vmul.f32 %v1677, %v1677
  %v3408 = vmul.f32 %v1680, %v1680
  %v3409 = vmul.f32 %v1685, %v1685
  %v3410 = vmul.f32 %v1688, %v1688
  %v3411 = vmul.f32 %v1693, %v1693
  %v3412 = vmul.f32 %v1696, %v1696
  %v3413 = vmul.f32 %v1701, %v1701
  %v3414 = vmul.f32 %v1704, %v1704
  %v3415 = vmul.f32 %v1709, %v1709
  %v3416 = vmul.f32 %v1712, %v1712
  %v3417 = vmul.f32 %v1717, %v1717
  %v3418 = vmul.f32 %v1720, %v1720
  %v3419 = vmul.f32 %v1725, %v1725
  %v3420 = vmul.f32 %v1728, %v1728
  %v3421 = vmul.f32 %v1733, %v1733
  %v3422 = vmul.f32 %v1736, %v1736
  %v3423 = vmul.f32 %v1741, %v1741
  %v3424 = vmul.f32 %v1744, %v1744
  %v3425 = vmul.f32 %v1749, %v1749
  %v3426 = vmul.f32 %v1752, %v1752
  %v3427 = vmul.f32 %v1757, %v1757
  %v3428 = vmul.f32 %v1760, %v1760
  %v3429 = vmul.f32 %v1765, %v1765
  %v3430 = vmul.f32 %v1768, %v1768
  %v3431 = vmul.f32 %v1773, %v1773
  %v3432 = vmul.f32 %v1776, %v1776
  %v3433 = vmul.f32 %v1781, %v1781
  %v3434 = vmul.f32 %v1784, %v1784
  %v3435 = vmul.f32 %v1789, %v1789
  %v3436 = vmul.f32 %v1792, %v1792
  %v3437 = vmul.f32 %v1797, %v1797
  %v3438 = vmul.f32 %v1800, %v1800
  %v3439 = vmul.f32 %v1805, %v1805
  %v3440 = vmul.f32 %v1808, %v1808
  %v3441 = vmul.f32 %v1813, %v1813
  %v3442 = vmul.f32 %v1816, %v1816
  %v3443 = vmul.f32 %v1821, %v1821
  %v3444 = vmul.f32 %v1824, %v1824
  %v3445 = vmul.f32 %v1829, %v1829
  %v3446 = vmul.f32 %v1832, %v1832
  %v3447 = vmul.f32 %v1837, %v1837
  %v3448 = vmul.f32 %v1840, %v1840
  %v3449 = vmul.f32 %v1845, %v1845
  %v3450 = vmul.f32 %v1848, %v1848
  %v3451 = vmul.f32 %v1853, %v1853
  %v3452 = vmul.f32 %v1856, %v1856
  %v3453 = vmul.f32 %v1861, %v1861
  %v3454 = vmul.f32 %v1864, %v1864
  %v3455 = vmul.f32 %v1869, %v1869
  %v3456 = vmul.f32 %v1872, %v1872
  %v3457 = vmul.f32 %v1877, %v1877
  %v3458 = vmul.f32 %v1880, %v1880
  %v3459 = vmul.f32 %v1885, %v1885
  %v3460 = vmul.f32 %v1888, %v1888
  %v3461 = vmul.f32 %v1893, %v1893
  %v3462 = vmul.f32 %v1896, %v1896
  %v3463 = vmul.f32 %v1901, %v1901
  %v3464 = vmul.f32 %v1904, %v1904
  %v3465 = vmul.f32 %v1909, %v1909
  %v3466 = vmul.f32 %v1912, %v1912
  %v3467 = vmul.f32 %v1917, %v1917
  %v3468 = vmul.f32 %v1920, %v1920
  %v3469 = vmul.f32 %v1925, %v1925
  %v3470 = vmul.f32 %v1928, %v1928
  %v3471 = vmul.f32 %v1933, %v1933
  %v3472 = vmul.f32 %v1936, %v1936
  %v3473 = vmul.f32 %v1941, %v1941
  %v3474 = vmul.f32 %v1944, %v1944
  %v3475 = vmul.f32 %v1949, %v1949
  %v3476 = vmul.f32 %v1952, %v1952
  %v3477 = vmul.f32 %v1957, %v1957
  %v3478 = vmul.f32 %v1960, %v1960
  %v3479 = vmul.f32 %v1965, %v1965
  %v3480 = vmul.f32 %v1968, %v1968
  %v3481 = vmul.f32 %v1973, %v1973
  %v3482 = vmul.f32 %v1976, %v1976
  %v3483 = vmul.f32 %v1981, %v1981
  %v3484 = vmul.f32 %v1984, %v1984
  %v3485 = vmul.f32 %v1989, %v1989
  %v3486 = vmul.f32 %v1992, %v1992
  %v3487 = vmul.f32 %v1997, %v1997
  %v3488 = vmul.f32 %v2000, %v2000
  %v3489 = vmul.f32 %v2005, %v2005
  %v3490 = vmul.f32 %v2008, %v2008
  %v3491 = vmul.f32 %v2013, %v2013
  %v3492 = vmul.f32 %v2016, %v2016
  %v3493 = vmul.f32 %v2021, %v2021
  %v3494 = vmul.f32 %v2024, %v2024
  %v3495 = vmul.f32 %v2029, %v2029
  %v3496 = vmul.f32 %v2032, %v2032
  %v3497 = vmul.f32 %v2037, %v2037
  %v3498 = vmul.f32 %v2040, %v2040
  %v3499 = vmul.f32 %v2045, %v2045
  %v3500 = vmul.f32 %v2048, %v2048
  %v3501 = vmul.f32 %v2053, %v2053
  %v3502 = vmul.f32 %v2056, %v2056
  %v3503 = vmul.f32 %v2061, %v2061
  %v3504 = vmul.f32 %v2064, %v2064
  %v3505 = vmul.f32 %v2069, %v2069
  %v3506 = vmul.f32 %v2072, %v2072
  %v3507 = vmul.f32 %v2077, %v2077
  %v3508 = vmul.f32 %v2080, %v2080
  %v3509 = vmul.f32 %v2085, %v2085
  %v3510 = vmul.f32 %v2088, %v2088
  %v3511 = vmul.f32 %v2093, %v2093
  %v3512 = vmul.f32 %v2096, %v2096
  %v3513 = vmul.f32 %v2101, %v2101
  %v3514 = vmul.f32 %v2104, %v2104
  %v3515 = vmul.f32 %v2109, %v2109
  %v3516 = vmul.f32 %v2112, %v2112
  %v3517 = vmul.f32 %v2117, %v2117
  %v3518 = vmul.f32 %v2120, %v2120
  %v3519 = vmul.f32 %v2125, %v2125
  %v3520 = vmul.f32 %v2128, %v2128
  %v3521 = vmul.f32 %v2133, %v2133
  %v3522 = vmul.f32 %v2136, %v2136
  %v3523 = vmul.f32 %v2141, %v2141
  %v3524 = vmul.f32 %v2144, %v2144
  %v3525 = vmul.f32 %v2149, %v2149
  %v3526 = vmul.f32 %v2152, %v2152
  %v3527 = vmul.f32 %v2157, %v2157
  %v3528 = vmul.f32 %v2160, %v2160
  %v3529 = vmul.f32 %v2165, %v2165
  %v3530 = vmul.f32 %v2168, %v2168
  %v3531 = vmul.f32 %v2173, %v2173
  %v3532 = vmul.f32 %v2176, %v2176
  %v3533 = vmul.f32 %v2181, %v2181
  %v3534 = vmul.f32 %v2184, %v2184
  %v3535 = vmul.f32 %v2189, %v2189
  %v3536 = vmul.f32 %v2192, %v2192
  %v3537 = vmul.f32 %v2197, %v2197
  %v3538 = vmul.f32 %v2200, %v2200
  %v3539 = vmul.f32 %v2205, %v2205
  %v3540 = vmul.f32 %v2208, %v2208
  %v3541 = vmul.f32 %v2213, %v2213
  %v3542 = vmul.f32 %v2216, %v2216
  %v3543 = vmul.f32 %v2221, %v2221
  %v3544 = vmul.f32 %v2224, %v2224
  %v3545 = vmul.f32 %v2229, %v2229
  %v3546 = vmul.f32 %v2232, %v2232
  %v3547 = vmul.f32 %v2237, %v2237
  %v3548 = vmul.f32 %v2240, %v2240
  %v3549 = vmul.f32 %v2245, %v2245
  %v3550 = vmul.f32 %v2248, %v2248
  %v3551 = vmul.f32 %v2253, %v2253
  %v3552 = vmul.f32 %v2256, %v2256
  %v3553 = vmul.f32 %v2261, %v2261
  %v3554 = vmul.f32 %v2264, %v2264
  %v3555 = vmul.f32 %v2269, %v2269
  %v3556 = vmul.f32 %v2272, %v2272
  %v3557 = vmul.f32 %v2277, %v2277
  %v3558 = vmul.f32 %v2280, %v2280
  %v3559 = vmul.f32 %v2285, %v2285
  %v3560 = vmul.f32 %v2288, %v2288
  %v3561 = vmul.f32 %v2293, %v2293
  %v3562 = vmul.f32 %v2296, %v2296
  %v3563 = vmul.f32 %v2301, %v2301
  %v3564 = vmul.f32 %v2304, %v2304
  %v3565 = vmul.f32 %v2309, %v2309
  %v3566 = vmul.f32 %v2312, %v2312
  %v3567 = vmul.f32 %v2317, %v2317
  %v3568 = vmul.f32 %v2320, %v2320
  %v3569 = vmul.f32 %v2325, %v2325
  %v3570 = vmul.f32 %v2328, %v2328
  %v3571 = vmul.f32 %v2333, %v2333
  %v3572 = vmul.f32 %v2336, %v2336
  %v3573 = vmul.f32 %v2341, %v2341
  %v3574 = vmul.f32 %v2344, %v2344
  %v3575 = vmul.f32 %v2349, %v2349
  %v3576 = vmul.f32 %v2352, %v2352
  %v3577 = vmul.f32 %v2357, %v2357
  %v3578 = vmul.f32 %v2360, %v2360
  %v3579 = vmul.f32 %v2365, %v2365
  %v3580 = vmul.f32 %v2368, %v2368
  %v3581 = vmul.f32 %v2373, %v2373
  %v3582 = vmul.f32 %v2376, %v2376
  %v3583 = vmul.f32 %v2381, %v2381
  %v3584 = vmul.f32 %v2384, %v2384
  %v3585 = vmul.f32 %v2389, %v2389
  %v3586 = vmul.f32 %v2392, %v2392
  %v3587 = vmul.f32 %v2397, %v2397
  %v3588 = vmul.f32 %v2400, %v2400
  %v3589 = vmul.f32 %v2405, %v2405
  %v3590 = vmul.f32 %v2408, %v2408
  %v3591 = vmul.f32 %v2413, %v2413
  %v3592 = vmul.f32 %v2416, %v2416
  %v3593 = vmul.f32 %v2421, %v2421
  %v3594 = vmul.f32 %v2424, %v2424
  %v3595 = vmul.f32 %v2429, %v2429
  %v3596 = vmul.f32 %v2432, %v2432
  %v3597 = vmul.f32 %v2437, %v2437
  %v3598 = vmul.f32 %v2440, %v2440
  %v3599 = vmul.f32 %v2445, %v2445
  %v3600 = vmul.f32 %v2448, %v2448
  %v3601 = vmul.f32 %v2453, %v2453
  %v3602 = vmul.f32 %v2456, %v2456
  %v3603 = vmul.f32 %v2461, %v2461
  %v3604 = vmul.f32 %v2464, %v2464
  %v3605 = vmul.f32 %v2469, %v2469
  %v3606 = vmul.f32 %v2472, %v2472
  %v3607 = vmul.f32 %v2477, %v2477
  %v3608 = vmul.f32 %v2480, %v2480
  %v3609 = vmul.f32 %v2485, %v2485
  %v3610 = vmul.f32 %v2488, %v2488
  %v3611 = vmul.f32 %v2493, %v2493
  %v3612 = vmul.f32 %v2496, %v2496
  %v3613 = vmul.f32 %v2501, %v2501
  %v3614 = vmul.f32 %v2504, %v2504
  %v3615 = vmul.f32 %v2509, %v2509
  %v3616 = vmul.f32 %v2512, %v2512
  %v3617 = vmul.f32 %v2517, %v2517
  %v3618 = vmul.f32 %v2520, %v2520
  %v3619 = vmul.f32 %v2525, %v2525
  %v3620 = vmul.f32 %v2528, %v2528
  %v3621 = vmul.f32 %v2533, %v2533
  %v3622 = vmul.f32 %v2536, %v2536
  %v3623 = vmul.f32 %v2541, %v2541
  %v3624 = vmul.f32 %v2544, %v2544
  %v3625 = vmul.f32 %v2549, %v2549
  %v3626 = vmul.f32 %v2552, %v2552
  %v3627 = vmul.f32 %v2557, %v2557
  %v3628 = vmul.f32 %v2560, %v2560
  %v3629 = vmul.f32 %v2565, %v2565
  %v3630 = vmul.f32 %v2568, %v2568
  %v3631 = vmul.f32 %v2573, %v2573
  %v3632 = vmul.f32 %v2576, %v2576
  %v3633 = vmul.f32 %v2581, %v2581
  %v3634 = vmul.f32 %v2584, %v2584
  %v3635 = vmul.f32 %v2589, %v2589
  %v3636 = vmul.f32 %v2592, %v2592
  %v3637 = vmul.f32 %v2597, %v2597
  %v3638 = vmul.f32 %v2600, %v2600
  %v3639 = vmul.f32 %v2605, %v2605
  %v3640 = vmul.f32 %v2608, %v2608
  %v3641 = vmul.f32 %v2613, %v2613
  %v3642 = vmul.f32 %v2616, %v2616
  %v3643 = vmul.f32 %v2621, %v2621
  %v3644 = vmul.f32 %v2624, %v2624
  %v3645 = vmul.f32 %v2629, %v2629
  %v3646 = vmul.f32 %v2632, %v2632
  %v3647 = vmul.f32 %v2637, %v2637
  %v3648 = vmul.f32 %v2640, %v2640
  %v3649 = vmul.f32 %v2645, %v2645
  %v3650 = vmul.f32 %v2648, %v2648
  %v3651 = vmul.f32 %v2653, %v2653
  %v3652 = vmul.f32 %v2656, %v2656
  %v3653 = vmul.f32 %v2661, %v2661
  %v3654 = vmul.f32 %v2664, %v2664
  %v3655 = vmul.f32 %v2669, %v2669
  %v3656 = vmul.f32 %v2672, %v2672
  %v3657 = vmul.f32 %v2677, %v2677
  %v3658 = vmul.f32 %v2680, %v2680
  %v3659 = vmul.f32 %v2685, %v2685
  %v3660 = vmul.f32 %v2688, %v2688
  %v3661 = vmul.f32 %v2693, %v2693
  %v3662 = vmul.f32 %v2696, %v2696
  %v3663 = vmul.f32 %v2701, %v2701
  %v3664 = vmul.f32 %v2704, %v2704
  %v3665 = vmul.f32 %v2709, %v2709
  %v3666 = vmul.f32 %v2712, %v2712
  %v3667 = vmul.f32 %v2717, %v2717
  %v3668 = vmul.f32 %v2720, %v2720
  %v3669 = vmul.f32 %v2725, %v2725
  %v3670 = vmul.f32 %v2728, %v2728
  %v3671 = vmul.f32 %v2733, %v2733
  %v3672 = vmul.f32 %v2736, %v2736
  %v3673 = vmul.f32 %v2741, %v2741
  %v3674 = vmul.f32 %v2744, %v2744
  %v3675 = vmul.f32 %v2749, %v2749
  %v3676 = vmul.f32 %v2752, %v2752
  %v3677 = vmul.f32 %v2757, %v2757
  %v3678 = vmul.f32 %v2760, %v2760
  %v3679 = vmul.f32 %v2765, %v2765
  %v3680 = vmul.f32 %v2768, %v2768
  %v3681 = vmul.f32 %v2773, %v2773
  %v3682 = vmul.f32 %v2776, %v2776
  %v3683 = vmul.f32 %v2781, %v2781
  %v3684 = vmul.f32 %v2784, %v2784
  %v3685 = vmul.f32 %v2789, %v2789
  %v3686 = vmul.f32 %v2792, %v2792
  %v3687 = vmul.f32 %v2797, %v2797
  %v3688 = vmul.f32 %v2800, %v2800
  %v3689 = vmul.f32 %v2805, %v2805
  %v3690 = vmul.f32 %v2808, %v2808
  %v3691 = vmul.f32 %v2813, %v2813
  %v3692 = vmul.f32 %v2816, %v2816
  %v3693 = vmul.f32 %v2821, %v2821
  %v3694 = vmul.f32 %v2824, %v2824
  %v3695 = vmul.f32 %v2829, %v2829
  %v3696 = vmul.f32 %v2832, %v2832
  %v3697 = vmul.f32 %v2837, %v2837
  %v3698 = vmul.f32 %v2840, %v2840
  %v3699 = vmul.f32 %v2845, %v2845
  %v3700 = vmul.f32 %v2848, %v2848
  %v3701 = vmul.f32 %v2853, %v2853
  %v3702 = vmul.f32 %v2856, %v2856
  %v3703 = vmul.f32 %v2861, %v2861
  %v3704 = vmul.f32 %v2864, %v2864
  %v3705 = vmul.f32 %v2869, %v2869
  %v3706 = vmul.f32 %v2872, %v2872
  %v3707 = vmul.f32 %v2877, %v2877
  %v3708 = vmul.f32 %v2880, %v2880
  %v3709 = vmul.f32 %v2885, %v2885
  %v3710 = vmul.f32 %v2888, %v2888
  %v3711 = vmul.f32 %v2893, %v2893
  %v3712 = vmul.f32 %v2896, %v2896
  %v3713 = vmul.f32 %v2901, %v2901
  %v3714 = vmul.f32 %v2904, %v2904
  %v3715 = vmul.f32 %v2909, %v2909
  %v3716 = vmul.f32 %v2912, %v2912
  %v3717 = vmul.f32 %v2917, %v2917
  %v3718 = vmul.f32 %v2920, %v2920
  %v3719 = vmul.f32 %v2925, %v2925
  %v3720 = vmul.f32 %v2928, %v2928
  %v3721 = vmul.f32 %v2933, %v2933
  %v3722 = vmul.f32 %v2936, %v2936
  %v3723 = vmul.f32 %v2941, %v2941
  %v3724 = vmul.f32 %v2944, %v2944
  %v3725 = vmul.f32 %v2949, %v2949
  %v3726 = vmul.f32 %v2952, %v2952
  %v3727 = vmul.f32 %v2957, %v2957
  %v3728 = vmul.f32 %v2960, %v2960
  %v3729 = vmul.f32 %v2965, %v2965
  %v3730 = vmul.f32 %v2968, %v2968
  %v3731 = vmul.f32 %v2973, %v2973
  %v3732 = vmul.f32 %v2976, %v2976
  %v3733 = vmul.f32 %v2981, %v2981
  %v3734 = vmul.f32 %v2984, %v2984
  %v3735 = vmul.f32 %v2989, %v2989
  %v3736 = vmul.f32 %v2992, %v2992
  %v3737 = vmul.f32 %v2997, %v2997
  %v3738 = vmul.f32 %v3000, %v3000
  %v3739 = vmul.f32 %v3005, %v3005
  %v3740 = vmul.f32 %v3008, %v3008
  %v3741 = vadd.f32 %v3379, %v3380
  %v3742 = vadd.f32 %v3741, %v3381
  %v3743 = vadd.f32 %v3742, %v3382
  %v3744 = vadd.f32 %v3743, %v3383
  %v3745 = vadd.f32 %v3744, %v3384
  %v3746 = vadd.f32 %v3745, %v3385
  %v3747 = vadd.f32 %v3746, %v3386
  %v3748 = vadd.f32 %v3747, %v3387
  %v3749 = vadd.f32 %v3748, %v3388
  %v3750 = vadd.f32 %v3749, %v3389
  %v3751 = vadd.f32 %v3750, %v3390
  %v3752 = vadd.f32 %v3751, %v3391
  %v3753 = vadd.f32 %v3752, %v3392
  %v3754 = vadd.f32 %v3753, %v3393
  %v3755 = vadd.f32 %v3754, %v3394
  %v3756 = vadd.f32 %v3755, %v3395
  %v3757 = vadd.f32 %v3756, %v3396
  %v3758 = vadd.f32 %v3757, %v3397
  %v3759 = vadd.f32 %v3758, %v3398
  %v3760 = vadd.f32 %v3759, %v3399
  %v3761 = vadd.f32 %v3760, %v3400
  %v3762 = vadd.f32 %v3761, %v3401
  %v3763 = vadd.f32 %v3762, %v3402
  %v3764 = vadd.f32 %v3763, %v3403
  %v3765 = vadd.f32 %v3764, %v3404
  %v3766 = vadd.f32 %v3765, %v3405
  %v3767 = vadd.f32 %v3766, %v3406
  %v3768 = vadd.f32 %v3767, %v3407
  %v3769 = vadd.f32 %v3768, %v3408
  %v3770 = vadd.f32 %v3769, %v3409
  %v3771 = vadd.f32 %v3770, %v3410
  %v3772 = vadd.f32 %v3771, %v3411
  %v3773 = vadd.f32 %v3772, %v3412
  %v3774 = vadd.f32 %v3773, %v3413
  %v3775 = vadd.f32 %v3774, %v3414
  %v3776 = vadd.f32 %v3775, %v3415
  %v3777 = vadd.f32 %v3776, %v3416
  %v3778 = vadd.f32 %v3777, %v3417
  %v3779 = vadd.f32 %v3778, %v3418
  %v3780 = vadd.f32 %v3779, %v3419
  %v3781 = vadd.f32 %v3780, %v3420
  %v3782 = vadd.f32 %v3781, %v3421
  %v3783 = vadd.f32 %v3782, %v3422
  %v3784 = vadd.f32 %v3783, %v3423
  %v3785 = vadd.f32 %v3784, %v3424
  %v3786 = vadd.f32 %v3785, %v3425
  %v3787 = vadd.f32 %v3786, %v3426
  %v3788 = vadd.f32 %v3787, %v3427
  %v3789 = vadd.f32 %v3788, %v3428
  %v3790 = vadd.f32 %v3789, %v3429
  %v3791 = vadd.f32 %v3790, %v3430
  %v3792 = vadd.f32 %v3791, %v3431
  %v3793 = vadd.f32 %v3792, %v3432
  %v3794 = vadd.f32 %v3793, %v3433
  %v3795 = vadd.f32 %v3794, %v3434
  %v3796 = vadd.f32 %v3795, %v3435
  %v3797 = vadd.f32 %v3796, %v3436
  %v3798 = vadd.f32 %v3797, %v3437
  %v3799 = vadd.f32 %v3798, %v3438
  %v3800 = vadd.f32 %v3799, %v3439
  %v3801 = vadd.f32 %v3800, %v3440
  %v3802 = vadd.f32 %v3801, %v3441
  %v3803 = vadd.f32 %v3802, %v3442
  %v3804 = vadd.f32 %v3803, %v3443
  %v3805 = vadd.f32 %v3804, %v3444
  %v3806 = vadd.f32 %v3805, %v3445
  %v3807 = vadd.f32 %v3806, %v3446
  %v3808 = vadd.f32 %v3807, %v3447
  %v3809 = vadd.f32 %v3808, %v3448
  %v3810 = vadd.f32 %v3809, %v3449
  %v3811 = vadd.f32 %v3810, %v3450
  %v3812 = vadd.f32 %v3811, %v3451
  %v3813 = vadd.f32 %v3812, %v3452
  %v3814 = vadd.f32 %v3813, %v3453
  %v3815 = vadd.f32 %v3814, %v3454
  %v3816 = vadd.f32 %v3815, %v3455
  %v3817 = vadd.f32 %v3816, %v3456
  %v3818 = vadd.f32 %v3817, %v3457
  %v3819 = vadd.f32 %v3818, %v3458
  %v3820 = vadd.f32 %v3819, %v3459
  %v3821 = vadd.f32 %v3820, %v3460
  %v3822 = vadd.f32 %v3821, %v3461
  %v3823 = vadd.f32 %v3822, %v3462
  %v3824 = vadd.f32 %v3823, %v3463
  %v3825 = vadd.f32 %v3824, %v3464
  %v3826 = vadd.f32 %v3825, %v3465
  %v3827 = vadd.f32 %v3826, %v3466
  %v3828 = vadd.f32 %v3827, %v3467
  %v3829 = vadd.f32 %v3828, %v3468
  %v3830 = vadd.f32 %v3829, %v3469
  %v3831 = vadd.f32 %v3830, %v3470
  %v3832 = vadd.f32 %v3831, %v3471
  %v3833 = vadd.f32 %v3832, %v3472
  %v3834 = vadd.f32 %v3833, %v3473
  %v3835 = vadd.f32 %v3834, %v3474
  %v3836 = vadd.f32 %v3835, %v3475
  %v3837 = vadd.f32 %v3836, %v3476
  %v3838 = vadd.f32 %v3837, %v3477
  %v3839 = vadd.f32 %v3838, %v3478
  %v3840 = vadd.f32 %v3839, %v3479
  %v3841 = vadd.f32 %v3840, %v3480
  %v3842 = vadd.f32 %v3841, %v3481
  %v3843 = vadd.f32 %v3842, %v3482
  %v3844 = vadd.f32 %v3843, %v3483
  %v3845 = vadd.f32 %v3844, %v3484
  %v3846 = vadd.f32 %v3845, %v3485
  %v3847 = vadd.f32 %v3846, %v3486
  %v3848 = vadd.f32 %v3847, %v3487
  %v3849 = vadd.f32 %v3848, %v3488
  %v3850 = vadd.f32 %v3849, %v3489
  %v3851 = vadd.f32 %v3850, %v3490
  %v3852 = vadd.f32 %v3851, %v3491
  %v3853 = vadd.f32 %v3852, %v3492
  %v3854 = vadd.f32 %v3853, %v3493
  %v3855 = vadd.f32 %v3854, %v3494
  %v3856 = vadd.f32 %v3855, %v3495
  %v3857 = vadd.f32 %v3856, %v3496
  %v3858 = vadd.f32 %v3857, %v3497
  %v3859 = vadd.f32 %v3858, %v3498
  %v3860 = vadd.f32 %v3859, %v3499
  %v3861 = vadd.f32 %v3860, %v3500
  %v3862 = vadd.f32 %v3861, %v3501
  %v3863 = vadd.f32 %v3862, %v3502
  %v3864 = vadd.f32 %v3863, %v3503
  %v3865 = vadd.f32 %v3864, %v3504
  %v3866 = vadd.f32 %v3865, %v3505
  %v3867 = vadd.f32 %v3866, %v3506
  %v3868 = vadd.f32 %v3867, %v3507
  %v3869 = vadd.f32 %v3868, %v3508
  %v3870 = vadd.f32 %v3869, %v3509
  %v3871 = vadd.f32 %v3870, %v3510
  %v3872 = vadd.f32 %v3871, %v3511
  %v3873 = vadd.f32 %v3872, %v3512
  %v3874 = vadd.f32 %v3873, %v3513
  %v3875 = vadd.f32 %v3874, %v3514
  %v3876 = vadd.f32 %v3875, %v3515
  %v3877 = vadd.f32 %v3876, %v3516
  %v3878 = vadd.f32 %v3877, %v3517
  %v3879 = vadd.f32 %v3878, %v3518
  %v3880 = vadd.f32 %v3879, %v3519
  %v3881 = vadd.f32 %v3880, %v3520
  %v3882 = vadd.f32 %v3881, %v3521
  %v3883 = vadd.f32 %v3882, %v3522
  %v3884 = vadd.f32 %v3883, %v3523
  %v3885 = vadd.f32 %v3884, %v3524
  %v3886 = vadd.f32 %v3885, %v3525
  %v3887 = vadd.f32 %v3886, %v3526
  %v3888 = vadd.f32 %v3887, %v3527
  %v3889 = vadd.f32 %v3888, %v3528
  %v3890 = vadd.f32 %v3889, %v3529
  %v3891 = vadd.f32 %v3890, %v3530
  %v3892 = vadd.f32 %v3891, %v3531
  %v3893 = vadd.f32 %v3892, %v3532
  %v3894 = vadd.f32 %v3893, %v3533
  %v3895 = vadd.f32 %v3894, %v3534
  %v3896 = vadd.f32 %v3895, %v3535
  %v3897 = vadd.f32 %v3896, %v3536
  %v3898 = vadd.f32 %v3897, %v3537
  %v3899 = vadd.f32 %v3898, %v3538
  %v3900 = vadd.f32 %v3899, %v3539
  %v3901 = vadd.f32 %v3900, %v3540
  %v3902 = vadd.f32 %v3901, %v3541
  %v3903 = vadd.f32 %v3902, %v3542
  %v3904 = vadd.f32 %v3903, %v3543
  %v3905 = vadd.f32 %v3904, %v3544
  %v3906 = vadd.f32 %v3905, %v3545
  %v3907 = vadd.f32 %v3906, %v3546
  %v3908 = vadd.f32 %v3907, %v3547
  %v3909 = vadd.f32 %v3908, %v3548
  %v3910 = vadd.f32 %v3909, %v3549
  %v3911 = vadd.f32 %v3910, %v3550
  %v3912 = vadd.f32 %v3911, %v3551
  %v3913 = vadd.f32 %v3912, %v3552
  %v3914 = vadd.f32 %v3913, %v3553
  %v3915 = vadd.f32 %v3914, %v3554
  %v3916 = vadd.f32 %v3915, %v3555
  %v3917 = vadd.f32 %v3916, %v3556
  %v3918 = vadd.f32 %v3917, %v3557
  %v3919 = vadd.f32 %v3918, %v3558
  %v3920 = vadd.f32 %v3919, %v3559
  %v3921 = vadd.f32 %v3920, %v3560
  %v3922 = vadd.f32 %v3921, %v3561
  %v3923 = vadd.f32 %v3922, %v3562
  %v3924 = vadd.f32 %v3923, %v3563
  %v3925 = vadd.f32 %v3924, %v3564
  %v3926 = vadd.f32 %v3925, %v3565
  %v3927 = vadd.f32 %v3926, %v3566
  %v3928 = vadd.f32 %v3927, %v3567
  %v3929 = vadd.f32 %v3928, %v3568
  %v3930 = vadd.f32 %v3929, %v3569
  %v3931 = vadd.f32 %v3930, %v3570
  %v3932 = vadd.f32 %v3931, %v3571
  %v3933 = vadd.f32 %v3932, %v3572
  %v3934 = vadd.f32 %v3933, %v3573
  %v3935 = vadd.f32 %v3934, %v3574
  %v3936 = vadd.f32 %v3935, %v3575
  %v3937 = vadd.f32 %v3936, %v3576
  %v3938 = vadd.f32 %v3937, %v3577
  %v3939 = vadd.f32 %v3938, %v3578
  %v3940 = vadd.f32 %v3939, %v3579
  %v3941 = vadd.f32 %v3940, %v3580
  %v3942 = vadd.f32 %v3941, %v3581
  %v3943 = vadd.f32 %v3942, %v3582
  %v3944 = vadd.f32 %v3943, %v3583
  %v3945 = vadd.f32 %v3944, %v3584
  %v3946 = vadd.f32 %v3945, %v3585
  %v3947 = vadd.f32 %v3946, %v3586
  %v3948 = vadd.f32 %v3947, %v3587
  %v3949 = vadd.f32 %v3948, %v3588
  %v3950 = vadd.f32 %v3949, %v3589
  %v3951 = vadd.f32 %v3950, %v3590
  %v3952 = vadd.f32 %v3951, %v3591
  %v3953 = vadd.f32 %v3952, %v3592
  %v3954 = vadd.f32 %v3953, %v3593
  %v3955 = vadd.f32 %v3954, %v3594
  %v3956 = vadd.f32 %v3955, %v3595
  %v3957 = vadd.f32 %v3956, %v3596
  %v3958 = vadd.f32 %v3957, %v3597
  %v3959 = vadd.f32 %v3958, %v3598
  %v3960 = vadd.f32 %v3959, %v3599
  %v3961 = vadd.f32 %v3960, %v3600
  %v3962 = vadd.f32 %v3961, %v3601
  %v3963 = vadd.f32 %v3962, %v3602
  %v3964 = vadd.f32 %v3963, %v3603
  %v3965 = vadd.f32 %v3964, %v3604
  %v3966 = vadd.f32 %v3965, %v3605
  %v3967 = vadd.f32 %v3966, %v3606
  %v3968 = vadd.f32 %v3967, %v3607
  %v3969 = vadd.f32 %v3968, %v3608
  %v3970 = vadd.f32 %v3969, %v3609
  %v3971 = vadd.f32 %v3970, %v3610
  %v3972 = vadd.f32 %v3971, %v3611
  %v3973 = vadd.f32 %v3972, %v3612
  %v3974 = vadd.f32 %v3973, %v3613
  %v3975 = vadd.f32 %v3974, %v3614
  %v3976 = vadd.f32 %v3975, %v3615
  %v3977 = vadd.f32 %v3976, %v3616
  %v3978 = vadd.f32 %v3977, %v3617
  %v3979 = vadd.f32 %v3978, %v3618
  %v3980 = vadd.f32 %v3979, %v3619
  %v3981 = vadd.f32 %v3980, %v3620
  %v3982 = vadd.f32 %v3981, %v3621
  %v3983 = vadd.f32 %v3982, %v3622
  %v3984 = vadd.f32 %v3983, %v3623
  %v3985 = vadd.f32 %v3984, %v3624
  %v3986 = vadd.f32 %v3985, %v3625
  %v3987 = vadd.f32 %v3986, %v3626
  %v3988 = vadd.f32 %v3987, %v3627
  %v3989 = vadd.f32 %v3988, %v3628
  %v3990 = vadd.f32 %v3989, %v3629
  %v3991 = vadd.f32 %v3990, %v3630
  %v3992 = vadd.f32 %v3991, %v3631
  %v3993 = vadd.f32 %v3992, %v3632
  %v3994 = vadd.f32 %v3993, %v3633
  %v3995 = vadd.f32 %v3994, %v3634
  %v3996 = vadd.f32 %v3995, %v3635
  %v3997 = vadd.f32 %v3996, %v3636
  %v3998 = vadd.f32 %v3997, %v3637
  %v3999 = vadd.f32 %v3998, %v3638
  %v4000 = vadd.f32 %v3999, %v3639
  %v4001 = vadd.f32 %v4000, %v3640
  %v4002 = vadd.f32 %v4001, %v3641
  %v4003 = vadd.f32 %v4002, %v3642
  %v4004 = vadd.f32 %v4003, %v3643
  %v4005 = vadd.f32 %v4004, %v3644
  %v4006 = vadd.f32 %v4005, %v3645
  %v4007 = vadd.f32 %v4006, %v3646
  %v4008 = vadd.f32 %v4007, %v3647
  %v4009 = vadd.f32 %v4008, %v3648
  %v4010 = vadd.f32 %v4009, %v3649
  %v4011 = vadd.f32 %v4010, %v3650
  %v4012 = vadd.f32 %v4011, %v3651
  %v4013 = vadd.f32 %v4012, %v3652
  %v4014 = vadd.f32 %v4013, %v3653
  %v4015 = vadd.f32 %v4014, %v3654
  %v4016 = vadd.f32 %v4015, %v3655
  %v4017 = vadd.f32 %v4016, %v3656
  %v4018 = vadd.f32 %v4017, %v3657
  %v4019 = vadd.f32 %v4018, %v3658
  %v4020 = vadd.f32 %v4019, %v3659
  %v4021 = vadd.f32 %v4020, %v3660
  %v4022 = vadd.f32 %v4021, %v3661
  %v4023 = vadd.f32 %v4022, %v3662
  %v4024 = vadd.f32 %v4023, %v3663
  %v4025 = vadd.f32 %v4024, %v3664
  %v4026 = vadd.f32 %v4025, %v3665
  %v4027 = vadd.f32 %v4026, %v3666
  %v4028 = vadd.f32 %v4027, %v3667
  %v4029 = vadd.f32 %v4028, %v3668
  %v4030 = vadd.f32 %v4029, %v3669
  %v4031 = vadd.f32 %v4030, %v3670
  %v4032 = vadd.f32 %v4031, %v3671
  %v4033 = vadd.f32 %v4032, %v3672
  %v4034 = vadd.f32 %v4033, %v3673
  %v4035 = vadd.f32 %v4034, %v3674
  %v4036 = vadd.f32 %v4035, %v3675
  %v4037 = vadd.f32 %v4036, %v3676
  %v4038 = vadd.f32 %v4037, %v3677
  %v4039 = vadd.f32 %v4038, %v3678
  %v4040 = vadd.f32 %v4039, %v3679
  %v4041 = vadd.f32 %v4040, %v3680
  %v4042 = vadd.f32 %v4041, %v3681
  %v4043 = vadd.f32 %v4042, %v3682
  %v4044 = vadd.f32 %v4043, %v3683
  %v4045 = vadd.f32 %v4044, %v3684
  %v4046 = vadd.f32 %v4045, %v3685
  %v4047 = vadd.f32 %v4046, %v3686
  %v4048 = vadd.f32 %v4047, %v3687
  %v4049 = vadd.f32 %v4048, %v3688
  %v4050 = vadd.f32 %v4049, %v3689
  %v4051 = vadd.f32 %v4050, %v3690
  %v4052 = vadd.f32 %v4051, %v3691
  %v4053 = vadd.f32 %v4052, %v3692
  %v4054 = vadd.f32 %v4053, %v3693
  %v4055 = vadd.f32 %v4054, %v3694
  %v4056 = vadd.f32 %v4055, %v3695
  %v4057 = vadd.f32 %v4056, %v3696
  %v4058 = vadd.f32 %v4057, %v3697
  %v4059 = vadd.f32 %v4058, %v3698
  %v4060 = vadd.f32 %v4059, %v3699
  %v4061 = vadd.f32 %v4060, %v3700
  %v4062 = vadd.f32 %v4061, %v3701
  %v4063 = vadd.f32 %v4062, %v3702
  %v4064 = vadd.f32 %v4063, %v3703
  %v4065 = vadd.f32 %v4064, %v3704
  %v4066 = vadd.f32 %v4065, %v3705
  %v4067 = vadd.f32 %v4066, %v3706
  %v4068 = vadd.f32 %v4067, %v3707
  %v4069 = vadd.f32 %v4068, %v3708
  %v4070 = vadd.f32 %v4069, %v3709
  %v4071 = vadd.f32 %v4070, %v3710
  %v4072 = vadd.f32 %v4071, %v3711
  %v4073 = vadd.f32 %v4072, %v3712
  %v4074 = vadd.f32 %v4073, %v3713
  %v4075 = vadd.f32 %v4074, %v3714
  %v4076 = vadd.f32 %v4075, %v3715
  %v4077 = vadd.f32 %v4076, %v3716
  %v4078 = vadd.f32 %v4077, %v3717
  %v4079 = vadd.f32 %v4078, %v3718
  %v4080 = vadd.f32 %v4079, %v3719
  %v4081 = vadd.f32 %v4080, %v3720
  %v4082 = vadd.f32 %v4081, %v3721
  %v4083 = vadd.f32 %v4082, %v3722
  %v4084 = vadd.f32 %v4083, %v3723
  %v4085 = vadd.f32 %v4084, %v3724
  %v4086 = vadd.f32 %v4085, %v3725
  %v4087 = vadd.f32 %v4086, %v3726
  %v4088 = vadd.f32 %v4087, %v3727
  %v4089 = vadd.f32 %v4088, %v3728
  %v4090 = vadd.f32 %v4089, %v3729
  %v4091 = vadd.f32 %v4090, %v3730
  %v4092 = vadd.f32 %v4091, %v3731
  %v4093 = vadd.f32 %v4092, %v3732
  %v4094 = vadd.f32 %v4093, %v3733
  %v4095 = vadd.f32 %v4094, %v3734
  %v4096 = vadd.f32 %v4095, %v3735
  %v4097 = vadd.f32 %v4096, %v3736
  %v4098 = vadd.f32 %v4097, %v3737
  %v4099 = vadd.f32 %v4098, %v3738
  %v4100 = vadd.f32 %v4099, %v3739
  %v4101 = vadd.f32 %v4100, %v3740
  %v4102 = vrot.slane %v4101, 4
  %v4103 = vadd.f32 %v4101, %v4102
  %v4104 = vrot.slane %v4103, 2
  %v4105 = vadd.f32 %v4103, %v4104
  %v4106 = vrot.slane %v4105, 1
  %v4107 = vadd.f32 %v4105, %v4106
  %v4108 = vmul.f32 %v4107, 0.00034626038
  %v4109 = vmul.f32 %v3378, %v3378
  %v4110 = vsub.f32 %v4108, %v4109
  %v4111 = vmax.f32 %v4110, 0.0
  %v4112 = vld [vmem:[%s2] sm:$0x1]
  %v4113 = vadd.f32 %v4111, 1e-05
  %v4114 = vrsqrt.pop %v4113
  %v4115 = vmul.f32 %v4112, %v4114
  %v4116 = vld [vmem:[%s3] sm:$0x1]
  %v4117 = vmul.f32 %v3378, %v4115
  %v4118 = vsub.f32 %v4116, %v4117
  %v4120 = vlaneseq
  %v4121 = vshrl.u32 %v4120, 7
  %v4122 = vsub.s32 0, %v4121
  %v4123 = vrot.slane %v4115, %v4122
  %v4125 = vmul.f32 %v1565, %v4123
  %v4126 = vmul.f32 %v1568, %v4123
  %v4127 = vmul.f32 %v1573, %v4123
  %v4128 = vmul.f32 %v1576, %v4123
  %v4129 = vmul.f32 %v1581, %v4123
  %v4130 = vmul.f32 %v1584, %v4123
  %v4131 = vmul.f32 %v1589, %v4123
  %v4132 = vmul.f32 %v1592, %v4123
  %v4133 = vmul.f32 %v1597, %v4123
  %v4134 = vmul.f32 %v1600, %v4123
  %v4135 = vmul.f32 %v1605, %v4123
  %v4136 = vmul.f32 %v1608, %v4123
  %v4137 = vmul.f32 %v1613, %v4123
  %v4138 = vmul.f32 %v1616, %v4123
  %v4139 = vmul.f32 %v1621, %v4123
  %v4140 = vmul.f32 %v1624, %v4123
  %v4141 = vmul.f32 %v1629, %v4123
  %v4142 = vmul.f32 %v1632, %v4123
  %v4143 = vmul.f32 %v1637, %v4123
  %v4144 = vmul.f32 %v1640, %v4123
  %v4145 = vmul.f32 %v1645, %v4123
  %v4146 = vmul.f32 %v1648, %v4123
  %v4147 = vmul.f32 %v1653, %v4123
  %v4148 = vmul.f32 %v1656, %v4123
  %v4149 = vmul.f32 %v1661, %v4123
  %v4150 = vmul.f32 %v1664, %v4123
  %v4151 = vmul.f32 %v1669, %v4123
  %v4152 = vmul.f32 %v1672, %v4123
  %v4153 = vmul.f32 %v1677, %v4123
  %v4154 = vmul.f32 %v1680, %v4123
  %v4155 = vmul.f32 %v1685, %v4123
  %v4156 = vmul.f32 %v1688, %v4123
  %v4157 = vmul.f32 %v1693, %v4123
  %v4158 = vmul.f32 %v1696, %v4123
  %v4159 = vmul.f32 %v1701, %v4123
  %v4160 = vmul.f32 %v1704, %v4123
  %v4161 = vmul.f32 %v1709, %v4123
  %v4162 = vmul.f32 %v1712, %v4123
  %v4163 = vmul.f32 %v1717, %v4123
  %v4164 = vmul.f32 %v1720, %v4123
  %v4165 = vmul.f32 %v1725, %v4123
  %v4166 = vmul.f32 %v1728, %v4123
  %v4167 = vmul.f32 %v1733, %v4123
  %v4168 = vmul.f32 %v1736, %v4123
  %v4169 = vmul.f32 %v1741, %v4123
  %v4170 = vmul.f32 %v1744, %v4123
  %v4171 = vmul.f32 %v1749, %v4123
  %v4172 = vmul.f32 %v1752, %v4123
  %v4173 = vmul.f32 %v1757, %v4123
  %v4174 = vmul.f32 %v1760, %v4123
  %v4175 = vmul.f32 %v1765, %v4123
  %v4176 = vmul.f32 %v1768, %v4123
  %v4177 = vmul.f32 %v1773, %v4123
  %v4178 = vmul.f32 %v1776, %v4123
  %v4179 = vmul.f32 %v1781, %v4123
  %v4180 = vmul.f32 %v1784, %v4123
  %v4181 = vmul.f32 %v1789, %v4123
  %v4182 = vmul.f32 %v1792, %v4123
  %v4183 = vmul.f32 %v1797, %v4123
  %v4184 = vmul.f32 %v1800, %v4123
  %v4185 = vmul.f32 %v1805, %v4123
  %v4186 = vmul.f32 %v1808, %v4123
  %v4187 = vmul.f32 %v1813, %v4123
  %v4188 = vmul.f32 %v1816, %v4123
  %v4189 = vmul.f32 %v1821, %v4123
  %v4190 = vmul.f32 %v1824, %v4123
  %v4191 = vmul.f32 %v1829, %v4123
  %v4192 = vmul.f32 %v1832, %v4123
  %v4193 = vmul.f32 %v1837, %v4123
  %v4194 = vmul.f32 %v1840, %v4123
  %v4195 = vmul.f32 %v1845, %v4123
  %v4196 = vmul.f32 %v1848, %v4123
  %v4197 = vmul.f32 %v1853, %v4123
  %v4198 = vmul.f32 %v1856, %v4123
  %v4199 = vmul.f32 %v1861, %v4123
  %v4200 = vmul.f32 %v1864, %v4123
  %v4201 = vmul.f32 %v1869, %v4123
  %v4202 = vmul.f32 %v1872, %v4123
  %v4203 = vmul.f32 %v1877, %v4123
  %v4204 = vmul.f32 %v1880, %v4123
  %v4205 = vmul.f32 %v1885, %v4123
  %v4206 = vmul.f32 %v1888, %v4123
  %v4207 = vmul.f32 %v1893, %v4123
  %v4208 = vmul.f32 %v1896, %v4123
  %v4209 = vmul.f32 %v1901, %v4123
  %v4210 = vmul.f32 %v1904, %v4123
  %v4211 = vmul.f32 %v1909, %v4123
  %v4212 = vmul.f32 %v1912, %v4123
  %v4213 = vmul.f32 %v1917, %v4123
  %v4214 = vmul.f32 %v1920, %v4123
  %v4215 = vmul.f32 %v1925, %v4123
  %v4216 = vmul.f32 %v1928, %v4123
  %v4217 = vmul.f32 %v1933, %v4123
  %v4218 = vmul.f32 %v1936, %v4123
  %v4219 = vmul.f32 %v1941, %v4123
  %v4220 = vmul.f32 %v1944, %v4123
  %v4221 = vmul.f32 %v1949, %v4123
  %v4222 = vmul.f32 %v1952, %v4123
  %v4223 = vmul.f32 %v1957, %v4123
  %v4224 = vmul.f32 %v1960, %v4123
  %v4225 = vmul.f32 %v1965, %v4123
  %v4226 = vmul.f32 %v1968, %v4123
  %v4227 = vmul.f32 %v1973, %v4123
  %v4228 = vmul.f32 %v1976, %v4123
  %v4229 = vmul.f32 %v1981, %v4123
  %v4230 = vmul.f32 %v1984, %v4123
  %v4231 = vmul.f32 %v1989, %v4123
  %v4232 = vmul.f32 %v1992, %v4123
  %v4233 = vmul.f32 %v1997, %v4123
  %v4234 = vmul.f32 %v2000, %v4123
  %v4235 = vmul.f32 %v2005, %v4123
  %v4236 = vmul.f32 %v2008, %v4123
  %v4237 = vmul.f32 %v2013, %v4123
  %v4238 = vmul.f32 %v2016, %v4123
  %v4239 = vmul.f32 %v2021, %v4123
  %v4240 = vmul.f32 %v2024, %v4123
  %v4241 = vmul.f32 %v2029, %v4123
  %v4242 = vmul.f32 %v2032, %v4123
  %v4243 = vmul.f32 %v2037, %v4123
  %v4244 = vmul.f32 %v2040, %v4123
  %v4245 = vmul.f32 %v2045, %v4123
  %v4246 = vmul.f32 %v2048, %v4123
  %v4247 = vmul.f32 %v2053, %v4123
  %v4248 = vmul.f32 %v2056, %v4123
  %v4249 = vmul.f32 %v2061, %v4123
  %v4250 = vmul.f32 %v2064, %v4123
  %v4251 = vmul.f32 %v2069, %v4123
  %v4252 = vmul.f32 %v2072, %v4123
  %v4253 = vmul.f32 %v2077, %v4123
  %v4254 = vmul.f32 %v2080, %v4123
  %v4255 = vmul.f32 %v2085, %v4123
  %v4256 = vmul.f32 %v2088, %v4123
  %v4257 = vmul.f32 %v2093, %v4123
  %v4258 = vmul.f32 %v2096, %v4123
  %v4259 = vmul.f32 %v2101, %v4123
  %v4260 = vmul.f32 %v2104, %v4123
  %v4261 = vmul.f32 %v2109, %v4123
  %v4262 = vmul.f32 %v2112, %v4123
  %v4263 = vmul.f32 %v2117, %v4123
  %v4264 = vmul.f32 %v2120, %v4123
  %v4265 = vmul.f32 %v2125, %v4123
  %v4266 = vmul.f32 %v2128, %v4123
  %v4267 = vmul.f32 %v2133, %v4123
  %v4268 = vmul.f32 %v2136, %v4123
  %v4269 = vmul.f32 %v2141, %v4123
  %v4270 = vmul.f32 %v2144, %v4123
  %v4271 = vmul.f32 %v2149, %v4123
  %v4272 = vmul.f32 %v2152, %v4123
  %v4273 = vmul.f32 %v2157, %v4123
  %v4274 = vmul.f32 %v2160, %v4123
  %v4275 = vmul.f32 %v2165, %v4123
  %v4276 = vmul.f32 %v2168, %v4123
  %v4277 = vmul.f32 %v2173, %v4123
  %v4278 = vmul.f32 %v2176, %v4123
  %v4279 = vmul.f32 %v2181, %v4123
  %v4280 = vmul.f32 %v2184, %v4123
  %v4281 = vmul.f32 %v2189, %v4123
  %v4282 = vmul.f32 %v2192, %v4123
  %v4283 = vmul.f32 %v2197, %v4123
  %v4284 = vmul.f32 %v2200, %v4123
  %v4285 = vmul.f32 %v2205, %v4123
  %v4286 = vmul.f32 %v2208, %v4123
  %v4287 = vmul.f32 %v2213, %v4123
  %v4288 = vmul.f32 %v2216, %v4123
  %v4289 = vmul.f32 %v2221, %v4123
  %v4290 = vmul.f32 %v2224, %v4123
  %v4291 = vmul.f32 %v2229, %v4123
  %v4292 = vmul.f32 %v2232, %v4123
  %v4293 = vmul.f32 %v2237, %v4123
  %v4294 = vmul.f32 %v2240, %v4123
  %v4295 = vmul.f32 %v2245, %v4123
  %v4296 = vmul.f32 %v2248, %v4123
  %v4297 = vmul.f32 %v2253, %v4123
  %v4298 = vmul.f32 %v2256, %v4123
  %v4299 = vmul.f32 %v2261, %v4123
  %v4300 = vmul.f32 %v2264, %v4123
  %v4301 = vmul.f32 %v2269, %v4123
  %v4302 = vmul.f32 %v2272, %v4123
  %v4303 = vmul.f32 %v2277, %v4123
  %v4304 = vmul.f32 %v2280, %v4123
  %v4305 = vmul.f32 %v2285, %v4123
  %v4306 = vmul.f32 %v2288, %v4123
  %v4307 = vmul.f32 %v2293, %v4123
  %v4308 = vmul.f32 %v2296, %v4123
  %v4309 = vmul.f32 %v2301, %v4123
  %v4310 = vmul.f32 %v2304, %v4123
  %v4311 = vmul.f32 %v2309, %v4123
  %v4312 = vmul.f32 %v2312, %v4123
  %v4313 = vmul.f32 %v2317, %v4123
  %v4314 = vmul.f32 %v2320, %v4123
  %v4315 = vmul.f32 %v2325, %v4123
  %v4316 = vmul.f32 %v2328, %v4123
  %v4317 = vmul.f32 %v2333, %v4123
  %v4318 = vmul.f32 %v2336, %v4123
  %v4319 = vmul.f32 %v2341, %v4123
  %v4320 = vmul.f32 %v2344, %v4123
  %v4321 = vmul.f32 %v2349, %v4123
  %v4322 = vmul.f32 %v2352, %v4123
  %v4323 = vmul.f32 %v2357, %v4123
  %v4324 = vmul.f32 %v2360, %v4123
  %v4325 = vmul.f32 %v2365, %v4123
  %v4326 = vmul.f32 %v2368, %v4123
  %v4327 = vmul.f32 %v2373, %v4123
  %v4328 = vmul.f32 %v2376, %v4123
  %v4329 = vmul.f32 %v2381, %v4123
  %v4330 = vmul.f32 %v2384, %v4123
  %v4331 = vmul.f32 %v2389, %v4123
  %v4332 = vmul.f32 %v2392, %v4123
  %v4333 = vmul.f32 %v2397, %v4123
  %v4334 = vmul.f32 %v2400, %v4123
  %v4335 = vmul.f32 %v2405, %v4123
  %v4336 = vmul.f32 %v2408, %v4123
  %v4337 = vmul.f32 %v2413, %v4123
  %v4338 = vmul.f32 %v2416, %v4123
  %v4339 = vmul.f32 %v2421, %v4123
  %v4340 = vmul.f32 %v2424, %v4123
  %v4341 = vmul.f32 %v2429, %v4123
  %v4342 = vmul.f32 %v2432, %v4123
  %v4343 = vmul.f32 %v2437, %v4123
  %v4344 = vmul.f32 %v2440, %v4123
  %v4345 = vmul.f32 %v2445, %v4123
  %v4346 = vmul.f32 %v2448, %v4123
  %v4347 = vmul.f32 %v2453, %v4123
  %v4348 = vmul.f32 %v2456, %v4123
  %v4349 = vmul.f32 %v2461, %v4123
  %v4350 = vmul.f32 %v2464, %v4123
  %v4351 = vmul.f32 %v2469, %v4123
  %v4352 = vmul.f32 %v2472, %v4123
  %v4353 = vmul.f32 %v2477, %v4123
  %v4354 = vmul.f32 %v2480, %v4123
  %v4355 = vmul.f32 %v2485, %v4123
  %v4356 = vmul.f32 %v2488, %v4123
  %v4357 = vmul.f32 %v2493, %v4123
  %v4358 = vmul.f32 %v2496, %v4123
  %v4359 = vmul.f32 %v2501, %v4123
  %v4360 = vmul.f32 %v2504, %v4123
  %v4361 = vmul.f32 %v2509, %v4123
  %v4362 = vmul.f32 %v2512, %v4123
  %v4363 = vmul.f32 %v2517, %v4123
  %v4364 = vmul.f32 %v2520, %v4123
  %v4365 = vmul.f32 %v2525, %v4123
  %v4366 = vmul.f32 %v2528, %v4123
  %v4367 = vmul.f32 %v2533, %v4123
  %v4368 = vmul.f32 %v2536, %v4123
  %v4369 = vmul.f32 %v2541, %v4123
  %v4370 = vmul.f32 %v2544, %v4123
  %v4371 = vmul.f32 %v2549, %v4123
  %v4372 = vmul.f32 %v2552, %v4123
  %v4373 = vmul.f32 %v2557, %v4123
  %v4374 = vmul.f32 %v2560, %v4123
  %v4375 = vmul.f32 %v2565, %v4123
  %v4376 = vmul.f32 %v2568, %v4123
  %v4377 = vmul.f32 %v2573, %v4123
  %v4378 = vmul.f32 %v2576, %v4123
  %v4379 = vmul.f32 %v2581, %v4123
  %v4380 = vmul.f32 %v2584, %v4123
  %v4381 = vmul.f32 %v2589, %v4123
  %v4382 = vmul.f32 %v2592, %v4123
  %v4383 = vmul.f32 %v2597, %v4123
  %v4384 = vmul.f32 %v2600, %v4123
  %v4385 = vmul.f32 %v2605, %v4123
  %v4386 = vmul.f32 %v2608, %v4123
  %v4387 = vmul.f32 %v2613, %v4123
  %v4388 = vmul.f32 %v2616, %v4123
  %v4389 = vmul.f32 %v2621, %v4123
  %v4390 = vmul.f32 %v2624, %v4123
  %v4391 = vmul.f32 %v2629, %v4123
  %v4392 = vmul.f32 %v2632, %v4123
  %v4393 = vmul.f32 %v2637, %v4123
  %v4394 = vmul.f32 %v2640, %v4123
  %v4395 = vmul.f32 %v2645, %v4123
  %v4396 = vmul.f32 %v2648, %v4123
  %v4397 = vmul.f32 %v2653, %v4123
  %v4398 = vmul.f32 %v2656, %v4123
  %v4399 = vmul.f32 %v2661, %v4123
  %v4400 = vmul.f32 %v2664, %v4123
  %v4401 = vmul.f32 %v2669, %v4123
  %v4402 = vmul.f32 %v2672, %v4123
  %v4403 = vmul.f32 %v2677, %v4123
  %v4404 = vmul.f32 %v2680, %v4123
  %v4405 = vmul.f32 %v2685, %v4123
  %v4406 = vmul.f32 %v2688, %v4123
  %v4407 = vmul.f32 %v2693, %v4123
  %v4408 = vmul.f32 %v2696, %v4123
  %v4409 = vmul.f32 %v2701, %v4123
  %v4410 = vmul.f32 %v2704, %v4123
  %v4411 = vmul.f32 %v2709, %v4123
  %v4412 = vmul.f32 %v2712, %v4123
  %v4413 = vmul.f32 %v2717, %v4123
  %v4414 = vmul.f32 %v2720, %v4123
  %v4415 = vmul.f32 %v2725, %v4123
  %v4416 = vmul.f32 %v2728, %v4123
  %v4417 = vmul.f32 %v2733, %v4123
  %v4418 = vmul.f32 %v2736, %v4123
  %v4419 = vmul.f32 %v2741, %v4123
  %v4420 = vmul.f32 %v2744, %v4123
  %v4421 = vmul.f32 %v2749, %v4123
  %v4422 = vmul.f32 %v2752, %v4123
  %v4423 = vmul.f32 %v2757, %v4123
  %v4424 = vmul.f32 %v2760, %v4123
  %v4425 = vmul.f32 %v2765, %v4123
  %v4426 = vmul.f32 %v2768, %v4123
  %v4427 = vmul.f32 %v2773, %v4123
  %v4428 = vmul.f32 %v2776, %v4123
  %v4429 = vmul.f32 %v2781, %v4123
  %v4430 = vmul.f32 %v2784, %v4123
  %v4431 = vmul.f32 %v2789, %v4123
  %v4432 = vmul.f32 %v2792, %v4123
  %v4433 = vmul.f32 %v2797, %v4123
  %v4434 = vmul.f32 %v2800, %v4123
  %v4435 = vmul.f32 %v2805, %v4123
  %v4436 = vmul.f32 %v2808, %v4123
  %v4437 = vmul.f32 %v2813, %v4123
  %v4438 = vmul.f32 %v2816, %v4123
  %v4439 = vmul.f32 %v2821, %v4123
  %v4440 = vmul.f32 %v2824, %v4123
  %v4441 = vmul.f32 %v2829, %v4123
  %v4442 = vmul.f32 %v2832, %v4123
  %v4443 = vmul.f32 %v2837, %v4123
  %v4444 = vmul.f32 %v2840, %v4123
  %v4445 = vmul.f32 %v2845, %v4123
  %v4446 = vmul.f32 %v2848, %v4123
  %v4447 = vmul.f32 %v2853, %v4123
  %v4448 = vmul.f32 %v2856, %v4123
  %v4449 = vmul.f32 %v2861, %v4123
  %v4450 = vmul.f32 %v2864, %v4123
  %v4451 = vmul.f32 %v2869, %v4123
  %v4452 = vmul.f32 %v2872, %v4123
  %v4453 = vmul.f32 %v2877, %v4123
  %v4454 = vmul.f32 %v2880, %v4123
  %v4455 = vmul.f32 %v2885, %v4123
  %v4456 = vmul.f32 %v2888, %v4123
  %v4457 = vmul.f32 %v2893, %v4123
  %v4458 = vmul.f32 %v2896, %v4123
  %v4459 = vmul.f32 %v2901, %v4123
  %v4460 = vmul.f32 %v2904, %v4123
  %v4461 = vmul.f32 %v2909, %v4123
  %v4462 = vmul.f32 %v2912, %v4123
  %v4463 = vmul.f32 %v2917, %v4123
  %v4464 = vmul.f32 %v2920, %v4123
  %v4465 = vmul.f32 %v2925, %v4123
  %v4466 = vmul.f32 %v2928, %v4123
  %v4467 = vmul.f32 %v2933, %v4123
  %v4468 = vmul.f32 %v2936, %v4123
  %v4469 = vmul.f32 %v2941, %v4123
  %v4470 = vmul.f32 %v2944, %v4123
  %v4471 = vmul.f32 %v2949, %v4123
  %v4472 = vmul.f32 %v2952, %v4123
  %v4473 = vmul.f32 %v2957, %v4123
  %v4474 = vmul.f32 %v2960, %v4123
  %v4475 = vmul.f32 %v2965, %v4123
  %v4476 = vmul.f32 %v2968, %v4123
  %v4477 = vmul.f32 %v2973, %v4123
  %v4478 = vmul.f32 %v2976, %v4123
  %v4479 = vmul.f32 %v2981, %v4123
  %v4480 = vmul.f32 %v2984, %v4123
  %v4481 = vmul.f32 %v2989, %v4123
  %v4482 = vmul.f32 %v2992, %v4123
  %v4483 = vmul.f32 %v2997, %v4123
  %v4484 = vmul.f32 %v3000, %v4123
  %v4485 = vmul.f32 %v3005, %v4123
  %v4486 = vmul.f32 %v3008, %v4123
  %v4488 = vlaneseq
  %v4489 = vshrl.u32 %v4488, 7
  %v4490 = vsub.s32 0, %v4489
  %v4491 = vrot.slane %v4118, %v4490
  %v4493 = vadd.f32 %v4125, %v4491
  %v4494 = vadd.f32 %v4126, %v4491
  %v4495 = vadd.f32 %v4127, %v4491
  %v4496 = vadd.f32 %v4128, %v4491
  %v4497 = vadd.f32 %v4129, %v4491
  %v4498 = vadd.f32 %v4130, %v4491
  %v4499 = vadd.f32 %v4131, %v4491
  %v4500 = vadd.f32 %v4132, %v4491
  %v4501 = vadd.f32 %v4133, %v4491
  %v4502 = vadd.f32 %v4134, %v4491
  %v4503 = vadd.f32 %v4135, %v4491
  %v4504 = vadd.f32 %v4136, %v4491
  %v4505 = vadd.f32 %v4137, %v4491
  %v4506 = vadd.f32 %v4138, %v4491
  %v4507 = vadd.f32 %v4139, %v4491
  %v4508 = vadd.f32 %v4140, %v4491
  %v4509 = vadd.f32 %v4141, %v4491
  %v4510 = vadd.f32 %v4142, %v4491
  %v4511 = vadd.f32 %v4143, %v4491
  %v4512 = vadd.f32 %v4144, %v4491
  %v4513 = vadd.f32 %v4145, %v4491
  %v4514 = vadd.f32 %v4146, %v4491
  %v4515 = vadd.f32 %v4147, %v4491
  %v4516 = vadd.f32 %v4148, %v4491
  %v4517 = vadd.f32 %v4149, %v4491
  %v4518 = vadd.f32 %v4150, %v4491
  %v4519 = vadd.f32 %v4151, %v4491
  %v4520 = vadd.f32 %v4152, %v4491
  %v4521 = vadd.f32 %v4153, %v4491
  %v4522 = vadd.f32 %v4154, %v4491
  %v4523 = vadd.f32 %v4155, %v4491
  %v4524 = vadd.f32 %v4156, %v4491
  %v4525 = vadd.f32 %v4157, %v4491
  %v4526 = vadd.f32 %v4158, %v4491
  %v4527 = vadd.f32 %v4159, %v4491
  %v4528 = vadd.f32 %v4160, %v4491
  %v4529 = vadd.f32 %v4161, %v4491
  %v4530 = vadd.f32 %v4162, %v4491
  %v4531 = vadd.f32 %v4163, %v4491
  %v4532 = vadd.f32 %v4164, %v4491
  %v4533 = vadd.f32 %v4165, %v4491
  %v4534 = vadd.f32 %v4166, %v4491
  %v4535 = vadd.f32 %v4167, %v4491
  %v4536 = vadd.f32 %v4168, %v4491
  %v4537 = vadd.f32 %v4169, %v4491
  %v4538 = vadd.f32 %v4170, %v4491
  %v4539 = vadd.f32 %v4171, %v4491
  %v4540 = vadd.f32 %v4172, %v4491
  %v4541 = vadd.f32 %v4173, %v4491
  %v4542 = vadd.f32 %v4174, %v4491
  %v4543 = vadd.f32 %v4175, %v4491
  %v4544 = vadd.f32 %v4176, %v4491
  %v4545 = vadd.f32 %v4177, %v4491
  %v4546 = vadd.f32 %v4178, %v4491
  %v4547 = vadd.f32 %v4179, %v4491
  %v4548 = vadd.f32 %v4180, %v4491
  %v4549 = vadd.f32 %v4181, %v4491
  %v4550 = vadd.f32 %v4182, %v4491
  %v4551 = vadd.f32 %v4183, %v4491
  %v4552 = vadd.f32 %v4184, %v4491
  %v4553 = vadd.f32 %v4185, %v4491
  %v4554 = vadd.f32 %v4186, %v4491
  %v4555 = vadd.f32 %v4187, %v4491
  %v4556 = vadd.f32 %v4188, %v4491
  %v4557 = vadd.f32 %v4189, %v4491
  %v4558 = vadd.f32 %v4190, %v4491
  %v4559 = vadd.f32 %v4191, %v4491
  %v4560 = vadd.f32 %v4192, %v4491
  %v4561 = vadd.f32 %v4193, %v4491
  %v4562 = vadd.f32 %v4194, %v4491
  %v4563 = vadd.f32 %v4195, %v4491
  %v4564 = vadd.f32 %v4196, %v4491
  %v4565 = vadd.f32 %v4197, %v4491
  %v4566 = vadd.f32 %v4198, %v4491
  %v4567 = vadd.f32 %v4199, %v4491
  %v4568 = vadd.f32 %v4200, %v4491
  %v4569 = vadd.f32 %v4201, %v4491
  %v4570 = vadd.f32 %v4202, %v4491
  %v4571 = vadd.f32 %v4203, %v4491
  %v4572 = vadd.f32 %v4204, %v4491
  %v4573 = vadd.f32 %v4205, %v4491
  %v4574 = vadd.f32 %v4206, %v4491
  %v4575 = vadd.f32 %v4207, %v4491
  %v4576 = vadd.f32 %v4208, %v4491
  %v4577 = vadd.f32 %v4209, %v4491
  %v4578 = vadd.f32 %v4210, %v4491
  %v4579 = vadd.f32 %v4211, %v4491
  %v4580 = vadd.f32 %v4212, %v4491
  %v4581 = vadd.f32 %v4213, %v4491
  %v4582 = vadd.f32 %v4214, %v4491
  %v4583 = vadd.f32 %v4215, %v4491
  %v4584 = vadd.f32 %v4216, %v4491
  %v4585 = vadd.f32 %v4217, %v4491
  %v4586 = vadd.f32 %v4218, %v4491
  %v4587 = vadd.f32 %v4219, %v4491
  %v4588 = vadd.f32 %v4220, %v4491
  %v4589 = vadd.f32 %v4221, %v4491
  %v4590 = vadd.f32 %v4222, %v4491
  %v4591 = vadd.f32 %v4223, %v4491
  %v4592 = vadd.f32 %v4224, %v4491
  %v4593 = vadd.f32 %v4225, %v4491
  %v4594 = vadd.f32 %v4226, %v4491
  %v4595 = vadd.f32 %v4227, %v4491
  %v4596 = vadd.f32 %v4228, %v4491
  %v4597 = vadd.f32 %v4229, %v4491
  %v4598 = vadd.f32 %v4230, %v4491
  %v4599 = vadd.f32 %v4231, %v4491
  %v4600 = vadd.f32 %v4232, %v4491
  %v4601 = vadd.f32 %v4233, %v4491
  %v4602 = vadd.f32 %v4234, %v4491
  %v4603 = vadd.f32 %v4235, %v4491
  %v4604 = vadd.f32 %v4236, %v4491
  %v4605 = vadd.f32 %v4237, %v4491
  %v4606 = vadd.f32 %v4238, %v4491
  %v4607 = vadd.f32 %v4239, %v4491
  %v4608 = vadd.f32 %v4240, %v4491
  %v4609 = vadd.f32 %v4241, %v4491
  %v4610 = vadd.f32 %v4242, %v4491
  %v4611 = vadd.f32 %v4243, %v4491
  %v4612 = vadd.f32 %v4244, %v4491
  %v4613 = vadd.f32 %v4245, %v4491
  %v4614 = vadd.f32 %v4246, %v4491
  %v4615 = vadd.f32 %v4247, %v4491
  %v4616 = vadd.f32 %v4248, %v4491
  %v4617 = vadd.f32 %v4249, %v4491
  %v4618 = vadd.f32 %v4250, %v4491
  %v4619 = vadd.f32 %v4251, %v4491
  %v4620 = vadd.f32 %v4252, %v4491
  %v4621 = vadd.f32 %v4253, %v4491
  %v4622 = vadd.f32 %v4254, %v4491
  %v4623 = vadd.f32 %v4255, %v4491
  %v4624 = vadd.f32 %v4256, %v4491
  %v4625 = vadd.f32 %v4257, %v4491
  %v4626 = vadd.f32 %v4258, %v4491
  %v4627 = vadd.f32 %v4259, %v4491
  %v4628 = vadd.f32 %v4260, %v4491
  %v4629 = vadd.f32 %v4261, %v4491
  %v4630 = vadd.f32 %v4262, %v4491
  %v4631 = vadd.f32 %v4263, %v4491
  %v4632 = vadd.f32 %v4264, %v4491
  %v4633 = vadd.f32 %v4265, %v4491
  %v4634 = vadd.f32 %v4266, %v4491
  %v4635 = vadd.f32 %v4267, %v4491
  %v4636 = vadd.f32 %v4268, %v4491
  %v4637 = vadd.f32 %v4269, %v4491
  %v4638 = vadd.f32 %v4270, %v4491
  %v4639 = vadd.f32 %v4271, %v4491
  %v4640 = vadd.f32 %v4272, %v4491
  %v4641 = vadd.f32 %v4273, %v4491
  %v4642 = vadd.f32 %v4274, %v4491
  %v4643 = vadd.f32 %v4275, %v4491
  %v4644 = vadd.f32 %v4276, %v4491
  %v4645 = vadd.f32 %v4277, %v4491
  %v4646 = vadd.f32 %v4278, %v4491
  %v4647 = vadd.f32 %v4279, %v4491
  %v4648 = vadd.f32 %v4280, %v4491
  %v4649 = vadd.f32 %v4281, %v4491
  %v4650 = vadd.f32 %v4282, %v4491
  %v4651 = vadd.f32 %v4283, %v4491
  %v4652 = vadd.f32 %v4284, %v4491
  %v4653 = vadd.f32 %v4285, %v4491
  %v4654 = vadd.f32 %v4286, %v4491
  %v4655 = vadd.f32 %v4287, %v4491
  %v4656 = vadd.f32 %v4288, %v4491
  %v4657 = vadd.f32 %v4289, %v4491
  %v4658 = vadd.f32 %v4290, %v4491
  %v4659 = vadd.f32 %v4291, %v4491
  %v4660 = vadd.f32 %v4292, %v4491
  %v4661 = vadd.f32 %v4293, %v4491
  %v4662 = vadd.f32 %v4294, %v4491
  %v4663 = vadd.f32 %v4295, %v4491
  %v4664 = vadd.f32 %v4296, %v4491
  %v4665 = vadd.f32 %v4297, %v4491
  %v4666 = vadd.f32 %v4298, %v4491
  %v4667 = vadd.f32 %v4299, %v4491
  %v4668 = vadd.f32 %v4300, %v4491
  %v4669 = vadd.f32 %v4301, %v4491
  %v4670 = vadd.f32 %v4302, %v4491
  %v4671 = vadd.f32 %v4303, %v4491
  %v4672 = vadd.f32 %v4304, %v4491
  %v4673 = vadd.f32 %v4305, %v4491
  %v4674 = vadd.f32 %v4306, %v4491
  %v4675 = vadd.f32 %v4307, %v4491
  %v4676 = vadd.f32 %v4308, %v4491
  %v4677 = vadd.f32 %v4309, %v4491
  %v4678 = vadd.f32 %v4310, %v4491
  %v4679 = vadd.f32 %v4311, %v4491
  %v4680 = vadd.f32 %v4312, %v4491
  %v4681 = vadd.f32 %v4313, %v4491
  %v4682 = vadd.f32 %v4314, %v4491
  %v4683 = vadd.f32 %v4315, %v4491
  %v4684 = vadd.f32 %v4316, %v4491
  %v4685 = vadd.f32 %v4317, %v4491
  %v4686 = vadd.f32 %v4318, %v4491
  %v4687 = vadd.f32 %v4319, %v4491
  %v4688 = vadd.f32 %v4320, %v4491
  %v4689 = vadd.f32 %v4321, %v4491
  %v4690 = vadd.f32 %v4322, %v4491
  %v4691 = vadd.f32 %v4323, %v4491
  %v4692 = vadd.f32 %v4324, %v4491
  %v4693 = vadd.f32 %v4325, %v4491
  %v4694 = vadd.f32 %v4326, %v4491
  %v4695 = vadd.f32 %v4327, %v4491
  %v4696 = vadd.f32 %v4328, %v4491
  %v4697 = vadd.f32 %v4329, %v4491
  %v4698 = vadd.f32 %v4330, %v4491
  %v4699 = vadd.f32 %v4331, %v4491
  %v4700 = vadd.f32 %v4332, %v4491
  %v4701 = vadd.f32 %v4333, %v4491
  %v4702 = vadd.f32 %v4334, %v4491
  %v4703 = vadd.f32 %v4335, %v4491
  %v4704 = vadd.f32 %v4336, %v4491
  %v4705 = vadd.f32 %v4337, %v4491
  %v4706 = vadd.f32 %v4338, %v4491
  %v4707 = vadd.f32 %v4339, %v4491
  %v4708 = vadd.f32 %v4340, %v4491
  %v4709 = vadd.f32 %v4341, %v4491
  %v4710 = vadd.f32 %v4342, %v4491
  %v4711 = vadd.f32 %v4343, %v4491
  %v4712 = vadd.f32 %v4344, %v4491
  %v4713 = vadd.f32 %v4345, %v4491
  %v4714 = vadd.f32 %v4346, %v4491
  %v4715 = vadd.f32 %v4347, %v4491
  %v4716 = vadd.f32 %v4348, %v4491
  %v4717 = vadd.f32 %v4349, %v4491
  %v4718 = vadd.f32 %v4350, %v4491
  %v4719 = vadd.f32 %v4351, %v4491
  %v4720 = vadd.f32 %v4352, %v4491
  %v4721 = vadd.f32 %v4353, %v4491
  %v4722 = vadd.f32 %v4354, %v4491
  %v4723 = vadd.f32 %v4355, %v4491
  %v4724 = vadd.f32 %v4356, %v4491
  %v4725 = vadd.f32 %v4357, %v4491
  %v4726 = vadd.f32 %v4358, %v4491
  %v4727 = vadd.f32 %v4359, %v4491
  %v4728 = vadd.f32 %v4360, %v4491
  %v4729 = vadd.f32 %v4361, %v4491
  %v4730 = vadd.f32 %v4362, %v4491
  %v4731 = vadd.f32 %v4363, %v4491
  %v4732 = vadd.f32 %v4364, %v4491
  %v4733 = vadd.f32 %v4365, %v4491
  %v4734 = vadd.f32 %v4366, %v4491
  %v4735 = vadd.f32 %v4367, %v4491
  %v4736 = vadd.f32 %v4368, %v4491
  %v4737 = vadd.f32 %v4369, %v4491
  %v4738 = vadd.f32 %v4370, %v4491
  %v4739 = vadd.f32 %v4371, %v4491
  %v4740 = vadd.f32 %v4372, %v4491
  %v4741 = vadd.f32 %v4373, %v4491
  %v4742 = vadd.f32 %v4374, %v4491
  %v4743 = vadd.f32 %v4375, %v4491
  %v4744 = vadd.f32 %v4376, %v4491
  %v4745 = vadd.f32 %v4377, %v4491
  %v4746 = vadd.f32 %v4378, %v4491
  %v4747 = vadd.f32 %v4379, %v4491
  %v4748 = vadd.f32 %v4380, %v4491
  %v4749 = vadd.f32 %v4381, %v4491
  %v4750 = vadd.f32 %v4382, %v4491
  %v4751 = vadd.f32 %v4383, %v4491
  %v4752 = vadd.f32 %v4384, %v4491
  %v4753 = vadd.f32 %v4385, %v4491
  %v4754 = vadd.f32 %v4386, %v4491
  %v4755 = vadd.f32 %v4387, %v4491
  %v4756 = vadd.f32 %v4388, %v4491
  %v4757 = vadd.f32 %v4389, %v4491
  %v4758 = vadd.f32 %v4390, %v4491
  %v4759 = vadd.f32 %v4391, %v4491
  %v4760 = vadd.f32 %v4392, %v4491
  %v4761 = vadd.f32 %v4393, %v4491
  %v4762 = vadd.f32 %v4394, %v4491
  %v4763 = vadd.f32 %v4395, %v4491
  %v4764 = vadd.f32 %v4396, %v4491
  %v4765 = vadd.f32 %v4397, %v4491
  %v4766 = vadd.f32 %v4398, %v4491
  %v4767 = vadd.f32 %v4399, %v4491
  %v4768 = vadd.f32 %v4400, %v4491
  %v4769 = vadd.f32 %v4401, %v4491
  %v4770 = vadd.f32 %v4402, %v4491
  %v4771 = vadd.f32 %v4403, %v4491
  %v4772 = vadd.f32 %v4404, %v4491
  %v4773 = vadd.f32 %v4405, %v4491
  %v4774 = vadd.f32 %v4406, %v4491
  %v4775 = vadd.f32 %v4407, %v4491
  %v4776 = vadd.f32 %v4408, %v4491
  %v4777 = vadd.f32 %v4409, %v4491
  %v4778 = vadd.f32 %v4410, %v4491
  %v4779 = vadd.f32 %v4411, %v4491
  %v4780 = vadd.f32 %v4412, %v4491
  %v4781 = vadd.f32 %v4413, %v4491
  %v4782 = vadd.f32 %v4414, %v4491
  %v4783 = vadd.f32 %v4415, %v4491
  %v4784 = vadd.f32 %v4416, %v4491
  %v4785 = vadd.f32 %v4417, %v4491
  %v4786 = vadd.f32 %v4418, %v4491
  %v4787 = vadd.f32 %v4419, %v4491
  %v4788 = vadd.f32 %v4420, %v4491
  %v4789 = vadd.f32 %v4421, %v4491
  %v4790 = vadd.f32 %v4422, %v4491
  %v4791 = vadd.f32 %v4423, %v4491
  %v4792 = vadd.f32 %v4424, %v4491
  %v4793 = vadd.f32 %v4425, %v4491
  %v4794 = vadd.f32 %v4426, %v4491
  %v4795 = vadd.f32 %v4427, %v4491
  %v4796 = vadd.f32 %v4428, %v4491
  %v4797 = vadd.f32 %v4429, %v4491
  %v4798 = vadd.f32 %v4430, %v4491
  %v4799 = vadd.f32 %v4431, %v4491
  %v4800 = vadd.f32 %v4432, %v4491
  %v4801 = vadd.f32 %v4433, %v4491
  %v4802 = vadd.f32 %v4434, %v4491
  %v4803 = vadd.f32 %v4435, %v4491
  %v4804 = vadd.f32 %v4436, %v4491
  %v4805 = vadd.f32 %v4437, %v4491
  %v4806 = vadd.f32 %v4438, %v4491
  %v4807 = vadd.f32 %v4439, %v4491
  %v4808 = vadd.f32 %v4440, %v4491
  %v4809 = vadd.f32 %v4441, %v4491
  %v4810 = vadd.f32 %v4442, %v4491
  %v4811 = vadd.f32 %v4443, %v4491
  %v4812 = vadd.f32 %v4444, %v4491
  %v4813 = vadd.f32 %v4445, %v4491
  %v4814 = vadd.f32 %v4446, %v4491
  %v4815 = vadd.f32 %v4447, %v4491
  %v4816 = vadd.f32 %v4448, %v4491
  %v4817 = vadd.f32 %v4449, %v4491
  %v4818 = vadd.f32 %v4450, %v4491
  %v4819 = vadd.f32 %v4451, %v4491
  %v4820 = vadd.f32 %v4452, %v4491
  %v4821 = vadd.f32 %v4453, %v4491
  %v4822 = vadd.f32 %v4454, %v4491
  %v4823 = vadd.f32 %v4455, %v4491
  %v4824 = vadd.f32 %v4456, %v4491
  %v4825 = vadd.f32 %v4457, %v4491
  %v4826 = vadd.f32 %v4458, %v4491
  %v4827 = vadd.f32 %v4459, %v4491
  %v4828 = vadd.f32 %v4460, %v4491
  %v4829 = vadd.f32 %v4461, %v4491
  %v4830 = vadd.f32 %v4462, %v4491
  %v4831 = vadd.f32 %v4463, %v4491
  %v4832 = vadd.f32 %v4464, %v4491
  %v4833 = vadd.f32 %v4465, %v4491
  %v4834 = vadd.f32 %v4466, %v4491
  %v4835 = vadd.f32 %v4467, %v4491
  %v4836 = vadd.f32 %v4468, %v4491
  %v4837 = vadd.f32 %v4469, %v4491
  %v4838 = vadd.f32 %v4470, %v4491
  %v4839 = vadd.f32 %v4471, %v4491
  %v4840 = vadd.f32 %v4472, %v4491
  %v4841 = vadd.f32 %v4473, %v4491
  %v4842 = vadd.f32 %v4474, %v4491
  %v4843 = vadd.f32 %v4475, %v4491
  %v4844 = vadd.f32 %v4476, %v4491
  %v4845 = vadd.f32 %v4477, %v4491
  %v4846 = vadd.f32 %v4478, %v4491
  %v4847 = vadd.f32 %v4479, %v4491
  %v4848 = vadd.f32 %v4480, %v4491
  %v4849 = vadd.f32 %v4481, %v4491
  %v4850 = vadd.f32 %v4482, %v4491
  %v4851 = vadd.f32 %v4483, %v4491
  %v4852 = vadd.f32 %v4484, %v4491
  %v4853 = vadd.f32 %v4485, %v4491
  %v4854 = vadd.f32 %v4486, %v4491
  %v4855 = vmax.f32 %v4493, 0.0
  %v4856 = vmax.f32 %v4494, 0.0
  %v4857 = vmax.f32 %v4495, 0.0
  %v4858 = vmax.f32 %v4496, 0.0
  %v4859 = vmax.f32 %v4497, 0.0
  %v4860 = vmax.f32 %v4498, 0.0
  %v4861 = vmax.f32 %v4499, 0.0
  %v4862 = vmax.f32 %v4500, 0.0
  %v4863 = vmax.f32 %v4501, 0.0
  %v4864 = vmax.f32 %v4502, 0.0
  %v4865 = vmax.f32 %v4503, 0.0
  %v4866 = vmax.f32 %v4504, 0.0
  %v4867 = vmax.f32 %v4505, 0.0
  %v4868 = vmax.f32 %v4506, 0.0
  %v4869 = vmax.f32 %v4507, 0.0
  %v4870 = vmax.f32 %v4508, 0.0
  %v4871 = vmax.f32 %v4509, 0.0
  %v4872 = vmax.f32 %v4510, 0.0
  %v4873 = vmax.f32 %v4511, 0.0
  %v4874 = vmax.f32 %v4512, 0.0
  %v4875 = vmax.f32 %v4513, 0.0
  %v4876 = vmax.f32 %v4514, 0.0
  %v4877 = vmax.f32 %v4515, 0.0
  %v4878 = vmax.f32 %v4516, 0.0
  %v4879 = vmax.f32 %v4517, 0.0
  %v4880 = vmax.f32 %v4518, 0.0
  %v4881 = vmax.f32 %v4519, 0.0
  %v4882 = vmax.f32 %v4520, 0.0
  %v4883 = vmax.f32 %v4521, 0.0
  %v4884 = vmax.f32 %v4522, 0.0
  %v4885 = vmax.f32 %v4523, 0.0
  %v4886 = vmax.f32 %v4524, 0.0
  %v4887 = vmax.f32 %v4525, 0.0
  %v4888 = vmax.f32 %v4526, 0.0
  %v4889 = vmax.f32 %v4527, 0.0
  %v4890 = vmax.f32 %v4528, 0.0
  %v4891 = vmax.f32 %v4529, 0.0
  %v4892 = vmax.f32 %v4530, 0.0
  %v4893 = vmax.f32 %v4531, 0.0
  %v4894 = vmax.f32 %v4532, 0.0
  %v4895 = vmax.f32 %v4533, 0.0
  %v4896 = vmax.f32 %v4534, 0.0
  %v4897 = vmax.f32 %v4535, 0.0
  %v4898 = vmax.f32 %v4536, 0.0
  %v4899 = vmax.f32 %v4537, 0.0
  %v4900 = vmax.f32 %v4538, 0.0
  %v4901 = vmax.f32 %v4539, 0.0
  %v4902 = vmax.f32 %v4540, 0.0
  %v4903 = vmax.f32 %v4541, 0.0
  %v4904 = vmax.f32 %v4542, 0.0
  %v4905 = vmax.f32 %v4543, 0.0
  %v4906 = vmax.f32 %v4544, 0.0
  %v4907 = vmax.f32 %v4545, 0.0
  %v4908 = vmax.f32 %v4546, 0.0
  %v4909 = vmax.f32 %v4547, 0.0
  %v4910 = vmax.f32 %v4548, 0.0
  %v4911 = vmax.f32 %v4549, 0.0
  %v4912 = vmax.f32 %v4550, 0.0
  %v4913 = vmax.f32 %v4551, 0.0
  %v4914 = vmax.f32 %v4552, 0.0
  %v4915 = vmax.f32 %v4553, 0.0
  %v4916 = vmax.f32 %v4554, 0.0
  %v4917 = vmax.f32 %v4555, 0.0
  %v4918 = vmax.f32 %v4556, 0.0
  %v4919 = vmax.f32 %v4557, 0.0
  %v4920 = vmax.f32 %v4558, 0.0
  %v4921 = vmax.f32 %v4559, 0.0
  %v4922 = vmax.f32 %v4560, 0.0
  %v4923 = vmax.f32 %v4561, 0.0
  %v4924 = vmax.f32 %v4562, 0.0
  %v4925 = vmax.f32 %v4563, 0.0
  %v4926 = vmax.f32 %v4564, 0.0
  %v4927 = vmax.f32 %v4565, 0.0
  %v4928 = vmax.f32 %v4566, 0.0
  %v4929 = vmax.f32 %v4567, 0.0
  %v4930 = vmax.f32 %v4568, 0.0
  %v4931 = vmax.f32 %v4569, 0.0
  %v4932 = vmax.f32 %v4570, 0.0
  %v4933 = vmax.f32 %v4571, 0.0
  %v4934 = vmax.f32 %v4572, 0.0
  %v4935 = vmax.f32 %v4573, 0.0
  %v4936 = vmax.f32 %v4574, 0.0
  %v4937 = vmax.f32 %v4575, 0.0
  %v4938 = vmax.f32 %v4576, 0.0
  %v4939 = vmax.f32 %v4577, 0.0
  %v4940 = vmax.f32 %v4578, 0.0
  %v4941 = vmax.f32 %v4579, 0.0
  %v4942 = vmax.f32 %v4580, 0.0
  %v4943 = vmax.f32 %v4581, 0.0
  %v4944 = vmax.f32 %v4582, 0.0
  %v4945 = vmax.f32 %v4583, 0.0
  %v4946 = vmax.f32 %v4584, 0.0
  %v4947 = vmax.f32 %v4585, 0.0
  %v4948 = vmax.f32 %v4586, 0.0
  %v4949 = vmax.f32 %v4587, 0.0
  %v4950 = vmax.f32 %v4588, 0.0
  %v4951 = vmax.f32 %v4589, 0.0
  %v4952 = vmax.f32 %v4590, 0.0
  %v4953 = vmax.f32 %v4591, 0.0
  %v4954 = vmax.f32 %v4592, 0.0
  %v4955 = vmax.f32 %v4593, 0.0
  %v4956 = vmax.f32 %v4594, 0.0
  %v4957 = vmax.f32 %v4595, 0.0
  %v4958 = vmax.f32 %v4596, 0.0
  %v4959 = vmax.f32 %v4597, 0.0
  %v4960 = vmax.f32 %v4598, 0.0
  %v4961 = vmax.f32 %v4599, 0.0
  %v4962 = vmax.f32 %v4600, 0.0
  %v4963 = vmax.f32 %v4601, 0.0
  %v4964 = vmax.f32 %v4602, 0.0
  %v4965 = vmax.f32 %v4603, 0.0
  %v4966 = vmax.f32 %v4604, 0.0
  %v4967 = vmax.f32 %v4605, 0.0
  %v4968 = vmax.f32 %v4606, 0.0
  %v4969 = vmax.f32 %v4607, 0.0
  %v4970 = vmax.f32 %v4608, 0.0
  %v4971 = vmax.f32 %v4609, 0.0
  %v4972 = vmax.f32 %v4610, 0.0
  %v4973 = vmax.f32 %v4611, 0.0
  %v4974 = vmax.f32 %v4612, 0.0
  %v4975 = vmax.f32 %v4613, 0.0
  %v4976 = vmax.f32 %v4614, 0.0
  %v4977 = vmax.f32 %v4615, 0.0
  %v4978 = vmax.f32 %v4616, 0.0
  %v4979 = vmax.f32 %v4617, 0.0
  %v4980 = vmax.f32 %v4618, 0.0
  %v4981 = vmax.f32 %v4619, 0.0
  %v4982 = vmax.f32 %v4620, 0.0
  %v4983 = vmax.f32 %v4621, 0.0
  %v4984 = vmax.f32 %v4622, 0.0
  %v4985 = vmax.f32 %v4623, 0.0
  %v4986 = vmax.f32 %v4624, 0.0
  %v4987 = vmax.f32 %v4625, 0.0
  %v4988 = vmax.f32 %v4626, 0.0
  %v4989 = vmax.f32 %v4627, 0.0
  %v4990 = vmax.f32 %v4628, 0.0
  %v4991 = vmax.f32 %v4629, 0.0
  %v4992 = vmax.f32 %v4630, 0.0
  %v4993 = vmax.f32 %v4631, 0.0
  %v4994 = vmax.f32 %v4632, 0.0
  %v4995 = vmax.f32 %v4633, 0.0
  %v4996 = vmax.f32 %v4634, 0.0
  %v4997 = vmax.f32 %v4635, 0.0
  %v4998 = vmax.f32 %v4636, 0.0
  %v4999 = vmax.f32 %v4637, 0.0
  %v5000 = vmax.f32 %v4638, 0.0
  %v5001 = vmax.f32 %v4639, 0.0
  %v5002 = vmax.f32 %v4640, 0.0
  %v5003 = vmax.f32 %v4641, 0.0
  %v5004 = vmax.f32 %v4642, 0.0
  %v5005 = vmax.f32 %v4643, 0.0
  %v5006 = vmax.f32 %v4644, 0.0
  %v5007 = vmax.f32 %v4645, 0.0
  %v5008 = vmax.f32 %v4646, 0.0
  %v5009 = vmax.f32 %v4647, 0.0
  %v5010 = vmax.f32 %v4648, 0.0
  %v5011 = vmax.f32 %v4649, 0.0
  %v5012 = vmax.f32 %v4650, 0.0
  %v5013 = vmax.f32 %v4651, 0.0
  %v5014 = vmax.f32 %v4652, 0.0
  %v5015 = vmax.f32 %v4653, 0.0
  %v5016 = vmax.f32 %v4654, 0.0
  %v5017 = vmax.f32 %v4655, 0.0
  %v5018 = vmax.f32 %v4656, 0.0
  %v5019 = vmax.f32 %v4657, 0.0
  %v5020 = vmax.f32 %v4658, 0.0
  %v5021 = vmax.f32 %v4659, 0.0
  %v5022 = vmax.f32 %v4660, 0.0
  %v5023 = vmax.f32 %v4661, 0.0
  %v5024 = vmax.f32 %v4662, 0.0
  %v5025 = vmax.f32 %v4663, 0.0
  %v5026 = vmax.f32 %v4664, 0.0
  %v5027 = vmax.f32 %v4665, 0.0
  %v5028 = vmax.f32 %v4666, 0.0
  %v5029 = vmax.f32 %v4667, 0.0
  %v5030 = vmax.f32 %v4668, 0.0
  %v5031 = vmax.f32 %v4669, 0.0
  %v5032 = vmax.f32 %v4670, 0.0
  %v5033 = vmax.f32 %v4671, 0.0
  %v5034 = vmax.f32 %v4672, 0.0
  %v5035 = vmax.f32 %v4673, 0.0
  %v5036 = vmax.f32 %v4674, 0.0
  %v5037 = vmax.f32 %v4675, 0.0
  %v5038 = vmax.f32 %v4676, 0.0
  %v5039 = vmax.f32 %v4677, 0.0
  %v5040 = vmax.f32 %v4678, 0.0
  %v5041 = vmax.f32 %v4679, 0.0
  %v5042 = vmax.f32 %v4680, 0.0
  %v5043 = vmax.f32 %v4681, 0.0
  %v5044 = vmax.f32 %v4682, 0.0
  %v5045 = vmax.f32 %v4683, 0.0
  %v5046 = vmax.f32 %v4684, 0.0
  %v5047 = vmax.f32 %v4685, 0.0
  %v5048 = vmax.f32 %v4686, 0.0
  %v5049 = vmax.f32 %v4687, 0.0
  %v5050 = vmax.f32 %v4688, 0.0
  %v5051 = vmax.f32 %v4689, 0.0
  %v5052 = vmax.f32 %v4690, 0.0
  %v5053 = vmax.f32 %v4691, 0.0
  %v5054 = vmax.f32 %v4692, 0.0
  %v5055 = vmax.f32 %v4693, 0.0
  %v5056 = vmax.f32 %v4694, 0.0
  %v5057 = vmax.f32 %v4695, 0.0
  %v5058 = vmax.f32 %v4696, 0.0
  %v5059 = vmax.f32 %v4697, 0.0
  %v5060 = vmax.f32 %v4698, 0.0
  %v5061 = vmax.f32 %v4699, 0.0
  %v5062 = vmax.f32 %v4700, 0.0
  %v5063 = vmax.f32 %v4701, 0.0
  %v5064 = vmax.f32 %v4702, 0.0
  %v5065 = vmax.f32 %v4703, 0.0
  %v5066 = vmax.f32 %v4704, 0.0
  %v5067 = vmax.f32 %v4705, 0.0
  %v5068 = vmax.f32 %v4706, 0.0
  %v5069 = vmax.f32 %v4707, 0.0
  %v5070 = vmax.f32 %v4708, 0.0
  %v5071 = vmax.f32 %v4709, 0.0
  %v5072 = vmax.f32 %v4710, 0.0
  %v5073 = vmax.f32 %v4711, 0.0
  %v5074 = vmax.f32 %v4712, 0.0
  %v5075 = vmax.f32 %v4713, 0.0
  %v5076 = vmax.f32 %v4714, 0.0
  %v5077 = vmax.f32 %v4715, 0.0
  %v5078 = vmax.f32 %v4716, 0.0
  %v5079 = vmax.f32 %v4717, 0.0
  %v5080 = vmax.f32 %v4718, 0.0
  %v5081 = vmax.f32 %v4719, 0.0
  %v5082 = vmax.f32 %v4720, 0.0
  %v5083 = vmax.f32 %v4721, 0.0
  %v5084 = vmax.f32 %v4722, 0.0
  %v5085 = vmax.f32 %v4723, 0.0
  %v5086 = vmax.f32 %v4724, 0.0
  %v5087 = vmax.f32 %v4725, 0.0
  %v5088 = vmax.f32 %v4726, 0.0
  %v5089 = vmax.f32 %v4727, 0.0
  %v5090 = vmax.f32 %v4728, 0.0
  %v5091 = vmax.f32 %v4729, 0.0
  %v5092 = vmax.f32 %v4730, 0.0
  %v5093 = vmax.f32 %v4731, 0.0
  %v5094 = vmax.f32 %v4732, 0.0
  %v5095 = vmax.f32 %v4733, 0.0
  %v5096 = vmax.f32 %v4734, 0.0
  %v5097 = vmax.f32 %v4735, 0.0
  %v5098 = vmax.f32 %v4736, 0.0
  %v5099 = vmax.f32 %v4737, 0.0
  %v5100 = vmax.f32 %v4738, 0.0
  %v5101 = vmax.f32 %v4739, 0.0
  %v5102 = vmax.f32 %v4740, 0.0
  %v5103 = vmax.f32 %v4741, 0.0
  %v5104 = vmax.f32 %v4742, 0.0
  %v5105 = vmax.f32 %v4743, 0.0
  %v5106 = vmax.f32 %v4744, 0.0
  %v5107 = vmax.f32 %v4745, 0.0
  %v5108 = vmax.f32 %v4746, 0.0
  %v5109 = vmax.f32 %v4747, 0.0
  %v5110 = vmax.f32 %v4748, 0.0
  %v5111 = vmax.f32 %v4749, 0.0
  %v5112 = vmax.f32 %v4750, 0.0
  %v5113 = vmax.f32 %v4751, 0.0
  %v5114 = vmax.f32 %v4752, 0.0
  %v5115 = vmax.f32 %v4753, 0.0
  %v5116 = vmax.f32 %v4754, 0.0
  %v5117 = vmax.f32 %v4755, 0.0
  %v5118 = vmax.f32 %v4756, 0.0
  %v5119 = vmax.f32 %v4757, 0.0
  %v5120 = vmax.f32 %v4758, 0.0
  %v5121 = vmax.f32 %v4759, 0.0
  %v5122 = vmax.f32 %v4760, 0.0
  %v5123 = vmax.f32 %v4761, 0.0
  %v5124 = vmax.f32 %v4762, 0.0
  %v5125 = vmax.f32 %v4763, 0.0
  %v5126 = vmax.f32 %v4764, 0.0
  %v5127 = vmax.f32 %v4765, 0.0
  %v5128 = vmax.f32 %v4766, 0.0
  %v5129 = vmax.f32 %v4767, 0.0
  %v5130 = vmax.f32 %v4768, 0.0
  %v5131 = vmax.f32 %v4769, 0.0
  %v5132 = vmax.f32 %v4770, 0.0
  %v5133 = vmax.f32 %v4771, 0.0
  %v5134 = vmax.f32 %v4772, 0.0
  %v5135 = vmax.f32 %v4773, 0.0
  %v5136 = vmax.f32 %v4774, 0.0
  %v5137 = vmax.f32 %v4775, 0.0
  %v5138 = vmax.f32 %v4776, 0.0
  %v5139 = vmax.f32 %v4777, 0.0
  %v5140 = vmax.f32 %v4778, 0.0
  %v5141 = vmax.f32 %v4779, 0.0
  %v5142 = vmax.f32 %v4780, 0.0
  %v5143 = vmax.f32 %v4781, 0.0
  %v5144 = vmax.f32 %v4782, 0.0
  %v5145 = vmax.f32 %v4783, 0.0
  %v5146 = vmax.f32 %v4784, 0.0
  %v5147 = vmax.f32 %v4785, 0.0
  %v5148 = vmax.f32 %v4786, 0.0
  %v5149 = vmax.f32 %v4787, 0.0
  %v5150 = vmax.f32 %v4788, 0.0
  %v5151 = vmax.f32 %v4789, 0.0
  %v5152 = vmax.f32 %v4790, 0.0
  %v5153 = vmax.f32 %v4791, 0.0
  %v5154 = vmax.f32 %v4792, 0.0
  %v5155 = vmax.f32 %v4793, 0.0
  %v5156 = vmax.f32 %v4794, 0.0
  %v5157 = vmax.f32 %v4795, 0.0
  %v5158 = vmax.f32 %v4796, 0.0
  %v5159 = vmax.f32 %v4797, 0.0
  %v5160 = vmax.f32 %v4798, 0.0
  %v5161 = vmax.f32 %v4799, 0.0
  %v5162 = vmax.f32 %v4800, 0.0
  %v5163 = vmax.f32 %v4801, 0.0
  %v5164 = vmax.f32 %v4802, 0.0
  %v5165 = vmax.f32 %v4803, 0.0
  %v5166 = vmax.f32 %v4804, 0.0
  %v5167 = vmax.f32 %v4805, 0.0
  %v5168 = vmax.f32 %v4806, 0.0
  %v5169 = vmax.f32 %v4807, 0.0
  %v5170 = vmax.f32 %v4808, 0.0
  %v5171 = vmax.f32 %v4809, 0.0
  %v5172 = vmax.f32 %v4810, 0.0
  %v5173 = vmax.f32 %v4811, 0.0
  %v5174 = vmax.f32 %v4812, 0.0
  %v5175 = vmax.f32 %v4813, 0.0
  %v5176 = vmax.f32 %v4814, 0.0
  %v5177 = vmax.f32 %v4815, 0.0
  %v5178 = vmax.f32 %v4816, 0.0
  %v5179 = vmax.f32 %v4817, 0.0
  %v5180 = vmax.f32 %v4818, 0.0
  %v5181 = vmax.f32 %v4819, 0.0
  %v5182 = vmax.f32 %v4820, 0.0
  %v5183 = vmax.f32 %v4821, 0.0
  %v5184 = vmax.f32 %v4822, 0.0
  %v5185 = vmax.f32 %v4823, 0.0
  %v5186 = vmax.f32 %v4824, 0.0
  %v5187 = vmax.f32 %v4825, 0.0
  %v5188 = vmax.f32 %v4826, 0.0
  %v5189 = vmax.f32 %v4827, 0.0
  %v5190 = vmax.f32 %v4828, 0.0
  %v5191 = vmax.f32 %v4829, 0.0
  %v5192 = vmax.f32 %v4830, 0.0
  %v5193 = vmax.f32 %v4831, 0.0
  %v5194 = vmax.f32 %v4832, 0.0
  %v5195 = vmax.f32 %v4833, 0.0
  %v5196 = vmax.f32 %v4834, 0.0
  %v5197 = vmax.f32 %v4835, 0.0
  %v5198 = vmax.f32 %v4836, 0.0
  %v5199 = vmax.f32 %v4837, 0.0
  %v5200 = vmax.f32 %v4838, 0.0
  %v5201 = vmax.f32 %v4839, 0.0
  %v5202 = vmax.f32 %v4840, 0.0
  %v5203 = vmax.f32 %v4841, 0.0
  %v5204 = vmax.f32 %v4842, 0.0
  %v5205 = vmax.f32 %v4843, 0.0
  %v5206 = vmax.f32 %v4844, 0.0
  %v5207 = vmax.f32 %v4845, 0.0
  %v5208 = vmax.f32 %v4846, 0.0
  %v5209 = vmax.f32 %v4847, 0.0
  %v5210 = vmax.f32 %v4848, 0.0
  %v5211 = vmax.f32 %v4849, 0.0
  %v5212 = vmax.f32 %v4850, 0.0
  %v5213 = vmax.f32 %v4851, 0.0
  %v5214 = vmax.f32 %v4852, 0.0
  %v5215 = vmax.f32 %v4853, 0.0
  %v5216 = vmax.f32 %v4854, 0.0
  %v5217 = vpack.c.bf16 %v4856, %v4855
  %v5218 = vpack.c.bf16 %v4858, %v4857
  %v5219 = vpack.c.bf16 %v4860, %v4859
  %v5220 = vpack.c.bf16 %v4862, %v4861
  %v5221 = vpack.c.bf16 %v4864, %v4863
  %v5222 = vpack.c.bf16 %v4866, %v4865
  %v5223 = vpack.c.bf16 %v4868, %v4867
  %v5224 = vpack.c.bf16 %v4870, %v4869
  %v5225 = vpack.c.bf16 %v4872, %v4871
  %v5226 = vpack.c.bf16 %v4874, %v4873
  %v5227 = vpack.c.bf16 %v4876, %v4875
  %v5228 = vpack.c.bf16 %v4878, %v4877
  %v5229 = vpack.c.bf16 %v4880, %v4879
  %v5230 = vpack.c.bf16 %v4882, %v4881
  %v5231 = vpack.c.bf16 %v4884, %v4883
  %v5232 = vpack.c.bf16 %v4886, %v4885
  %v5233 = vpack.c.bf16 %v4888, %v4887
  %v5234 = vpack.c.bf16 %v4890, %v4889
  %v5235 = vpack.c.bf16 %v4892, %v4891
  %v5236 = vpack.c.bf16 %v4894, %v4893
  %v5237 = vpack.c.bf16 %v4896, %v4895
  %v5238 = vpack.c.bf16 %v4898, %v4897
  %v5239 = vpack.c.bf16 %v4900, %v4899
  %v5240 = vpack.c.bf16 %v4902, %v4901
  %v5241 = vpack.c.bf16 %v4904, %v4903
  %v5242 = vpack.c.bf16 %v4906, %v4905
  %v5243 = vpack.c.bf16 %v4908, %v4907
  %v5244 = vpack.c.bf16 %v4910, %v4909
  %v5245 = vpack.c.bf16 %v4912, %v4911
  %v5246 = vpack.c.bf16 %v4914, %v4913
  %v5247 = vpack.c.bf16 %v4916, %v4915
  %v5248 = vpack.c.bf16 %v4918, %v4917
  %v5249 = vpack.c.bf16 %v4920, %v4919
  %v5250 = vpack.c.bf16 %v4922, %v4921
  %v5251 = vpack.c.bf16 %v4924, %v4923
  %v5252 = vpack.c.bf16 %v4926, %v4925
  %v5253 = vpack.c.bf16 %v4928, %v4927
  %v5254 = vpack.c.bf16 %v4930, %v4929
  %v5255 = vpack.c.bf16 %v4932, %v4931
  %v5256 = vpack.c.bf16 %v4934, %v4933
  %v5257 = vpack.c.bf16 %v4936, %v4935
  %v5258 = vpack.c.bf16 %v4938, %v4937
  %v5259 = vpack.c.bf16 %v4940, %v4939
  %v5260 = vpack.c.bf16 %v4942, %v4941
  %v5261 = vpack.c.bf16 %v4944, %v4943
  %v5262 = vpack.c.bf16 %v4946, %v4945
  %v5263 = vpack.c.bf16 %v4948, %v4947
  %v5264 = vpack.c.bf16 %v4950, %v4949
  %v5265 = vpack.c.bf16 %v4952, %v4951
  %v5266 = vpack.c.bf16 %v4954, %v4953
  %v5267 = vpack.c.bf16 %v4956, %v4955
  %v5268 = vpack.c.bf16 %v4958, %v4957
  %v5269 = vpack.c.bf16 %v4960, %v4959
  %v5270 = vpack.c.bf16 %v4962, %v4961
  %v5271 = vpack.c.bf16 %v4964, %v4963
  %v5272 = vpack.c.bf16 %v4966, %v4965
  %v5273 = vpack.c.bf16 %v4968, %v4967
  %v5274 = vpack.c.bf16 %v4970, %v4969
  %v5275 = vpack.c.bf16 %v4972, %v4971
  %v5276 = vpack.c.bf16 %v4974, %v4973
  %v5277 = vpack.c.bf16 %v4976, %v4975
  %v5278 = vpack.c.bf16 %v4978, %v4977
  %v5279 = vpack.c.bf16 %v4980, %v4979
  %v5280 = vpack.c.bf16 %v4982, %v4981
  %v5281 = vpack.c.bf16 %v4984, %v4983
  %v5282 = vpack.c.bf16 %v4986, %v4985
  %v5283 = vpack.c.bf16 %v4988, %v4987
  %v5284 = vpack.c.bf16 %v4990, %v4989
  %v5285 = vpack.c.bf16 %v4992, %v4991
  %v5286 = vpack.c.bf16 %v4994, %v4993
  %v5287 = vpack.c.bf16 %v4996, %v4995
  %v5288 = vpack.c.bf16 %v4998, %v4997
  %v5289 = vpack.c.bf16 %v5000, %v4999
  %v5290 = vpack.c.bf16 %v5002, %v5001
  %v5291 = vpack.c.bf16 %v5004, %v5003
  %v5292 = vpack.c.bf16 %v5006, %v5005
  %v5293 = vpack.c.bf16 %v5008, %v5007
  %v5294 = vpack.c.bf16 %v5010, %v5009
  %v5295 = vpack.c.bf16 %v5012, %v5011
  %v5296 = vpack.c.bf16 %v5014, %v5013
  %v5297 = vpack.c.bf16 %v5016, %v5015
  %v5298 = vpack.c.bf16 %v5018, %v5017
  %v5299 = vpack.c.bf16 %v5020, %v5019
  %v5300 = vpack.c.bf16 %v5022, %v5021
  %v5301 = vpack.c.bf16 %v5024, %v5023
  %v5302 = vpack.c.bf16 %v5026, %v5025
  %v5303 = vpack.c.bf16 %v5028, %v5027
  %v5304 = vpack.c.bf16 %v5030, %v5029
  %v5305 = vpack.c.bf16 %v5032, %v5031
  %v5306 = vpack.c.bf16 %v5034, %v5033
  %v5307 = vpack.c.bf16 %v5036, %v5035
  %v5308 = vpack.c.bf16 %v5038, %v5037
  %v5309 = vpack.c.bf16 %v5040, %v5039
  %v5310 = vpack.c.bf16 %v5042, %v5041
  %v5311 = vpack.c.bf16 %v5044, %v5043
  %v5312 = vpack.c.bf16 %v5046, %v5045
  %v5313 = vpack.c.bf16 %v5048, %v5047
  %v5314 = vpack.c.bf16 %v5050, %v5049
  %v5315 = vpack.c.bf16 %v5052, %v5051
  %v5316 = vpack.c.bf16 %v5054, %v5053
  %v5317 = vpack.c.bf16 %v5056, %v5055
  %v5318 = vpack.c.bf16 %v5058, %v5057
  %v5319 = vpack.c.bf16 %v5060, %v5059
  %v5320 = vpack.c.bf16 %v5062, %v5061
  %v5321 = vpack.c.bf16 %v5064, %v5063
  %v5322 = vpack.c.bf16 %v5066, %v5065
  %v5323 = vpack.c.bf16 %v5068, %v5067
  %v5324 = vpack.c.bf16 %v5070, %v5069
  %v5325 = vpack.c.bf16 %v5072, %v5071
  %v5326 = vpack.c.bf16 %v5074, %v5073
  %v5327 = vpack.c.bf16 %v5076, %v5075
  %v5328 = vpack.c.bf16 %v5078, %v5077
  %v5329 = vpack.c.bf16 %v5080, %v5079
  %v5330 = vpack.c.bf16 %v5082, %v5081
  %v5331 = vpack.c.bf16 %v5084, %v5083
  %v5332 = vpack.c.bf16 %v5086, %v5085
  %v5333 = vpack.c.bf16 %v5088, %v5087
  %v5334 = vpack.c.bf16 %v5090, %v5089
  %v5335 = vpack.c.bf16 %v5092, %v5091
  %v5336 = vpack.c.bf16 %v5094, %v5093
  %v5337 = vpack.c.bf16 %v5096, %v5095
  %v5338 = vpack.c.bf16 %v5098, %v5097
  %v5339 = vpack.c.bf16 %v5100, %v5099
  %v5340 = vpack.c.bf16 %v5102, %v5101
  %v5341 = vpack.c.bf16 %v5104, %v5103
  %v5342 = vpack.c.bf16 %v5106, %v5105
  %v5343 = vpack.c.bf16 %v5108, %v5107
  %v5344 = vpack.c.bf16 %v5110, %v5109
  %v5345 = vpack.c.bf16 %v5112, %v5111
  %v5346 = vpack.c.bf16 %v5114, %v5113
  %v5347 = vpack.c.bf16 %v5116, %v5115
  %v5348 = vpack.c.bf16 %v5118, %v5117
  %v5349 = vpack.c.bf16 %v5120, %v5119
  %v5350 = vpack.c.bf16 %v5122, %v5121
  %v5351 = vpack.c.bf16 %v5124, %v5123
  %v5352 = vpack.c.bf16 %v5126, %v5125
  %v5353 = vpack.c.bf16 %v5128, %v5127
  %v5354 = vpack.c.bf16 %v5130, %v5129
  %v5355 = vpack.c.bf16 %v5132, %v5131
  %v5356 = vpack.c.bf16 %v5134, %v5133
  %v5357 = vpack.c.bf16 %v5136, %v5135
  %v5358 = vpack.c.bf16 %v5138, %v5137
  %v5359 = vpack.c.bf16 %v5140, %v5139
  %v5360 = vpack.c.bf16 %v5142, %v5141
  %v5361 = vpack.c.bf16 %v5144, %v5143
  %v5362 = vpack.c.bf16 %v5146, %v5145
  %v5363 = vpack.c.bf16 %v5148, %v5147
  %v5364 = vpack.c.bf16 %v5150, %v5149
  %v5365 = vpack.c.bf16 %v5152, %v5151
  %v5366 = vpack.c.bf16 %v5154, %v5153
  %v5367 = vpack.c.bf16 %v5156, %v5155
  %v5368 = vpack.c.bf16 %v5158, %v5157
  %v5369 = vpack.c.bf16 %v5160, %v5159
  %v5370 = vpack.c.bf16 %v5162, %v5161
  %v5371 = vpack.c.bf16 %v5164, %v5163
  %v5372 = vpack.c.bf16 %v5166, %v5165
  %v5373 = vpack.c.bf16 %v5168, %v5167
  %v5374 = vpack.c.bf16 %v5170, %v5169
  %v5375 = vpack.c.bf16 %v5172, %v5171
  %v5376 = vpack.c.bf16 %v5174, %v5173
  %v5377 = vpack.c.bf16 %v5176, %v5175
  %v5378 = vpack.c.bf16 %v5178, %v5177
  %v5379 = vpack.c.bf16 %v5180, %v5179
  %v5380 = vpack.c.bf16 %v5182, %v5181
  %v5381 = vpack.c.bf16 %v5184, %v5183
  %v5382 = vpack.c.bf16 %v5186, %v5185
  %v5383 = vpack.c.bf16 %v5188, %v5187
  %v5384 = vpack.c.bf16 %v5190, %v5189
  %v5385 = vpack.c.bf16 %v5192, %v5191
  %v5386 = vpack.c.bf16 %v5194, %v5193
  %v5387 = vpack.c.bf16 %v5196, %v5195
  %v5388 = vpack.c.bf16 %v5198, %v5197
  %v5389 = vpack.c.bf16 %v5200, %v5199
  %v5390 = vpack.c.bf16 %v5202, %v5201
  %v5391 = vpack.c.bf16 %v5204, %v5203
  %v5392 = vpack.c.bf16 %v5206, %v5205
  %v5393 = vpack.c.bf16 %v5208, %v5207
  %v5394 = vpack.c.bf16 %v5210, %v5209
  %v5395 = vpack.c.bf16 %v5212, %v5211
  %v5396 = vpack.c.bf16 %v5214, %v5213
  %v5397 = vpack.c.bf16 %v5216, %v5215
  %v5579 = vunpack.c.l.b16 %v5217
  %v5580 = vunpack.c.h.b16 %v5217
  %v5581 = vunpack.c.l.b16 %v5218
  %v5582 = vunpack.c.h.b16 %v5218
  %v5583 = vunpack.c.l.b16 %v5219
  %v5584 = vunpack.c.h.b16 %v5219
  %v5585 = vunpack.c.l.b16 %v5220
  %v5586 = vunpack.c.h.b16 %v5220
  %v5587 = vunpack.c.l.b16 %v5221
  %v5588 = vunpack.c.h.b16 %v5221
  %v5589 = vunpack.c.l.b16 %v5222
  %v5590 = vunpack.c.h.b16 %v5222
  %v5591 = vunpack.c.l.b16 %v5223
  %v5592 = vunpack.c.h.b16 %v5223
  %v5593 = vunpack.c.l.b16 %v5224
  %v5594 = vunpack.c.h.b16 %v5224
  %v5595 = vunpack.c.l.b16 %v5225
  %v5596 = vunpack.c.h.b16 %v5225
  %v5597 = vunpack.c.l.b16 %v5226
  %v5598 = vunpack.c.h.b16 %v5226
  %v5599 = vunpack.c.l.b16 %v5227
  %v5600 = vunpack.c.h.b16 %v5227
  %v5601 = vunpack.c.l.b16 %v5228
  %v5602 = vunpack.c.h.b16 %v5228
  %v5603 = vunpack.c.l.b16 %v5229
  %v5604 = vunpack.c.h.b16 %v5229
  %v5605 = vunpack.c.l.b16 %v5230
  %v5606 = vunpack.c.h.b16 %v5230
  %v5607 = vunpack.c.l.b16 %v5231
  %v5608 = vunpack.c.h.b16 %v5231
  %v5609 = vunpack.c.l.b16 %v5232
  %v5610 = vunpack.c.h.b16 %v5232
  %v5611 = vunpack.c.l.b16 %v5233
  %v5612 = vunpack.c.h.b16 %v5233
  %v5613 = vunpack.c.l.b16 %v5234
  %v5614 = vunpack.c.h.b16 %v5234
  %v5615 = vunpack.c.l.b16 %v5235
  %v5616 = vunpack.c.h.b16 %v5235
  %v5617 = vunpack.c.l.b16 %v5236
  %v5618 = vunpack.c.h.b16 %v5236
  %v5619 = vunpack.c.l.b16 %v5237
  %v5620 = vunpack.c.h.b16 %v5237
  %v5621 = vunpack.c.l.b16 %v5238
  %v5622 = vunpack.c.h.b16 %v5238
  %v5623 = vunpack.c.l.b16 %v5239
  %v5624 = vunpack.c.h.b16 %v5239
  %v5625 = vunpack.c.l.b16 %v5240
  %v5626 = vunpack.c.h.b16 %v5240
  %v5627 = vunpack.c.l.b16 %v5241
  %v5628 = vunpack.c.h.b16 %v5241
  %v5629 = vunpack.c.l.b16 %v5242
  %v5630 = vunpack.c.h.b16 %v5242
  %v5631 = vunpack.c.l.b16 %v5243
  %v5632 = vunpack.c.h.b16 %v5243
  %v5633 = vunpack.c.l.b16 %v5244
  %v5634 = vunpack.c.h.b16 %v5244
  %v5635 = vunpack.c.l.b16 %v5245
  %v5636 = vunpack.c.h.b16 %v5245
  %v5637 = vunpack.c.l.b16 %v5246
  %v5638 = vunpack.c.h.b16 %v5246
  %v5639 = vunpack.c.l.b16 %v5247
  %v5640 = vunpack.c.h.b16 %v5247
  %v5641 = vunpack.c.l.b16 %v5248
  %v5642 = vunpack.c.h.b16 %v5248
  %v5643 = vunpack.c.l.b16 %v5249
  %v5644 = vunpack.c.h.b16 %v5249
  %v5645 = vunpack.c.l.b16 %v5250
  %v5646 = vunpack.c.h.b16 %v5250
  %v5647 = vunpack.c.l.b16 %v5251
  %v5648 = vunpack.c.h.b16 %v5251
  %v5649 = vunpack.c.l.b16 %v5252
  %v5650 = vunpack.c.h.b16 %v5252
  %v5651 = vunpack.c.l.b16 %v5253
  %v5652 = vunpack.c.h.b16 %v5253
  %v5653 = vunpack.c.l.b16 %v5254
  %v5654 = vunpack.c.h.b16 %v5254
  %v5655 = vunpack.c.l.b16 %v5255
  %v5656 = vunpack.c.h.b16 %v5255
  %v5657 = vunpack.c.l.b16 %v5256
  %v5658 = vunpack.c.h.b16 %v5256
  %v5659 = vunpack.c.l.b16 %v5257
  %v5660 = vunpack.c.h.b16 %v5257
  %v5661 = vunpack.c.l.b16 %v5258
  %v5662 = vunpack.c.h.b16 %v5258
  %v5663 = vunpack.c.l.b16 %v5259
  %v5664 = vunpack.c.h.b16 %v5259
  %v5665 = vunpack.c.l.b16 %v5260
  %v5666 = vunpack.c.h.b16 %v5260
  %v5667 = vunpack.c.l.b16 %v5261
  %v5668 = vunpack.c.h.b16 %v5261
  %v5669 = vunpack.c.l.b16 %v5262
  %v5670 = vunpack.c.h.b16 %v5262
  %v5671 = vunpack.c.l.b16 %v5263
  %v5672 = vunpack.c.h.b16 %v5263
  %v5673 = vunpack.c.l.b16 %v5264
  %v5674 = vunpack.c.h.b16 %v5264
  %v5675 = vunpack.c.l.b16 %v5265
  %v5676 = vunpack.c.h.b16 %v5265
  %v5677 = vunpack.c.l.b16 %v5266
  %v5678 = vunpack.c.h.b16 %v5266
  %v5679 = vunpack.c.l.b16 %v5267
  %v5680 = vunpack.c.h.b16 %v5267
  %v5681 = vunpack.c.l.b16 %v5268
  %v5682 = vunpack.c.h.b16 %v5268
  %v5683 = vunpack.c.l.b16 %v5269
  %v5684 = vunpack.c.h.b16 %v5269
  %v5685 = vunpack.c.l.b16 %v5270
  %v5686 = vunpack.c.h.b16 %v5270
  %v5687 = vunpack.c.l.b16 %v5271
  %v5688 = vunpack.c.h.b16 %v5271
  %v5689 = vunpack.c.l.b16 %v5272
  %v5690 = vunpack.c.h.b16 %v5272
  %v5691 = vunpack.c.l.b16 %v5273
  %v5692 = vunpack.c.h.b16 %v5273
  %v5693 = vunpack.c.l.b16 %v5274
  %v5694 = vunpack.c.h.b16 %v5274
  %v5695 = vunpack.c.l.b16 %v5275
  %v5696 = vunpack.c.h.b16 %v5275
  %v5697 = vunpack.c.l.b16 %v5276
  %v5698 = vunpack.c.h.b16 %v5276
  %v5699 = vunpack.c.l.b16 %v5277
  %v5700 = vunpack.c.h.b16 %v5277
  %v5701 = vunpack.c.l.b16 %v5278
  %v5702 = vunpack.c.h.b16 %v5278
  %v5703 = vunpack.c.l.b16 %v5279
  %v5704 = vunpack.c.h.b16 %v5279
  %v5705 = vunpack.c.l.b16 %v5280
  %v5706 = vunpack.c.h.b16 %v5280
  %v5707 = vunpack.c.l.b16 %v5281
  %v5708 = vunpack.c.h.b16 %v5281
  %v5709 = vunpack.c.l.b16 %v5282
  %v5710 = vunpack.c.h.b16 %v5282
  %v5711 = vunpack.c.l.b16 %v5283
  %v5712 = vunpack.c.h.b16 %v5283
  %v5713 = vunpack.c.l.b16 %v5284
  %v5714 = vunpack.c.h.b16 %v5284
  %v5715 = vunpack.c.l.b16 %v5285
  %v5716 = vunpack.c.h.b16 %v5285
  %v5717 = vunpack.c.l.b16 %v5286
  %v5718 = vunpack.c.h.b16 %v5286
  %v5719 = vunpack.c.l.b16 %v5287
  %v5720 = vunpack.c.h.b16 %v5287
  %v5721 = vunpack.c.l.b16 %v5288
  %v5722 = vunpack.c.h.b16 %v5288
  %v5723 = vunpack.c.l.b16 %v5289
  %v5724 = vunpack.c.h.b16 %v5289
  %v5725 = vunpack.c.l.b16 %v5290
  %v5726 = vunpack.c.h.b16 %v5290
  %v5727 = vunpack.c.l.b16 %v5291
  %v5728 = vunpack.c.h.b16 %v5291
  %v5729 = vunpack.c.l.b16 %v5292
  %v5730 = vunpack.c.h.b16 %v5292
  %v5731 = vunpack.c.l.b16 %v5293
  %v5732 = vunpack.c.h.b16 %v5293
  %v5733 = vunpack.c.l.b16 %v5294
  %v5734 = vunpack.c.h.b16 %v5294
  %v5735 = vunpack.c.l.b16 %v5295
  %v5736 = vunpack.c.h.b16 %v5295
  %v5737 = vunpack.c.l.b16 %v5296
  %v5738 = vunpack.c.h.b16 %v5296
  %v5739 = vunpack.c.l.b16 %v5297
  %v5740 = vunpack.c.h.b16 %v5297
  %v5741 = vunpack.c.l.b16 %v5298
  %v5742 = vunpack.c.h.b16 %v5298
  %v5743 = vunpack.c.l.b16 %v5299
  %v5744 = vunpack.c.h.b16 %v5299
  %v5745 = vunpack.c.l.b16 %v5300
  %v5746 = vunpack.c.h.b16 %v5300
  %v5747 = vunpack.c.l.b16 %v5301
  %v5748 = vunpack.c.h.b16 %v5301
  %v5749 = vunpack.c.l.b16 %v5302
  %v5750 = vunpack.c.h.b16 %v5302
  %v5751 = vunpack.c.l.b16 %v5303
  %v5752 = vunpack.c.h.b16 %v5303
  %v5753 = vunpack.c.l.b16 %v5304
  %v5754 = vunpack.c.h.b16 %v5304
  %v5755 = vunpack.c.l.b16 %v5305
  %v5756 = vunpack.c.h.b16 %v5305
  %v5757 = vunpack.c.l.b16 %v5306
  %v5758 = vunpack.c.h.b16 %v5306
  %v5759 = vunpack.c.l.b16 %v5307
  %v5760 = vunpack.c.h.b16 %v5307
  %v5761 = vunpack.c.l.b16 %v5308
  %v5762 = vunpack.c.h.b16 %v5308
  %v5763 = vunpack.c.l.b16 %v5309
  %v5764 = vunpack.c.h.b16 %v5309
  %v5765 = vunpack.c.l.b16 %v5310
  %v5766 = vunpack.c.h.b16 %v5310
  %v5767 = vunpack.c.l.b16 %v5311
  %v5768 = vunpack.c.h.b16 %v5311
  %v5769 = vunpack.c.l.b16 %v5312
  %v5770 = vunpack.c.h.b16 %v5312
  %v5771 = vunpack.c.l.b16 %v5313
  %v5772 = vunpack.c.h.b16 %v5313
  %v5773 = vunpack.c.l.b16 %v5314
  %v5774 = vunpack.c.h.b16 %v5314
  %v5775 = vunpack.c.l.b16 %v5315
  %v5776 = vunpack.c.h.b16 %v5315
  %v5777 = vunpack.c.l.b16 %v5316
  %v5778 = vunpack.c.h.b16 %v5316
  %v5779 = vunpack.c.l.b16 %v5317
  %v5780 = vunpack.c.h.b16 %v5317
  %v5781 = vunpack.c.l.b16 %v5318
  %v5782 = vunpack.c.h.b16 %v5318
  %v5783 = vunpack.c.l.b16 %v5319
  %v5784 = vunpack.c.h.b16 %v5319
  %v5785 = vunpack.c.l.b16 %v5320
  %v5786 = vunpack.c.h.b16 %v5320
  %v5787 = vunpack.c.l.b16 %v5321
  %v5788 = vunpack.c.h.b16 %v5321
  %v5789 = vunpack.c.l.b16 %v5322
  %v5790 = vunpack.c.h.b16 %v5322
  %v5791 = vunpack.c.l.b16 %v5323
  %v5792 = vunpack.c.h.b16 %v5323
  %v5793 = vunpack.c.l.b16 %v5324
  %v5794 = vunpack.c.h.b16 %v5324
  %v5795 = vunpack.c.l.b16 %v5325
  %v5796 = vunpack.c.h.b16 %v5325
  %v5797 = vunpack.c.l.b16 %v5326
  %v5798 = vunpack.c.h.b16 %v5326
  %v5799 = vunpack.c.l.b16 %v5327
  %v5800 = vunpack.c.h.b16 %v5327
  %v5801 = vunpack.c.l.b16 %v5328
  %v5802 = vunpack.c.h.b16 %v5328
  %v5803 = vunpack.c.l.b16 %v5329
  %v5804 = vunpack.c.h.b16 %v5329
  %v5805 = vunpack.c.l.b16 %v5330
  %v5806 = vunpack.c.h.b16 %v5330
  %v5807 = vunpack.c.l.b16 %v5331
  %v5808 = vunpack.c.h.b16 %v5331
  %v5809 = vunpack.c.l.b16 %v5332
  %v5810 = vunpack.c.h.b16 %v5332
  %v5811 = vunpack.c.l.b16 %v5333
  %v5812 = vunpack.c.h.b16 %v5333
  %v5813 = vunpack.c.l.b16 %v5334
  %v5814 = vunpack.c.h.b16 %v5334
  %v5815 = vunpack.c.l.b16 %v5335
  %v5816 = vunpack.c.h.b16 %v5335
  %v5817 = vunpack.c.l.b16 %v5336
  %v5818 = vunpack.c.h.b16 %v5336
  %v5819 = vunpack.c.l.b16 %v5337
  %v5820 = vunpack.c.h.b16 %v5337
  %v5821 = vunpack.c.l.b16 %v5338
  %v5822 = vunpack.c.h.b16 %v5338
  %v5823 = vunpack.c.l.b16 %v5339
  %v5824 = vunpack.c.h.b16 %v5339
  %v5825 = vunpack.c.l.b16 %v5340
  %v5826 = vunpack.c.h.b16 %v5340
  %v5827 = vunpack.c.l.b16 %v5341
  %v5828 = vunpack.c.h.b16 %v5341
  %v5829 = vunpack.c.l.b16 %v5342
  %v5830 = vunpack.c.h.b16 %v5342
  %v5831 = vunpack.c.l.b16 %v5343
  %v5832 = vunpack.c.h.b16 %v5343
  %v5833 = vunpack.c.l.b16 %v5344
  %v5834 = vunpack.c.h.b16 %v5344
  %v5835 = vunpack.c.l.b16 %v5345
  %v5836 = vunpack.c.h.b16 %v5345
  %v5837 = vunpack.c.l.b16 %v5346
  %v5838 = vunpack.c.h.b16 %v5346
  %v5839 = vunpack.c.l.b16 %v5347
  %v5840 = vunpack.c.h.b16 %v5347
  %v5841 = vunpack.c.l.b16 %v5348
  %v5842 = vunpack.c.h.b16 %v5348
  %v5843 = vunpack.c.l.b16 %v5349
  %v5844 = vunpack.c.h.b16 %v5349
  %v5845 = vunpack.c.l.b16 %v5350
  %v5846 = vunpack.c.h.b16 %v5350
  %v5847 = vunpack.c.l.b16 %v5351
  %v5848 = vunpack.c.h.b16 %v5351
  %v5849 = vunpack.c.l.b16 %v5352
  %v5850 = vunpack.c.h.b16 %v5352
  %v5851 = vunpack.c.l.b16 %v5353
  %v5852 = vunpack.c.h.b16 %v5353
  %v5853 = vunpack.c.l.b16 %v5354
  %v5854 = vunpack.c.h.b16 %v5354
  %v5855 = vunpack.c.l.b16 %v5355
  %v5856 = vunpack.c.h.b16 %v5355
  %v5857 = vunpack.c.l.b16 %v5356
  %v5858 = vunpack.c.h.b16 %v5356
  %v5859 = vunpack.c.l.b16 %v5357
  %v5860 = vunpack.c.h.b16 %v5357
  %v5861 = vunpack.c.l.b16 %v5358
  %v5862 = vunpack.c.h.b16 %v5358
  %v5863 = vunpack.c.l.b16 %v5359
  %v5864 = vunpack.c.h.b16 %v5359
  %v5865 = vunpack.c.l.b16 %v5360
  %v5866 = vunpack.c.h.b16 %v5360
  %v5867 = vunpack.c.l.b16 %v5361
  %v5868 = vunpack.c.h.b16 %v5361
  %v5869 = vunpack.c.l.b16 %v5362
  %v5870 = vunpack.c.h.b16 %v5362
  %v5871 = vunpack.c.l.b16 %v5363
  %v5872 = vunpack.c.h.b16 %v5363
  %v5873 = vunpack.c.l.b16 %v5364
  %v5874 = vunpack.c.h.b16 %v5364
  %v5875 = vunpack.c.l.b16 %v5365
  %v5876 = vunpack.c.h.b16 %v5365
  %v5877 = vunpack.c.l.b16 %v5366
  %v5878 = vunpack.c.h.b16 %v5366
  %v5879 = vunpack.c.l.b16 %v5367
  %v5880 = vunpack.c.h.b16 %v5367
  %v5881 = vunpack.c.l.b16 %v5368
  %v5882 = vunpack.c.h.b16 %v5368
  %v5883 = vunpack.c.l.b16 %v5369
  %v5884 = vunpack.c.h.b16 %v5369
  %v5885 = vunpack.c.l.b16 %v5370
  %v5886 = vunpack.c.h.b16 %v5370
  %v5887 = vunpack.c.l.b16 %v5371
  %v5888 = vunpack.c.h.b16 %v5371
  %v5889 = vunpack.c.l.b16 %v5372
  %v5890 = vunpack.c.h.b16 %v5372
  %v5891 = vunpack.c.l.b16 %v5373
  %v5892 = vunpack.c.h.b16 %v5373
  %v5893 = vunpack.c.l.b16 %v5374
  %v5894 = vunpack.c.h.b16 %v5374
  %v5895 = vunpack.c.l.b16 %v5375
  %v5896 = vunpack.c.h.b16 %v5375
  %v5897 = vunpack.c.l.b16 %v5376
  %v5898 = vunpack.c.h.b16 %v5376
  %v5899 = vunpack.c.l.b16 %v5377
  %v5900 = vunpack.c.h.b16 %v5377
  %v5901 = vunpack.c.l.b16 %v5378
  %v5902 = vunpack.c.h.b16 %v5378
  %v5903 = vunpack.c.l.b16 %v5379
  %v5904 = vunpack.c.h.b16 %v5379
  %v5905 = vunpack.c.l.b16 %v5380
  %v5906 = vunpack.c.h.b16 %v5380
  %v5907 = vunpack.c.l.b16 %v5381
  %v5908 = vunpack.c.h.b16 %v5381
  %v5909 = vunpack.c.l.b16 %v5382
  %v5910 = vunpack.c.h.b16 %v5382
  %v5911 = vunpack.c.l.b16 %v5383
  %v5912 = vunpack.c.h.b16 %v5383
  %v5913 = vunpack.c.l.b16 %v5384
  %v5914 = vunpack.c.h.b16 %v5384
  %v5915 = vunpack.c.l.b16 %v5385
  %v5916 = vunpack.c.h.b16 %v5385
  %v5917 = vunpack.c.l.b16 %v5386
  %v5918 = vunpack.c.h.b16 %v5386
  %v5919 = vunpack.c.l.b16 %v5387
  %v5920 = vunpack.c.h.b16 %v5387
  %v5921 = vunpack.c.l.b16 %v5388
  %v5922 = vunpack.c.h.b16 %v5388
  %v5923 = vunpack.c.l.b16 %v5389
  %v5924 = vunpack.c.h.b16 %v5389
  %v5925 = vunpack.c.l.b16 %v5390
  %v5926 = vunpack.c.h.b16 %v5390
  %v5927 = vunpack.c.l.b16 %v5391
  %v5928 = vunpack.c.h.b16 %v5391
  %v5929 = vunpack.c.l.b16 %v5392
  %v5930 = vunpack.c.h.b16 %v5392
  %v5931 = vunpack.c.l.b16 %v5393
  %v5932 = vunpack.c.h.b16 %v5393
  %v5933 = vunpack.c.l.b16 %v5394
  %v5934 = vunpack.c.h.b16 %v5394
  %v5935 = vunpack.c.l.b16 %v5395
  %v5936 = vunpack.c.h.b16 %v5395
  %v5937 = vunpack.c.l.b16 %v5396
  %v5938 = vunpack.c.h.b16 %v5396
  %v5939 = vunpack.c.l.b16 %v5397
  %v5940 = vunpack.c.h.b16 %v5397
  %v5941 = vpack.c.b16 %v5579, %v5579
  %v5942 = vpack.c.b16 %v5580, %v5580
  %v5943 = vpack.c.b16 %v5581, %v5581
  %v5944 = vpack.c.b16 %v5582, %v5582
  %v5945 = vpack.c.b16 %v5583, %v5583
  %v5946 = vpack.c.b16 %v5584, %v5584
  %v5947 = vpack.c.b16 %v5585, %v5585
  %v5948 = vpack.c.b16 %v5586, %v5586
  %v5949 = vpack.c.b16 %v5587, %v5587
  %v5950 = vpack.c.b16 %v5588, %v5588
  %v5951 = vpack.c.b16 %v5589, %v5589
  %v5952 = vpack.c.b16 %v5590, %v5590
  %v5953 = vpack.c.b16 %v5591, %v5591
  %v5954 = vpack.c.b16 %v5592, %v5592
  %v5955 = vpack.c.b16 %v5593, %v5593
  %v5956 = vpack.c.b16 %v5594, %v5594
  %v5957 = vpack.c.b16 %v5595, %v5595
  %v5958 = vpack.c.b16 %v5596, %v5596
  %v5959 = vpack.c.b16 %v5597, %v5597
  %v5960 = vpack.c.b16 %v5598, %v5598
  %v5961 = vpack.c.b16 %v5599, %v5599
  %v5962 = vpack.c.b16 %v5600, %v5600
  %v5963 = vpack.c.b16 %v5601, %v5601
  %v5964 = vpack.c.b16 %v5602, %v5602
  %v5965 = vpack.c.b16 %v5603, %v5603
  %v5966 = vpack.c.b16 %v5604, %v5604
  %v5967 = vpack.c.b16 %v5605, %v5605
  %v5968 = vpack.c.b16 %v5606, %v5606
  %v5969 = vpack.c.b16 %v5607, %v5607
  %v5970 = vpack.c.b16 %v5608, %v5608
  %v5971 = vpack.c.b16 %v5609, %v5609
  %v5972 = vpack.c.b16 %v5610, %v5610
  %v5973 = vpack.c.b16 %v5611, %v5611
  %v5974 = vpack.c.b16 %v5612, %v5612
  %v5975 = vpack.c.b16 %v5613, %v5613
  %v5976 = vpack.c.b16 %v5614, %v5614
  %v5977 = vpack.c.b16 %v5615, %v5615
  %v5978 = vpack.c.b16 %v5616, %v5616
  %v5979 = vpack.c.b16 %v5617, %v5617
  %v5980 = vpack.c.b16 %v5618, %v5618
  %v5981 = vpack.c.b16 %v5619, %v5619
  %v5982 = vpack.c.b16 %v5620, %v5620
  %v5983 = vpack.c.b16 %v5621, %v5621
  %v5984 = vpack.c.b16 %v5622, %v5622
  %v5985 = vpack.c.b16 %v5623, %v5623
  %v5986 = vpack.c.b16 %v5624, %v5624
  %v5987 = vpack.c.b16 %v5625, %v5625
  %v5988 = vpack.c.b16 %v5626, %v5626
  %v5989 = vpack.c.b16 %v5627, %v5627
  %v5990 = vpack.c.b16 %v5628, %v5628
  %v5991 = vpack.c.b16 %v5629, %v5629
  %v5992 = vpack.c.b16 %v5630, %v5630
  %v5993 = vpack.c.b16 %v5631, %v5631
  %v5994 = vpack.c.b16 %v5632, %v5632
  %v5995 = vpack.c.b16 %v5633, %v5633
  %v5996 = vpack.c.b16 %v5634, %v5634
  %v5997 = vpack.c.b16 %v5635, %v5635
  %v5998 = vpack.c.b16 %v5636, %v5636
  %v5999 = vpack.c.b16 %v5637, %v5637
  %v6000 = vpack.c.b16 %v5638, %v5638
  %v6001 = vpack.c.b16 %v5639, %v5639
  %v6002 = vpack.c.b16 %v5640, %v5640
  %v6003 = vpack.c.b16 %v5641, %v5641
  %v6004 = vpack.c.b16 %v5642, %v5642
  %v6005 = vpack.c.b16 %v5643, %v5643
  %v6006 = vpack.c.b16 %v5644, %v5644
  %v6007 = vpack.c.b16 %v5645, %v5645
  %v6008 = vpack.c.b16 %v5646, %v5646
  %v6009 = vpack.c.b16 %v5647, %v5647
  %v6010 = vpack.c.b16 %v5648, %v5648
  %v6011 = vpack.c.b16 %v5649, %v5649
  %v6012 = vpack.c.b16 %v5650, %v5650
  %v6013 = vpack.c.b16 %v5651, %v5651
  %v6014 = vpack.c.b16 %v5652, %v5652
  %v6015 = vpack.c.b16 %v5653, %v5653
  %v6016 = vpack.c.b16 %v5654, %v5654
  %v6017 = vpack.c.b16 %v5655, %v5655
  %v6018 = vpack.c.b16 %v5656, %v5656
  %v6019 = vpack.c.b16 %v5657, %v5657
  %v6020 = vpack.c.b16 %v5658, %v5658
  %v6021 = vpack.c.b16 %v5659, %v5659
  %v6022 = vpack.c.b16 %v5660, %v5660
  %v6023 = vpack.c.b16 %v5661, %v5661
  %v6024 = vpack.c.b16 %v5662, %v5662
  %v6025 = vpack.c.b16 %v5663, %v5663
  %v6026 = vpack.c.b16 %v5664, %v5664
  %v6027 = vpack.c.b16 %v5665, %v5665
  %v6028 = vpack.c.b16 %v5666, %v5666
  %v6029 = vpack.c.b16 %v5667, %v5667
  %v6030 = vpack.c.b16 %v5668, %v5668
  %v6031 = vpack.c.b16 %v5669, %v5669
  %v6032 = vpack.c.b16 %v5670, %v5670
  %v6033 = vpack.c.b16 %v5671, %v5671
  %v6034 = vpack.c.b16 %v5672, %v5672
  %v6035 = vpack.c.b16 %v5673, %v5673
  %v6036 = vpack.c.b16 %v5674, %v5674
  %v6037 = vpack.c.b16 %v5675, %v5675
  %v6038 = vpack.c.b16 %v5676, %v5676
  %v6039 = vpack.c.b16 %v5677, %v5677
  %v6040 = vpack.c.b16 %v5678, %v5678
  %v6041 = vpack.c.b16 %v5679, %v5679
  %v6042 = vpack.c.b16 %v5680, %v5680
  %v6043 = vpack.c.b16 %v5681, %v5681
  %v6044 = vpack.c.b16 %v5682, %v5682
  %v6045 = vpack.c.b16 %v5683, %v5683
  %v6046 = vpack.c.b16 %v5684, %v5684
  %v6047 = vpack.c.b16 %v5685, %v5685
  %v6048 = vpack.c.b16 %v5686, %v5686
  %v6049 = vpack.c.b16 %v5687, %v5687
  %v6050 = vpack.c.b16 %v5688, %v5688
  %v6051 = vpack.c.b16 %v5689, %v5689
  %v6052 = vpack.c.b16 %v5690, %v5690
  %v6053 = vpack.c.b16 %v5691, %v5691
  %v6054 = vpack.c.b16 %v5692, %v5692
  %v6055 = vpack.c.b16 %v5693, %v5693
  %v6056 = vpack.c.b16 %v5694, %v5694
  %v6057 = vpack.c.b16 %v5695, %v5695
  %v6058 = vpack.c.b16 %v5696, %v5696
  %v6059 = vpack.c.b16 %v5697, %v5697
  %v6060 = vpack.c.b16 %v5698, %v5698
  %v6061 = vpack.c.b16 %v5699, %v5699
  %v6062 = vpack.c.b16 %v5700, %v5700
  %v6063 = vpack.c.b16 %v5701, %v5701
  %v6064 = vpack.c.b16 %v5702, %v5702
  %v6065 = vpack.c.b16 %v5703, %v5703
  %v6066 = vpack.c.b16 %v5704, %v5704
  %v6067 = vpack.c.b16 %v5705, %v5705
  %v6068 = vpack.c.b16 %v5706, %v5706
  %v6069 = vpack.c.b16 %v5707, %v5707
  %v6070 = vpack.c.b16 %v5708, %v5708
  %v6071 = vpack.c.b16 %v5709, %v5709
  %v6072 = vpack.c.b16 %v5710, %v5710
  %v6073 = vpack.c.b16 %v5711, %v5711
  %v6074 = vpack.c.b16 %v5712, %v5712
  %v6075 = vpack.c.b16 %v5713, %v5713
  %v6076 = vpack.c.b16 %v5714, %v5714
  %v6077 = vpack.c.b16 %v5715, %v5715
  %v6078 = vpack.c.b16 %v5716, %v5716
  %v6079 = vpack.c.b16 %v5717, %v5717
  %v6080 = vpack.c.b16 %v5718, %v5718
  %v6081 = vpack.c.b16 %v5719, %v5719
  %v6082 = vpack.c.b16 %v5720, %v5720
  %v6083 = vpack.c.b16 %v5721, %v5721
  %v6084 = vpack.c.b16 %v5722, %v5722
  %v6085 = vpack.c.b16 %v5723, %v5723
  %v6086 = vpack.c.b16 %v5724, %v5724
  %v6087 = vpack.c.b16 %v5725, %v5725
  %v6088 = vpack.c.b16 %v5726, %v5726
  %v6089 = vpack.c.b16 %v5727, %v5727
  %v6090 = vpack.c.b16 %v5728, %v5728
  %v6091 = vpack.c.b16 %v5729, %v5729
  %v6092 = vpack.c.b16 %v5730, %v5730
  %v6093 = vpack.c.b16 %v5731, %v5731
  %v6094 = vpack.c.b16 %v5732, %v5732
  %v6095 = vpack.c.b16 %v5733, %v5733
  %v6096 = vpack.c.b16 %v5734, %v5734
  %v6097 = vpack.c.b16 %v5735, %v5735
  %v6098 = vpack.c.b16 %v5736, %v5736
  %v6099 = vpack.c.b16 %v5737, %v5737
  %v6100 = vpack.c.b16 %v5738, %v5738
  %v6101 = vpack.c.b16 %v5739, %v5739
  %v6102 = vpack.c.b16 %v5740, %v5740
  %v6103 = vpack.c.b16 %v5741, %v5741
  %v6104 = vpack.c.b16 %v5742, %v5742
  %v6105 = vpack.c.b16 %v5743, %v5743
  %v6106 = vpack.c.b16 %v5744, %v5744
  %v6107 = vpack.c.b16 %v5745, %v5745
  %v6108 = vpack.c.b16 %v5746, %v5746
  %v6109 = vpack.c.b16 %v5747, %v5747
  %v6110 = vpack.c.b16 %v5748, %v5748
  %v6111 = vpack.c.b16 %v5749, %v5749
  %v6112 = vpack.c.b16 %v5750, %v5750
  %v6113 = vpack.c.b16 %v5751, %v5751
  %v6114 = vpack.c.b16 %v5752, %v5752
  %v6115 = vpack.c.b16 %v5753, %v5753
  %v6116 = vpack.c.b16 %v5754, %v5754
  %v6117 = vpack.c.b16 %v5755, %v5755
  %v6118 = vpack.c.b16 %v5756, %v5756
  %v6119 = vpack.c.b16 %v5757, %v5757
  %v6120 = vpack.c.b16 %v5758, %v5758
  %v6121 = vpack.c.b16 %v5759, %v5759
  %v6122 = vpack.c.b16 %v5760, %v5760
  %v6123 = vpack.c.b16 %v5761, %v5761
  %v6124 = vpack.c.b16 %v5762, %v5762
  %v6125 = vpack.c.b16 %v5763, %v5763
  %v6126 = vpack.c.b16 %v5764, %v5764
  %v6127 = vpack.c.b16 %v5765, %v5765
  %v6128 = vpack.c.b16 %v5766, %v5766
  %v6129 = vpack.c.b16 %v5767, %v5767
  %v6130 = vpack.c.b16 %v5768, %v5768
  %v6131 = vpack.c.b16 %v5769, %v5769
  %v6132 = vpack.c.b16 %v5770, %v5770
  %v6133 = vpack.c.b16 %v5771, %v5771
  %v6134 = vpack.c.b16 %v5772, %v5772
  %v6135 = vpack.c.b16 %v5773, %v5773
  %v6136 = vpack.c.b16 %v5774, %v5774
  %v6137 = vpack.c.b16 %v5775, %v5775
  %v6138 = vpack.c.b16 %v5776, %v5776
  %v6139 = vpack.c.b16 %v5777, %v5777
  %v6140 = vpack.c.b16 %v5778, %v5778
  %v6141 = vpack.c.b16 %v5779, %v5779
  %v6142 = vpack.c.b16 %v5780, %v5780
  %v6143 = vpack.c.b16 %v5781, %v5781
  %v6144 = vpack.c.b16 %v5782, %v5782
  %v6145 = vpack.c.b16 %v5783, %v5783
  %v6146 = vpack.c.b16 %v5784, %v5784
  %v6147 = vpack.c.b16 %v5785, %v5785
  %v6148 = vpack.c.b16 %v5786, %v5786
  %v6149 = vpack.c.b16 %v5787, %v5787
  %v6150 = vpack.c.b16 %v5788, %v5788
  %v6151 = vpack.c.b16 %v5789, %v5789
  %v6152 = vpack.c.b16 %v5790, %v5790
  %v6153 = vpack.c.b16 %v5791, %v5791
  %v6154 = vpack.c.b16 %v5792, %v5792
  %v6155 = vpack.c.b16 %v5793, %v5793
  %v6156 = vpack.c.b16 %v5794, %v5794
  %v6157 = vpack.c.b16 %v5795, %v5795
  %v6158 = vpack.c.b16 %v5796, %v5796
  %v6159 = vpack.c.b16 %v5797, %v5797
  %v6160 = vpack.c.b16 %v5798, %v5798
  %v6161 = vpack.c.b16 %v5799, %v5799
  %v6162 = vpack.c.b16 %v5800, %v5800
  %v6163 = vpack.c.b16 %v5801, %v5801
  %v6164 = vpack.c.b16 %v5802, %v5802
  %v6165 = vpack.c.b16 %v5803, %v5803
  %v6166 = vpack.c.b16 %v5804, %v5804
  %v6167 = vpack.c.b16 %v5805, %v5805
  %v6168 = vpack.c.b16 %v5806, %v5806
  %v6169 = vpack.c.b16 %v5807, %v5807
  %v6170 = vpack.c.b16 %v5808, %v5808
  %v6171 = vpack.c.b16 %v5809, %v5809
  %v6172 = vpack.c.b16 %v5810, %v5810
  %v6173 = vpack.c.b16 %v5811, %v5811
  %v6174 = vpack.c.b16 %v5812, %v5812
  %v6175 = vpack.c.b16 %v5813, %v5813
  %v6176 = vpack.c.b16 %v5814, %v5814
  %v6177 = vpack.c.b16 %v5815, %v5815
  %v6178 = vpack.c.b16 %v5816, %v5816
  %v6179 = vpack.c.b16 %v5817, %v5817
  %v6180 = vpack.c.b16 %v5818, %v5818
  %v6181 = vpack.c.b16 %v5819, %v5819
  %v6182 = vpack.c.b16 %v5820, %v5820
  %v6183 = vpack.c.b16 %v5821, %v5821
  %v6184 = vpack.c.b16 %v5822, %v5822
  %v6185 = vpack.c.b16 %v5823, %v5823
  %v6186 = vpack.c.b16 %v5824, %v5824
  %v6187 = vpack.c.b16 %v5825, %v5825
  %v6188 = vpack.c.b16 %v5826, %v5826
  %v6189 = vpack.c.b16 %v5827, %v5827
  %v6190 = vpack.c.b16 %v5828, %v5828
  %v6191 = vpack.c.b16 %v5829, %v5829
  %v6192 = vpack.c.b16 %v5830, %v5830
  %v6193 = vpack.c.b16 %v5831, %v5831
  %v6194 = vpack.c.b16 %v5832, %v5832
  %v6195 = vpack.c.b16 %v5833, %v5833
  %v6196 = vpack.c.b16 %v5834, %v5834
  %v6197 = vpack.c.b16 %v5835, %v5835
  %v6198 = vpack.c.b16 %v5836, %v5836
  %v6199 = vpack.c.b16 %v5837, %v5837
  %v6200 = vpack.c.b16 %v5838, %v5838
  %v6201 = vpack.c.b16 %v5839, %v5839
  %v6202 = vpack.c.b16 %v5840, %v5840
  %v6203 = vpack.c.b16 %v5841, %v5841
  %v6204 = vpack.c.b16 %v5842, %v5842
  %v6205 = vpack.c.b16 %v5843, %v5843
  %v6206 = vpack.c.b16 %v5844, %v5844
  %v6207 = vpack.c.b16 %v5845, %v5845
  %v6208 = vpack.c.b16 %v5846, %v5846
  %v6209 = vpack.c.b16 %v5847, %v5847
  %v6210 = vpack.c.b16 %v5848, %v5848
  %v6211 = vpack.c.b16 %v5849, %v5849
  %v6212 = vpack.c.b16 %v5850, %v5850
  %v6213 = vpack.c.b16 %v5851, %v5851
  %v6214 = vpack.c.b16 %v5852, %v5852
  %v6215 = vpack.c.b16 %v5853, %v5853
  %v6216 = vpack.c.b16 %v5854, %v5854
  %v6217 = vpack.c.b16 %v5855, %v5855
  %v6218 = vpack.c.b16 %v5856, %v5856
  %v6219 = vpack.c.b16 %v5857, %v5857
  %v6220 = vpack.c.b16 %v5858, %v5858
  %v6221 = vpack.c.b16 %v5859, %v5859
  %v6222 = vpack.c.b16 %v5860, %v5860
  %v6223 = vpack.c.b16 %v5861, %v5861
  %v6224 = vpack.c.b16 %v5862, %v5862
  %v6225 = vpack.c.b16 %v5863, %v5863
  %v6226 = vpack.c.b16 %v5864, %v5864
  %v6227 = vpack.c.b16 %v5865, %v5865
  %v6228 = vpack.c.b16 %v5866, %v5866
  %v6229 = vpack.c.b16 %v5867, %v5867
  %v6230 = vpack.c.b16 %v5868, %v5868
  %v6231 = vpack.c.b16 %v5869, %v5869
  %v6232 = vpack.c.b16 %v5870, %v5870
  %v6233 = vpack.c.b16 %v5871, %v5871
  %v6234 = vpack.c.b16 %v5872, %v5872
  %v6235 = vpack.c.b16 %v5873, %v5873
  %v6236 = vpack.c.b16 %v5874, %v5874
  %v6237 = vpack.c.b16 %v5875, %v5875
  %v6238 = vpack.c.b16 %v5876, %v5876
  %v6239 = vpack.c.b16 %v5877, %v5877
  %v6240 = vpack.c.b16 %v5878, %v5878
  %v6241 = vpack.c.b16 %v5879, %v5879
  %v6242 = vpack.c.b16 %v5880, %v5880
  %v6243 = vpack.c.b16 %v5881, %v5881
  %v6244 = vpack.c.b16 %v5882, %v5882
  %v6245 = vpack.c.b16 %v5883, %v5883
  %v6246 = vpack.c.b16 %v5884, %v5884
  %v6247 = vpack.c.b16 %v5885, %v5885
  %v6248 = vpack.c.b16 %v5886, %v5886
  %v6249 = vpack.c.b16 %v5887, %v5887
  %v6250 = vpack.c.b16 %v5888, %v5888
  %v6251 = vpack.c.b16 %v5889, %v5889
  %v6252 = vpack.c.b16 %v5890, %v5890
  %v6253 = vpack.c.b16 %v5891, %v5891
  %v6254 = vpack.c.b16 %v5892, %v5892
  %v6255 = vpack.c.b16 %v5893, %v5893
  %v6256 = vpack.c.b16 %v5894, %v5894
  %v6257 = vpack.c.b16 %v5895, %v5895
  %v6258 = vpack.c.b16 %v5896, %v5896
  %v6259 = vpack.c.b16 %v5897, %v5897
  %v6260 = vpack.c.b16 %v5898, %v5898
  %v6261 = vpack.c.b16 %v5899, %v5899
  %v6262 = vpack.c.b16 %v5900, %v5900
  %v6263 = vpack.c.b16 %v5901, %v5901
  %v6264 = vpack.c.b16 %v5902, %v5902
  %v6265 = vpack.c.b16 %v5903, %v5903
  %v6266 = vpack.c.b16 %v5904, %v5904
  %v6267 = vpack.c.b16 %v5905, %v5905
  %v6268 = vpack.c.b16 %v5906, %v5906
  %v6269 = vpack.c.b16 %v5907, %v5907
  %v6270 = vpack.c.b16 %v5908, %v5908
  %v6271 = vpack.c.b16 %v5909, %v5909
  %v6272 = vpack.c.b16 %v5910, %v5910
  %v6273 = vpack.c.b16 %v5911, %v5911
  %v6274 = vpack.c.b16 %v5912, %v5912
  %v6275 = vpack.c.b16 %v5913, %v5913
  %v6276 = vpack.c.b16 %v5914, %v5914
  %v6277 = vpack.c.b16 %v5915, %v5915
  %v6278 = vpack.c.b16 %v5916, %v5916
  %v6279 = vpack.c.b16 %v5917, %v5917
  %v6280 = vpack.c.b16 %v5918, %v5918
  %v6281 = vpack.c.b16 %v5919, %v5919
  %v6282 = vpack.c.b16 %v5920, %v5920
  %v6283 = vpack.c.b16 %v5921, %v5921
  %v6284 = vpack.c.b16 %v5922, %v5922
  %v6285 = vpack.c.b16 %v5923, %v5923
  %v6286 = vpack.c.b16 %v5924, %v5924
  %v6287 = vpack.c.b16 %v5925, %v5925
  %v6288 = vpack.c.b16 %v5926, %v5926
  %v6289 = vpack.c.b16 %v5927, %v5927
  %v6290 = vpack.c.b16 %v5928, %v5928
  %v6291 = vpack.c.b16 %v5929, %v5929
  %v6292 = vpack.c.b16 %v5930, %v5930
  %v6293 = vpack.c.b16 %v5931, %v5931
  %v6294 = vpack.c.b16 %v5932, %v5932
  %v6295 = vpack.c.b16 %v5933, %v5933
  %v6296 = vpack.c.b16 %v5934, %v5934
  %v6297 = vpack.c.b16 %v5935, %v5935
  %v6298 = vpack.c.b16 %v5936, %v5936
  %v6299 = vpack.c.b16 %v5937, %v5937
  %v6300 = vpack.c.b16 %v5938, %v5938
  %v6301 = vpack.c.b16 %v5939, %v5939
  %v6302 = vpack.c.b16 %v5940, %v5940
  %6665 = vst [vmem:[%s4] sm:$0xf] %v5941
  %6666 = vst [vmem:[%s4 + $0x4] sm:$0xf] %v5942
  %6667 = vst [vmem:[%s4 + $0x8] sm:$0xf] %v5943
  %6668 = vst [vmem:[%s4 + $0xc] sm:$0xf] %v5944
  %6669 = vst [vmem:[%s4 + $0x10] sm:$0xf] %v5945
  %6670 = vst [vmem:[%s4 + $0x14] sm:$0xf] %v5946
  %6671 = vst [vmem:[%s4 + $0x18] sm:$0xf] %v5947
  %6672 = vst [vmem:[%s4 + $0x1c] sm:$0xf] %v5948
  %6673 = vst [vmem:[%s4 + $0x20] sm:$0xf] %v5949
  %6674 = vst [vmem:[%s4 + $0x24] sm:$0xf] %v5950
  %6675 = vst [vmem:[%s4 + $0x28] sm:$0xf] %v5951
  %6676 = vst [vmem:[%s4 + $0x2c] sm:$0xf] %v5952
  %6677 = vst [vmem:[%s4 + $0x30] sm:$0xf] %v5953
  %6678 = vst [vmem:[%s4 + $0x34] sm:$0xf] %v5954
  %6679 = vst [vmem:[%s4 + $0x38] sm:$0xf] %v5955
  %6680 = vst [vmem:[%s4 + $0x3c] sm:$0xf] %v5956
  %6681 = vst [vmem:[%s4 + $0x40] sm:$0xf] %v5957
  %6682 = vst [vmem:[%s4 + $0x44] sm:$0xf] %v5958
  %6683 = vst [vmem:[%s4 + $0x48] sm:$0xf] %v5959
  %6684 = vst [vmem:[%s4 + $0x4c] sm:$0xf] %v5960
  %6685 = vst [vmem:[%s4 + $0x50] sm:$0xf] %v5961
  %6686 = vst [vmem:[%s4 + $0x54] sm:$0xf] %v5962
  %6687 = vst [vmem:[%s4 + $0x58] sm:$0xf] %v5963
  %6688 = vst [vmem:[%s4 + $0x5c] sm:$0xf] %v5964
  %6689 = vst [vmem:[%s4 + $0x60] sm:$0xf] %v5965
  %6690 = vst [vmem:[%s4 + $0x64] sm:$0xf] %v5966
  %6691 = vst [vmem:[%s4 + $0x68] sm:$0xf] %v5967
  %6692 = vst [vmem:[%s4 + $0x6c] sm:$0xf] %v5968
  %6693 = vst [vmem:[%s4 + $0x70] sm:$0xf] %v5969
  %6694 = vst [vmem:[%s4 + $0x74] sm:$0xf] %v5970
  %6695 = vst [vmem:[%s4 + $0x78] sm:$0xf] %v5971
  %6696 = vst [vmem:[%s4 + $0x7c] sm:$0xf] %v5972
  %6697 = vst [vmem:[%s4 + $0x80] sm:$0xf] %v5973
  %6698 = vst [vmem:[%s4 + $0x84] sm:$0xf] %v5974
  %6699 = vst [vmem:[%s4 + $0x88] sm:$0xf] %v5975
  %6700 = vst [vmem:[%s4 + $0x8c] sm:$0xf] %v5976
  %6701 = vst [vmem:[%s4 + $0x90] sm:$0xf] %v5977
  %6702 = vst [vmem:[%s4 + $0x94] sm:$0xf] %v5978
  %6703 = vst [vmem:[%s4 + $0x98] sm:$0xf] %v5979
  %6704 = vst [vmem:[%s4 + $0x9c] sm:$0xf] %v5980
  %6705 = vst [vmem:[%s4 + $0xa0] sm:$0xf] %v5981
  %6706 = vst [vmem:[%s4 + $0xa4] sm:$0xf] %v5982
  %6707 = vst [vmem:[%s4 + $0xa8] sm:$0xf] %v5983
  %6708 = vst [vmem:[%s4 + $0xac] sm:$0xf] %v5984
  %6709 = vst [vmem:[%s4 + $0xb0] sm:$0xf] %v5985
  %6710 = vst [vmem:[%s4 + $0xb4] sm:$0xf] %v5986
  %6711 = vst [vmem:[%s4 + $0xb8] sm:$0xf] %v5987
  %6712 = vst [vmem:[%s4 + $0xbc] sm:$0xf] %v5988
  %6713 = vst [vmem:[%s4 + $0xc0] sm:$0xf] %v5989
  %6714 = vst [vmem:[%s4 + $0xc4] sm:$0xf] %v5990
  %6715 = vst [vmem:[%s4 + $0xc8] sm:$0xf] %v5991
  %6716 = vst [vmem:[%s4 + $0xcc] sm:$0xf] %v5992
  %6717 = vst [vmem:[%s4 + $0xd0] sm:$0xf] %v5993
  %6718 = vst [vmem:[%s4 + $0xd4] sm:$0xf] %v5994
  %6719 = vst [vmem:[%s4 + $0xd8] sm:$0xf] %v5995
  %6720 = vst [vmem:[%s4 + $0xdc] sm:$0xf] %v5996
  %6721 = vst [vmem:[%s4 + $0xe0] sm:$0xf] %v5997
  %6722 = vst [vmem:[%s4 + $0xe4] sm:$0xf] %v5998
  %6723 = vst [vmem:[%s4 + $0xe8] sm:$0xf] %v5999
  %6724 = vst [vmem:[%s4 + $0xec] sm:$0xf] %v6000
  %6725 = vst [vmem:[%s4 + $0xf0] sm:$0xf] %v6001
  %6726 = vst [vmem:[%s4 + $0xf4] sm:$0xf] %v6002
  %6727 = vst [vmem:[%s4 + $0xf8] sm:$0xf] %v6003
  %6728 = vst [vmem:[%s4 + $0xfc] sm:$0xf] %v6004
  %6729 = vst [vmem:[%s4 + $0x100] sm:$0xf] %v6005
  %6730 = vst [vmem:[%s4 + $0x104] sm:$0xf] %v6006
  %6731 = vst [vmem:[%s4 + $0x108] sm:$0xf] %v6007
  %6732 = vst [vmem:[%s4 + $0x10c] sm:$0xf] %v6008
  %6733 = vst [vmem:[%s4 + $0x110] sm:$0xf] %v6009
  %6734 = vst [vmem:[%s4 + $0x114] sm:$0xf] %v6010
  %6735 = vst [vmem:[%s4 + $0x118] sm:$0xf] %v6011
  %6736 = vst [vmem:[%s4 + $0x11c] sm:$0xf] %v6012
  %6737 = vst [vmem:[%s4 + $0x120] sm:$0xf] %v6013
  %6738 = vst [vmem:[%s4 + $0x124] sm:$0xf] %v6014
  %6739 = vst [vmem:[%s4 + $0x128] sm:$0xf] %v6015
  %6740 = vst [vmem:[%s4 + $0x12c] sm:$0xf] %v6016
  %6741 = vst [vmem:[%s4 + $0x130] sm:$0xf] %v6017
  %6742 = vst [vmem:[%s4 + $0x134] sm:$0xf] %v6018
  %6743 = vst [vmem:[%s4 + $0x138] sm:$0xf] %v6019
  %6744 = vst [vmem:[%s4 + $0x13c] sm:$0xf] %v6020
  %6745 = vst [vmem:[%s4 + $0x140] sm:$0xf] %v6021
  %6746 = vst [vmem:[%s4 + $0x144] sm:$0xf] %v6022
  %6747 = vst [vmem:[%s4 + $0x148] sm:$0xf] %v6023
  %6748 = vst [vmem:[%s4 + $0x14c] sm:$0xf] %v6024
  %6749 = vst [vmem:[%s4 + $0x150] sm:$0xf] %v6025
  %6750 = vst [vmem:[%s4 + $0x154] sm:$0xf] %v6026
  %6751 = vst [vmem:[%s4 + $0x158] sm:$0xf] %v6027
  %6752 = vst [vmem:[%s4 + $0x15c] sm:$0xf] %v6028
  %6753 = vst [vmem:[%s4 + $0x160] sm:$0xf] %v6029
  %6754 = vst [vmem:[%s4 + $0x164] sm:$0xf] %v6030
  %6755 = vst [vmem:[%s4 + $0x168] sm:$0xf] %v6031
  %6756 = vst [vmem:[%s4 + $0x16c] sm:$0xf] %v6032
  %6757 = vst [vmem:[%s4 + $0x170] sm:$0xf] %v6033
  %6758 = vst [vmem:[%s4 + $0x174] sm:$0xf] %v6034
  %6759 = vst [vmem:[%s4 + $0x178] sm:$0xf] %v6035
  %6760 = vst [vmem:[%s4 + $0x17c] sm:$0xf] %v6036
  %6761 = vst [vmem:[%s4 + $0x180] sm:$0xf] %v6037
  %6762 = vst [vmem:[%s4 + $0x184] sm:$0xf] %v6038
  %6763 = vst [vmem:[%s4 + $0x188] sm:$0xf] %v6039
  %6764 = vst [vmem:[%s4 + $0x18c] sm:$0xf] %v6040
  %6765 = vst [vmem:[%s4 + $0x190] sm:$0xf] %v6041
  %6766 = vst [vmem:[%s4 + $0x194] sm:$0xf] %v6042
  %6767 = vst [vmem:[%s4 + $0x198] sm:$0xf] %v6043
  %6768 = vst [vmem:[%s4 + $0x19c] sm:$0xf] %v6044
  %6769 = vst [vmem:[%s4 + $0x1a0] sm:$0xf] %v6045
  %6770 = vst [vmem:[%s4 + $0x1a4] sm:$0xf] %v6046
  %6771 = vst [vmem:[%s4 + $0x1a8] sm:$0xf] %v6047
  %6772 = vst [vmem:[%s4 + $0x1ac] sm:$0xf] %v6048
  %6773 = vst [vmem:[%s4 + $0x1b0] sm:$0xf] %v6049
  %6774 = vst [vmem:[%s4 + $0x1b4] sm:$0xf] %v6050
  %6775 = vst [vmem:[%s4 + $0x1b8] sm:$0xf] %v6051
  %6776 = vst [vmem:[%s4 + $0x1bc] sm:$0xf] %v6052
  %6777 = vst [vmem:[%s4 + $0x1c0] sm:$0xf] %v6053
  %6778 = vst [vmem:[%s4 + $0x1c4] sm:$0xf] %v6054
  %6779 = vst [vmem:[%s4 + $0x1c8] sm:$0xf] %v6055
  %6780 = vst [vmem:[%s4 + $0x1cc] sm:$0xf] %v6056
  %6781 = vst [vmem:[%s4 + $0x1d0] sm:$0xf] %v6057
  %6782 = vst [vmem:[%s4 + $0x1d4] sm:$0xf] %v6058
  %6783 = vst [vmem:[%s4 + $0x1d8] sm:$0xf] %v6059
  %6784 = vst [vmem:[%s4 + $0x1dc] sm:$0xf] %v6060
  %6785 = vst [vmem:[%s4 + $0x1e0] sm:$0xf] %v6061
  %6786 = vst [vmem:[%s4 + $0x1e4] sm:$0xf] %v6062
  %6787 = vst [vmem:[%s4 + $0x1e8] sm:$0xf] %v6063
  %6788 = vst [vmem:[%s4 + $0x1ec] sm:$0xf] %v6064
  %6789 = vst [vmem:[%s4 + $0x1f0] sm:$0xf] %v6065
  %6790 = vst [vmem:[%s4 + $0x1f4] sm:$0xf] %v6066
  %6791 = vst [vmem:[%s4 + $0x1f8] sm:$0xf] %v6067
  %6792 = vst [vmem:[%s4 + $0x1fc] sm:$0xf] %v6068
  %6793 = vst [vmem:[%s4 + $0x200] sm:$0xf] %v6069
  %6794 = vst [vmem:[%s4 + $0x204] sm:$0xf] %v6070
  %6795 = vst [vmem:[%s4 + $0x208] sm:$0xf] %v6071
  %6796 = vst [vmem:[%s4 + $0x20c] sm:$0xf] %v6072
  %6797 = vst [vmem:[%s4 + $0x210] sm:$0xf] %v6073
  %6798 = vst [vmem:[%s4 + $0x214] sm:$0xf] %v6074
  %6799 = vst [vmem:[%s4 + $0x218] sm:$0xf] %v6075
  %6800 = vst [vmem:[%s4 + $0x21c] sm:$0xf] %v6076
  %6801 = vst [vmem:[%s4 + $0x220] sm:$0xf] %v6077
  %6802 = vst [vmem:[%s4 + $0x224] sm:$0xf] %v6078
  %6803 = vst [vmem:[%s4 + $0x228] sm:$0xf] %v6079
  %6804 = vst [vmem:[%s4 + $0x22c] sm:$0xf] %v6080
  %6805 = vst [vmem:[%s4 + $0x230] sm:$0xf] %v6081
  %6806 = vst [vmem:[%s4 + $0x234] sm:$0xf] %v6082
  %6807 = vst [vmem:[%s4 + $0x238] sm:$0xf] %v6083
  %6808 = vst [vmem:[%s4 + $0x23c] sm:$0xf] %v6084
  %6809 = vst [vmem:[%s4 + $0x240] sm:$0xf] %v6085
  %6810 = vst [vmem:[%s4 + $0x244] sm:$0xf] %v6086
  %6811 = vst [vmem:[%s4 + $0x248] sm:$0xf] %v6087
  %6812 = vst [vmem:[%s4 + $0x24c] sm:$0xf] %v6088
  %6813 = vst [vmem:[%s4 + $0x250] sm:$0xf] %v6089
  %6814 = vst [vmem:[%s4 + $0x254] sm:$0xf] %v6090
  %6815 = vst [vmem:[%s4 + $0x258] sm:$0xf] %v6091
  %6816 = vst [vmem:[%s4 + $0x25c] sm:$0xf] %v6092
  %6817 = vst [vmem:[%s4 + $0x260] sm:$0xf] %v6093
  %6818 = vst [vmem:[%s4 + $0x264] sm:$0xf] %v6094
  %6819 = vst [vmem:[%s4 + $0x268] sm:$0xf] %v6095
  %6820 = vst [vmem:[%s4 + $0x26c] sm:$0xf] %v6096
  %6821 = vst [vmem:[%s4 + $0x270] sm:$0xf] %v6097
  %6822 = vst [vmem:[%s4 + $0x274] sm:$0xf] %v6098
  %6823 = vst [vmem:[%s4 + $0x278] sm:$0xf] %v6099
  %6824 = vst [vmem:[%s4 + $0x27c] sm:$0xf] %v6100
  %6825 = vst [vmem:[%s4 + $0x280] sm:$0xf] %v6101
  %6826 = vst [vmem:[%s4 + $0x284] sm:$0xf] %v6102
  %6827 = vst [vmem:[%s4 + $0x288] sm:$0xf] %v6103
  %6828 = vst [vmem:[%s4 + $0x28c] sm:$0xf] %v6104
  %6829 = vst [vmem:[%s4 + $0x290] sm:$0xf] %v6105
  %6830 = vst [vmem:[%s4 + $0x294] sm:$0xf] %v6106
  %6831 = vst [vmem:[%s4 + $0x298] sm:$0xf] %v6107
  %6832 = vst [vmem:[%s4 + $0x29c] sm:$0xf] %v6108
  %6833 = vst [vmem:[%s4 + $0x2a0] sm:$0xf] %v6109
  %6834 = vst [vmem:[%s4 + $0x2a4] sm:$0xf] %v6110
  %6835 = vst [vmem:[%s4 + $0x2a8] sm:$0xf] %v6111
  %6836 = vst [vmem:[%s4 + $0x2ac] sm:$0xf] %v6112
  %6837 = vst [vmem:[%s4 + $0x2b0] sm:$0xf] %v6113
  %6838 = vst [vmem:[%s4 + $0x2b4] sm:$0xf] %v6114
  %6839 = vst [vmem:[%s4 + $0x2b8] sm:$0xf] %v6115
  %6840 = vst [vmem:[%s4 + $0x2bc] sm:$0xf] %v6116
  %6841 = vst [vmem:[%s4 + $0x2c0] sm:$0xf] %v6117
  %6842 = vst [vmem:[%s4 + $0x2c4] sm:$0xf] %v6118
  %6843 = vst [vmem:[%s4 + $0x2c8] sm:$0xf] %v6119
  %6844 = vst [vmem:[%s4 + $0x2cc] sm:$0xf] %v6120
  %6845 = vst [vmem:[%s4 + $0x2d0] sm:$0xf] %v6121
  %6846 = vst [vmem:[%s4 + $0x2d4] sm:$0xf] %v6122
  %6847 = vst [vmem:[%s4 + $0x2d8] sm:$0xf] %v6123
  %6848 = vst [vmem:[%s4 + $0x2dc] sm:$0xf] %v6124
  %6849 = vst [vmem:[%s4 + $0x2e0] sm:$0xf] %v6125
  %6850 = vst [vmem:[%s4 + $0x2e4] sm:$0xf] %v6126
  %6851 = vst [vmem:[%s4 + $0x2e8] sm:$0xf] %v6127
  %6852 = vst [vmem:[%s4 + $0x2ec] sm:$0xf] %v6128
  %6853 = vst [vmem:[%s4 + $0x2f0] sm:$0xf] %v6129
  %6854 = vst [vmem:[%s4 + $0x2f4] sm:$0xf] %v6130
  %6855 = vst [vmem:[%s4 + $0x2f8] sm:$0xf] %v6131
  %6856 = vst [vmem:[%s4 + $0x2fc] sm:$0xf] %v6132
  %6857 = vst [vmem:[%s4 + $0x300] sm:$0xf] %v6133
  %6858 = vst [vmem:[%s4 + $0x304] sm:$0xf] %v6134
  %6859 = vst [vmem:[%s4 + $0x308] sm:$0xf] %v6135
  %6860 = vst [vmem:[%s4 + $0x30c] sm:$0xf] %v6136
  %6861 = vst [vmem:[%s4 + $0x310] sm:$0xf] %v6137
  %6862 = vst [vmem:[%s4 + $0x314] sm:$0xf] %v6138
  %6863 = vst [vmem:[%s4 + $0x318] sm:$0xf] %v6139
  %6864 = vst [vmem:[%s4 + $0x31c] sm:$0xf] %v6140
  %6865 = vst [vmem:[%s4 + $0x320] sm:$0xf] %v6141
  %6866 = vst [vmem:[%s4 + $0x324] sm:$0xf] %v6142
  %6867 = vst [vmem:[%s4 + $0x328] sm:$0xf] %v6143
  %6868 = vst [vmem:[%s4 + $0x32c] sm:$0xf] %v6144
  %6869 = vst [vmem:[%s4 + $0x330] sm:$0xf] %v6145
  %6870 = vst [vmem:[%s4 + $0x334] sm:$0xf] %v6146
  %6871 = vst [vmem:[%s4 + $0x338] sm:$0xf] %v6147
  %6872 = vst [vmem:[%s4 + $0x33c] sm:$0xf] %v6148
  %6873 = vst [vmem:[%s4 + $0x340] sm:$0xf] %v6149
  %6874 = vst [vmem:[%s4 + $0x344] sm:$0xf] %v6150
  %6875 = vst [vmem:[%s4 + $0x348] sm:$0xf] %v6151
  %6876 = vst [vmem:[%s4 + $0x34c] sm:$0xf] %v6152
  %6877 = vst [vmem:[%s4 + $0x350] sm:$0xf] %v6153
  %6878 = vst [vmem:[%s4 + $0x354] sm:$0xf] %v6154
  %6879 = vst [vmem:[%s4 + $0x358] sm:$0xf] %v6155
  %6880 = vst [vmem:[%s4 + $0x35c] sm:$0xf] %v6156
  %6881 = vst [vmem:[%s4 + $0x360] sm:$0xf] %v6157
  %6882 = vst [vmem:[%s4 + $0x364] sm:$0xf] %v6158
  %6883 = vst [vmem:[%s4 + $0x368] sm:$0xf] %v6159
  %6884 = vst [vmem:[%s4 + $0x36c] sm:$0xf] %v6160
  %6885 = vst [vmem:[%s4 + $0x370] sm:$0xf] %v6161
  %6886 = vst [vmem:[%s4 + $0x374] sm:$0xf] %v6162
  %6887 = vst [vmem:[%s4 + $0x378] sm:$0xf] %v6163
  %6888 = vst [vmem:[%s4 + $0x37c] sm:$0xf] %v6164
  %6889 = vst [vmem:[%s4 + $0x380] sm:$0xf] %v6165
  %6890 = vst [vmem:[%s4 + $0x384] sm:$0xf] %v6166
  %6891 = vst [vmem:[%s4 + $0x388] sm:$0xf] %v6167
  %6892 = vst [vmem:[%s4 + $0x38c] sm:$0xf] %v6168
  %6893 = vst [vmem:[%s4 + $0x390] sm:$0xf] %v6169
  %6894 = vst [vmem:[%s4 + $0x394] sm:$0xf] %v6170
  %6895 = vst [vmem:[%s4 + $0x398] sm:$0xf] %v6171
  %6896 = vst [vmem:[%s4 + $0x39c] sm:$0xf] %v6172
  %6897 = vst [vmem:[%s4 + $0x3a0] sm:$0xf] %v6173
  %6898 = vst [vmem:[%s4 + $0x3a4] sm:$0xf] %v6174
  %6899 = vst [vmem:[%s4 + $0x3a8] sm:$0xf] %v6175
  %6900 = vst [vmem:[%s4 + $0x3ac] sm:$0xf] %v6176
  %6901 = vst [vmem:[%s4 + $0x3b0] sm:$0xf] %v6177
  %6902 = vst [vmem:[%s4 + $0x3b4] sm:$0xf] %v6178
  %6903 = vst [vmem:[%s4 + $0x3b8] sm:$0xf] %v6179
  %6904 = vst [vmem:[%s4 + $0x3bc] sm:$0xf] %v6180
  %6905 = vst [vmem:[%s4 + $0x3c0] sm:$0xf] %v6181
  %6906 = vst [vmem:[%s4 + $0x3c4] sm:$0xf] %v6182
  %6907 = vst [vmem:[%s4 + $0x3c8] sm:$0xf] %v6183
  %6908 = vst [vmem:[%s4 + $0x3cc] sm:$0xf] %v6184
  %6909 = vst [vmem:[%s4 + $0x3d0] sm:$0xf] %v6185
  %6910 = vst [vmem:[%s4 + $0x3d4] sm:$0xf] %v6186
  %6911 = vst [vmem:[%s4 + $0x3d8] sm:$0xf] %v6187
  %6912 = vst [vmem:[%s4 + $0x3dc] sm:$0xf] %v6188
  %6913 = vst [vmem:[%s4 + $0x3e0] sm:$0xf] %v6189
  %6914 = vst [vmem:[%s4 + $0x3e4] sm:$0xf] %v6190
  %6915 = vst [vmem:[%s4 + $0x3e8] sm:$0xf] %v6191
  %6916 = vst [vmem:[%s4 + $0x3ec] sm:$0xf] %v6192
  %6917 = vst [vmem:[%s4 + $0x3f0] sm:$0xf] %v6193
  %6918 = vst [vmem:[%s4 + $0x3f4] sm:$0xf] %v6194
  %6919 = vst [vmem:[%s4 + $0x3f8] sm:$0xf] %v6195
  %6920 = vst [vmem:[%s4 + $0x3fc] sm:$0xf] %v6196
  %6921 = vst [vmem:[%s4 + $0x400] sm:$0xf] %v6197
  %6922 = vst [vmem:[%s4 + $0x404] sm:$0xf] %v6198
  %6923 = vst [vmem:[%s4 + $0x408] sm:$0xf] %v6199
  %6924 = vst [vmem:[%s4 + $0x40c] sm:$0xf] %v6200
  %6925 = vst [vmem:[%s4 + $0x410] sm:$0xf] %v6201
  %6926 = vst [vmem:[%s4 + $0x414] sm:$0xf] %v6202
  %6927 = vst [vmem:[%s4 + $0x418] sm:$0xf] %v6203
  %6928 = vst [vmem:[%s4 + $0x41c] sm:$0xf] %v6204
  %6929 = vst [vmem:[%s4 + $0x420] sm:$0xf] %v6205
  %6930 = vst [vmem:[%s4 + $0x424] sm:$0xf] %v6206
  %6931 = vst [vmem:[%s4 + $0x428] sm:$0xf] %v6207
  %6932 = vst [vmem:[%s4 + $0x42c] sm:$0xf] %v6208
  %6933 = vst [vmem:[%s4 + $0x430] sm:$0xf] %v6209
  %6934 = vst [vmem:[%s4 + $0x434] sm:$0xf] %v6210
  %6935 = vst [vmem:[%s4 + $0x438] sm:$0xf] %v6211
  %6936 = vst [vmem:[%s4 + $0x43c] sm:$0xf] %v6212
  %6937 = vst [vmem:[%s4 + $0x440] sm:$0xf] %v6213
  %6938 = vst [vmem:[%s4 + $0x444] sm:$0xf] %v6214
  %6939 = vst [vmem:[%s4 + $0x448] sm:$0xf] %v6215
  %6940 = vst [vmem:[%s4 + $0x44c] sm:$0xf] %v6216
  %6941 = vst [vmem:[%s4 + $0x450] sm:$0xf] %v6217
  %6942 = vst [vmem:[%s4 + $0x454] sm:$0xf] %v6218
  %6943 = vst [vmem:[%s4 + $0x458] sm:$0xf] %v6219
  %6944 = vst [vmem:[%s4 + $0x45c] sm:$0xf] %v6220
  %6945 = vst [vmem:[%s4 + $0x460] sm:$0xf] %v6221
  %6946 = vst [vmem:[%s4 + $0x464] sm:$0xf] %v6222
  %6947 = vst [vmem:[%s4 + $0x468] sm:$0xf] %v6223
  %6948 = vst [vmem:[%s4 + $0x46c] sm:$0xf] %v6224
  %6949 = vst [vmem:[%s4 + $0x470] sm:$0xf] %v6225
  %6950 = vst [vmem:[%s4 + $0x474] sm:$0xf] %v6226
  %6951 = vst [vmem:[%s4 + $0x478] sm:$0xf] %v6227
  %6952 = vst [vmem:[%s4 + $0x47c] sm:$0xf] %v6228
  %6953 = vst [vmem:[%s4 + $0x480] sm:$0xf] %v6229
  %6954 = vst [vmem:[%s4 + $0x484] sm:$0xf] %v6230
  %6955 = vst [vmem:[%s4 + $0x488] sm:$0xf] %v6231
  %6956 = vst [vmem:[%s4 + $0x48c] sm:$0xf] %v6232
  %6957 = vst [vmem:[%s4 + $0x490] sm:$0xf] %v6233
  %6958 = vst [vmem:[%s4 + $0x494] sm:$0xf] %v6234
  %6959 = vst [vmem:[%s4 + $0x498] sm:$0xf] %v6235
  %6960 = vst [vmem:[%s4 + $0x49c] sm:$0xf] %v6236
  %6961 = vst [vmem:[%s4 + $0x4a0] sm:$0xf] %v6237
  %6962 = vst [vmem:[%s4 + $0x4a4] sm:$0xf] %v6238
  %6963 = vst [vmem:[%s4 + $0x4a8] sm:$0xf] %v6239
  %6964 = vst [vmem:[%s4 + $0x4ac] sm:$0xf] %v6240
  %6965 = vst [vmem:[%s4 + $0x4b0] sm:$0xf] %v6241
  %6966 = vst [vmem:[%s4 + $0x4b4] sm:$0xf] %v6242
  %6967 = vst [vmem:[%s4 + $0x4b8] sm:$0xf] %v6243
  %6968 = vst [vmem:[%s4 + $0x4bc] sm:$0xf] %v6244
  %6969 = vst [vmem:[%s4 + $0x4c0] sm:$0xf] %v6245
  %6970 = vst [vmem:[%s4 + $0x4c4] sm:$0xf] %v6246
  %6971 = vst [vmem:[%s4 + $0x4c8] sm:$0xf] %v6247
  %6972 = vst [vmem:[%s4 + $0x4cc] sm:$0xf] %v6248
  %6973 = vst [vmem:[%s4 + $0x4d0] sm:$0xf] %v6249
  %6974 = vst [vmem:[%s4 + $0x4d4] sm:$0xf] %v6250
  %6975 = vst [vmem:[%s4 + $0x4d8] sm:$0xf] %v6251
  %6976 = vst [vmem:[%s4 + $0x4dc] sm:$0xf] %v6252
  %6977 = vst [vmem:[%s4 + $0x4e0] sm:$0xf] %v6253
  %6978 = vst [vmem:[%s4 + $0x4e4] sm:$0xf] %v6254
  %6979 = vst [vmem:[%s4 + $0x4e8] sm:$0xf] %v6255
  %6980 = vst [vmem:[%s4 + $0x4ec] sm:$0xf] %v6256
  %6981 = vst [vmem:[%s4 + $0x4f0] sm:$0xf] %v6257
  %6982 = vst [vmem:[%s4 + $0x4f4] sm:$0xf] %v6258
  %6983 = vst [vmem:[%s4 + $0x4f8] sm:$0xf] %v6259
  %6984 = vst [vmem:[%s4 + $0x4fc] sm:$0xf] %v6260
  %6985 = vst [vmem:[%s4 + $0x500] sm:$0xf] %v6261
  %6986 = vst [vmem:[%s4 + $0x504] sm:$0xf] %v6262
  %6987 = vst [vmem:[%s4 + $0x508] sm:$0xf] %v6263
  %6988 = vst [vmem:[%s4 + $0x50c] sm:$0xf] %v6264
  %6989 = vst [vmem:[%s4 + $0x510] sm:$0xf] %v6265
  %6990 = vst [vmem:[%s4 + $0x514] sm:$0xf] %v6266
  %6991 = vst [vmem:[%s4 + $0x518] sm:$0xf] %v6267
  %6992 = vst [vmem:[%s4 + $0x51c] sm:$0xf] %v6268
  %6993 = vst [vmem:[%s4 + $0x520] sm:$0xf] %v6269
  %6994 = vst [vmem:[%s4 + $0x524] sm:$0xf] %v6270
  %6995 = vst [vmem:[%s4 + $0x528] sm:$0xf] %v6271
  %6996 = vst [vmem:[%s4 + $0x52c] sm:$0xf] %v6272
  %6997 = vst [vmem:[%s4 + $0x530] sm:$0xf] %v6273
  %6998 = vst [vmem:[%s4 + $0x534] sm:$0xf] %v6274
  %6999 = vst [vmem:[%s4 + $0x538] sm:$0xf] %v6275
  %7000 = vst [vmem:[%s4 + $0x53c] sm:$0xf] %v6276
  %7001 = vst [vmem:[%s4 + $0x540] sm:$0xf] %v6277
  %7002 = vst [vmem:[%s4 + $0x544] sm:$0xf] %v6278
  %7003 = vst [vmem:[%s4 + $0x548] sm:$0xf] %v6279
  %7004 = vst [vmem:[%s4 + $0x54c] sm:$0xf] %v6280
  %7005 = vst [vmem:[%s4 + $0x550] sm:$0xf] %v6281
  %7006 = vst [vmem:[%s4 + $0x554] sm:$0xf] %v6282
  %7007 = vst [vmem:[%s4 + $0x558] sm:$0xf] %v6283
  %7008 = vst [vmem:[%s4 + $0x55c] sm:$0xf] %v6284
  %7009 = vst [vmem:[%s4 + $0x560] sm:$0xf] %v6285
  %7010 = vst [vmem:[%s4 + $0x564] sm:$0xf] %v6286
  %7011 = vst [vmem:[%s4 + $0x568] sm:$0xf] %v6287
  %7012 = vst [vmem:[%s4 + $0x56c] sm:$0xf] %v6288
  %7013 = vst [vmem:[%s4 + $0x570] sm:$0xf] %v6289
  %7014 = vst [vmem:[%s4 + $0x574] sm:$0xf] %v6290
  %7015 = vst [vmem:[%s4 + $0x578] sm:$0xf] %v6291
  %7016 = vst [vmem:[%s4 + $0x57c] sm:$0xf] %v6292
  %7017 = vst [vmem:[%s4 + $0x580] sm:$0xf] %v6293
  %7018 = vst [vmem:[%s4 + $0x584] sm:$0xf] %v6294
  %7019 = vst [vmem:[%s4 + $0x588] sm:$0xf] %v6295
  %7020 = vst [vmem:[%s4 + $0x58c] sm:$0xf] %v6296
  %7021 = vst [vmem:[%s4 + $0x590] sm:$0xf] %v6297
  %7022 = vst [vmem:[%s4 + $0x594] sm:$0xf] %v6298
  %7023 = vst [vmem:[%s4 + $0x598] sm:$0xf] %v6299
  %7024 = vst [vmem:[%s4 + $0x59c] sm:$0xf] %v6300
  %7025 = vst [vmem:[%s4 + $0x5a0] sm:$0xf] %v6301
  %7026 = vst [vmem:[%s4 + $0x5a4] sm:$0xf] %v6302
  // Predicated region
  $region18: #{policy_forward.4} parent=0 // pred_check
    _
  $region19: #{policy_forward.4} parent=0 // pred_check_branch
    %7028 = sbr.rel (0) target = $region21
  $region20: #{policy_forward.4} parent=0 // pred_region
    _
  $region21: #{policy_forward.4} parent=0 // pred_fallthru
    _
  // Predicated region
  $region22: #{policy_forward.4} parent=0 // pred_check
    _
  $region23: #{policy_forward.4} parent=0 // pred_check_branch
    %7030 = sbr.rel (0) target = $region25
  $region24: #{policy_forward.4} parent=0 // pred_region
    _
  $region25: #{policy_forward.4} parent=0 // pred_fallthru
    _

// kernel: policy_forward.5
$region0: #{policy_forward.5}
  #allocation0 [shape = 'u32[]', space=smem, size = 0x4, offset = 0x4, fixed_abs, tag = 'smem constant byte address 0x4 - core index']
  #allocation1 [shape = 'u32[144,128]{1,0:T(1,128)}', space=vmem, size = 0x12000, scoped, tag = 'internal scratch']
  %s0 = inlined_call_operand.vmem [shape: bf16[592,512], index: 0, kind: input, shape index: {}]
  %s1 = inlined_call_operand.vmem [shape: bf16[512,128], index: 1, kind: input, shape index: {}]
  %s2 = inlined_call_operand.vmem [shape: f32[1,128], index: 2, kind: input, shape index: {}]
  %s3 = inlined_call_operand.vmem [shape: f32[1,128], index: 3, kind: input, shape index: {}]
  %s4 = inlined_call_operand.vmem [shape: bf16[592,128], index: 4, kind: output, shape index: {}]
  %s5 = sld [smem:[#allocation0]]
  $region26: #{policy_forward.5} parent=0
    _
  %s7 = ssub.s32 1, %s5
  %s8 = scalar_select 0, %s7, %s5
  // Predicated region
  $region2: #{policy_forward.5} parent=0 // pred_check
    _
  $region3: #{policy_forward.5} parent=0 // pred_check_branch
    %10 = sbr.rel (0) target = $region5
  $region4: #{policy_forward.5} parent=0 // pred_region
    _
  $region5: #{policy_forward.5} parent=0 // pred_fallthru
    _
  // Predicated region
  $region6: #{policy_forward.5} parent=0 // pred_check
    _
  $region7: #{policy_forward.5} parent=0 // pred_check_branch
    %12 = sbr.rel (0) target = $region9
  $region8: #{policy_forward.5} parent=0 // pred_region
    _
  $region9: #{policy_forward.5} parent=0 // pred_fallthru
    _
  // Predicated region
  $region10: #{policy_forward.5} parent=0 // pred_check
    _
  $region11: #{policy_forward.5} parent=0 // pred_check_branch
    %14 = sbr.rel (0) target = $region13
  $region12: #{policy_forward.5} parent=0 // pred_region
    _
  $region13: #{policy_forward.5} parent=0 // pred_fallthru
    _
  // Predicated region
  $region14: #{policy_forward.5} parent=0 // pred_check
    _
  $region15: #{policy_forward.5} parent=0 // pred_check_branch
    %16 = sbr.rel (0) target = $region17
  $region16: #{policy_forward.5} parent=0 // pred_region
    _
  $region17: #{policy_forward.5} parent=0 // pred_fallthru
    _
  %v18 = vld [vmem:[%s0] sm:$0xff]
  %v19 = vld [vmem:[%s0 + $0x8] sm:$0xff]
  %v20 = vld [vmem:[%s0 + $0x10] sm:$0xff]
  %v21 = vld [vmem:[%s0 + $0x18] sm:$0xff]
  %v22 = vld [vmem:[%s0 + $0x20] sm:$0xff]
  %v23 = vld [vmem:[%s0 + $0x28] sm:$0xff]
  %v24 = vld [vmem:[%s0 + $0x30] sm:$0xff]
  %v25 = vld [vmem:[%s0 + $0x38] sm:$0xff]
  %v26 = vld [vmem:[%s0 + $0x40] sm:$0xff]
  %v27 = vld [vmem:[%s0 + $0x48] sm:$0xff]
  %v28 = vld [vmem:[%s0 + $0x50] sm:$0xff]
  %v29 = vld [vmem:[%s0 + $0x58] sm:$0xff]
  %v30 = vld [vmem:[%s0 + $0x60] sm:$0xff]
  %v31 = vld [vmem:[%s0 + $0x68] sm:$0xff]
  %v32 = vld [vmem:[%s0 + $0x70] sm:$0xff]
  %v33 = vld [vmem:[%s0 + $0x78] sm:$0xff]
  %v34 = vld [vmem:[%s0 + $0x80] sm:$0xff]
  %v35 = vld [vmem:[%s0 + $0x88] sm:$0xff]
  %v36 = vld [vmem:[%s0 + $0x90] sm:$0xff]
  %v37 = vld [vmem:[%s0 + $0x98] sm:$0xff]
  %v38 = vld [vmem:[%s0 + $0xa0] sm:$0xff]
  %v39 = vld [vmem:[%s0 + $0xa8] sm:$0xff]
  %v40 = vld [vmem:[%s0 + $0xb0] sm:$0xff]
  %v41 = vld [vmem:[%s0 + $0xb8] sm:$0xff]
  %v42 = vld [vmem:[%s0 + $0xc0] sm:$0xff]
  %v43 = vld [vmem:[%s0 + $0xc8] sm:$0xff]
  %v44 = vld [vmem:[%s0 + $0xd0] sm:$0xff]
  %v45 = vld [vmem:[%s0 + $0xd8] sm:$0xff]
  %v46 = vld [vmem:[%s0 + $0xe0] sm:$0xff]
  %v47 = vld [vmem:[%s0 + $0xe8] sm:$0xff]
  %v48 = vld [vmem:[%s0 + $0xf0] sm:$0xff]
  %v49 = vld [vmem:[%s0 + $0xf8] sm:$0xff]
  %v50 = vld [vmem:[%s0 + $0x100] sm:$0xff]
  %v51 = vld [vmem:[%s0 + $0x108] sm:$0xff]
  %v52 = vld [vmem:[%s0 + $0x110] sm:$0xff]
  %v53 = vld [vmem:[%s0 + $0x118] sm:$0xff]
  %v54 = vld [vmem:[%s0 + $0x120] sm:$0xff]
  %v55 = vld [vmem:[%s0 + $0x128] sm:$0xff]
  %v56 = vld [vmem:[%s0 + $0x130] sm:$0xff]
  %v57 = vld [vmem:[%s0 + $0x138] sm:$0xff]
  %v58 = vld [vmem:[%s0 + $0x140] sm:$0xff]
  %v59 = vld [vmem:[%s0 + $0x148] sm:$0xff]
  %v60 = vld [vmem:[%s0 + $0x150] sm:$0xff]
  %v61 = vld [vmem:[%s0 + $0x158] sm:$0xff]
  %v62 = vld [vmem:[%s0 + $0x160] sm:$0xff]
  %v63 = vld [vmem:[%s0 + $0x168] sm:$0xff]
  %v64 = vld [vmem:[%s0 + $0x170] sm:$0xff]
  %v65 = vld [vmem:[%s0 + $0x178] sm:$0xff]
  %v66 = vld [vmem:[%s0 + $0x180] sm:$0xff]
  %v67 = vld [vmem:[%s0 + $0x188] sm:$0xff]
  %v68 = vld [vmem:[%s0 + $0x190] sm:$0xff]
  %v69 = vld [vmem:[%s0 + $0x198] sm:$0xff]
  %v70 = vld [vmem:[%s0 + $0x1a0] sm:$0xff]
  %v71 = vld [vmem:[%s0 + $0x1a8] sm:$0xff]
  %v72 = vld [vmem:[%s0 + $0x1b0] sm:$0xff]
  %v73 = vld [vmem:[%s0 + $0x1b8] sm:$0xff]
  %v74 = vld [vmem:[%s0 + $0x1c0] sm:$0xff]
  %v75 = vld [vmem:[%s0 + $0x1c8] sm:$0xff]
  %v76 = vld [vmem:[%s0 + $0x1d0] sm:$0xff]
  %v77 = vld [vmem:[%s0 + $0x1d8] sm:$0xff]
  %v78 = vld [vmem:[%s0 + $0x1e0] sm:$0xff]
  %v79 = vld [vmem:[%s0 + $0x1e8] sm:$0xff]
  %v80 = vld [vmem:[%s0 + $0x1f0] sm:$0xff]
  %v81 = vld [vmem:[%s0 + $0x1f8] sm:$0xff]
  %v82 = vld [vmem:[%s0 + $0x200] sm:$0xff]
  %v83 = vld [vmem:[%s0 + $0x208] sm:$0xff]
  %v84 = vld [vmem:[%s0 + $0x210] sm:$0xff]
  %v85 = vld [vmem:[%s0 + $0x218] sm:$0xff]
  %v86 = vld [vmem:[%s0 + $0x220] sm:$0xff]
  %v87 = vld [vmem:[%s0 + $0x228] sm:$0xff]
  %v88 = vld [vmem:[%s0 + $0x230] sm:$0xff]
  %v89 = vld [vmem:[%s0 + $0x238] sm:$0xff]
  %v90 = vld [vmem:[%s0 + $0x240] sm:$0xff]
  %v91 = vld [vmem:[%s0 + $0x248] sm:$0xff]
  %v92 = vld [vmem:[%s0 + $0x250] sm:$0xff]
  %v93 = vld [vmem:[%s0 + $0x258] sm:$0xff]
  %v94 = vld [vmem:[%s0 + $0x260] sm:$0xff]
  %v95 = vld [vmem:[%s0 + $0x268] sm:$0xff]
  %v96 = vld [vmem:[%s0 + $0x270] sm:$0xff]
  %v97 = vld [vmem:[%s0 + $0x278] sm:$0xff]
  %v98 = vld [vmem:[%s0 + $0x280] sm:$0xff]
  %v99 = vld [vmem:[%s0 + $0x288] sm:$0xff]
  %v100 = vld [vmem:[%s0 + $0x290] sm:$0xff]
  %v101 = vld [vmem:[%s0 + $0x298] sm:$0xff]
  %v102 = vld [vmem:[%s0 + $0x2a0] sm:$0xff]
  %v103 = vld [vmem:[%s0 + $0x2a8] sm:$0xff]
  %v104 = vld [vmem:[%s0 + $0x2b0] sm:$0xff]
  %v105 = vld [vmem:[%s0 + $0x2b8] sm:$0xff]
  %v106 = vld [vmem:[%s0 + $0x2c0] sm:$0xff]
  %v107 = vld [vmem:[%s0 + $0x2c8] sm:$0xff]
  %v108 = vld [vmem:[%s0 + $0x2d0] sm:$0xff]
  %v109 = vld [vmem:[%s0 + $0x2d8] sm:$0xff]
  %v110 = vld [vmem:[%s0 + $0x2e0] sm:$0xff]
  %v111 = vld [vmem:[%s0 + $0x2e8] sm:$0xff]
  %v112 = vld [vmem:[%s0 + $0x2f0] sm:$0xff]
  %v113 = vld [vmem:[%s0 + $0x2f8] sm:$0xff]
  %v114 = vld [vmem:[%s0 + $0x300] sm:$0xff]
  %v115 = vld [vmem:[%s0 + $0x308] sm:$0xff]
  %v116 = vld [vmem:[%s0 + $0x310] sm:$0xff]
  %v117 = vld [vmem:[%s0 + $0x318] sm:$0xff]
  %v118 = vld [vmem:[%s0 + $0x320] sm:$0xff]
  %v119 = vld [vmem:[%s0 + $0x328] sm:$0xff]
  %v120 = vld [vmem:[%s0 + $0x330] sm:$0xff]
  %v121 = vld [vmem:[%s0 + $0x338] sm:$0xff]
  %v122 = vld [vmem:[%s0 + $0x340] sm:$0xff]
  %v123 = vld [vmem:[%s0 + $0x348] sm:$0xff]
  %v124 = vld [vmem:[%s0 + $0x350] sm:$0xff]
  %v125 = vld [vmem:[%s0 + $0x358] sm:$0xff]
  %v126 = vld [vmem:[%s0 + $0x360] sm:$0xff]
  %v127 = vld [vmem:[%s0 + $0x368] sm:$0xff]
  %v128 = vld [vmem:[%s0 + $0x370] sm:$0xff]
  %v129 = vld [vmem:[%s0 + $0x378] sm:$0xff]
  %v130 = vld [vmem:[%s0 + $0x380] sm:$0xff]
  %v131 = vld [vmem:[%s0 + $0x388] sm:$0xff]
  %v132 = vld [vmem:[%s0 + $0x390] sm:$0xff]
  %v133 = vld [vmem:[%s0 + $0x398] sm:$0xff]
  %v134 = vld [vmem:[%s0 + $0x3a0] sm:$0xff]
  %v135 = vld [vmem:[%s0 + $0x3a8] sm:$0xff]
  %v136 = vld [vmem:[%s0 + $0x3b0] sm:$0xff]
  %v137 = vld [vmem:[%s0 + $0x3b8] sm:$0xff]
  %v138 = vld [vmem:[%s0 + $0x3c0] sm:$0xff]
  %v139 = vld [vmem:[%s0 + $0x3c8] sm:$0xff]
  %v140 = vld [vmem:[%s0 + $0x3d0] sm:$0xff]
  %v141 = vld [vmem:[%s0 + $0x3d8] sm:$0xff]
  %v142 = vld [vmem:[%s0 + $0x3e0] sm:$0xff]
  %v143 = vld [vmem:[%s0 + $0x3e8] sm:$0xff]
  %v144 = vld [vmem:[%s0 + $0x3f0] sm:$0xff]
  %v145 = vld [vmem:[%s0 + $0x3f8] sm:$0xff]
  %v146 = vld [vmem:[%s0 + $0x400] sm:$0xff]
  %v147 = vld [vmem:[%s0 + $0x408] sm:$0xff]
  %v148 = vld [vmem:[%s0 + $0x410] sm:$0xff]
  %v149 = vld [vmem:[%s0 + $0x418] sm:$0xff]
  %v150 = vld [vmem:[%s0 + $0x420] sm:$0xff]
  %v151 = vld [vmem:[%s0 + $0x428] sm:$0xff]
  %v152 = vld [vmem:[%s0 + $0x430] sm:$0xff]
  %v153 = vld [vmem:[%s0 + $0x438] sm:$0xff]
  %v154 = vld [vmem:[%s0 + $0x440] sm:$0xff]
  %v155 = vld [vmem:[%s0 + $0x448] sm:$0xff]
  %v156 = vld [vmem:[%s0 + $0x450] sm:$0xff]
  %v157 = vld [vmem:[%s0 + $0x458] sm:$0xff]
  %v158 = vld [vmem:[%s0 + $0x460] sm:$0xff]
  %v159 = vld [vmem:[%s0 + $0x468] sm:$0xff]
  %v160 = vld [vmem:[%s0 + $0x470] sm:$0xff]
  %v161 = vld [vmem:[%s0 + $0x478] sm:$0xff]
  %v162 = vld [vmem:[%s0 + $0x480] sm:$0xff]
  %v163 = vld [vmem:[%s0 + $0x488] sm:$0xff]
  %v164 = vld [vmem:[%s0 + $0x490] sm:$0xff]
  %v165 = vld [vmem:[%s0 + $0x498] sm:$0xff]
  %v166 = vld [vmem:[%s1] sm:$0xf]
  %v167 = vld [vmem:[%s1 + $0x4] sm:$0xf]
  %v168 = vld [vmem:[%s1 + $0x8] sm:$0xf]
  %v169 = vld [vmem:[%s1 + $0xc] sm:$0xf]
  %v170 = vld [vmem:[%s1 + $0x10] sm:$0xf]
  %v171 = vld [vmem:[%s1 + $0x14] sm:$0xf]
  %v172 = vld [vmem:[%s1 + $0x18] sm:$0xf]
  %v173 = vld [vmem:[%s1 + $0x1c] sm:$0xf]
  %v174 = vld [vmem:[%s1 + $0x20] sm:$0xf]
  %v175 = vld [vmem:[%s1 + $0x24] sm:$0xf]
  %v176 = vld [vmem:[%s1 + $0x28] sm:$0xf]
  %v177 = vld [vmem:[%s1 + $0x2c] sm:$0xf]
  %v178 = vld [vmem:[%s1 + $0x30] sm:$0xf]
  %v179 = vld [vmem:[%s1 + $0x34] sm:$0xf]
  %v180 = vld [vmem:[%s1 + $0x38] sm:$0xf]
  %v181 = vld [vmem:[%s1 + $0x3c] sm:$0xf]
  %v182 = vld [vmem:[%s1 + $0x40] sm:$0xf]
  %v183 = vld [vmem:[%s1 + $0x44] sm:$0xf]
  %v184 = vld [vmem:[%s1 + $0x48] sm:$0xf]
  %v185 = vld [vmem:[%s1 + $0x4c] sm:$0xf]
  %v186 = vld [vmem:[%s1 + $0x50] sm:$0xf]
  %v187 = vld [vmem:[%s1 + $0x54] sm:$0xf]
  %v188 = vld [vmem:[%s1 + $0x58] sm:$0xf]
  %v189 = vld [vmem:[%s1 + $0x5c] sm:$0xf]
  %v190 = vld [vmem:[%s1 + $0x60] sm:$0xf]
  %v191 = vld [vmem:[%s1 + $0x64] sm:$0xf]
  %v192 = vld [vmem:[%s1 + $0x68] sm:$0xf]
  %v193 = vld [vmem:[%s1 + $0x6c] sm:$0xf]
  %v194 = vld [vmem:[%s1 + $0x70] sm:$0xf]
  %v195 = vld [vmem:[%s1 + $0x74] sm:$0xf]
  %v196 = vld [vmem:[%s1 + $0x78] sm:$0xf]
  %v197 = vld [vmem:[%s1 + $0x7c] sm:$0xf]
  %v198 = vld [vmem:[%s1 + $0x80] sm:$0xf]
  %v199 = vld [vmem:[%s1 + $0x84] sm:$0xf]
  %v200 = vld [vmem:[%s1 + $0x88] sm:$0xf]
  %v201 = vld [vmem:[%s1 + $0x8c] sm:$0xf]
  %v202 = vld [vmem:[%s1 + $0x90] sm:$0xf]
  %v203 = vld [vmem:[%s1 + $0x94] sm:$0xf]
  %v204 = vld [vmem:[%s1 + $0x98] sm:$0xf]
  %v205 = vld [vmem:[%s1 + $0x9c] sm:$0xf]
  %v206 = vld [vmem:[%s1 + $0xa0] sm:$0xf]
  %v207 = vld [vmem:[%s1 + $0xa4] sm:$0xf]
  %v208 = vld [vmem:[%s1 + $0xa8] sm:$0xf]
  %v209 = vld [vmem:[%s1 + $0xac] sm:$0xf]
  %v210 = vld [vmem:[%s1 + $0xb0] sm:$0xf]
  %v211 = vld [vmem:[%s1 + $0xb4] sm:$0xf]
  %v212 = vld [vmem:[%s1 + $0xb8] sm:$0xf]
  %v213 = vld [vmem:[%s1 + $0xbc] sm:$0xf]
  %v214 = vld [vmem:[%s1 + $0xc0] sm:$0xf]
  %v215 = vld [vmem:[%s1 + $0xc4] sm:$0xf]
  %v216 = vld [vmem:[%s1 + $0xc8] sm:$0xf]
  %v217 = vld [vmem:[%s1 + $0xcc] sm:$0xf]
  %v218 = vld [vmem:[%s1 + $0xd0] sm:$0xf]
  %v219 = vld [vmem:[%s1 + $0xd4] sm:$0xf]
  %v220 = vld [vmem:[%s1 + $0xd8] sm:$0xf]
  %v221 = vld [vmem:[%s1 + $0xdc] sm:$0xf]
  %v222 = vld [vmem:[%s1 + $0xe0] sm:$0xf]
  %v223 = vld [vmem:[%s1 + $0xe4] sm:$0xf]
  %v224 = vld [vmem:[%s1 + $0xe8] sm:$0xf]
  %v225 = vld [vmem:[%s1 + $0xec] sm:$0xf]
  %v226 = vld [vmem:[%s1 + $0xf0] sm:$0xf]
  %v227 = vld [vmem:[%s1 + $0xf4] sm:$0xf]
  %v228 = vld [vmem:[%s1 + $0xf8] sm:$0xf]
  %v229 = vld [vmem:[%s1 + $0xfc] sm:$0xf]
  %v378 = vunpack.c.l.b16 %v18
  %v379 = vunpack.c.h.b16 %v18
  %v380 = vunpack.c.l.b16 %v19
  %v381 = vunpack.c.h.b16 %v19
  %v382 = vunpack.c.l.b16 %v20
  %v383 = vunpack.c.h.b16 %v20
  %v384 = vunpack.c.l.b16 %v21
  %v385 = vunpack.c.h.b16 %v21
  %v386 = vunpack.c.l.b16 %v22
  %v387 = vunpack.c.h.b16 %v22
  %v388 = vunpack.c.l.b16 %v23
  %v389 = vunpack.c.h.b16 %v23
  %v390 = vunpack.c.l.b16 %v24
  %v391 = vunpack.c.h.b16 %v24
  %v392 = vunpack.c.l.b16 %v25
  %v393 = vunpack.c.h.b16 %v25
  %v394 = vunpack.c.l.b16 %v26
  %v395 = vunpack.c.h.b16 %v26
  %v396 = vunpack.c.l.b16 %v27
  %v397 = vunpack.c.h.b16 %v27
  %v398 = vunpack.c.l.b16 %v28
  %v399 = vunpack.c.h.b16 %v28
  %v400 = vunpack.c.l.b16 %v29
  %v401 = vunpack.c.h.b16 %v29
  %v402 = vunpack.c.l.b16 %v30
  %v403 = vunpack.c.h.b16 %v30
  %v404 = vunpack.c.l.b16 %v31
  %v405 = vunpack.c.h.b16 %v31
  %v406 = vunpack.c.l.b16 %v32
  %v407 = vunpack.c.h.b16 %v32
  %v408 = vunpack.c.l.b16 %v33
  %v409 = vunpack.c.h.b16 %v33
  %v410 = vunpack.c.l.b16 %v34
  %v411 = vunpack.c.h.b16 %v34
  %v412 = vunpack.c.l.b16 %v35
  %v413 = vunpack.c.h.b16 %v35
  %v414 = vunpack.c.l.b16 %v36
  %v415 = vunpack.c.h.b16 %v36
  %v416 = vunpack.c.l.b16 %v37
  %v417 = vunpack.c.h.b16 %v37
  %v418 = vunpack.c.l.b16 %v38
  %v419 = vunpack.c.h.b16 %v38
  %v420 = vunpack.c.l.b16 %v39
  %v421 = vunpack.c.h.b16 %v39
  %v422 = vunpack.c.l.b16 %v40
  %v423 = vunpack.c.h.b16 %v40
  %v424 = vunpack.c.l.b16 %v41
  %v425 = vunpack.c.h.b16 %v41
  %v426 = vunpack.c.l.b16 %v42
  %v427 = vunpack.c.h.b16 %v42
  %v428 = vunpack.c.l.b16 %v43
  %v429 = vunpack.c.h.b16 %v43
  %v430 = vunpack.c.l.b16 %v44
  %v431 = vunpack.c.h.b16 %v44
  %v432 = vunpack.c.l.b16 %v45
  %v433 = vunpack.c.h.b16 %v45
  %v434 = vunpack.c.l.b16 %v46
  %v435 = vunpack.c.h.b16 %v46
  %v436 = vunpack.c.l.b16 %v47
  %v437 = vunpack.c.h.b16 %v47
  %v438 = vunpack.c.l.b16 %v48
  %v439 = vunpack.c.h.b16 %v48
  %v440 = vunpack.c.l.b16 %v49
  %v441 = vunpack.c.h.b16 %v49
  %v442 = vunpack.c.l.b16 %v50
  %v443 = vunpack.c.h.b16 %v50
  %v444 = vunpack.c.l.b16 %v51
  %v445 = vunpack.c.h.b16 %v51
  %v446 = vunpack.c.l.b16 %v52
  %v447 = vunpack.c.h.b16 %v52
  %v448 = vunpack.c.l.b16 %v53
  %v449 = vunpack.c.h.b16 %v53
  %v450 = vunpack.c.l.b16 %v54
  %v451 = vunpack.c.h.b16 %v54
  %v452 = vunpack.c.l.b16 %v55
  %v453 = vunpack.c.h.b16 %v55
  %v454 = vunpack.c.l.b16 %v56
  %v455 = vunpack.c.h.b16 %v56
  %v456 = vunpack.c.l.b16 %v57
  %v457 = vunpack.c.h.b16 %v57
  %v458 = vunpack.c.l.b16 %v58
  %v459 = vunpack.c.h.b16 %v58
  %v460 = vunpack.c.l.b16 %v59
  %v461 = vunpack.c.h.b16 %v59
  %v462 = vunpack.c.l.b16 %v60
  %v463 = vunpack.c.h.b16 %v60
  %v464 = vunpack.c.l.b16 %v61
  %v465 = vunpack.c.h.b16 %v61
  %v466 = vunpack.c.l.b16 %v62
  %v467 = vunpack.c.h.b16 %v62
  %v468 = vunpack.c.l.b16 %v63
  %v469 = vunpack.c.h.b16 %v63
  %v470 = vunpack.c.l.b16 %v64
  %v471 = vunpack.c.h.b16 %v64
  %v472 = vunpack.c.l.b16 %v65
  %v473 = vunpack.c.h.b16 %v65
  %v474 = vunpack.c.l.b16 %v66
  %v475 = vunpack.c.h.b16 %v66
  %v476 = vunpack.c.l.b16 %v67
  %v477 = vunpack.c.h.b16 %v67
  %v478 = vunpack.c.l.b16 %v68
  %v479 = vunpack.c.h.b16 %v68
  %v480 = vunpack.c.l.b16 %v69
  %v481 = vunpack.c.h.b16 %v69
  %v482 = vunpack.c.l.b16 %v70
  %v483 = vunpack.c.h.b16 %v70
  %v484 = vunpack.c.l.b16 %v71
  %v485 = vunpack.c.h.b16 %v71
  %v486 = vunpack.c.l.b16 %v72
  %v487 = vunpack.c.h.b16 %v72
  %v488 = vunpack.c.l.b16 %v73
  %v489 = vunpack.c.h.b16 %v73
  %v490 = vunpack.c.l.b16 %v74
  %v491 = vunpack.c.h.b16 %v74
  %v492 = vunpack.c.l.b16 %v75
  %v493 = vunpack.c.h.b16 %v75
  %v494 = vunpack.c.l.b16 %v76
  %v495 = vunpack.c.h.b16 %v76
  %v496 = vunpack.c.l.b16 %v77
  %v497 = vunpack.c.h.b16 %v77
  %v498 = vunpack.c.l.b16 %v78
  %v499 = vunpack.c.h.b16 %v78
  %v500 = vunpack.c.l.b16 %v79
  %v501 = vunpack.c.h.b16 %v79
  %v502 = vunpack.c.l.b16 %v80
  %v503 = vunpack.c.h.b16 %v80
  %v504 = vunpack.c.l.b16 %v81
  %v505 = vunpack.c.h.b16 %v81
  %v506 = vunpack.c.l.b16 %v82
  %v507 = vunpack.c.h.b16 %v82
  %v508 = vunpack.c.l.b16 %v83
  %v509 = vunpack.c.h.b16 %v83
  %v510 = vunpack.c.l.b16 %v84
  %v511 = vunpack.c.h.b16 %v84
  %v512 = vunpack.c.l.b16 %v85
  %v513 = vunpack.c.h.b16 %v85
  %v514 = vunpack.c.l.b16 %v86
  %v515 = vunpack.c.h.b16 %v86
  %v516 = vunpack.c.l.b16 %v87
  %v517 = vunpack.c.h.b16 %v87
  %v518 = vunpack.c.l.b16 %v88
  %v519 = vunpack.c.h.b16 %v88
  %v520 = vunpack.c.l.b16 %v89
  %v521 = vunpack.c.h.b16 %v89
  %v522 = vunpack.c.l.b16 %v90
  %v523 = vunpack.c.h.b16 %v90
  %v524 = vunpack.c.l.b16 %v91
  %v525 = vunpack.c.h.b16 %v91
  %v526 = vunpack.c.l.b16 %v92
  %v527 = vunpack.c.h.b16 %v92
  %v528 = vunpack.c.l.b16 %v93
  %v529 = vunpack.c.h.b16 %v93
  %v530 = vunpack.c.l.b16 %v94
  %v531 = vunpack.c.h.b16 %v94
  %v532 = vunpack.c.l.b16 %v95
  %v533 = vunpack.c.h.b16 %v95
  %v534 = vunpack.c.l.b16 %v96
  %v535 = vunpack.c.h.b16 %v96
  %v536 = vunpack.c.l.b16 %v97
  %v537 = vunpack.c.h.b16 %v97
  %v538 = vunpack.c.l.b16 %v98
  %v539 = vunpack.c.h.b16 %v98
  %v540 = vunpack.c.l.b16 %v99
  %v541 = vunpack.c.h.b16 %v99
  %v542 = vunpack.c.l.b16 %v100
  %v543 = vunpack.c.h.b16 %v100
  %v544 = vunpack.c.l.b16 %v101
  %v545 = vunpack.c.h.b16 %v101
  %v546 = vunpack.c.l.b16 %v102
  %v547 = vunpack.c.h.b16 %v102
  %v548 = vunpack.c.l.b16 %v103
  %v549 = vunpack.c.h.b16 %v103
  %v550 = vunpack.c.l.b16 %v104
  %v551 = vunpack.c.h.b16 %v104
  %v552 = vunpack.c.l.b16 %v105
  %v553 = vunpack.c.h.b16 %v105
  %v554 = vunpack.c.l.b16 %v106
  %v555 = vunpack.c.h.b16 %v106
  %v556 = vunpack.c.l.b16 %v107
  %v557 = vunpack.c.h.b16 %v107
  %v558 = vunpack.c.l.b16 %v108
  %v559 = vunpack.c.h.b16 %v108
  %v560 = vunpack.c.l.b16 %v109
  %v561 = vunpack.c.h.b16 %v109
  %v562 = vunpack.c.l.b16 %v110
  %v563 = vunpack.c.h.b16 %v110
  %v564 = vunpack.c.l.b16 %v111
  %v565 = vunpack.c.h.b16 %v111
  %v566 = vunpack.c.l.b16 %v112
  %v567 = vunpack.c.h.b16 %v112
  %v568 = vunpack.c.l.b16 %v113
  %v569 = vunpack.c.h.b16 %v113
  %v570 = vunpack.c.l.b16 %v114
  %v571 = vunpack.c.h.b16 %v114
  %v572 = vunpack.c.l.b16 %v115
  %v573 = vunpack.c.h.b16 %v115
  %v574 = vunpack.c.l.b16 %v116
  %v575 = vunpack.c.h.b16 %v116
  %v576 = vunpack.c.l.b16 %v117
  %v577 = vunpack.c.h.b16 %v117
  %v578 = vunpack.c.l.b16 %v118
  %v579 = vunpack.c.h.b16 %v118
  %v580 = vunpack.c.l.b16 %v119
  %v581 = vunpack.c.h.b16 %v119
  %v582 = vunpack.c.l.b16 %v120
  %v583 = vunpack.c.h.b16 %v120
  %v584 = vunpack.c.l.b16 %v121
  %v585 = vunpack.c.h.b16 %v121
  %v586 = vunpack.c.l.b16 %v122
  %v587 = vunpack.c.h.b16 %v122
  %v588 = vunpack.c.l.b16 %v123
  %v589 = vunpack.c.h.b16 %v123
  %v590 = vunpack.c.l.b16 %v124
  %v591 = vunpack.c.h.b16 %v124
  %v592 = vunpack.c.l.b16 %v125
  %v593 = vunpack.c.h.b16 %v125
  %v594 = vunpack.c.l.b16 %v126
  %v595 = vunpack.c.h.b16 %v126
  %v596 = vunpack.c.l.b16 %v127
  %v597 = vunpack.c.h.b16 %v127
  %v598 = vunpack.c.l.b16 %v128
  %v599 = vunpack.c.h.b16 %v128
  %v600 = vunpack.c.l.b16 %v129
  %v601 = vunpack.c.h.b16 %v129
  %v602 = vunpack.c.l.b16 %v130
  %v603 = vunpack.c.h.b16 %v130
  %v604 = vunpack.c.l.b16 %v131
  %v605 = vunpack.c.h.b16 %v131
  %v606 = vunpack.c.l.b16 %v132
  %v607 = vunpack.c.h.b16 %v132
  %v608 = vunpack.c.l.b16 %v133
  %v609 = vunpack.c.h.b16 %v133
  %v610 = vunpack.c.l.b16 %v134
  %v611 = vunpack.c.h.b16 %v134
  %v612 = vunpack.c.l.b16 %v135
  %v613 = vunpack.c.h.b16 %v135
  %v614 = vunpack.c.l.b16 %v136
  %v615 = vunpack.c.h.b16 %v136
  %v616 = vunpack.c.l.b16 %v137
  %v617 = vunpack.c.h.b16 %v137
  %v618 = vunpack.c.l.b16 %v138
  %v619 = vunpack.c.h.b16 %v138
  %v620 = vunpack.c.l.b16 %v139
  %v621 = vunpack.c.h.b16 %v139
  %v622 = vunpack.c.l.b16 %v140
  %v623 = vunpack.c.h.b16 %v140
  %v624 = vunpack.c.l.b16 %v141
  %v625 = vunpack.c.h.b16 %v141
  %v626 = vunpack.c.l.b16 %v142
  %v627 = vunpack.c.h.b16 %v142
  %v628 = vunpack.c.l.b16 %v143
  %v629 = vunpack.c.h.b16 %v143
  %v630 = vunpack.c.l.b16 %v144
  %v631 = vunpack.c.h.b16 %v144
  %v632 = vunpack.c.l.b16 %v145
  %v633 = vunpack.c.h.b16 %v145
  %v634 = vunpack.c.l.b16 %v146
  %v635 = vunpack.c.h.b16 %v146
  %v636 = vunpack.c.l.b16 %v147
  %v637 = vunpack.c.h.b16 %v147
  %v638 = vunpack.c.l.b16 %v148
  %v639 = vunpack.c.h.b16 %v148
  %v640 = vunpack.c.l.b16 %v149
  %v641 = vunpack.c.h.b16 %v149
  %v642 = vunpack.c.l.b16 %v150
  %v643 = vunpack.c.h.b16 %v150
  %v644 = vunpack.c.l.b16 %v151
  %v645 = vunpack.c.h.b16 %v151
  %v646 = vunpack.c.l.b16 %v152
  %v647 = vunpack.c.h.b16 %v152
  %v648 = vunpack.c.l.b16 %v153
  %v649 = vunpack.c.h.b16 %v153
  %v650 = vunpack.c.l.b16 %v154
  %v651 = vunpack.c.h.b16 %v154
  %v652 = vunpack.c.l.b16 %v155
  %v653 = vunpack.c.h.b16 %v155
  %v654 = vunpack.c.l.b16 %v156
  %v655 = vunpack.c.h.b16 %v156
  %v656 = vunpack.c.l.b16 %v157
  %v657 = vunpack.c.h.b16 %v157
  %v658 = vunpack.c.l.b16 %v158
  %v659 = vunpack.c.h.b16 %v158
  %v660 = vunpack.c.l.b16 %v159
  %v661 = vunpack.c.h.b16 %v159
  %v662 = vunpack.c.l.b16 %v160
  %v663 = vunpack.c.h.b16 %v160
  %v664 = vunpack.c.l.b16 %v161
  %v665 = vunpack.c.h.b16 %v161
  %v666 = vunpack.c.l.b16 %v162
  %v667 = vunpack.c.h.b16 %v162
  %v668 = vunpack.c.l.b16 %v163
  %v669 = vunpack.c.h.b16 %v163
  %v670 = vunpack.c.l.b16 %v164
  %v671 = vunpack.c.h.b16 %v164
  %v672 = vunpack.c.l.b16 %v165
  %v673 = vunpack.c.h.b16 %v165
  %v674 = vpack.c.b16 %v382, %v378
  %v675 = vpack.c.b16 %v383, %v379
  %v676 = vpack.c.b16 %v384, %v380
  %v677 = vpack.c.b16 %v385, %v381
  %v678 = vpack.c.b16 %v390, %v386
  %v679 = vpack.c.b16 %v391, %v387
  %v680 = vpack.c.b16 %v392, %v388
  %v681 = vpack.c.b16 %v393, %v389
  %v682 = vpack.c.b16 %v398, %v394
  %v683 = vpack.c.b16 %v399, %v395
  %v684 = vpack.c.b16 %v400, %v396
  %v685 = vpack.c.b16 %v401, %v397
  %v686 = vpack.c.b16 %v406, %v402
  %v687 = vpack.c.b16 %v407, %v403
  %v688 = vpack.c.b16 %v408, %v404
  %v689 = vpack.c.b16 %v409, %v405
  %v690 = vpack.c.b16 %v414, %v410
  %v691 = vpack.c.b16 %v415, %v411
  %v692 = vpack.c.b16 %v416, %v412
  %v693 = vpack.c.b16 %v417, %v413
  %v694 = vpack.c.b16 %v422, %v418
  %v695 = vpack.c.b16 %v423, %v419
  %v696 = vpack.c.b16 %v424, %v420
  %v697 = vpack.c.b16 %v425, %v421
  %v698 = vpack.c.b16 %v430, %v426
  %v699 = vpack.c.b16 %v431, %v427
  %v700 = vpack.c.b16 %v432, %v428
  %v701 = vpack.c.b16 %v433, %v429
  %v702 = vpack.c.b16 %v438, %v434
  %v703 = vpack.c.b16 %v439, %v435
  %v704 = vpack.c.b16 %v440, %v436
  %v705 = vpack.c.b16 %v441, %v437
  %v706 = vpack.c.b16 %v446, %v442
  %v707 = vpack.c.b16 %v447, %v443
  %v708 = vpack.c.b16 %v448, %v444
  %v709 = vpack.c.b16 %v449, %v445
  %v710 = vpack.c.b16 %v454, %v450
  %v711 = vpack.c.b16 %v455, %v451
  %v712 = vpack.c.b16 %v456, %v452
  %v713 = vpack.c.b16 %v457, %v453
  %v714 = vpack.c.b16 %v462, %v458
  %v715 = vpack.c.b16 %v463, %v459
  %v716 = vpack.c.b16 %v464, %v460
  %v717 = vpack.c.b16 %v465, %v461
  %v718 = vpack.c.b16 %v470, %v466
  %v719 = vpack.c.b16 %v471, %v467
  %v720 = vpack.c.b16 %v472, %v468
  %v721 = vpack.c.b16 %v473, %v469
  %v722 = vpack.c.b16 %v478, %v474
  %v723 = vpack.c.b16 %v479, %v475
  %v724 = vpack.c.b16 %v480, %v476
  %v725 = vpack.c.b16 %v481, %v477
  %v726 = vpack.c.b16 %v486, %v482
  %v727 = vpack.c.b16 %v487, %v483
  %v728 = vpack.c.b16 %v488, %v484
  %v729 = vpack.c.b16 %v489, %v485
  %v730 = vpack.c.b16 %v494, %v490
  %v731 = vpack.c.b16 %v495, %v491
  %v732 = vpack.c.b16 %v496, %v492
  %v733 = vpack.c.b16 %v497, %v493
  %v734 = vpack.c.b16 %v502, %v498
  %v735 = vpack.c.b16 %v503, %v499
  %v736 = vpack.c.b16 %v504, %v500
  %v737 = vpack.c.b16 %v505, %v501
  %v738 = vpack.c.b16 %v510, %v506
  %v739 = vpack.c.b16 %v511, %v507
  %v740 = vpack.c.b16 %v512, %v508
  %v741 = vpack.c.b16 %v513, %v509
  %v742 = vpack.c.b16 %v518, %v514
  %v743 = vpack.c.b16 %v519, %v515
  %v744 = vpack.c.b16 %v520, %v516
  %v745 = vpack.c.b16 %v521, %v517
  %v746 = vpack.c.b16 %v526, %v522
  %v747 = vpack.c.b16 %v527, %v523
  %v748 = vpack.c.b16 %v528, %v524
  %v749 = vpack.c.b16 %v529, %v525
  %v750 = vpack.c.b16 %v534, %v530
  %v751 = vpack.c.b16 %v535, %v531
  %v752 = vpack.c.b16 %v536, %v532
  %v753 = vpack.c.b16 %v537, %v533
  %v754 = vpack.c.b16 %v542, %v538
  %v755 = vpack.c.b16 %v543, %v539
  %v756 = vpack.c.b16 %v544, %v540
  %v757 = vpack.c.b16 %v545, %v541
  %v758 = vpack.c.b16 %v550, %v546
  %v759 = vpack.c.b16 %v551, %v547
  %v760 = vpack.c.b16 %v552, %v548
  %v761 = vpack.c.b16 %v553, %v549
  %v762 = vpack.c.b16 %v558, %v554
  %v763 = vpack.c.b16 %v559, %v555
  %v764 = vpack.c.b16 %v560, %v556
  %v765 = vpack.c.b16 %v561, %v557
  %v766 = vpack.c.b16 %v566, %v562
  %v767 = vpack.c.b16 %v567, %v563
  %v768 = vpack.c.b16 %v568, %v564
  %v769 = vpack.c.b16 %v569, %v565
  %v770 = vpack.c.b16 %v574, %v570
  %v771 = vpack.c.b16 %v575, %v571
  %v772 = vpack.c.b16 %v576, %v572
  %v773 = vpack.c.b16 %v577, %v573
  %v774 = vpack.c.b16 %v582, %v578
  %v775 = vpack.c.b16 %v583, %v579
  %v776 = vpack.c.b16 %v584, %v580
  %v777 = vpack.c.b16 %v585, %v581
  %v778 = vpack.c.b16 %v590, %v586
  %v779 = vpack.c.b16 %v591, %v587
  %v780 = vpack.c.b16 %v592, %v588
  %v781 = vpack.c.b16 %v593, %v589
  %v782 = vpack.c.b16 %v598, %v594
  %v783 = vpack.c.b16 %v599, %v595
  %v784 = vpack.c.b16 %v600, %v596
  %v785 = vpack.c.b16 %v601, %v597
  %v786 = vpack.c.b16 %v606, %v602
  %v787 = vpack.c.b16 %v607, %v603
  %v788 = vpack.c.b16 %v608, %v604
  %v789 = vpack.c.b16 %v609, %v605
  %v790 = vpack.c.b16 %v614, %v610
  %v791 = vpack.c.b16 %v615, %v611
  %v792 = vpack.c.b16 %v616, %v612
  %v793 = vpack.c.b16 %v617, %v613
  %v794 = vpack.c.b16 %v622, %v618
  %v795 = vpack.c.b16 %v623, %v619
  %v796 = vpack.c.b16 %v624, %v620
  %v797 = vpack.c.b16 %v625, %v621
  %v798 = vpack.c.b16 %v630, %v626
  %v799 = vpack.c.b16 %v631, %v627
  %v800 = vpack.c.b16 %v632, %v628
  %v801 = vpack.c.b16 %v633, %v629
  %v802 = vpack.c.b16 %v638, %v634
  %v803 = vpack.c.b16 %v639, %v635
  %v804 = vpack.c.b16 %v640, %v636
  %v805 = vpack.c.b16 %v641, %v637
  %v806 = vpack.c.b16 %v646, %v642
  %v807 = vpack.c.b16 %v647, %v643
  %v808 = vpack.c.b16 %v648, %v644
  %v809 = vpack.c.b16 %v649, %v645
  %v810 = vpack.c.b16 %v654, %v650
  %v811 = vpack.c.b16 %v655, %v651
  %v812 = vpack.c.b16 %v656, %v652
  %v813 = vpack.c.b16 %v657, %v653
  %v814 = vpack.c.b16 %v662, %v658
  %v815 = vpack.c.b16 %v663, %v659
  %v816 = vpack.c.b16 %v664, %v660
  %v817 = vpack.c.b16 %v665, %v661
  %v818 = vpack.c.b16 %v670, %v666
  %v819 = vpack.c.b16 %v671, %v667
  %v820 = vpack.c.b16 %v672, %v668
  %v821 = vpack.c.b16 %v673, %v669
  %v1034 = vunpack.c.l.b16 %v166
  %v1035 = vunpack.c.l.b16 %v167
  %v1036 = vunpack.c.l.b16 %v168
  %v1037 = vunpack.c.l.b16 %v169
  %v1038 = vunpack.c.l.b16 %v170
  %v1039 = vunpack.c.l.b16 %v171
  %v1040 = vunpack.c.l.b16 %v172
  %v1041 = vunpack.c.l.b16 %v173
  %v1042 = vunpack.c.l.b16 %v174
  %v1043 = vunpack.c.l.b16 %v175
  %v1044 = vunpack.c.l.b16 %v176
  %v1045 = vunpack.c.l.b16 %v177
  %v1046 = vunpack.c.l.b16 %v178
  %v1047 = vunpack.c.l.b16 %v179
  %v1048 = vunpack.c.l.b16 %v180
  %v1049 = vunpack.c.l.b16 %v181
  %v1050 = vunpack.c.l.b16 %v182
  %v1051 = vunpack.c.l.b16 %v183
  %v1052 = vunpack.c.l.b16 %v184
  %v1053 = vunpack.c.l.b16 %v185
  %v1054 = vunpack.c.l.b16 %v186
  %v1055 = vunpack.c.l.b16 %v187
  %v1056 = vunpack.c.l.b16 %v188
  %v1057 = vunpack.c.l.b16 %v189
  %v1058 = vunpack.c.l.b16 %v190
  %v1059 = vunpack.c.l.b16 %v191
  %v1060 = vunpack.c.l.b16 %v192
  %v1061 = vunpack.c.l.b16 %v193
  %v1062 = vunpack.c.l.b16 %v194
  %v1063 = vunpack.c.l.b16 %v195
  %v1064 = vunpack.c.l.b16 %v196
  %v1065 = vunpack.c.l.b16 %v197
  %v1066 = vunpack.c.l.b16 %v198
  %v1067 = vunpack.c.l.b16 %v199
  %v1068 = vunpack.c.l.b16 %v200
  %v1069 = vunpack.c.l.b16 %v201
  %v1070 = vunpack.c.l.b16 %v202
  %v1071 = vunpack.c.l.b16 %v203
  %v1072 = vunpack.c.l.b16 %v204
  %v1073 = vunpack.c.l.b16 %v205
  %v1074 = vunpack.c.l.b16 %v206
  %v1075 = vunpack.c.l.b16 %v207
  %v1076 = vunpack.c.l.b16 %v208
  %v1077 = vunpack.c.l.b16 %v209
  %v1078 = vunpack.c.l.b16 %v210
  %v1079 = vunpack.c.l.b16 %v211
  %v1080 = vunpack.c.l.b16 %v212
  %v1081 = vunpack.c.l.b16 %v213
  %v1082 = vunpack.c.l.b16 %v214
  %v1083 = vunpack.c.l.b16 %v215
  %v1084 = vunpack.c.l.b16 %v216
  %v1085 = vunpack.c.l.b16 %v217
  %v1086 = vunpack.c.l.b16 %v218
  %v1087 = vunpack.c.l.b16 %v219
  %v1088 = vunpack.c.l.b16 %v220
  %v1089 = vunpack.c.l.b16 %v221
  %v1090 = vunpack.c.l.b16 %v222
  %v1091 = vunpack.c.l.b16 %v223
  %v1092 = vunpack.c.l.b16 %v224
  %v1093 = vunpack.c.l.b16 %v225
  %v1094 = vunpack.c.l.b16 %v226
  %v1095 = vunpack.c.l.b16 %v227
  %v1096 = vunpack.c.l.b16 %v228
  %v1097 = vunpack.c.l.b16 %v229
  %v1098 = vpack.c.b16 %v1035, %v1034
  %v1099 = vpack.c.b16 %v1037, %v1036
  %v1100 = vpack.c.b16 %v1039, %v1038
  %v1101 = vpack.c.b16 %v1041, %v1040
  %v1102 = vpack.c.b16 %v1043, %v1042
  %v1103 = vpack.c.b16 %v1045, %v1044
  %v1104 = vpack.c.b16 %v1047, %v1046
  %v1105 = vpack.c.b16 %v1049, %v1048
  %v1106 = vpack.c.b16 %v1051, %v1050
  %v1107 = vpack.c.b16 %v1053, %v1052
  %v1108 = vpack.c.b16 %v1055, %v1054
  %v1109 = vpack.c.b16 %v1057, %v1056
  %v1110 = vpack.c.b16 %v1059, %v1058
  %v1111 = vpack.c.b16 %v1061, %v1060
  %v1112 = vpack.c.b16 %v1063, %v1062
  %v1113 = vpack.c.b16 %v1065, %v1064
  %v1114 = vpack.c.b16 %v1067, %v1066
  %v1115 = vpack.c.b16 %v1069, %v1068
  %v1116 = vpack.c.b16 %v1071, %v1070
  %v1117 = vpack.c.b16 %v1073, %v1072
  %v1118 = vpack.c.b16 %v1075, %v1074
  %v1119 = vpack.c.b16 %v1077, %v1076
  %v1120 = vpack.c.b16 %v1079, %v1078
  %v1121 = vpack.c.b16 %v1081, %v1080
  %v1122 = vpack.c.b16 %v1083, %v1082
  %v1123 = vpack.c.b16 %v1085, %v1084
  %v1124 = vpack.c.b16 %v1087, %v1086
  %v1125 = vpack.c.b16 %v1089, %v1088
  %v1126 = vpack.c.b16 %v1091, %v1090
  %v1127 = vpack.c.b16 %v1093, %v1092
  %v1128 = vpack.c.b16 %v1095, %v1094
  %v1129 = vpack.c.b16 %v1097, %v1096
  %1162 = vmatprep.subr.bf16.mxu0 0
  %1163 = vmatpush1.bf16.msra.mxu0 %v1098
  %1164 = vmatprep.subr.bf16.mxu0 0
  %1165 = vmatpush1.bf16.msra.mxu0 %v1099
  %1166 = vmatprep.subr.bf16.mxu0 0
  %1167 = vmatpush1.bf16.msra.mxu0 %v1100
  %1168 = vmatprep.subr.bf16.mxu0 0
  %1169 = vmatpush1.bf16.msra.mxu0 %v1101
  %1170 = vmatprep.subr.bf16.mxu0 0
  %1171 = vmatpush1.bf16.msra.mxu0 %v1102
  %1172 = vmatprep.subr.bf16.mxu0 0
  %1173 = vmatpush1.bf16.msra.mxu0 %v1103
  %1174 = vmatprep.subr.bf16.mxu0 0
  %1175 = vmatpush1.bf16.msra.mxu0 %v1104
  %1176 = vmatprep.subr.bf16.mxu0 0
  %1177 = vmatpush1.bf16.msra.mxu0 %v1105
  %1178 = vmatprep.subr.bf16.mxu0 0
  %1179 = vmatpush1.bf16.msra.mxu0 %v1106
  %1180 = vmatprep.subr.bf16.mxu0 0
  %1181 = vmatpush1.bf16.msra.mxu0 %v1107
  %1182 = vmatprep.subr.bf16.mxu0 0
  %1183 = vmatpush1.bf16.msra.mxu0 %v1108
  %1184 = vmatprep.subr.bf16.mxu0 0
  %1185 = vmatpush1.bf16.msra.mxu0 %v1109
  %1186 = vmatprep.subr.bf16.mxu0 0
  %1187 = vmatpush1.bf16.msra.mxu0 %v1110
  %1188 = vmatprep.subr.bf16.mxu0 0
  %1189 = vmatpush1.bf16.msra.mxu0 %v1111
  %1190 = vmatprep.subr.bf16.mxu0 0
  %1191 = vmatpush1.bf16.msra.mxu0 %v1112
  %1192 = vmatprep.subr.bf16.mxu0 0
  %1193 = vmatpush1.bf16.msra.mxu0 %v1113
  %1194 = vmatprep.mubr.bf16.mxu0 %v675
  %1195 = vmatmul.mubr.bf16.gmra.mrb[0].mxu0 %v674
  %v1196 = vpop.f32.mrb[0].mxu0
  %v1197 = vadd.f32 0.0, %v1196
  %v1198 = vpop.f32.mrb[0].mxu0
  %v1199 = vpop.f32.mrb[0].mxu0
  %v1200 = vadd.f32 0.0, %v1199
  %v1201 = vpop.f32.mrb[0].mxu0
  %1202 = vmatprep.mubr.bf16.mxu0 %v679
  %1203 = vmatmul.mubr.bf16.gmra.mrb[0].mxu0 %v678
  %v1204 = vpop.f32.mrb[0].mxu0
  %v1205 = vadd.f32 0.0, %v1204
  %v1206 = vpop.f32.mrb[0].mxu0
  %v1207 = vpop.f32.mrb[0].mxu0
  %v1208 = vadd.f32 0.0, %v1207
  %v1209 = vpop.f32.mrb[0].mxu0
  %1210 = vmatprep.mubr.bf16.mxu0 %v683
  %1211 = vmatmul.mubr.bf16.gmra.mrb[0].mxu0 %v682
  %v1212 = vpop.f32.mrb[0].mxu0
  %v1213 = vadd.f32 0.0, %v1212
  %v1214 = vpop.f32.mrb[0].mxu0
  %v1215 = vpop.f32.mrb[0].mxu0
  %v1216 = vadd.f32 0.0, %v1215
  %v1217 = vpop.f32.mrb[0].mxu0
  %1218 = vmatprep.mubr.bf16.mxu0 %v687
  %1219 = vmatmul.mubr.bf16.gmra.mrb[0].mxu0 %v686
  %v1220 = vpop.f32.mrb[0].mxu0
  %v1221 = vadd.f32 0.0, %v1220
  %v1222 = vpop.f32.mrb[0].mxu0
  %v1223 = vpop.f32.mrb[0].mxu0
  %v1224 = vadd.f32 0.0, %v1223
  %v1225 = vpop.f32.mrb[0].mxu0
  %1226 = vmatprep.mubr.bf16.mxu0 %v691
  %1227 = vmatmul.mubr.bf16.gmra.mrb[0].mxu0 %v690
  %v1228 = vpop.f32.mrb[0].mxu0
  %v1229 = vadd.f32 0.0, %v1228
  %v1230 = vpop.f32.mrb[0].mxu0
  %v1231 = vpop.f32.mrb[0].mxu0
  %v1232 = vadd.f32 0.0, %v1231
  %v1233 = vpop.f32.mrb[0].mxu0
  %1234 = vmatprep.mubr.bf16.mxu0 %v695
  %1235 = vmatmul.mubr.bf16.gmra.mrb[0].mxu0 %v694
  %v1236 = vpop.f32.mrb[0].mxu0
  %v1237 = vadd.f32 0.0, %v1236
  %v1238 = vpop.f32.mrb[0].mxu0
  %v1239 = vpop.f32.mrb[0].mxu0
  %v1240 = vadd.f32 0.0, %v1239
  %v1241 = vpop.f32.mrb[0].mxu0
  %1242 = vmatprep.mubr.bf16.mxu0 %v699
  %1243 = vmatmul.mubr.bf16.gmra.mrb[0].mxu0 %v698
  %v1244 = vpop.f32.mrb[0].mxu0
  %v1245 = vadd.f32 0.0, %v1244
  %v1246 = vpop.f32.mrb[0].mxu0
  %v1247 = vpop.f32.mrb[0].mxu0
  %v1248 = vadd.f32 0.0, %v1247
  %v1249 = vpop.f32.mrb[0].mxu0
  %1250 = vmatprep.mubr.bf16.mxu0 %v703
  %1251 = vmatmul.mubr.bf16.gmra.mrb[0].mxu0 %v702
  %v1252 = vpop.f32.mrb[0].mxu0
  %v1253 = vadd.f32 0.0, %v1252
  %v1254 = vpop.f32.mrb[0].mxu0
  %v1255 = vpop.f32.mrb[0].mxu0
  %v1256 = vadd.f32 0.0, %v1255
  %v1257 = vpop.f32.mrb[0].mxu0
  %1258 = vmatprep.mubr.bf16.mxu0 %v707
  %1259 = vmatmul.mubr.bf16.gmra.mrb[0].mxu0 %v706
  %v1260 = vpop.f32.mrb[0].mxu0
  %v1261 = vadd.f32 0.0, %v1260
  %v1262 = vpop.f32.mrb[0].mxu0
  %v1263 = vpop.f32.mrb[0].mxu0
  %v1264 = vadd.f32 0.0, %v1263
  %v1265 = vpop.f32.mrb[0].mxu0
  %1266 = vmatprep.mubr.bf16.mxu0 %v711
  %1267 = vmatmul.mubr.bf16.gmra.mrb[0].mxu0 %v710
  %v1268 = vpop.f32.mrb[0].mxu0
  %v1269 = vadd.f32 0.0, %v1268
  %v1270 = vpop.f32.mrb[0].mxu0
  %v1271 = vpop.f32.mrb[0].mxu0
  %v1272 = vadd.f32 0.0, %v1271
  %v1273 = vpop.f32.mrb[0].mxu0
  %1274 = vmatprep.mubr.bf16.mxu0 %v715
  %1275 = vmatmul.mubr.bf16.gmra.mrb[0].mxu0 %v714
  %v1276 = vpop.f32.mrb[0].mxu0
  %v1277 = vadd.f32 0.0, %v1276
  %v1278 = vpop.f32.mrb[0].mxu0
  %v1279 = vpop.f32.mrb[0].mxu0
  %v1280 = vadd.f32 0.0, %v1279
  %v1281 = vpop.f32.mrb[0].mxu0
  %1282 = vmatprep.mubr.bf16.mxu0 %v719
  %1283 = vmatmul.mubr.bf16.gmra.mrb[0].mxu0 %v718
  %v1284 = vpop.f32.mrb[0].mxu0
  %v1285 = vadd.f32 0.0, %v1284
  %v1286 = vpop.f32.mrb[0].mxu0
  %v1287 = vpop.f32.mrb[0].mxu0
  %v1288 = vadd.f32 0.0, %v1287
  %v1289 = vpop.f32.mrb[0].mxu0
  %1290 = vmatprep.mubr.bf16.mxu0 %v723
  %1291 = vmatmul.mubr.bf16.gmra.mrb[0].mxu0 %v722
  %v1292 = vpop.f32.mrb[0].mxu0
  %v1293 = vadd.f32 0.0, %v1292
  %v1294 = vpop.f32.mrb[0].mxu0
  %v1295 = vpop.f32.mrb[0].mxu0
  %v1296 = vadd.f32 0.0, %v1295
  %v1297 = vpop.f32.mrb[0].mxu0
  %1298 = vmatprep.mubr.bf16.mxu0 %v727
  %1299 = vmatmul.mubr.bf16.gmra.mrb[0].mxu0 %v726
  %v1300 = vpop.f32.mrb[0].mxu0
  %v1301 = vadd.f32 0.0, %v1300
  %v1302 = vpop.f32.mrb[0].mxu0
  %v1303 = vpop.f32.mrb[0].mxu0
  %v1304 = vadd.f32 0.0, %v1303
  %v1305 = vpop.f32.mrb[0].mxu0
  %1306 = vmatprep.mubr.bf16.mxu0 %v731
  %1307 = vmatmul.mubr.bf16.gmra.mrb[0].mxu0 %v730
  %v1308 = vpop.f32.mrb[0].mxu0
  %v1309 = vadd.f32 0.0, %v1308
  %v1310 = vpop.f32.mrb[0].mxu0
  %v1311 = vpop.f32.mrb[0].mxu0
  %v1312 = vadd.f32 0.0, %v1311
  %v1313 = vpop.f32.mrb[0].mxu0
  %1314 = vmatprep.mubr.bf16.mxu0 %v735
  %1315 = vmatmul.mubr.bf16.gmra.mrb[0].mxu0 %v734
  %v1316 = vpop.f32.mrb[0].mxu0
  %v1317 = vadd.f32 0.0, %v1316
  %v1318 = vpop.f32.mrb[0].mxu0
  %v1319 = vpop.f32.mrb[0].mxu0
  %v1320 = vadd.f32 0.0, %v1319
  %v1321 = vpop.f32.mrb[0].mxu0
  %1322 = vmatprep.mubr.bf16.mxu0 %v739
  %1323 = vmatmul.mubr.bf16.gmra.mrb[0].mxu0 %v738
  %v1324 = vpop.f32.mrb[0].mxu0
  %v1325 = vadd.f32 0.0, %v1324
  %v1326 = vpop.f32.mrb[0].mxu0
  %v1327 = vpop.f32.mrb[0].mxu0
  %v1328 = vadd.f32 0.0, %v1327
  %v1329 = vpop.f32.mrb[0].mxu0
  %1330 = vmatprep.mubr.bf16.mxu0 %v743
  %1331 = vmatmul.mubr.bf16.gmra.mrb[0].mxu0 %v742
  %v1332 = vpop.f32.mrb[0].mxu0
  %v1333 = vadd.f32 0.0, %v1332
  %v1334 = vpop.f32.mrb[0].mxu0
  %v1335 = vpop.f32.mrb[0].mxu0
  %v1336 = vadd.f32 0.0, %v1335
  %v1337 = vpop.f32.mrb[0].mxu0
  %1338 = vmatprep.mubr.bf16.mxu0 %v747
  %1339 = vmatmul.mubr.bf16.gmra.mrb[0].mxu0 %v746
  %v1340 = vpop.f32.mrb[0].mxu0
  %v1341 = vadd.f32 0.0, %v1340
  %v1342 = vpop.f32.mrb[0].mxu0
  %v1343 = vpop.f32.mrb[0].mxu0
  %v1344 = vadd.f32 0.0, %v1343
  %v1345 = vpop.f32.mrb[0].mxu0
  %1346 = vmatprep.mubr.bf16.mxu0 %v751
  %1347 = vmatmul.mubr.bf16.gmra.mrb[0].mxu0 %v750
  %v1348 = vpop.f32.mrb[0].mxu0
  %v1349 = vadd.f32 0.0, %v1348
  %v1350 = vpop.f32.mrb[0].mxu0
  %v1351 = vpop.f32.mrb[0].mxu0
  %v1352 = vadd.f32 0.0, %v1351
  %v1353 = vpop.f32.mrb[0].mxu0
  %1354 = vmatprep.mubr.bf16.mxu0 %v755
  %1355 = vmatmul.mubr.bf16.gmra.mrb[0].mxu0 %v754
  %v1356 = vpop.f32.mrb[0].mxu0
  %v1357 = vadd.f32 0.0, %v1356
  %v1358 = vpop.f32.mrb[0].mxu0
  %v1359 = vpop.f32.mrb[0].mxu0
  %v1360 = vadd.f32 0.0, %v1359
  %v1361 = vpop.f32.mrb[0].mxu0
  %1362 = vmatprep.mubr.bf16.mxu0 %v759
  %1363 = vmatmul.mubr.bf16.gmra.mrb[0].mxu0 %v758
  %v1364 = vpop.f32.mrb[0].mxu0
  %v1365 = vadd.f32 0.0, %v1364
  %v1366 = vpop.f32.mrb[0].mxu0
  %v1367 = vpop.f32.mrb[0].mxu0
  %v1368 = vadd.f32 0.0, %v1367
  %v1369 = vpop.f32.mrb[0].mxu0
  %1370 = vmatprep.mubr.bf16.mxu0 %v763
  %1371 = vmatmul.mubr.bf16.gmra.mrb[0].mxu0 %v762
  %v1372 = vpop.f32.mrb[0].mxu0
  %v1373 = vadd.f32 0.0, %v1372
  %v1374 = vpop.f32.mrb[0].mxu0
  %v1375 = vpop.f32.mrb[0].mxu0
  %v1376 = vadd.f32 0.0, %v1375
  %v1377 = vpop.f32.mrb[0].mxu0
  %1378 = vmatprep.mubr.bf16.mxu0 %v767
  %1379 = vmatmul.mubr.bf16.gmra.mrb[0].mxu0 %v766
  %v1380 = vpop.f32.mrb[0].mxu0
  %v1381 = vadd.f32 0.0, %v1380
  %v1382 = vpop.f32.mrb[0].mxu0
  %v1383 = vpop.f32.mrb[0].mxu0
  %v1384 = vadd.f32 0.0, %v1383
  %v1385 = vpop.f32.mrb[0].mxu0
  %1386 = vmatprep.mubr.bf16.mxu0 %v771
  %1387 = vmatmul.mubr.bf16.gmra.mrb[0].mxu0 %v770
  %v1388 = vpop.f32.mrb[0].mxu0
  %v1389 = vadd.f32 0.0, %v1388
  %v1390 = vpop.f32.mrb[0].mxu0
  %v1391 = vpop.f32.mrb[0].mxu0
  %v1392 = vadd.f32 0.0, %v1391
  %v1393 = vpop.f32.mrb[0].mxu0
  %1394 = vmatprep.mubr.bf16.mxu0 %v775
  %1395 = vmatmul.mubr.bf16.gmra.mrb[0].mxu0 %v774
  %v1396 = vpop.f32.mrb[0].mxu0
  %v1397 = vadd.f32 0.0, %v1396
  %v1398 = vpop.f32.mrb[0].mxu0
  %v1399 = vpop.f32.mrb[0].mxu0
  %v1400 = vadd.f32 0.0, %v1399
  %v1401 = vpop.f32.mrb[0].mxu0
  %1402 = vmatprep.mubr.bf16.mxu0 %v779
  %1403 = vmatmul.mubr.bf16.gmra.mrb[0].mxu0 %v778
  %v1404 = vpop.f32.mrb[0].mxu0
  %v1405 = vadd.f32 0.0, %v1404
  %v1406 = vpop.f32.mrb[0].mxu0
  %v1407 = vpop.f32.mrb[0].mxu0
  %v1408 = vadd.f32 0.0, %v1407
  %v1409 = vpop.f32.mrb[0].mxu0
  %1410 = vmatprep.mubr.bf16.mxu0 %v783
  %1411 = vmatmul.mubr.bf16.gmra.mrb[0].mxu0 %v782
  %v1412 = vpop.f32.mrb[0].mxu0
  %v1413 = vadd.f32 0.0, %v1412
  %v1414 = vpop.f32.mrb[0].mxu0
  %v1415 = vpop.f32.mrb[0].mxu0
  %v1416 = vadd.f32 0.0, %v1415
  %v1417 = vpop.f32.mrb[0].mxu0
  %1418 = vmatprep.mubr.bf16.mxu0 %v787
  %1419 = vmatmul.mubr.bf16.gmra.mrb[0].mxu0 %v786
  %v1420 = vpop.f32.mrb[0].mxu0
  %v1421 = vadd.f32 0.0, %v1420
  %v1422 = vpop.f32.mrb[0].mxu0
  %v1423 = vpop.f32.mrb[0].mxu0
  %v1424 = vadd.f32 0.0, %v1423
  %v1425 = vpop.f32.mrb[0].mxu0
  %1426 = vmatprep.mubr.bf16.mxu0 %v791
  %1427 = vmatmul.mubr.bf16.gmra.mrb[0].mxu0 %v790
  %v1428 = vpop.f32.mrb[0].mxu0
  %v1429 = vadd.f32 0.0, %v1428
  %v1430 = vpop.f32.mrb[0].mxu0
  %v1431 = vpop.f32.mrb[0].mxu0
  %v1432 = vadd.f32 0.0, %v1431
  %v1433 = vpop.f32.mrb[0].mxu0
  %1434 = vmatprep.mubr.bf16.mxu0 %v795
  %1435 = vmatmul.mubr.bf16.gmra.mrb[0].mxu0 %v794
  %v1436 = vpop.f32.mrb[0].mxu0
  %v1437 = vadd.f32 0.0, %v1436
  %v1438 = vpop.f32.mrb[0].mxu0
  %v1439 = vpop.f32.mrb[0].mxu0
  %v1440 = vadd.f32 0.0, %v1439
  %v1441 = vpop.f32.mrb[0].mxu0
  %1442 = vmatprep.mubr.bf16.mxu0 %v799
  %1443 = vmatmul.mubr.bf16.gmra.mrb[0].mxu0 %v798
  %v1444 = vpop.f32.mrb[0].mxu0
  %v1445 = vadd.f32 0.0, %v1444
  %v1446 = vpop.f32.mrb[0].mxu0
  %v1447 = vpop.f32.mrb[0].mxu0
  %v1448 = vadd.f32 0.0, %v1447
  %v1449 = vpop.f32.mrb[0].mxu0
  %1450 = vmatprep.mubr.bf16.mxu0 %v803
  %1451 = vmatmul.mubr.bf16.gmra.mrb[0].mxu0 %v802
  %v1452 = vpop.f32.mrb[0].mxu0
  %v1453 = vadd.f32 0.0, %v1452
  %v1454 = vpop.f32.mrb[0].mxu0
  %v1455 = vpop.f32.mrb[0].mxu0
  %v1456 = vadd.f32 0.0, %v1455
  %v1457 = vpop.f32.mrb[0].mxu0
  %1458 = vmatprep.mubr.bf16.mxu0 %v807
  %1459 = vmatmul.mubr.bf16.gmra.mrb[0].mxu0 %v806
  %v1460 = vpop.f32.mrb[0].mxu0
  %v1461 = vadd.f32 0.0, %v1460
  %v1462 = vpop.f32.mrb[0].mxu0
  %v1463 = vpop.f32.mrb[0].mxu0
  %v1464 = vadd.f32 0.0, %v1463
  %v1465 = vpop.f32.mrb[0].mxu0
  %1466 = vmatprep.mubr.bf16.mxu0 %v811
  %1467 = vmatmul.mubr.bf16.gmra.mrb[0].mxu0 %v810
  %v1468 = vpop.f32.mrb[0].mxu0
  %v1469 = vadd.f32 0.0, %v1468
  %v1470 = vpop.f32.mrb[0].mxu0
  %v1471 = vpop.f32.mrb[0].mxu0
  %v1472 = vadd.f32 0.0, %v1471
  %v1473 = vpop.f32.mrb[0].mxu0
  %1474 = vmatprep.mubr.bf16.mxu0 %v815
  %1475 = vmatmul.mubr.bf16.gmra.mrb[0].mxu0 %v814
  %v1476 = vpop.f32.mrb[0].mxu0
  %v1477 = vadd.f32 0.0, %v1476
  %v1478 = vpop.f32.mrb[0].mxu0
  %v1479 = vpop.f32.mrb[0].mxu0
  %v1480 = vadd.f32 0.0, %v1479
  %v1481 = vpop.f32.mrb[0].mxu0
  %1482 = vmatprep.mubr.bf16.mxu0 %v819
  %1483 = vmatmul.mubr.bf16.gmra.mrb[0].mxu0 %v818
  %v1484 = vpop.f32.mrb[0].mxu0
  %v1485 = vadd.f32 0.0, %v1484
  %v1486 = vpop.f32.mrb[0].mxu0
  %v1487 = vpop.f32.mrb[0].mxu0
  %v1488 = vadd.f32 0.0, %v1487
  %v1489 = vpop.f32.mrb[0].mxu0
  %1490 = vdwg.mxu0
  %1491 = vmatprep.subr.bf16.mxu0 0
  %1492 = vmatpush1.bf16.msra.mxu0 %v1114
  %1493 = vmatprep.subr.bf16.mxu0 0
  %1494 = vmatpush1.bf16.msra.mxu0 %v1115
  %1495 = vmatprep.subr.bf16.mxu0 0
  %1496 = vmatpush1.bf16.msra.mxu0 %v1116
  %1497 = vmatprep.subr.bf16.mxu0 0
  %1498 = vmatpush1.bf16.msra.mxu0 %v1117
  %1499 = vmatprep.subr.bf16.mxu0 0
  %1500 = vmatpush1.bf16.msra.mxu0 %v1118
  %1501 = vmatprep.subr.bf16.mxu0 0
  %1502 = vmatpush1.bf16.msra.mxu0 %v1119
  %1503 = vmatprep.subr.bf16.mxu0 0
  %1504 = vmatpush1.bf16.msra.mxu0 %v1120
  %1505 = vmatprep.subr.bf16.mxu0 0
  %1506 = vmatpush1.bf16.msra.mxu0 %v1121
  %1507 = vmatprep.subr.bf16.mxu0 0
  %1508 = vmatpush1.bf16.msra.mxu0 %v1122
  %1509 = vmatprep.subr.bf16.mxu0 0
  %1510 = vmatpush1.bf16.msra.mxu0 %v1123
  %1511 = vmatprep.subr.bf16.mxu0 0
  %1512 = vmatpush1.bf16.msra.mxu0 %v1124
  %1513 = vmatprep.subr.bf16.mxu0 0
  %1514 = vmatpush1.bf16.msra.mxu0 %v1125
  %1515 = vmatprep.subr.bf16.mxu0 0
  %1516 = vmatpush1.bf16.msra.mxu0 %v1126
  %1517 = vmatprep.subr.bf16.mxu0 0
  %1518 = vmatpush1.bf16.msra.mxu0 %v1127
  %1519 = vmatprep.subr.bf16.mxu0 0
  %1520 = vmatpush1.bf16.msra.mxu0 %v1128
  %1521 = vmatprep.subr.bf16.mxu0 0
  %1522 = vmatpush1.bf16.msra.mxu0 %v1129
  %1523 = vmatprep.mubr.bf16.mxu0 %v677
  %1524 = vmatmul.mubr.bf16.gmra.mrb[0].mxu0 %v676
  %v1525 = vpop.f32.mrb[0].mxu0
  %v1526 = vadd.f32 %v1197, %v1525
  %v1527 = vpop.f32.mrb[0].mxu0
  %v1528 = vpop.f32.mrb[0].mxu0
  %v1529 = vadd.f32 %v1200, %v1528
  %v1530 = vpop.f32.mrb[0].mxu0
  %1531 = vmatprep.mubr.bf16.mxu0 %v681
  %1532 = vmatmul.mubr.bf16.gmra.mrb[0].mxu0 %v680
  %v1533 = vpop.f32.mrb[0].mxu0
  %v1534 = vadd.f32 %v1205, %v1533
  %v1535 = vpop.f32.mrb[0].mxu0
  %v1536 = vpop.f32.mrb[0].mxu0
  %v1537 = vadd.f32 %v1208, %v1536
  %v1538 = vpop.f32.mrb[0].mxu0
  %1539 = vmatprep.mubr.bf16.mxu0 %v685
  %1540 = vmatmul.mubr.bf16.gmra.mrb[0].mxu0 %v684
  %v1541 = vpop.f32.mrb[0].mxu0
  %v1542 = vadd.f32 %v1213, %v1541
  %v1543 = vpop.f32.mrb[0].mxu0
  %v1544 = vpop.f32.mrb[0].mxu0
  %v1545 = vadd.f32 %v1216, %v1544
  %v1546 = vpop.f32.mrb[0].mxu0
  %1547 = vmatprep.mubr.bf16.mxu0 %v689
  %1548 = vmatmul.mubr.bf16.gmra.mrb[0].mxu0 %v688
  %v1549 = vpop.f32.mrb[0].mxu0
  %v1550 = vadd.f32 %v1221, %v1549
  %v1551 = vpop.f32.mrb[0].mxu0
  %v1552 = vpop.f32.mrb[0].mxu0
  %v1553 = vadd.f32 %v1224, %v1552
  %v1554 = vpop.f32.mrb[0].mxu0
  %1555 = vmatprep.mubr.bf16.mxu0 %v693
  %1556 = vmatmul.mubr.bf16.gmra.mrb[0].mxu0 %v692
  %v1557 = vpop.f32.mrb[0].mxu0
  %v1558 = vadd.f32 %v1229, %v1557
  %v1559 = vpop.f32.mrb[0].mxu0
  %v1560 = vpop.f32.mrb[0].mxu0
  %v1561 = vadd.f32 %v1232, %v1560
  %v1562 = vpop.f32.mrb[0].mxu0
  %1563 = vmatprep.mubr.bf16.mxu0 %v697
  %1564 = vmatmul.mubr.bf16.gmra.mrb[0].mxu0 %v696
  %v1565 = vpop.f32.mrb[0].mxu0
  %v1566 = vadd.f32 %v1237, %v1565
  %v1567 = vpop.f32.mrb[0].mxu0
  %v1568 = vpop.f32.mrb[0].mxu0
  %v1569 = vadd.f32 %v1240, %v1568
  %v1570 = vpop.f32.mrb[0].mxu0
  %1571 = vmatprep.mubr.bf16.mxu0 %v701
  %1572 = vmatmul.mubr.bf16.gmra.mrb[0].mxu0 %v700
  %v1573 = vpop.f32.mrb[0].mxu0
  %v1574 = vadd.f32 %v1245, %v1573
  %v1575 = vpop.f32.mrb[0].mxu0
  %v1576 = vpop.f32.mrb[0].mxu0
  %v1577 = vadd.f32 %v1248, %v1576
  %v1578 = vpop.f32.mrb[0].mxu0
  %1579 = vmatprep.mubr.bf16.mxu0 %v705
  %1580 = vmatmul.mubr.bf16.gmra.mrb[0].mxu0 %v704
  %v1581 = vpop.f32.mrb[0].mxu0
  %v1582 = vadd.f32 %v1253, %v1581
  %v1583 = vpop.f32.mrb[0].mxu0
  %v1584 = vpop.f32.mrb[0].mxu0
  %v1585 = vadd.f32 %v1256, %v1584
  %v1586 = vpop.f32.mrb[0].mxu0
  %1587 = vmatprep.mubr.bf16.mxu0 %v709
  %1588 = vmatmul.mubr.bf16.gmra.mrb[0].mxu0 %v708
  %v1589 = vpop.f32.mrb[0].mxu0
  %v1590 = vadd.f32 %v1261, %v1589
  %v1591 = vpop.f32.mrb[0].mxu0
  %v1592 = vpop.f32.mrb[0].mxu0
  %v1593 = vadd.f32 %v1264, %v1592
  %v1594 = vpop.f32.mrb[0].mxu0
  %1595 = vmatprep.mubr.bf16.mxu0 %v713
  %1596 = vmatmul.mubr.bf16.gmra.mrb[0].mxu0 %v712
  %v1597 = vpop.f32.mrb[0].mxu0
  %v1598 = vadd.f32 %v1269, %v1597
  %v1599 = vpop.f32.mrb[0].mxu0
  %v1600 = vpop.f32.mrb[0].mxu0
  %v1601 = vadd.f32 %v1272, %v1600
  %v1602 = vpop.f32.mrb[0].mxu0
  %1603 = vmatprep.mubr.bf16.mxu0 %v717
  %1604 = vmatmul.mubr.bf16.gmra.mrb[0].mxu0 %v716
  %v1605 = vpop.f32.mrb[0].mxu0
  %v1606 = vadd.f32 %v1277, %v1605
  %v1607 = vpop.f32.mrb[0].mxu0
  %v1608 = vpop.f32.mrb[0].mxu0
  %v1609 = vadd.f32 %v1280, %v1608
  %v1610 = vpop.f32.mrb[0].mxu0
  %1611 = vmatprep.mubr.bf16.mxu0 %v721
  %1612 = vmatmul.mubr.bf16.gmra.mrb[0].mxu0 %v720
  %v1613 = vpop.f32.mrb[0].mxu0
  %v1614 = vadd.f32 %v1285, %v1613
  %v1615 = vpop.f32.mrb[0].mxu0
  %v1616 = vpop.f32.mrb[0].mxu0
  %v1617 = vadd.f32 %v1288, %v1616
  %v1618 = vpop.f32.mrb[0].mxu0
  %1619 = vmatprep.mubr.bf16.mxu0 %v725
  %1620 = vmatmul.mubr.bf16.gmra.mrb[0].mxu0 %v724
  %v1621 = vpop.f32.mrb[0].mxu0
  %v1622 = vadd.f32 %v1293, %v1621
  %v1623 = vpop.f32.mrb[0].mxu0
  %v1624 = vpop.f32.mrb[0].mxu0
  %v1625 = vadd.f32 %v1296, %v1624
  %v1626 = vpop.f32.mrb[0].mxu0
  %1627 = vmatprep.mubr.bf16.mxu0 %v729
  %1628 = vmatmul.mubr.bf16.gmra.mrb[0].mxu0 %v728
  %v1629 = vpop.f32.mrb[0].mxu0
  %v1630 = vadd.f32 %v1301, %v1629
  %v1631 = vpop.f32.mrb[0].mxu0
  %v1632 = vpop.f32.mrb[0].mxu0
  %v1633 = vadd.f32 %v1304, %v1632
  %v1634 = vpop.f32.mrb[0].mxu0
  %1635 = vmatprep.mubr.bf16.mxu0 %v733
  %1636 = vmatmul.mubr.bf16.gmra.mrb[0].mxu0 %v732
  %v1637 = vpop.f32.mrb[0].mxu0
  %v1638 = vadd.f32 %v1309, %v1637
  %v1639 = vpop.f32.mrb[0].mxu0
  %v1640 = vpop.f32.mrb[0].mxu0
  %v1641 = vadd.f32 %v1312, %v1640
  %v1642 = vpop.f32.mrb[0].mxu0
  %1643 = vmatprep.mubr.bf16.mxu0 %v737
  %1644 = vmatmul.mubr.bf16.gmra.mrb[0].mxu0 %v736
  %v1645 = vpop.f32.mrb[0].mxu0
  %v1646 = vadd.f32 %v1317, %v1645
  %v1647 = vpop.f32.mrb[0].mxu0
  %v1648 = vpop.f32.mrb[0].mxu0
  %v1649 = vadd.f32 %v1320, %v1648
  %v1650 = vpop.f32.mrb[0].mxu0
  %1651 = vmatprep.mubr.bf16.mxu0 %v741
  %1652 = vmatmul.mubr.bf16.gmra.mrb[0].mxu0 %v740
  %v1653 = vpop.f32.mrb[0].mxu0
  %v1654 = vadd.f32 %v1325, %v1653
  %v1655 = vpop.f32.mrb[0].mxu0
  %v1656 = vpop.f32.mrb[0].mxu0
  %v1657 = vadd.f32 %v1328, %v1656
  %v1658 = vpop.f32.mrb[0].mxu0
  %1659 = vmatprep.mubr.bf16.mxu0 %v745
  %1660 = vmatmul.mubr.bf16.gmra.mrb[0].mxu0 %v744
  %v1661 = vpop.f32.mrb[0].mxu0
  %v1662 = vadd.f32 %v1333, %v1661
  %v1663 = vpop.f32.mrb[0].mxu0
  %v1664 = vpop.f32.mrb[0].mxu0
  %v1665 = vadd.f32 %v1336, %v1664
  %v1666 = vpop.f32.mrb[0].mxu0
  %1667 = vmatprep.mubr.bf16.mxu0 %v749
  %1668 = vmatmul.mubr.bf16.gmra.mrb[0].mxu0 %v748
  %v1669 = vpop.f32.mrb[0].mxu0
  %v1670 = vadd.f32 %v1341, %v1669
  %v1671 = vpop.f32.mrb[0].mxu0
  %v1672 = vpop.f32.mrb[0].mxu0
  %v1673 = vadd.f32 %v1344, %v1672
  %v1674 = vpop.f32.mrb[0].mxu0
  %1675 = vmatprep.mubr.bf16.mxu0 %v753
  %1676 = vmatmul.mubr.bf16.gmra.mrb[0].mxu0 %v752
  %v1677 = vpop.f32.mrb[0].mxu0
  %v1678 = vadd.f32 %v1349, %v1677
  %v1679 = vpop.f32.mrb[0].mxu0
  %v1680 = vpop.f32.mrb[0].mxu0
  %v1681 = vadd.f32 %v1352, %v1680
  %v1682 = vpop.f32.mrb[0].mxu0
  %1683 = vmatprep.mubr.bf16.mxu0 %v757
  %1684 = vmatmul.mubr.bf16.gmra.mrb[0].mxu0 %v756
  %v1685 = vpop.f32.mrb[0].mxu0
  %v1686 = vadd.f32 %v1357, %v1685
  %v1687 = vpop.f32.mrb[0].mxu0
  %v1688 = vpop.f32.mrb[0].mxu0
  %v1689 = vadd.f32 %v1360, %v1688
  %v1690 = vpop.f32.mrb[0].mxu0
  %1691 = vmatprep.mubr.bf16.mxu0 %v761
  %1692 = vmatmul.mubr.bf16.gmra.mrb[0].mxu0 %v760
  %v1693 = vpop.f32.mrb[0].mxu0
  %v1694 = vadd.f32 %v1365, %v1693
  %v1695 = vpop.f32.mrb[0].mxu0
  %v1696 = vpop.f32.mrb[0].mxu0
  %v1697 = vadd.f32 %v1368, %v1696
  %v1698 = vpop.f32.mrb[0].mxu0
  %1699 = vmatprep.mubr.bf16.mxu0 %v765
  %1700 = vmatmul.mubr.bf16.gmra.mrb[0].mxu0 %v764
  %v1701 = vpop.f32.mrb[0].mxu0
  %v1702 = vadd.f32 %v1373, %v1701
  %v1703 = vpop.f32.mrb[0].mxu0
  %v1704 = vpop.f32.mrb[0].mxu0
  %v1705 = vadd.f32 %v1376, %v1704
  %v1706 = vpop.f32.mrb[0].mxu0
  %1707 = vmatprep.mubr.bf16.mxu0 %v769
  %1708 = vmatmul.mubr.bf16.gmra.mrb[0].mxu0 %v768
  %v1709 = vpop.f32.mrb[0].mxu0
  %v1710 = vadd.f32 %v1381, %v1709
  %v1711 = vpop.f32.mrb[0].mxu0
  %v1712 = vpop.f32.mrb[0].mxu0
  %v1713 = vadd.f32 %v1384, %v1712
  %v1714 = vpop.f32.mrb[0].mxu0
  %1715 = vmatprep.mubr.bf16.mxu0 %v773
  %1716 = vmatmul.mubr.bf16.gmra.mrb[0].mxu0 %v772
  %v1717 = vpop.f32.mrb[0].mxu0
  %v1718 = vadd.f32 %v1389, %v1717
  %v1719 = vpop.f32.mrb[0].mxu0
  %v1720 = vpop.f32.mrb[0].mxu0
  %v1721 = vadd.f32 %v1392, %v1720
  %v1722 = vpop.f32.mrb[0].mxu0
  %1723 = vmatprep.mubr.bf16.mxu0 %v777
  %1724 = vmatmul.mubr.bf16.gmra.mrb[0].mxu0 %v776
  %v1725 = vpop.f32.mrb[0].mxu0
  %v1726 = vadd.f32 %v1397, %v1725
  %v1727 = vpop.f32.mrb[0].mxu0
  %v1728 = vpop.f32.mrb[0].mxu0
  %v1729 = vadd.f32 %v1400, %v1728
  %v1730 = vpop.f32.mrb[0].mxu0
  %1731 = vmatprep.mubr.bf16.mxu0 %v781
  %1732 = vmatmul.mubr.bf16.gmra.mrb[0].mxu0 %v780
  %v1733 = vpop.f32.mrb[0].mxu0
  %v1734 = vadd.f32 %v1405, %v1733
  %v1735 = vpop.f32.mrb[0].mxu0
  %v1736 = vpop.f32.mrb[0].mxu0
  %v1737 = vadd.f32 %v1408, %v1736
  %v1738 = vpop.f32.mrb[0].mxu0
  %1739 = vmatprep.mubr.bf16.mxu0 %v785
  %1740 = vmatmul.mubr.bf16.gmra.mrb[0].mxu0 %v784
  %v1741 = vpop.f32.mrb[0].mxu0
  %v1742 = vadd.f32 %v1413, %v1741
  %v1743 = vpop.f32.mrb[0].mxu0
  %v1744 = vpop.f32.mrb[0].mxu0
  %v1745 = vadd.f32 %v1416, %v1744
  %v1746 = vpop.f32.mrb[0].mxu0
  %1747 = vmatprep.mubr.bf16.mxu0 %v789
  %1748 = vmatmul.mubr.bf16.gmra.mrb[0].mxu0 %v788
  %v1749 = vpop.f32.mrb[0].mxu0
  %v1750 = vadd.f32 %v1421, %v1749
  %v1751 = vpop.f32.mrb[0].mxu0
  %v1752 = vpop.f32.mrb[0].mxu0
  %v1753 = vadd.f32 %v1424, %v1752
  %v1754 = vpop.f32.mrb[0].mxu0
  %1755 = vmatprep.mubr.bf16.mxu0 %v793
  %1756 = vmatmul.mubr.bf16.gmra.mrb[0].mxu0 %v792
  %v1757 = vpop.f32.mrb[0].mxu0
  %v1758 = vadd.f32 %v1429, %v1757
  %v1759 = vpop.f32.mrb[0].mxu0
  %v1760 = vpop.f32.mrb[0].mxu0
  %v1761 = vadd.f32 %v1432, %v1760
  %v1762 = vpop.f32.mrb[0].mxu0
  %1763 = vmatprep.mubr.bf16.mxu0 %v797
  %1764 = vmatmul.mubr.bf16.gmra.mrb[0].mxu0 %v796
  %v1765 = vpop.f32.mrb[0].mxu0
  %v1766 = vadd.f32 %v1437, %v1765
  %v1767 = vpop.f32.mrb[0].mxu0
  %v1768 = vpop.f32.mrb[0].mxu0
  %v1769 = vadd.f32 %v1440, %v1768
  %v1770 = vpop.f32.mrb[0].mxu0
  %1771 = vmatprep.mubr.bf16.mxu0 %v801
  %1772 = vmatmul.mubr.bf16.gmra.mrb[0].mxu0 %v800
  %v1773 = vpop.f32.mrb[0].mxu0
  %v1774 = vadd.f32 %v1445, %v1773
  %v1775 = vpop.f32.mrb[0].mxu0
  %v1776 = vpop.f32.mrb[0].mxu0
  %v1777 = vadd.f32 %v1448, %v1776
  %v1778 = vpop.f32.mrb[0].mxu0
  %1779 = vmatprep.mubr.bf16.mxu0 %v805
  %1780 = vmatmul.mubr.bf16.gmra.mrb[0].mxu0 %v804
  %v1781 = vpop.f32.mrb[0].mxu0
  %v1782 = vadd.f32 %v1453, %v1781
  %v1783 = vpop.f32.mrb[0].mxu0
  %v1784 = vpop.f32.mrb[0].mxu0
  %v1785 = vadd.f32 %v1456, %v1784
  %v1786 = vpop.f32.mrb[0].mxu0
  %1787 = vmatprep.mubr.bf16.mxu0 %v809
  %1788 = vmatmul.mubr.bf16.gmra.mrb[0].mxu0 %v808
  %v1789 = vpop.f32.mrb[0].mxu0
  %v1790 = vadd.f32 %v1461, %v1789
  %v1791 = vpop.f32.mrb[0].mxu0
  %v1792 = vpop.f32.mrb[0].mxu0
  %v1793 = vadd.f32 %v1464, %v1792
  %v1794 = vpop.f32.mrb[0].mxu0
  %1795 = vmatprep.mubr.bf16.mxu0 %v813
  %1796 = vmatmul.mubr.bf16.gmra.mrb[0].mxu0 %v812
  %v1797 = vpop.f32.mrb[0].mxu0
  %v1798 = vadd.f32 %v1469, %v1797
  %v1799 = vpop.f32.mrb[0].mxu0
  %v1800 = vpop.f32.mrb[0].mxu0
  %v1801 = vadd.f32 %v1472, %v1800
  %v1802 = vpop.f32.mrb[0].mxu0
  %1803 = vmatprep.mubr.bf16.mxu0 %v817
  %1804 = vmatmul.mubr.bf16.gmra.mrb[0].mxu0 %v816
  %v1805 = vpop.f32.mrb[0].mxu0
  %v1806 = vadd.f32 %v1477, %v1805
  %v1807 = vpop.f32.mrb[0].mxu0
  %v1808 = vpop.f32.mrb[0].mxu0
  %v1809 = vadd.f32 %v1480, %v1808
  %v1810 = vpop.f32.mrb[0].mxu0
  %1811 = vmatprep.mubr.bf16.mxu0 %v821
  %1812 = vmatmul.mubr.bf16.gmra.mrb[0].mxu0 %v820
  %v1813 = vpop.f32.mrb[0].mxu0
  %v1814 = vadd.f32 %v1485, %v1813
  %v1815 = vpop.f32.mrb[0].mxu0
  %v1816 = vpop.f32.mrb[0].mxu0
  %v1817 = vadd.f32 %v1488, %v1816
  %v1818 = vpop.f32.mrb[0].mxu0
  %1819 = vdwg.mxu0
  %v1820 = vadd.f32 %v1526, %v1529
  %v1821 = vadd.f32 %v1820, %v1534
  %v1822 = vadd.f32 %v1821, %v1537
  %v1823 = vadd.f32 %v1822, %v1542
  %v1824 = vadd.f32 %v1823, %v1545
  %v1825 = vadd.f32 %v1824, %v1550
  %v1826 = vadd.f32 %v1825, %v1553
  %v1827 = vadd.f32 %v1826, %v1558
  %v1828 = vadd.f32 %v1827, %v1561
  %v1829 = vadd.f32 %v1828, %v1566
  %v1830 = vadd.f32 %v1829, %v1569
  %v1831 = vadd.f32 %v1830, %v1574
  %v1832 = vadd.f32 %v1831, %v1577
  %v1833 = vadd.f32 %v1832, %v1582
  %v1834 = vadd.f32 %v1833, %v1585
  %v1835 = vadd.f32 %v1834, %v1590
  %v1836 = vadd.f32 %v1835, %v1593
  %v1837 = vadd.f32 %v1836, %v1598
  %v1838 = vadd.f32 %v1837, %v1601
  %v1839 = vadd.f32 %v1838, %v1606
  %v1840 = vadd.f32 %v1839, %v1609
  %v1841 = vadd.f32 %v1840, %v1614
  %v1842 = vadd.f32 %v1841, %v1617
  %v1843 = vadd.f32 %v1842, %v1622
  %v1844 = vadd.f32 %v1843, %v1625
  %v1845 = vadd.f32 %v1844, %v1630
  %v1846 = vadd.f32 %v1845, %v1633
  %v1847 = vadd.f32 %v1846, %v1638
  %v1848 = vadd.f32 %v1847, %v1641
  %v1849 = vadd.f32 %v1848, %v1646
  %v1850 = vadd.f32 %v1849, %v1649
  %v1851 = vadd.f32 %v1850, %v1654
  %v1852 = vadd.f32 %v1851, %v1657
  %v1853 = vadd.f32 %v1852, %v1662
  %v1854 = vadd.f32 %v1853, %v1665
  %v1855 = vadd.f32 %v1854, %v1670
  %v1856 = vadd.f32 %v1855, %v1673
  %v1857 = vadd.f32 %v1856, %v1678
  %v1858 = vadd.f32 %v1857, %v1681
  %v1859 = vadd.f32 %v1858, %v1686
  %v1860 = vadd.f32 %v1859, %v1689
  %v1861 = vadd.f32 %v1860, %v1694
  %v1862 = vadd.f32 %v1861, %v1697
  %v1863 = vadd.f32 %v1862, %v1702
  %v1864 = vadd.f32 %v1863, %v1705
  %v1865 = vadd.f32 %v1864, %v1710
  %v1866 = vadd.f32 %v1865, %v1713
  %v1867 = vadd.f32 %v1866, %v1718
  %v1868 = vadd.f32 %v1867, %v1721
  %v1869 = vadd.f32 %v1868, %v1726
  %v1870 = vadd.f32 %v1869, %v1729
  %v1871 = vadd.f32 %v1870, %v1734
  %v1872 = vadd.f32 %v1871, %v1737
  %v1873 = vadd.f32 %v1872, %v1742
  %v1874 = vadd.f32 %v1873, %v1745
  %v1875 = vadd.f32 %v1874, %v1750
  %v1876 = vadd.f32 %v1875, %v1753
  %v1877 = vadd.f32 %v1876, %v1758
  %v1878 = vadd.f32 %v1877, %v1761
  %v1879 = vadd.f32 %v1878, %v1766
  %v1880 = vadd.f32 %v1879, %v1769
  %v1881 = vadd.f32 %v1880, %v1774
  %v1882 = vadd.f32 %v1881, %v1777
  %v1883 = vadd.f32 %v1882, %v1782
  %v1884 = vadd.f32 %v1883, %v1785
  %v1885 = vadd.f32 %v1884, %v1790
  %v1886 = vadd.f32 %v1885, %v1793
  %v1887 = vadd.f32 %v1886, %v1798
  %v1888 = vadd.f32 %v1887, %v1801
  %v1889 = vadd.f32 %v1888, %v1806
  %v1890 = vadd.f32 %v1889, %v1809
  %v1891 = vadd.f32 %v1890, %v1814
  %v1892 = vadd.f32 %v1891, %v1817
  %v1893 = vrot.slane %v1892, 4
  %v1894 = vadd.f32 %v1892, %v1893
  %v1895 = vrot.slane %v1894, 2
  %v1896 = vadd.f32 %v1894, %v1895
  %v1897 = vrot.slane %v1896, 1
  %v1898 = vadd.f32 %v1896, %v1897
  %v1899 = vmul.f32 %v1898, 0.0017301039
  %v1900 = vmul.f32 %v1526, %v1526
  %v1901 = vmul.f32 %v1529, %v1529
  %v1902 = vmul.f32 %v1534, %v1534
  %v1903 = vmul.f32 %v1537, %v1537
  %v1904 = vmul.f32 %v1542, %v1542
  %v1905 = vmul.f32 %v1545, %v1545
  %v1906 = vmul.f32 %v1550, %v1550
  %v1907 = vmul.f32 %v1553, %v1553
  %v1908 = vmul.f32 %v1558, %v1558
  %v1909 = vmul.f32 %v1561, %v1561
  %v1910 = vmul.f32 %v1566, %v1566
  %v1911 = vmul.f32 %v1569, %v1569
  %v1912 = vmul.f32 %v1574, %v1574
  %v1913 = vmul.f32 %v1577, %v1577
  %v1914 = vmul.f32 %v1582, %v1582
  %v1915 = vmul.f32 %v1585, %v1585
  %v1916 = vmul.f32 %v1590, %v1590
  %v1917 = vmul.f32 %v1593, %v1593
  %v1918 = vmul.f32 %v1598, %v1598
  %v1919 = vmul.f32 %v1601, %v1601
  %v1920 = vmul.f32 %v1606, %v1606
  %v1921 = vmul.f32 %v1609, %v1609
  %v1922 = vmul.f32 %v1614, %v1614
  %v1923 = vmul.f32 %v1617, %v1617
  %v1924 = vmul.f32 %v1622, %v1622
  %v1925 = vmul.f32 %v1625, %v1625
  %v1926 = vmul.f32 %v1630, %v1630
  %v1927 = vmul.f32 %v1633, %v1633
  %v1928 = vmul.f32 %v1638, %v1638
  %v1929 = vmul.f32 %v1641, %v1641
  %v1930 = vmul.f32 %v1646, %v1646
  %v1931 = vmul.f32 %v1649, %v1649
  %v1932 = vmul.f32 %v1654, %v1654
  %v1933 = vmul.f32 %v1657, %v1657
  %v1934 = vmul.f32 %v1662, %v1662
  %v1935 = vmul.f32 %v1665, %v1665
  %v1936 = vmul.f32 %v1670, %v1670
  %v1937 = vmul.f32 %v1673, %v1673
  %v1938 = vmul.f32 %v1678, %v1678
  %v1939 = vmul.f32 %v1681, %v1681
  %v1940 = vmul.f32 %v1686, %v1686
  %v1941 = vmul.f32 %v1689, %v1689
  %v1942 = vmul.f32 %v1694, %v1694
  %v1943 = vmul.f32 %v1697, %v1697
  %v1944 = vmul.f32 %v1702, %v1702
  %v1945 = vmul.f32 %v1705, %v1705
  %v1946 = vmul.f32 %v1710, %v1710
  %v1947 = vmul.f32 %v1713, %v1713
  %v1948 = vmul.f32 %v1718, %v1718
  %v1949 = vmul.f32 %v1721, %v1721
  %v1950 = vmul.f32 %v1726, %v1726
  %v1951 = vmul.f32 %v1729, %v1729
  %v1952 = vmul.f32 %v1734, %v1734
  %v1953 = vmul.f32 %v1737, %v1737
  %v1954 = vmul.f32 %v1742, %v1742
  %v1955 = vmul.f32 %v1745, %v1745
  %v1956 = vmul.f32 %v1750, %v1750
  %v1957 = vmul.f32 %v1753, %v1753
  %v1958 = vmul.f32 %v1758, %v1758
  %v1959 = vmul.f32 %v1761, %v1761
  %v1960 = vmul.f32 %v1766, %v1766
  %v1961 = vmul.f32 %v1769, %v1769
  %v1962 = vmul.f32 %v1774, %v1774
  %v1963 = vmul.f32 %v1777, %v1777
  %v1964 = vmul.f32 %v1782, %v1782
  %v1965 = vmul.f32 %v1785, %v1785
  %v1966 = vmul.f32 %v1790, %v1790
  %v1967 = vmul.f32 %v1793, %v1793
  %v1968 = vmul.f32 %v1798, %v1798
  %v1969 = vmul.f32 %v1801, %v1801
  %v1970 = vmul.f32 %v1806, %v1806
  %v1971 = vmul.f32 %v1809, %v1809
  %v1972 = vmul.f32 %v1814, %v1814
  %v1973 = vmul.f32 %v1817, %v1817
  %v1974 = vadd.f32 %v1900, %v1901
  %v1975 = vadd.f32 %v1974, %v1902
  %v1976 = vadd.f32 %v1975, %v1903
  %v1977 = vadd.f32 %v1976, %v1904
  %v1978 = vadd.f32 %v1977, %v1905
  %v1979 = vadd.f32 %v1978, %v1906
  %v1980 = vadd.f32 %v1979, %v1907
  %v1981 = vadd.f32 %v1980, %v1908
  %v1982 = vadd.f32 %v1981, %v1909
  %v1983 = vadd.f32 %v1982, %v1910
  %v1984 = vadd.f32 %v1983, %v1911
  %v1985 = vadd.f32 %v1984, %v1912
  %v1986 = vadd.f32 %v1985, %v1913
  %v1987 = vadd.f32 %v1986, %v1914
  %v1988 = vadd.f32 %v1987, %v1915
  %v1989 = vadd.f32 %v1988, %v1916
  %v1990 = vadd.f32 %v1989, %v1917
  %v1991 = vadd.f32 %v1990, %v1918
  %v1992 = vadd.f32 %v1991, %v1919
  %v1993 = vadd.f32 %v1992, %v1920
  %v1994 = vadd.f32 %v1993, %v1921
  %v1995 = vadd.f32 %v1994, %v1922
  %v1996 = vadd.f32 %v1995, %v1923
  %v1997 = vadd.f32 %v1996, %v1924
  %v1998 = vadd.f32 %v1997, %v1925
  %v1999 = vadd.f32 %v1998, %v1926
  %v2000 = vadd.f32 %v1999, %v1927
  %v2001 = vadd.f32 %v2000, %v1928
  %v2002 = vadd.f32 %v2001, %v1929
  %v2003 = vadd.f32 %v2002, %v1930
  %v2004 = vadd.f32 %v2003, %v1931
  %v2005 = vadd.f32 %v2004, %v1932
  %v2006 = vadd.f32 %v2005, %v1933
  %v2007 = vadd.f32 %v2006, %v1934
  %v2008 = vadd.f32 %v2007, %v1935
  %v2009 = vadd.f32 %v2008, %v1936
  %v2010 = vadd.f32 %v2009, %v1937
  %v2011 = vadd.f32 %v2010, %v1938
  %v2012 = vadd.f32 %v2011, %v1939
  %v2013 = vadd.f32 %v2012, %v1940
  %v2014 = vadd.f32 %v2013, %v1941
  %v2015 = vadd.f32 %v2014, %v1942
  %v2016 = vadd.f32 %v2015, %v1943
  %v2017 = vadd.f32 %v2016, %v1944
  %v2018 = vadd.f32 %v2017, %v1945
  %v2019 = vadd.f32 %v2018, %v1946
  %v2020 = vadd.f32 %v2019, %v1947
  %v2021 = vadd.f32 %v2020, %v1948
  %v2022 = vadd.f32 %v2021, %v1949
  %v2023 = vadd.f32 %v2022, %v1950
  %v2024 = vadd.f32 %v2023, %v1951
  %v2025 = vadd.f32 %v2024, %v1952
  %v2026 = vadd.f32 %v2025, %v1953
  %v2027 = vadd.f32 %v2026, %v1954
  %v2028 = vadd.f32 %v2027, %v1955
  %v2029 = vadd.f32 %v2028, %v1956
  %v2030 = vadd.f32 %v2029, %v1957
  %v2031 = vadd.f32 %v2030, %v1958
  %v2032 = vadd.f32 %v2031, %v1959
  %v2033 = vadd.f32 %v2032, %v1960
  %v2034 = vadd.f32 %v2033, %v1961
  %v2035 = vadd.f32 %v2034, %v1962
  %v2036 = vadd.f32 %v2035, %v1963
  %v2037 = vadd.f32 %v2036, %v1964
  %v2038 = vadd.f32 %v2037, %v1965
  %v2039 = vadd.f32 %v2038, %v1966
  %v2040 = vadd.f32 %v2039, %v1967
  %v2041 = vadd.f32 %v2040, %v1968
  %v2042 = vadd.f32 %v2041, %v1969
  %v2043 = vadd.f32 %v2042, %v1970
  %v2044 = vadd.f32 %v2043, %v1971
  %v2045 = vadd.f32 %v2044, %v1972
  %v2046 = vadd.f32 %v2045, %v1973
  %v2047 = vrot.slane %v2046, 4
  %v2048 = vadd.f32 %v2046, %v2047
  %v2049 = vrot.slane %v2048, 2
  %v2050 = vadd.f32 %v2048, %v2049
  %v2051 = vrot.slane %v2050, 1
  %v2052 = vadd.f32 %v2050, %v2051
  %v2053 = vmul.f32 %v2052, 0.0017301039
  %v2054 = vmul.f32 %v1899, %v1899
  %v2055 = vsub.f32 %v2053, %v2054
  %v2056 = vmax.f32 %v2055, 0.0
  %v2057 = vld [vmem:[%s2] sm:$0x1]
  %v2058 = vadd.f32 %v2056, 1e-05
  %v2059 = vrsqrt.pop %v2058
  %v2060 = vmul.f32 %v2057, %v2059
  %v2061 = vld [vmem:[%s3] sm:$0x1]
  %v2062 = vmul.f32 %v1899, %v2060
  %v2063 = vsub.f32 %v2061, %v2062
  %v2065 = vlaneseq
  %v2066 = vshrl.u32 %v2065, 7
  %v2067 = vsub.s32 0, %v2066
  %v2068 = vrot.slane %v2060, %v2067
  %v2070 = vmul.f32 %v1526, %v2068
  %v2071 = vmul.f32 %v1529, %v2068
  %v2072 = vmul.f32 %v1534, %v2068
  %v2073 = vmul.f32 %v1537, %v2068
  %v2074 = vmul.f32 %v1542, %v2068
  %v2075 = vmul.f32 %v1545, %v2068
  %v2076 = vmul.f32 %v1550, %v2068
  %v2077 = vmul.f32 %v1553, %v2068
  %v2078 = vmul.f32 %v1558, %v2068
  %v2079 = vmul.f32 %v1561, %v2068
  %v2080 = vmul.f32 %v1566, %v2068
  %v2081 = vmul.f32 %v1569, %v2068
  %v2082 = vmul.f32 %v1574, %v2068
  %v2083 = vmul.f32 %v1577, %v2068
  %v2084 = vmul.f32 %v1582, %v2068
  %v2085 = vmul.f32 %v1585, %v2068
  %v2086 = vmul.f32 %v1590, %v2068
  %v2087 = vmul.f32 %v1593, %v2068
  %v2088 = vmul.f32 %v1598, %v2068
  %v2089 = vmul.f32 %v1601, %v2068
  %v2090 = vmul.f32 %v1606, %v2068
  %v2091 = vmul.f32 %v1609, %v2068
  %v2092 = vmul.f32 %v1614, %v2068
  %v2093 = vmul.f32 %v1617, %v2068
  %v2094 = vmul.f32 %v1622, %v2068
  %v2095 = vmul.f32 %v1625, %v2068
  %v2096 = vmul.f32 %v1630, %v2068
  %v2097 = vmul.f32 %v1633, %v2068
  %v2098 = vmul.f32 %v1638, %v2068
  %v2099 = vmul.f32 %v1641, %v2068
  %v2100 = vmul.f32 %v1646, %v2068
  %v2101 = vmul.f32 %v1649, %v2068
  %v2102 = vmul.f32 %v1654, %v2068
  %v2103 = vmul.f32 %v1657, %v2068
  %v2104 = vmul.f32 %v1662, %v2068
  %v2105 = vmul.f32 %v1665, %v2068
  %v2106 = vmul.f32 %v1670, %v2068
  %v2107 = vmul.f32 %v1673, %v2068
  %v2108 = vmul.f32 %v1678, %v2068
  %v2109 = vmul.f32 %v1681, %v2068
  %v2110 = vmul.f32 %v1686, %v2068
  %v2111 = vmul.f32 %v1689, %v2068
  %v2112 = vmul.f32 %v1694, %v2068
  %v2113 = vmul.f32 %v1697, %v2068
  %v2114 = vmul.f32 %v1702, %v2068
  %v2115 = vmul.f32 %v1705, %v2068
  %v2116 = vmul.f32 %v1710, %v2068
  %v2117 = vmul.f32 %v1713, %v2068
  %v2118 = vmul.f32 %v1718, %v2068
  %v2119 = vmul.f32 %v1721, %v2068
  %v2120 = vmul.f32 %v1726, %v2068
  %v2121 = vmul.f32 %v1729, %v2068
  %v2122 = vmul.f32 %v1734, %v2068
  %v2123 = vmul.f32 %v1737, %v2068
  %v2124 = vmul.f32 %v1742, %v2068
  %v2125 = vmul.f32 %v1745, %v2068
  %v2126 = vmul.f32 %v1750, %v2068
  %v2127 = vmul.f32 %v1753, %v2068
  %v2128 = vmul.f32 %v1758, %v2068
  %v2129 = vmul.f32 %v1761, %v2068
  %v2130 = vmul.f32 %v1766, %v2068
  %v2131 = vmul.f32 %v1769, %v2068
  %v2132 = vmul.f32 %v1774, %v2068
  %v2133 = vmul.f32 %v1777, %v2068
  %v2134 = vmul.f32 %v1782, %v2068
  %v2135 = vmul.f32 %v1785, %v2068
  %v2136 = vmul.f32 %v1790, %v2068
  %v2137 = vmul.f32 %v1793, %v2068
  %v2138 = vmul.f32 %v1798, %v2068
  %v2139 = vmul.f32 %v1801, %v2068
  %v2140 = vmul.f32 %v1806, %v2068
  %v2141 = vmul.f32 %v1809, %v2068
  %v2142 = vmul.f32 %v1814, %v2068
  %v2143 = vmul.f32 %v1817, %v2068
  %v2145 = vlaneseq
  %v2146 = vshrl.u32 %v2145, 7
  %v2147 = vsub.s32 0, %v2146
  %v2148 = vrot.slane %v2063, %v2147
  %v2150 = vadd.f32 %v2070, %v2148
  %v2151 = vadd.f32 %v2071, %v2148
  %v2152 = vadd.f32 %v2072, %v2148
  %v2153 = vadd.f32 %v2073, %v2148
  %v2154 = vadd.f32 %v2074, %v2148
  %v2155 = vadd.f32 %v2075, %v2148
  %v2156 = vadd.f32 %v2076, %v2148
  %v2157 = vadd.f32 %v2077, %v2148
  %v2158 = vadd.f32 %v2078, %v2148
  %v2159 = vadd.f32 %v2079, %v2148
  %v2160 = vadd.f32 %v2080, %v2148
  %v2161 = vadd.f32 %v2081, %v2148
  %v2162 = vadd.f32 %v2082, %v2148
  %v2163 = vadd.f32 %v2083, %v2148
  %v2164 = vadd.f32 %v2084, %v2148
  %v2165 = vadd.f32 %v2085, %v2148
  %v2166 = vadd.f32 %v2086, %v2148
  %v2167 = vadd.f32 %v2087, %v2148
  %v2168 = vadd.f32 %v2088, %v2148
  %v2169 = vadd.f32 %v2089, %v2148
  %v2170 = vadd.f32 %v2090, %v2148
  %v2171 = vadd.f32 %v2091, %v2148
  %v2172 = vadd.f32 %v2092, %v2148
  %v2173 = vadd.f32 %v2093, %v2148
  %v2174 = vadd.f32 %v2094, %v2148
  %v2175 = vadd.f32 %v2095, %v2148
  %v2176 = vadd.f32 %v2096, %v2148
  %v2177 = vadd.f32 %v2097, %v2148
  %v2178 = vadd.f32 %v2098, %v2148
  %v2179 = vadd.f32 %v2099, %v2148
  %v2180 = vadd.f32 %v2100, %v2148
  %v2181 = vadd.f32 %v2101, %v2148
  %v2182 = vadd.f32 %v2102, %v2148
  %v2183 = vadd.f32 %v2103, %v2148
  %v2184 = vadd.f32 %v2104, %v2148
  %v2185 = vadd.f32 %v2105, %v2148
  %v2186 = vadd.f32 %v2106, %v2148
  %v2187 = vadd.f32 %v2107, %v2148
  %v2188 = vadd.f32 %v2108, %v2148
  %v2189 = vadd.f32 %v2109, %v2148
  %v2190 = vadd.f32 %v2110, %v2148
  %v2191 = vadd.f32 %v2111, %v2148
  %v2192 = vadd.f32 %v2112, %v2148
  %v2193 = vadd.f32 %v2113, %v2148
  %v2194 = vadd.f32 %v2114, %v2148
  %v2195 = vadd.f32 %v2115, %v2148
  %v2196 = vadd.f32 %v2116, %v2148
  %v2197 = vadd.f32 %v2117, %v2148
  %v2198 = vadd.f32 %v2118, %v2148
  %v2199 = vadd.f32 %v2119, %v2148
  %v2200 = vadd.f32 %v2120, %v2148
  %v2201 = vadd.f32 %v2121, %v2148
  %v2202 = vadd.f32 %v2122, %v2148
  %v2203 = vadd.f32 %v2123, %v2148
  %v2204 = vadd.f32 %v2124, %v2148
  %v2205 = vadd.f32 %v2125, %v2148
  %v2206 = vadd.f32 %v2126, %v2148
  %v2207 = vadd.f32 %v2127, %v2148
  %v2208 = vadd.f32 %v2128, %v2148
  %v2209 = vadd.f32 %v2129, %v2148
  %v2210 = vadd.f32 %v2130, %v2148
  %v2211 = vadd.f32 %v2131, %v2148
  %v2212 = vadd.f32 %v2132, %v2148
  %v2213 = vadd.f32 %v2133, %v2148
  %v2214 = vadd.f32 %v2134, %v2148
  %v2215 = vadd.f32 %v2135, %v2148
  %v2216 = vadd.f32 %v2136, %v2148
  %v2217 = vadd.f32 %v2137, %v2148
  %v2218 = vadd.f32 %v2138, %v2148
  %v2219 = vadd.f32 %v2139, %v2148
  %v2220 = vadd.f32 %v2140, %v2148
  %v2221 = vadd.f32 %v2141, %v2148
  %v2222 = vadd.f32 %v2142, %v2148
  %v2223 = vadd.f32 %v2143, %v2148
  %v2224 = vmax.f32 %v2150, 0.0
  %v2225 = vmax.f32 %v2151, 0.0
  %v2226 = vmax.f32 %v2152, 0.0
  %v2227 = vmax.f32 %v2153, 0.0
  %v2228 = vmax.f32 %v2154, 0.0
  %v2229 = vmax.f32 %v2155, 0.0
  %v2230 = vmax.f32 %v2156, 0.0
  %v2231 = vmax.f32 %v2157, 0.0
  %v2232 = vmax.f32 %v2158, 0.0
  %v2233 = vmax.f32 %v2159, 0.0
  %v2234 = vmax.f32 %v2160, 0.0
  %v2235 = vmax.f32 %v2161, 0.0
  %v2236 = vmax.f32 %v2162, 0.0
  %v2237 = vmax.f32 %v2163, 0.0
  %v2238 = vmax.f32 %v2164, 0.0
  %v2239 = vmax.f32 %v2165, 0.0
  %v2240 = vmax.f32 %v2166, 0.0
  %v2241 = vmax.f32 %v2167, 0.0
  %v2242 = vmax.f32 %v2168, 0.0
  %v2243 = vmax.f32 %v2169, 0.0
  %v2244 = vmax.f32 %v2170, 0.0
  %v2245 = vmax.f32 %v2171, 0.0
  %v2246 = vmax.f32 %v2172, 0.0
  %v2247 = vmax.f32 %v2173, 0.0
  %v2248 = vmax.f32 %v2174, 0.0
  %v2249 = vmax.f32 %v2175, 0.0
  %v2250 = vmax.f32 %v2176, 0.0
  %v2251 = vmax.f32 %v2177, 0.0
  %v2252 = vmax.f32 %v2178, 0.0
  %v2253 = vmax.f32 %v2179, 0.0
  %v2254 = vmax.f32 %v2180, 0.0
  %v2255 = vmax.f32 %v2181, 0.0
  %v2256 = vmax.f32 %v2182, 0.0
  %v2257 = vmax.f32 %v2183, 0.0
  %v2258 = vmax.f32 %v2184, 0.0
  %v2259 = vmax.f32 %v2185, 0.0
  %v2260 = vmax.f32 %v2186, 0.0
  %v2261 = vmax.f32 %v2187, 0.0
  %v2262 = vmax.f32 %v2188, 0.0
  %v2263 = vmax.f32 %v2189, 0.0
  %v2264 = vmax.f32 %v2190, 0.0
  %v2265 = vmax.f32 %v2191, 0.0
  %v2266 = vmax.f32 %v2192, 0.0
  %v2267 = vmax.f32 %v2193, 0.0
  %v2268 = vmax.f32 %v2194, 0.0
  %v2269 = vmax.f32 %v2195, 0.0
  %v2270 = vmax.f32 %v2196, 0.0
  %v2271 = vmax.f32 %v2197, 0.0
  %v2272 = vmax.f32 %v2198, 0.0
  %v2273 = vmax.f32 %v2199, 0.0
  %v2274 = vmax.f32 %v2200, 0.0
  %v2275 = vmax.f32 %v2201, 0.0
  %v2276 = vmax.f32 %v2202, 0.0
  %v2277 = vmax.f32 %v2203, 0.0
  %v2278 = vmax.f32 %v2204, 0.0
  %v2279 = vmax.f32 %v2205, 0.0
  %v2280 = vmax.f32 %v2206, 0.0
  %v2281 = vmax.f32 %v2207, 0.0
  %v2282 = vmax.f32 %v2208, 0.0
  %v2283 = vmax.f32 %v2209, 0.0
  %v2284 = vmax.f32 %v2210, 0.0
  %v2285 = vmax.f32 %v2211, 0.0
  %v2286 = vmax.f32 %v2212, 0.0
  %v2287 = vmax.f32 %v2213, 0.0
  %v2288 = vmax.f32 %v2214, 0.0
  %v2289 = vmax.f32 %v2215, 0.0
  %v2290 = vmax.f32 %v2216, 0.0
  %v2291 = vmax.f32 %v2217, 0.0
  %v2292 = vmax.f32 %v2218, 0.0
  %v2293 = vmax.f32 %v2219, 0.0
  %v2294 = vmax.f32 %v2220, 0.0
  %v2295 = vmax.f32 %v2221, 0.0
  %v2296 = vmax.f32 %v2222, 0.0
  %v2297 = vmax.f32 %v2223, 0.0
  %v2298 = vpack.c.bf16 %v2225, %v2224
  %v2299 = vpack.c.bf16 %v2227, %v2226
  %v2300 = vpack.c.bf16 %v2229, %v2228
  %v2301 = vpack.c.bf16 %v2231, %v2230
  %v2302 = vpack.c.bf16 %v2233, %v2232
  %v2303 = vpack.c.bf16 %v2235, %v2234
  %v2304 = vpack.c.bf16 %v2237, %v2236
  %v2305 = vpack.c.bf16 %v2239, %v2238
  %v2306 = vpack.c.bf16 %v2241, %v2240
  %v2307 = vpack.c.bf16 %v2243, %v2242
  %v2308 = vpack.c.bf16 %v2245, %v2244
  %v2309 = vpack.c.bf16 %v2247, %v2246
  %v2310 = vpack.c.bf16 %v2249, %v2248
  %v2311 = vpack.c.bf16 %v2251, %v2250
  %v2312 = vpack.c.bf16 %v2253, %v2252
  %v2313 = vpack.c.bf16 %v2255, %v2254
  %v2314 = vpack.c.bf16 %v2257, %v2256
  %v2315 = vpack.c.bf16 %v2259, %v2258
  %v2316 = vpack.c.bf16 %v2261, %v2260
  %v2317 = vpack.c.bf16 %v2263, %v2262
  %v2318 = vpack.c.bf16 %v2265, %v2264
  %v2319 = vpack.c.bf16 %v2267, %v2266
  %v2320 = vpack.c.bf16 %v2269, %v2268
  %v2321 = vpack.c.bf16 %v2271, %v2270
  %v2322 = vpack.c.bf16 %v2273, %v2272
  %v2323 = vpack.c.bf16 %v2275, %v2274
  %v2324 = vpack.c.bf16 %v2277, %v2276
  %v2325 = vpack.c.bf16 %v2279, %v2278
  %v2326 = vpack.c.bf16 %v2281, %v2280
  %v2327 = vpack.c.bf16 %v2283, %v2282
  %v2328 = vpack.c.bf16 %v2285, %v2284
  %v2329 = vpack.c.bf16 %v2287, %v2286
  %v2330 = vpack.c.bf16 %v2289, %v2288
  %v2331 = vpack.c.bf16 %v2291, %v2290
  %v2332 = vpack.c.bf16 %v2293, %v2292
  %v2333 = vpack.c.bf16 %v2295, %v2294
  %v2334 = vpack.c.bf16 %v2297, %v2296
  %v2372 = vunpack.c.l.b16 %v2298
  %v2373 = vunpack.c.h.b16 %v2298
  %v2374 = vunpack.c.l.b16 %v2299
  %v2375 = vunpack.c.h.b16 %v2299
  %v2376 = vunpack.c.l.b16 %v2300
  %v2377 = vunpack.c.h.b16 %v2300
  %v2378 = vunpack.c.l.b16 %v2301
  %v2379 = vunpack.c.h.b16 %v2301
  %v2380 = vunpack.c.l.b16 %v2302
  %v2381 = vunpack.c.h.b16 %v2302
  %v2382 = vunpack.c.l.b16 %v2303
  %v2383 = vunpack.c.h.b16 %v2303
  %v2384 = vunpack.c.l.b16 %v2304
  %v2385 = vunpack.c.h.b16 %v2304
  %v2386 = vunpack.c.l.b16 %v2305
  %v2387 = vunpack.c.h.b16 %v2305
  %v2388 = vunpack.c.l.b16 %v2306
  %v2389 = vunpack.c.h.b16 %v2306
  %v2390 = vunpack.c.l.b16 %v2307
  %v2391 = vunpack.c.h.b16 %v2307
  %v2392 = vunpack.c.l.b16 %v2308
  %v2393 = vunpack.c.h.b16 %v2308
  %v2394 = vunpack.c.l.b16 %v2309
  %v2395 = vunpack.c.h.b16 %v2309
  %v2396 = vunpack.c.l.b16 %v2310
  %v2397 = vunpack.c.h.b16 %v2310
  %v2398 = vunpack.c.l.b16 %v2311
  %v2399 = vunpack.c.h.b16 %v2311
  %v2400 = vunpack.c.l.b16 %v2312
  %v2401 = vunpack.c.h.b16 %v2312
  %v2402 = vunpack.c.l.b16 %v2313
  %v2403 = vunpack.c.h.b16 %v2313
  %v2404 = vunpack.c.l.b16 %v2314
  %v2405 = vunpack.c.h.b16 %v2314
  %v2406 = vunpack.c.l.b16 %v2315
  %v2407 = vunpack.c.h.b16 %v2315
  %v2408 = vunpack.c.l.b16 %v2316
  %v2409 = vunpack.c.h.b16 %v2316
  %v2410 = vunpack.c.l.b16 %v2317
  %v2411 = vunpack.c.h.b16 %v2317
  %v2412 = vunpack.c.l.b16 %v2318
  %v2413 = vunpack.c.h.b16 %v2318
  %v2414 = vunpack.c.l.b16 %v2319
  %v2415 = vunpack.c.h.b16 %v2319
  %v2416 = vunpack.c.l.b16 %v2320
  %v2417 = vunpack.c.h.b16 %v2320
  %v2418 = vunpack.c.l.b16 %v2321
  %v2419 = vunpack.c.h.b16 %v2321
  %v2420 = vunpack.c.l.b16 %v2322
  %v2421 = vunpack.c.h.b16 %v2322
  %v2422 = vunpack.c.l.b16 %v2323
  %v2423 = vunpack.c.h.b16 %v2323
  %v2424 = vunpack.c.l.b16 %v2324
  %v2425 = vunpack.c.h.b16 %v2324
  %v2426 = vunpack.c.l.b16 %v2325
  %v2427 = vunpack.c.h.b16 %v2325
  %v2428 = vunpack.c.l.b16 %v2326
  %v2429 = vunpack.c.h.b16 %v2326
  %v2430 = vunpack.c.l.b16 %v2327
  %v2431 = vunpack.c.h.b16 %v2327
  %v2432 = vunpack.c.l.b16 %v2328
  %v2433 = vunpack.c.h.b16 %v2328
  %v2434 = vunpack.c.l.b16 %v2329
  %v2435 = vunpack.c.h.b16 %v2329
  %v2436 = vunpack.c.l.b16 %v2330
  %v2437 = vunpack.c.h.b16 %v2330
  %v2438 = vunpack.c.l.b16 %v2331
  %v2439 = vunpack.c.h.b16 %v2331
  %v2440 = vunpack.c.l.b16 %v2332
  %v2441 = vunpack.c.h.b16 %v2332
  %v2442 = vunpack.c.l.b16 %v2333
  %v2443 = vunpack.c.h.b16 %v2333
  %v2444 = vunpack.c.l.b16 %v2334
  %v2445 = vunpack.c.h.b16 %v2334
  %v2446 = vpack.c.b16 %v2372, %v2372
  %v2447 = vpack.c.b16 %v2373, %v2373
  %v2448 = vpack.c.b16 %v2374, %v2374
  %v2449 = vpack.c.b16 %v2375, %v2375
  %v2450 = vpack.c.b16 %v2376, %v2376
  %v2451 = vpack.c.b16 %v2377, %v2377
  %v2452 = vpack.c.b16 %v2378, %v2378
  %v2453 = vpack.c.b16 %v2379, %v2379
  %v2454 = vpack.c.b16 %v2380, %v2380
  %v2455 = vpack.c.b16 %v2381, %v2381
  %v2456 = vpack.c.b16 %v2382, %v2382
  %v2457 = vpack.c.b16 %v2383, %v2383
  %v2458 = vpack.c.b16 %v2384, %v2384
  %v2459 = vpack.c.b16 %v2385, %v2385
  %v2460 = vpack.c.b16 %v2386, %v2386
  %v2461 = vpack.c.b16 %v2387, %v2387
  %v2462 = vpack.c.b16 %v2388, %v2388
  %v2463 = vpack.c.b16 %v2389, %v2389
  %v2464 = vpack.c.b16 %v2390, %v2390
  %v2465 = vpack.c.b16 %v2391, %v2391
  %v2466 = vpack.c.b16 %v2392, %v2392
  %v2467 = vpack.c.b16 %v2393, %v2393
  %v2468 = vpack.c.b16 %v2394, %v2394
  %v2469 = vpack.c.b16 %v2395, %v2395
  %v2470 = vpack.c.b16 %v2396, %v2396
  %v2471 = vpack.c.b16 %v2397, %v2397
  %v2472 = vpack.c.b16 %v2398, %v2398
  %v2473 = vpack.c.b16 %v2399, %v2399
  %v2474 = vpack.c.b16 %v2400, %v2400
  %v2475 = vpack.c.b16 %v2401, %v2401
  %v2476 = vpack.c.b16 %v2402, %v2402
  %v2477 = vpack.c.b16 %v2403, %v2403
  %v2478 = vpack.c.b16 %v2404, %v2404
  %v2479 = vpack.c.b16 %v2405, %v2405
  %v2480 = vpack.c.b16 %v2406, %v2406
  %v2481 = vpack.c.b16 %v2407, %v2407
  %v2482 = vpack.c.b16 %v2408, %v2408
  %v2483 = vpack.c.b16 %v2409, %v2409
  %v2484 = vpack.c.b16 %v2410, %v2410
  %v2485 = vpack.c.b16 %v2411, %v2411
  %v2486 = vpack.c.b16 %v2412, %v2412
  %v2487 = vpack.c.b16 %v2413, %v2413
  %v2488 = vpack.c.b16 %v2414, %v2414
  %v2489 = vpack.c.b16 %v2415, %v2415
  %v2490 = vpack.c.b16 %v2416, %v2416
  %v2491 = vpack.c.b16 %v2417, %v2417
  %v2492 = vpack.c.b16 %v2418, %v2418
  %v2493 = vpack.c.b16 %v2419, %v2419
  %v2494 = vpack.c.b16 %v2420, %v2420
  %v2495 = vpack.c.b16 %v2421, %v2421
  %v2496 = vpack.c.b16 %v2422, %v2422
  %v2497 = vpack.c.b16 %v2423, %v2423
  %v2498 = vpack.c.b16 %v2424, %v2424
  %v2499 = vpack.c.b16 %v2425, %v2425
  %v2500 = vpack.c.b16 %v2426, %v2426
  %v2501 = vpack.c.b16 %v2427, %v2427
  %v2502 = vpack.c.b16 %v2428, %v2428
  %v2503 = vpack.c.b16 %v2429, %v2429
  %v2504 = vpack.c.b16 %v2430, %v2430
  %v2505 = vpack.c.b16 %v2431, %v2431
  %v2506 = vpack.c.b16 %v2432, %v2432
  %v2507 = vpack.c.b16 %v2433, %v2433
  %v2508 = vpack.c.b16 %v2434, %v2434
  %v2509 = vpack.c.b16 %v2435, %v2435
  %v2510 = vpack.c.b16 %v2436, %v2436
  %v2511 = vpack.c.b16 %v2437, %v2437
  %v2512 = vpack.c.b16 %v2438, %v2438
  %v2513 = vpack.c.b16 %v2439, %v2439
  %v2514 = vpack.c.b16 %v2440, %v2440
  %v2515 = vpack.c.b16 %v2441, %v2441
  %v2516 = vpack.c.b16 %v2442, %v2442
  %v2517 = vpack.c.b16 %v2443, %v2443
  %v2518 = vpack.c.b16 %v2444, %v2444
  %v2519 = vpack.c.b16 %v2445, %v2445
  %2594 = vst [vmem:[%s4] sm:$0xf] %v2446
  %2595 = vst [vmem:[%s4 + $0x4] sm:$0xf] %v2447
  %2596 = vst [vmem:[%s4 + $0x8] sm:$0xf] %v2448
  %2597 = vst [vmem:[%s4 + $0xc] sm:$0xf] %v2449
  %2598 = vst [vmem:[%s4 + $0x10] sm:$0xf] %v2450
  %2599 = vst [vmem:[%s4 + $0x14] sm:$0xf] %v2451
  %2600 = vst [vmem:[%s4 + $0x18] sm:$0xf] %v2452
  %2601 = vst [vmem:[%s4 + $0x1c] sm:$0xf] %v2453
  %2602 = vst [vmem:[%s4 + $0x20] sm:$0xf] %v2454
  %2603 = vst [vmem:[%s4 + $0x24] sm:$0xf] %v2455
  %2604 = vst [vmem:[%s4 + $0x28] sm:$0xf] %v2456
  %2605 = vst [vmem:[%s4 + $0x2c] sm:$0xf] %v2457
  %2606 = vst [vmem:[%s4 + $0x30] sm:$0xf] %v2458
  %2607 = vst [vmem:[%s4 + $0x34] sm:$0xf] %v2459
  %2608 = vst [vmem:[%s4 + $0x38] sm:$0xf] %v2460
  %2609 = vst [vmem:[%s4 + $0x3c] sm:$0xf] %v2461
  %2610 = vst [vmem:[%s4 + $0x40] sm:$0xf] %v2462
  %2611 = vst [vmem:[%s4 + $0x44] sm:$0xf] %v2463
  %2612 = vst [vmem:[%s4 + $0x48] sm:$0xf] %v2464
  %2613 = vst [vmem:[%s4 + $0x4c] sm:$0xf] %v2465
  %2614 = vst [vmem:[%s4 + $0x50] sm:$0xf] %v2466
  %2615 = vst [vmem:[%s4 + $0x54] sm:$0xf] %v2467
  %2616 = vst [vmem:[%s4 + $0x58] sm:$0xf] %v2468
  %2617 = vst [vmem:[%s4 + $0x5c] sm:$0xf] %v2469
  %2618 = vst [vmem:[%s4 + $0x60] sm:$0xf] %v2470
  %2619 = vst [vmem:[%s4 + $0x64] sm:$0xf] %v2471
  %2620 = vst [vmem:[%s4 + $0x68] sm:$0xf] %v2472
  %2621 = vst [vmem:[%s4 + $0x6c] sm:$0xf] %v2473
  %2622 = vst [vmem:[%s4 + $0x70] sm:$0xf] %v2474
  %2623 = vst [vmem:[%s4 + $0x74] sm:$0xf] %v2475
  %2624 = vst [vmem:[%s4 + $0x78] sm:$0xf] %v2476
  %2625 = vst [vmem:[%s4 + $0x7c] sm:$0xf] %v2477
  %2626 = vst [vmem:[%s4 + $0x80] sm:$0xf] %v2478
  %2627 = vst [vmem:[%s4 + $0x84] sm:$0xf] %v2479
  %2628 = vst [vmem:[%s4 + $0x88] sm:$0xf] %v2480
  %2629 = vst [vmem:[%s4 + $0x8c] sm:$0xf] %v2481
  %2630 = vst [vmem:[%s4 + $0x90] sm:$0xf] %v2482
  %2631 = vst [vmem:[%s4 + $0x94] sm:$0xf] %v2483
  %2632 = vst [vmem:[%s4 + $0x98] sm:$0xf] %v2484
  %2633 = vst [vmem:[%s4 + $0x9c] sm:$0xf] %v2485
  %2634 = vst [vmem:[%s4 + $0xa0] sm:$0xf] %v2486
  %2635 = vst [vmem:[%s4 + $0xa4] sm:$0xf] %v2487
  %2636 = vst [vmem:[%s4 + $0xa8] sm:$0xf] %v2488
  %2637 = vst [vmem:[%s4 + $0xac] sm:$0xf] %v2489
  %2638 = vst [vmem:[%s4 + $0xb0] sm:$0xf] %v2490
  %2639 = vst [vmem:[%s4 + $0xb4] sm:$0xf] %v2491
  %2640 = vst [vmem:[%s4 + $0xb8] sm:$0xf] %v2492
  %2641 = vst [vmem:[%s4 + $0xbc] sm:$0xf] %v2493
  %2642 = vst [vmem:[%s4 + $0xc0] sm:$0xf] %v2494
  %2643 = vst [vmem:[%s4 + $0xc4] sm:$0xf] %v2495
  %2644 = vst [vmem:[%s4 + $0xc8] sm:$0xf] %v2496
  %2645 = vst [vmem:[%s4 + $0xcc] sm:$0xf] %v2497
  %2646 = vst [vmem:[%s4 + $0xd0] sm:$0xf] %v2498
  %2647 = vst [vmem:[%s4 + $0xd4] sm:$0xf] %v2499
  %2648 = vst [vmem:[%s4 + $0xd8] sm:$0xf] %v2500
  %2649 = vst [vmem:[%s4 + $0xdc] sm:$0xf] %v2501
  %2650 = vst [vmem:[%s4 + $0xe0] sm:$0xf] %v2502
  %2651 = vst [vmem:[%s4 + $0xe4] sm:$0xf] %v2503
  %2652 = vst [vmem:[%s4 + $0xe8] sm:$0xf] %v2504
  %2653 = vst [vmem:[%s4 + $0xec] sm:$0xf] %v2505
  %2654 = vst [vmem:[%s4 + $0xf0] sm:$0xf] %v2506
  %2655 = vst [vmem:[%s4 + $0xf4] sm:$0xf] %v2507
  %2656 = vst [vmem:[%s4 + $0xf8] sm:$0xf] %v2508
  %2657 = vst [vmem:[%s4 + $0xfc] sm:$0xf] %v2509
  %2658 = vst [vmem:[%s4 + $0x100] sm:$0xf] %v2510
  %2659 = vst [vmem:[%s4 + $0x104] sm:$0xf] %v2511
  %2660 = vst [vmem:[%s4 + $0x108] sm:$0xf] %v2512
  %2661 = vst [vmem:[%s4 + $0x10c] sm:$0xf] %v2513
  %2662 = vst [vmem:[%s4 + $0x110] sm:$0xf] %v2514
  %2663 = vst [vmem:[%s4 + $0x114] sm:$0xf] %v2515
  %2664 = vst [vmem:[%s4 + $0x118] sm:$0xf] %v2516
  %2665 = vst [vmem:[%s4 + $0x11c] sm:$0xf] %v2517
  %2666 = vst [vmem:[%s4 + $0x120] sm:$0xf] %v2518
  %2667 = vst [vmem:[%s4 + $0x124] sm:$0xf] %v2519
  // Predicated region
  $region18: #{policy_forward.5} parent=0 // pred_check
    _
  $region19: #{policy_forward.5} parent=0 // pred_check_branch
    %2669 = sbr.rel (0) target = $region21
  $region20: #{policy_forward.5} parent=0 // pred_region
    _
  $region21: #{policy_forward.5} parent=0 // pred_fallthru
    _
  // Predicated region
  $region22: #{policy_forward.5} parent=0 // pred_check
    _
  $region23: #{policy_forward.5} parent=0 // pred_check_branch
    %2671 = sbr.rel (0) target = $region25
  $region24: #{policy_forward.5} parent=0 // pred_region
    _
  $region25: #{policy_forward.5} parent=0 // pred_fallthru
    _

// kernel: policy_forward.6
$region0: #{policy_forward.6}
  #allocation0 [shape = 'u32[]', space=smem, size = 0x4, offset = 0x4, fixed_abs, tag = 'smem constant byte address 0x4 - core index']
  #allocation1 [shape = 'u32[144,128]{1,0:T(1,128)}', space=vmem, size = 0x12000, scoped, tag = 'internal scratch']
  %s0 = inlined_call_operand.vmem [shape: bf16[112,896], index: 0, kind: input, shape index: {}]
  %s1 = inlined_call_operand.vmem [shape: bf16[896,128], index: 1, kind: input, shape index: {}]
  %s2 = inlined_call_operand.vmem [shape: f32[1,128], index: 2, kind: input, shape index: {}]
  %s3 = inlined_call_operand.vmem [shape: f32[1,128], index: 3, kind: input, shape index: {}]
  %s4 = inlined_call_operand.vmem [shape: bf16[112,128], index: 4, kind: output, shape index: {}]
  %s5 = sld [smem:[#allocation0]]
  $region26: #{policy_forward.6} parent=0
    _
  %s7 = ssub.s32 1, %s5
  %s8 = scalar_select 0, %s7, %s5
  // Predicated region
  $region2: #{policy_forward.6} parent=0 // pred_check
    _
  $region3: #{policy_forward.6} parent=0 // pred_check_branch
    %10 = sbr.rel (0) target = $region5
  $region4: #{policy_forward.6} parent=0 // pred_region
    _
  $region5: #{policy_forward.6} parent=0 // pred_fallthru
    _
  // Predicated region
  $region6: #{policy_forward.6} parent=0 // pred_check
    _
  $region7: #{policy_forward.6} parent=0 // pred_check_branch
    %12 = sbr.rel (0) target = $region9
  $region8: #{policy_forward.6} parent=0 // pred_region
    _
  $region9: #{policy_forward.6} parent=0 // pred_fallthru
    _
  // Predicated region
  $region10: #{policy_forward.6} parent=0 // pred_check
    _
  $region11: #{policy_forward.6} parent=0 // pred_check_branch
    %14 = sbr.rel (0) target = $region13
  $region12: #{policy_forward.6} parent=0 // pred_region
    _
  $region13: #{policy_forward.6} parent=0 // pred_fallthru
    _
  // Predicated region
  $region14: #{policy_forward.6} parent=0 // pred_check
    _
  $region15: #{policy_forward.6} parent=0 // pred_check_branch
    %16 = sbr.rel (0) target = $region17
  $region16: #{policy_forward.6} parent=0 // pred_region
    _
  $region17: #{policy_forward.6} parent=0 // pred_fallthru
    _
  %v18 = vld [vmem:[%s0] sm:$0xff]
  %v19 = vld [vmem:[%s0 + $0x8] sm:$0xff]
  %v20 = vld [vmem:[%s0 + $0x10] sm:$0xff]
  %v21 = vld [vmem:[%s0 + $0x18] sm:$0xf]
  %v22 = vld [vmem:[%s0 + $0x1c] sm:$0xff]
  %v23 = vld [vmem:[%s0 + $0x24] sm:$0xff]
  %v24 = vld [vmem:[%s0 + $0x2c] sm:$0xff]
  %v25 = vld [vmem:[%s0 + $0x34] sm:$0xf]
  %v26 = vld [vmem:[%s0 + $0x38] sm:$0xff]
  %v27 = vld [vmem:[%s0 + $0x40] sm:$0xff]
  %v28 = vld [vmem:[%s0 + $0x48] sm:$0xff]
  %v29 = vld [vmem:[%s0 + $0x50] sm:$0xf]
  %v30 = vld [vmem:[%s0 + $0x54] sm:$0xff]
  %v31 = vld [vmem:[%s0 + $0x5c] sm:$0xff]
  %v32 = vld [vmem:[%s0 + $0x64] sm:$0xff]
  %v33 = vld [vmem:[%s0 + $0x6c] sm:$0xf]
  %v34 = vld [vmem:[%s0 + $0x70] sm:$0xff]
  %v35 = vld [vmem:[%s0 + $0x78] sm:$0xff]
  %v36 = vld [vmem:[%s0 + $0x80] sm:$0xff]
  %v37 = vld [vmem:[%s0 + $0x88] sm:$0xf]
  %v38 = vld [vmem:[%s0 + $0x8c] sm:$0xff]
  %v39 = vld [vmem:[%s0 + $0x94] sm:$0xff]
  %v40 = vld [vmem:[%s0 + $0x9c] sm:$0xff]
  %v41 = vld [vmem:[%s0 + $0xa4] sm:$0xf]
  %v42 = vld [vmem:[%s0 + $0xa8] sm:$0xff]
  %v43 = vld [vmem:[%s0 + $0xb0] sm:$0xff]
  %v44 = vld [vmem:[%s0 + $0xb8] sm:$0xff]
  %v45 = vld [vmem:[%s0 + $0xc0] sm:$0xf]
  %v46 = vld [vmem:[%s0 + $0xc4] sm:$0xff]
  %v47 = vld [vmem:[%s0 + $0xcc] sm:$0xff]
  %v48 = vld [vmem:[%s0 + $0xd4] sm:$0xff]
  %v49 = vld [vmem:[%s0 + $0xdc] sm:$0xf]
  %v50 = vld [vmem:[%s0 + $0xe0] sm:$0xff]
  %v51 = vld [vmem:[%s0 + $0xe8] sm:$0xff]
  %v52 = vld [vmem:[%s0 + $0xf0] sm:$0xff]
  %v53 = vld [vmem:[%s0 + $0xf8] sm:$0xf]
  %v54 = vld [vmem:[%s0 + $0xfc] sm:$0xff]
  %v55 = vld [vmem:[%s0 + $0x104] sm:$0xff]
  %v56 = vld [vmem:[%s0 + $0x10c] sm:$0xff]
  %v57 = vld [vmem:[%s0 + $0x114] sm:$0xf]
  %v58 = vld [vmem:[%s0 + $0x118] sm:$0xff]
  %v59 = vld [vmem:[%s0 + $0x120] sm:$0xff]
  %v60 = vld [vmem:[%s0 + $0x128] sm:$0xff]
  %v61 = vld [vmem:[%s0 + $0x130] sm:$0xf]
  %v62 = vld [vmem:[%s0 + $0x134] sm:$0xff]
  %v63 = vld [vmem:[%s0 + $0x13c] sm:$0xff]
  %v64 = vld [vmem:[%s0 + $0x144] sm:$0xff]
  %v65 = vld [vmem:[%s0 + $0x14c] sm:$0xf]
  %v66 = vld [vmem:[%s0 + $0x150] sm:$0xff]
  %v67 = vld [vmem:[%s0 + $0x158] sm:$0xff]
  %v68 = vld [vmem:[%s0 + $0x160] sm:$0xff]
  %v69 = vld [vmem:[%s0 + $0x168] sm:$0xf]
  %v70 = vld [vmem:[%s0 + $0x16c] sm:$0xff]
  %v71 = vld [vmem:[%s0 + $0x174] sm:$0xff]
  %v72 = vld [vmem:[%s0 + $0x17c] sm:$0xff]
  %v73 = vld [vmem:[%s0 + $0x184] sm:$0xf]
  %v74 = vld [vmem:[%s1] sm:$0xf]
  %v75 = vld [vmem:[%s1 + $0x4] sm:$0xf]
  %v76 = vld [vmem:[%s1 + $0x8] sm:$0xf]
  %v77 = vld [vmem:[%s1 + $0xc] sm:$0xf]
  %v78 = vld [vmem:[%s1 + $0x10] sm:$0xf]
  %v79 = vld [vmem:[%s1 + $0x14] sm:$0xf]
  %v80 = vld [vmem:[%s1 + $0x18] sm:$0xf]
  %v81 = vld [vmem:[%s1 + $0x1c] sm:$0xf]
  %v82 = vld [vmem:[%s1 + $0x20] sm:$0xf]
  %v83 = vld [vmem:[%s1 + $0x24] sm:$0xf]
  %v84 = vld [vmem:[%s1 + $0x28] sm:$0xf]
  %v85 = vld [vmem:[%s1 + $0x2c] sm:$0xf]
  %v86 = vld [vmem:[%s1 + $0x30] sm:$0xf]
  %v87 = vld [vmem:[%s1 + $0x34] sm:$0xf]
  %v88 = vld [vmem:[%s1 + $0x38] sm:$0xf]
  %v89 = vld [vmem:[%s1 + $0x3c] sm:$0xf]
  %v90 = vld [vmem:[%s1 + $0x40] sm:$0xf]
  %v91 = vld [vmem:[%s1 + $0x44] sm:$0xf]
  %v92 = vld [vmem:[%s1 + $0x48] sm:$0xf]
  %v93 = vld [vmem:[%s1 + $0x4c] sm:$0xf]
  %v94 = vld [vmem:[%s1 + $0x50] sm:$0xf]
  %v95 = vld [vmem:[%s1 + $0x54] sm:$0xf]
  %v96 = vld [vmem:[%s1 + $0x58] sm:$0xf]
  %v97 = vld [vmem:[%s1 + $0x5c] sm:$0xf]
  %v98 = vld [vmem:[%s1 + $0x60] sm:$0xf]
  %v99 = vld [vmem:[%s1 + $0x64] sm:$0xf]
  %v100 = vld [vmem:[%s1 + $0x68] sm:$0xf]
  %v101 = vld [vmem:[%s1 + $0x6c] sm:$0xf]
  %v102 = vld [vmem:[%s1 + $0x70] sm:$0xf]
  %v103 = vld [vmem:[%s1 + $0x74] sm:$0xf]
  %v104 = vld [vmem:[%s1 + $0x78] sm:$0xf]
  %v105 = vld [vmem:[%s1 + $0x7c] sm:$0xf]
  %v106 = vld [vmem:[%s1 + $0x80] sm:$0xf]
  %v107 = vld [vmem:[%s1 + $0x84] sm:$0xf]
  %v108 = vld [vmem:[%s1 + $0x88] sm:$0xf]
  %v109 = vld [vmem:[%s1 + $0x8c] sm:$0xf]
  %v110 = vld [vmem:[%s1 + $0x90] sm:$0xf]
  %v111 = vld [vmem:[%s1 + $0x94] sm:$0xf]
  %v112 = vld [vmem:[%s1 + $0x98] sm:$0xf]
  %v113 = vld [vmem:[%s1 + $0x9c] sm:$0xf]
  %v114 = vld [vmem:[%s1 + $0xa0] sm:$0xf]
  %v115 = vld [vmem:[%s1 + $0xa4] sm:$0xf]
  %v116 = vld [vmem:[%s1 + $0xa8] sm:$0xf]
  %v117 = vld [vmem:[%s1 + $0xac] sm:$0xf]
  %v118 = vld [vmem:[%s1 + $0xb0] sm:$0xf]
  %v119 = vld [vmem:[%s1 + $0xb4] sm:$0xf]
  %v120 = vld [vmem:[%s1 + $0xb8] sm:$0xf]
  %v121 = vld [vmem:[%s1 + $0xbc] sm:$0xf]
  %v122 = vld [vmem:[%s1 + $0xc0] sm:$0xf]
  %v123 = vld [vmem:[%s1 + $0xc4] sm:$0xf]
  %v124 = vld [vmem:[%s1 + $0xc8] sm:$0xf]
  %v125 = vld [vmem:[%s1 + $0xcc] sm:$0xf]
  %v126 = vld [vmem:[%s1 + $0xd0] sm:$0xf]
  %v127 = vld [vmem:[%s1 + $0xd4] sm:$0xf]
  %v128 = vld [vmem:[%s1 + $0xd8] sm:$0xf]
  %v129 = vld [vmem:[%s1 + $0xdc] sm:$0xf]
  %v130 = vld [vmem:[%s1 + $0xe0] sm:$0xf]
  %v131 = vld [vmem:[%s1 + $0xe4] sm:$0xf]
  %v132 = vld [vmem:[%s1 + $0xe8] sm:$0xf]
  %v133 = vld [vmem:[%s1 + $0xec] sm:$0xf]
  %v134 = vld [vmem:[%s1 + $0xf0] sm:$0xf]
  %v135 = vld [vmem:[%s1 + $0xf4] sm:$0xf]
  %v136 = vld [vmem:[%s1 + $0xf8] sm:$0xf]
  %v137 = vld [vmem:[%s1 + $0xfc] sm:$0xf]
  %v138 = vld [vmem:[%s1 + $0x100] sm:$0xf]
  %v139 = vld [vmem:[%s1 + $0x104] sm:$0xf]
  %v140 = vld [vmem:[%s1 + $0x108] sm:$0xf]
  %v141 = vld [vmem:[%s1 + $0x10c] sm:$0xf]
  %v142 = vld [vmem:[%s1 + $0x110] sm:$0xf]
  %v143 = vld [vmem:[%s1 + $0x114] sm:$0xf]
  %v144 = vld [vmem:[%s1 + $0x118] sm:$0xf]
  %v145 = vld [vmem:[%s1 + $0x11c] sm:$0xf]
  %v146 = vld [vmem:[%s1 + $0x120] sm:$0xf]
  %v147 = vld [vmem:[%s1 + $0x124] sm:$0xf]
  %v148 = vld [vmem:[%s1 + $0x128] sm:$0xf]
  %v149 = vld [vmem:[%s1 + $0x12c] sm:$0xf]
  %v150 = vld [vmem:[%s1 + $0x130] sm:$0xf]
  %v151 = vld [vmem:[%s1 + $0x134] sm:$0xf]
  %v152 = vld [vmem:[%s1 + $0x138] sm:$0xf]
  %v153 = vld [vmem:[%s1 + $0x13c] sm:$0xf]
  %v154 = vld [vmem:[%s1 + $0x140] sm:$0xf]
  %v155 = vld [vmem:[%s1 + $0x144] sm:$0xf]
  %v156 = vld [vmem:[%s1 + $0x148] sm:$0xf]
  %v157 = vld [vmem:[%s1 + $0x14c] sm:$0xf]
  %v158 = vld [vmem:[%s1 + $0x150] sm:$0xf]
  %v159 = vld [vmem:[%s1 + $0x154] sm:$0xf]
  %v160 = vld [vmem:[%s1 + $0x158] sm:$0xf]
  %v161 = vld [vmem:[%s1 + $0x15c] sm:$0xf]
  %v162 = vld [vmem:[%s1 + $0x160] sm:$0xf]
  %v163 = vld [vmem:[%s1 + $0x164] sm:$0xf]
  %v164 = vld [vmem:[%s1 + $0x168] sm:$0xf]
  %v165 = vld [vmem:[%s1 + $0x16c] sm:$0xf]
  %v166 = vld [vmem:[%s1 + $0x170] sm:$0xf]
  %v167 = vld [vmem:[%s1 + $0x174] sm:$0xf]
  %v168 = vld [vmem:[%s1 + $0x178] sm:$0xf]
  %v169 = vld [vmem:[%s1 + $0x17c] sm:$0xf]
  %v170 = vld [vmem:[%s1 + $0x180] sm:$0xf]
  %v171 = vld [vmem:[%s1 + $0x184] sm:$0xf]
  %v172 = vld [vmem:[%s1 + $0x188] sm:$0xf]
  %v173 = vld [vmem:[%s1 + $0x18c] sm:$0xf]
  %v174 = vld [vmem:[%s1 + $0x190] sm:$0xf]
  %v175 = vld [vmem:[%s1 + $0x194] sm:$0xf]
  %v176 = vld [vmem:[%s1 + $0x198] sm:$0xf]
  %v177 = vld [vmem:[%s1 + $0x19c] sm:$0xf]
  %v178 = vld [vmem:[%s1 + $0x1a0] sm:$0xf]
  %v179 = vld [vmem:[%s1 + $0x1a4] sm:$0xf]
  %v180 = vld [vmem:[%s1 + $0x1a8] sm:$0xf]
  %v181 = vld [vmem:[%s1 + $0x1ac] sm:$0xf]
  %v182 = vld [vmem:[%s1 + $0x1b0] sm:$0xf]
  %v183 = vld [vmem:[%s1 + $0x1b4] sm:$0xf]
  %v184 = vld [vmem:[%s1 + $0x1b8] sm:$0xf]
  %v185 = vld [vmem:[%s1 + $0x1bc] sm:$0xf]
  %v242 = vunpack.c.l.b16 %v18
  %v243 = vunpack.c.h.b16 %v18
  %v244 = vunpack.c.l.b16 %v19
  %v245 = vunpack.c.h.b16 %v19
  %v246 = vunpack.c.l.b16 %v20
  %v247 = vunpack.c.h.b16 %v20
  %v248 = vunpack.c.l.b16 %v21
  %v249 = vunpack.c.l.b16 %v22
  %v250 = vunpack.c.h.b16 %v22
  %v251 = vunpack.c.l.b16 %v23
  %v252 = vunpack.c.h.b16 %v23
  %v253 = vunpack.c.l.b16 %v24
  %v254 = vunpack.c.h.b16 %v24
  %v255 = vunpack.c.l.b16 %v25
  %v256 = vunpack.c.l.b16 %v26
  %v257 = vunpack.c.h.b16 %v26
  %v258 = vunpack.c.l.b16 %v27
  %v259 = vunpack.c.h.b16 %v27
  %v260 = vunpack.c.l.b16 %v28
  %v261 = vunpack.c.h.b16 %v28
  %v262 = vunpack.c.l.b16 %v29
  %v263 = vunpack.c.l.b16 %v30
  %v264 = vunpack.c.h.b16 %v30
  %v265 = vunpack.c.l.b16 %v31
  %v266 = vunpack.c.h.b16 %v31
  %v267 = vunpack.c.l.b16 %v32
  %v268 = vunpack.c.h.b16 %v32
  %v269 = vunpack.c.l.b16 %v33
  %v270 = vunpack.c.l.b16 %v34
  %v271 = vunpack.c.h.b16 %v34
  %v272 = vunpack.c.l.b16 %v35
  %v273 = vunpack.c.h.b16 %v35
  %v274 = vunpack.c.l.b16 %v36
  %v275 = vunpack.c.h.b16 %v36
  %v276 = vunpack.c.l.b16 %v37
  %v277 = vunpack.c.l.b16 %v38
  %v278 = vunpack.c.h.b16 %v38
  %v279 = vunpack.c.l.b16 %v39
  %v280 = vunpack.c.h.b16 %v39
  %v281 = vunpack.c.l.b16 %v40
  %v282 = vunpack.c.h.b16 %v40
  %v283 = vunpack.c.l.b16 %v41
  %v284 = vunpack.c.l.b16 %v42
  %v285 = vunpack.c.h.b16 %v42
  %v286 = vunpack.c.l.b16 %v43
  %v287 = vunpack.c.h.b16 %v43
  %v288 = vunpack.c.l.b16 %v44
  %v289 = vunpack.c.h.b16 %v44
  %v290 = vunpack.c.l.b16 %v45
  %v291 = vunpack.c.l.b16 %v46
  %v292 = vunpack.c.h.b16 %v46
  %v293 = vunpack.c.l.b16 %v47
  %v294 = vunpack.c.h.b16 %v47
  %v295 = vunpack.c.l.b16 %v48
  %v296 = vunpack.c.h.b16 %v48
  %v297 = vunpack.c.l.b16 %v49
  %v298 = vunpack.c.l.b16 %v50
  %v299 = vunpack.c.h.b16 %v50
  %v300 = vunpack.c.l.b16 %v51
  %v301 = vunpack.c.h.b16 %v51
  %v302 = vunpack.c.l.b16 %v52
  %v303 = vunpack.c.h.b16 %v52
  %v304 = vunpack.c.l.b16 %v53
  %v305 = vunpack.c.l.b16 %v54
  %v306 = vunpack.c.h.b16 %v54
  %v307 = vunpack.c.l.b16 %v55
  %v308 = vunpack.c.h.b16 %v55
  %v309 = vunpack.c.l.b16 %v56
  %v310 = vunpack.c.h.b16 %v56
  %v311 = vunpack.c.l.b16 %v57
  %v312 = vunpack.c.l.b16 %v58
  %v313 = vunpack.c.h.b16 %v58
  %v314 = vunpack.c.l.b16 %v59
  %v315 = vunpack.c.h.b16 %v59
  %v316 = vunpack.c.l.b16 %v60
  %v317 = vunpack.c.h.b16 %v60
  %v318 = vunpack.c.l.b16 %v61
  %v319 = vunpack.c.l.b16 %v62
  %v320 = vunpack.c.h.b16 %v62
  %v321 = vunpack.c.l.b16 %v63
  %v322 = vunpack.c.h.b16 %v63
  %v323 = vunpack.c.l.b16 %v64
  %v324 = vunpack.c.h.b16 %v64
  %v325 = vunpack.c.l.b16 %v65
  %v326 = vunpack.c.l.b16 %v66
  %v327 = vunpack.c.h.b16 %v66
  %v328 = vunpack.c.l.b16 %v67
  %v329 = vunpack.c.h.b16 %v67
  %v330 = vunpack.c.l.b16 %v68
  %v331 = vunpack.c.h.b16 %v68
  %v332 = vunpack.c.l.b16 %v69
  %v333 = vunpack.c.l.b16 %v70
  %v334 = vunpack.c.h.b16 %v70
  %v335 = vunpack.c.l.b16 %v71
  %v336 = vunpack.c.h.b16 %v71
  %v337 = vunpack.c.l.b16 %v72
  %v338 = vunpack.c.h.b16 %v72
  %v339 = vunpack.c.l.b16 %v73
  %v340 = vpack.c.b16 %v249, %v242
  %v341 = vpack.c.b16 %v250, %v243
  %v342 = vpack.c.b16 %v251, %v244
  %v343 = vpack.c.b16 %v252, %v245
  %v344 = vpack.c.b16 %v253, %v246
  %v345 = vpack.c.b16 %v254, %v247
  %v346 = vpack.c.b16 %v255, %v248
  %v347 = vpack.c.b16 %v263, %v256
  %v348 = vpack.c.b16 %v264, %v257
  %v349 = vpack.c.b16 %v265, %v258
  %v350 = vpack.c.b16 %v266, %v259
  %v351 = vpack.c.b16 %v267, %v260
  %v352 = vpack.c.b16 %v268, %v261
  %v353 = vpack.c.b16 %v269, %v262
  %v354 = vpack.c.b16 %v277, %v270
  %v355 = vpack.c.b16 %v278, %v271
  %v356 = vpack.c.b16 %v279, %v272
  %v357 = vpack.c.b16 %v280, %v273
  %v358 = vpack.c.b16 %v281, %v274
  %v359 = vpack.c.b16 %v282, %v275
  %v360 = vpack.c.b16 %v283, %v276
  %v361 = vpack.c.b16 %v291, %v284
  %v362 = vpack.c.b16 %v292, %v285
  %v363 = vpack.c.b16 %v293, %v286
  %v364 = vpack.c.b16 %v294, %v287
  %v365 = vpack.c.b16 %v295, %v288
  %v366 = vpack.c.b16 %v296, %v289
  %v367 = vpack.c.b16 %v297, %v290
  %v368 = vpack.c.b16 %v305, %v298
  %v369 = vpack.c.b16 %v306, %v299
  %v370 = vpack.c.b16 %v307, %v300
  %v371 = vpack.c.b16 %v308, %v301
  %v372 = vpack.c.b16 %v309, %v302
  %v373 = vpack.c.b16 %v310, %v303
  %v374 = vpack.c.b16 %v311, %v304
  %v375 = vpack.c.b16 %v319, %v312
  %v376 = vpack.c.b16 %v320, %v313
  %v377 = vpack.c.b16 %v321, %v314
  %v378 = vpack.c.b16 %v322, %v315
  %v379 = vpack.c.b16 %v323, %v316
  %v380 = vpack.c.b16 %v324, %v317
  %v381 = vpack.c.b16 %v325, %v318
  %v382 = vpack.c.b16 %v333, %v326
  %v383 = vpack.c.b16 %v334, %v327
  %v384 = vpack.c.b16 %v335, %v328
  %v385 = vpack.c.b16 %v336, %v329
  %v386 = vpack.c.b16 %v337, %v330
  %v387 = vpack.c.b16 %v338, %v331
  %v388 = vpack.c.b16 %v339, %v332
  %v550 = vunpack.c.l.b16 %v74
  %v551 = vunpack.c.l.b16 %v75
  %v552 = vunpack.c.l.b16 %v76
  %v553 = vunpack.c.l.b16 %v77
  %v554 = vunpack.c.l.b16 %v78
  %v555 = vunpack.c.l.b16 %v79
  %v556 = vunpack.c.l.b16 %v80
  %v557 = vunpack.c.l.b16 %v81
  %v558 = vunpack.c.l.b16 %v82
  %v559 = vunpack.c.l.b16 %v83
  %v560 = vunpack.c.l.b16 %v84
  %v561 = vunpack.c.l.b16 %v85
  %v562 = vunpack.c.l.b16 %v86
  %v563 = vunpack.c.l.b16 %v87
  %v564 = vunpack.c.l.b16 %v88
  %v565 = vunpack.c.l.b16 %v89
  %v566 = vunpack.c.l.b16 %v90
  %v567 = vunpack.c.l.b16 %v91
  %v568 = vunpack.c.l.b16 %v92
  %v569 = vunpack.c.l.b16 %v93
  %v570 = vunpack.c.l.b16 %v94
  %v571 = vunpack.c.l.b16 %v95
  %v572 = vunpack.c.l.b16 %v96
  %v573 = vunpack.c.l.b16 %v97
  %v574 = vunpack.c.l.b16 %v98
  %v575 = vunpack.c.l.b16 %v99
  %v576 = vunpack.c.l.b16 %v100
  %v577 = vunpack.c.l.b16 %v101
  %v578 = vunpack.c.l.b16 %v102
  %v579 = vunpack.c.l.b16 %v103
  %v580 = vunpack.c.l.b16 %v104
  %v581 = vunpack.c.l.b16 %v105
  %v582 = vunpack.c.l.b16 %v106
  %v583 = vunpack.c.l.b16 %v107
  %v584 = vunpack.c.l.b16 %v108
  %v585 = vunpack.c.l.b16 %v109
  %v586 = vunpack.c.l.b16 %v110
  %v587 = vunpack.c.l.b16 %v111
  %v588 = vunpack.c.l.b16 %v112
  %v589 = vunpack.c.l.b16 %v113
  %v590 = vunpack.c.l.b16 %v114
  %v591 = vunpack.c.l.b16 %v115
  %v592 = vunpack.c.l.b16 %v116
  %v593 = vunpack.c.l.b16 %v117
  %v594 = vunpack.c.l.b16 %v118
  %v595 = vunpack.c.l.b16 %v119
  %v596 = vunpack.c.l.b16 %v120
  %v597 = vunpack.c.l.b16 %v121
  %v598 = vunpack.c.l.b16 %v122
  %v599 = vunpack.c.l.b16 %v123
  %v600 = vunpack.c.l.b16 %v124
  %v601 = vunpack.c.l.b16 %v125
  %v602 = vunpack.c.l.b16 %v126
  %v603 = vunpack.c.l.b16 %v127
  %v604 = vunpack.c.l.b16 %v128
  %v605 = vunpack.c.l.b16 %v129
  %v606 = vunpack.c.l.b16 %v130
  %v607 = vunpack.c.l.b16 %v131
  %v608 = vunpack.c.l.b16 %v132
  %v609 = vunpack.c.l.b16 %v133
  %v610 = vunpack.c.l.b16 %v134
  %v611 = vunpack.c.l.b16 %v135
  %v612 = vunpack.c.l.b16 %v136
  %v613 = vunpack.c.l.b16 %v137
  %v614 = vunpack.c.l.b16 %v138
  %v615 = vunpack.c.l.b16 %v139
  %v616 = vunpack.c.l.b16 %v140
  %v617 = vunpack.c.l.b16 %v141
  %v618 = vunpack.c.l.b16 %v142
  %v619 = vunpack.c.l.b16 %v143
  %v620 = vunpack.c.l.b16 %v144
  %v621 = vunpack.c.l.b16 %v145
  %v622 = vunpack.c.l.b16 %v146
  %v623 = vunpack.c.l.b16 %v147
  %v624 = vunpack.c.l.b16 %v148
  %v625 = vunpack.c.l.b16 %v149
  %v626 = vunpack.c.l.b16 %v150
  %v627 = vunpack.c.l.b16 %v151
  %v628 = vunpack.c.l.b16 %v152
  %v629 = vunpack.c.l.b16 %v153
  %v630 = vunpack.c.l.b16 %v154
  %v631 = vunpack.c.l.b16 %v155
  %v632 = vunpack.c.l.b16 %v156
  %v633 = vunpack.c.l.b16 %v157
  %v634 = vunpack.c.l.b16 %v158
  %v635 = vunpack.c.l.b16 %v159
  %v636 = vunpack.c.l.b16 %v160
  %v637 = vunpack.c.l.b16 %v161
  %v638 = vunpack.c.l.b16 %v162
  %v639 = vunpack.c.l.b16 %v163
  %v640 = vunpack.c.l.b16 %v164
  %v641 = vunpack.c.l.b16 %v165
  %v642 = vunpack.c.l.b16 %v166
  %v643 = vunpack.c.l.b16 %v167
  %v644 = vunpack.c.l.b16 %v168
  %v645 = vunpack.c.l.b16 %v169
  %v646 = vunpack.c.l.b16 %v170
  %v647 = vunpack.c.l.b16 %v171
  %v648 = vunpack.c.l.b16 %v172
  %v649 = vunpack.c.l.b16 %v173
  %v650 = vunpack.c.l.b16 %v174
  %v651 = vunpack.c.l.b16 %v175
  %v652 = vunpack.c.l.b16 %v176
  %v653 = vunpack.c.l.b16 %v177
  %v654 = vunpack.c.l.b16 %v178
  %v655 = vunpack.c.l.b16 %v179
  %v656 = vunpack.c.l.b16 %v180
  %v657 = vunpack.c.l.b16 %v181
  %v658 = vunpack.c.l.b16 %v182
  %v659 = vunpack.c.l.b16 %v183
  %v660 = vunpack.c.l.b16 %v184
  %v661 = vunpack.c.l.b16 %v185
  %v662 = vpack.c.b16 %v551, %v550
  %v663 = vpack.c.b16 %v553, %v552
  %v664 = vpack.c.b16 %v555, %v554
  %v665 = vpack.c.b16 %v557, %v556
  %v666 = vpack.c.b16 %v559, %v558
  %v667 = vpack.c.b16 %v561, %v560
  %v668 = vpack.c.b16 %v563, %v562
  %v669 = vpack.c.b16 %v565, %v564
  %v670 = vpack.c.b16 %v567, %v566
  %v671 = vpack.c.b16 %v569, %v568
  %v672 = vpack.c.b16 %v571, %v570
  %v673 = vpack.c.b16 %v573, %v572
  %v674 = vpack.c.b16 %v575, %v574
  %v675 = vpack.c.b16 %v577, %v576
  %v676 = vpack.c.b16 %v579, %v578
  %v677 = vpack.c.b16 %v581, %v580
  %v678 = vpack.c.b16 %v583, %v582
  %v679 = vpack.c.b16 %v585, %v584
  %v680 = vpack.c.b16 %v587, %v586
  %v681 = vpack.c.b16 %v589, %v588
  %v682 = vpack.c.b16 %v591, %v590
  %v683 = vpack.c.b16 %v593, %v592
  %v684 = vpack.c.b16 %v595, %v594
  %v685 = vpack.c.b16 %v597, %v596
  %v686 = vpack.c.b16 %v599, %v598
  %v687 = vpack.c.b16 %v601, %v600
  %v688 = vpack.c.b16 %v603, %v602
  %v689 = vpack.c.b16 %v605, %v604
  %v690 = vpack.c.b16 %v607, %v606
  %v691 = vpack.c.b16 %v609, %v608
  %v692 = vpack.c.b16 %v611, %v610
  %v693 = vpack.c.b16 %v613, %v612
  %v694 = vpack.c.b16 %v615, %v614
  %v695 = vpack.c.b16 %v617, %v616
  %v696 = vpack.c.b16 %v619, %v618
  %v697 = vpack.c.b16 %v621, %v620
  %v698 = vpack.c.b16 %v623, %v622
  %v699 = vpack.c.b16 %v625, %v624
  %v700 = vpack.c.b16 %v627, %v626
  %v701 = vpack.c.b16 %v629, %v628
  %v702 = vpack.c.b16 %v631, %v630
  %v703 = vpack.c.b16 %v633, %v632
  %v704 = vpack.c.b16 %v635, %v634
  %v705 = vpack.c.b16 %v637, %v636
  %v706 = vpack.c.b16 %v639, %v638
  %v707 = vpack.c.b16 %v641, %v640
  %v708 = vpack.c.b16 %v643, %v642
  %v709 = vpack.c.b16 %v645, %v644
  %v710 = vpack.c.b16 %v647, %v646
  %v711 = vpack.c.b16 %v649, %v648
  %v712 = vpack.c.b16 %v651, %v650
  %v713 = vpack.c.b16 %v653, %v652
  %v714 = vpack.c.b16 %v655, %v654
  %v715 = vpack.c.b16 %v657, %v656
  %v716 = vpack.c.b16 %v659, %v658
  %v717 = vpack.c.b16 %v661, %v660
  %774 = vmatprep.subr.bf16.mxu0 0
  %775 = vmatpush1.bf16.msra.mxu0 %v662
  %776 = vmatprep.subr.bf16.mxu0 0
  %777 = vmatpush1.bf16.msra.mxu0 %v663
  %778 = vmatprep.subr.bf16.mxu0 0
  %779 = vmatpush1.bf16.msra.mxu0 %v664
  %780 = vmatprep.subr.bf16.mxu0 0
  %781 = vmatpush1.bf16.msra.mxu0 %v665
  %782 = vmatprep.subr.bf16.mxu0 0
  %783 = vmatpush1.bf16.msra.mxu0 %v666
  %784 = vmatprep.subr.bf16.mxu0 0
  %785 = vmatpush1.bf16.msra.mxu0 %v667
  %786 = vmatprep.subr.bf16.mxu0 0
  %787 = vmatpush1.bf16.msra.mxu0 %v668
  %788 = vmatprep.subr.bf16.mxu0 0
  %789 = vmatpush1.bf16.msra.mxu0 %v669
  %790 = vmatprep.subr.bf16.mxu0 0
  %791 = vmatpush1.bf16.msra.mxu0 %v670
  %792 = vmatprep.subr.bf16.mxu0 0
  %793 = vmatpush1.bf16.msra.mxu0 %v671
  %794 = vmatprep.subr.bf16.mxu0 0
  %795 = vmatpush1.bf16.msra.mxu0 %v672
  %796 = vmatprep.subr.bf16.mxu0 0
  %797 = vmatpush1.bf16.msra.mxu0 %v673
  %798 = vmatprep.subr.bf16.mxu0 0
  %799 = vmatpush1.bf16.msra.mxu0 %v674
  %800 = vmatprep.subr.bf16.mxu0 0
  %801 = vmatpush1.bf16.msra.mxu0 %v675
  %802 = vmatprep.subr.bf16.mxu0 0
  %803 = vmatpush1.bf16.msra.mxu0 %v676
  %804 = vmatprep.subr.bf16.mxu0 0
  %805 = vmatpush1.bf16.msra.mxu0 %v677
  %806 = vmatprep.mubr.bf16.mxu0 %v341
  %807 = vmatmul.mubr.bf16.gmra.mrb[0].mxu0 %v340
  %v808 = vpop.f32.mrb[0].mxu0
  %v809 = vadd.f32 0.0, %v808
  %v810 = vpop.f32.mrb[0].mxu0
  %v811 = vpop.f32.mrb[0].mxu0
  %v812 = vadd.f32 0.0, %v811
  %v813 = vpop.f32.mrb[0].mxu0
  %814 = vmatprep.mubr.bf16.mxu0 %v348
  %815 = vmatmul.mubr.bf16.gmra.mrb[0].mxu0 %v347
  %v816 = vpop.f32.mrb[0].mxu0
  %v817 = vadd.f32 0.0, %v816
  %v818 = vpop.f32.mrb[0].mxu0
  %v819 = vpop.f32.mrb[0].mxu0
  %v820 = vadd.f32 0.0, %v819
  %v821 = vpop.f32.mrb[0].mxu0
  %822 = vmatprep.mubr.bf16.mxu0 %v355
  %823 = vmatmul.mubr.bf16.gmra.mrb[0].mxu0 %v354
  %v824 = vpop.f32.mrb[0].mxu0
  %v825 = vadd.f32 0.0, %v824
  %v826 = vpop.f32.mrb[0].mxu0
  %v827 = vpop.f32.mrb[0].mxu0
  %v828 = vadd.f32 0.0, %v827
  %v829 = vpop.f32.mrb[0].mxu0
  %830 = vmatprep.mubr.bf16.mxu0 %v362
  %831 = vmatmul.mubr.bf16.gmra.mrb[0].mxu0 %v361
  %v832 = vpop.f32.mrb[0].mxu0
  %v833 = vadd.f32 0.0, %v832
  %v834 = vpop.f32.mrb[0].mxu0
  %v835 = vpop.f32.mrb[0].mxu0
  %v836 = vadd.f32 0.0, %v835
  %v837 = vpop.f32.mrb[0].mxu0
  %838 = vmatprep.mubr.bf16.mxu0 %v369
  %839 = vmatmul.mubr.bf16.gmra.mrb[0].mxu0 %v368
  %v840 = vpop.f32.mrb[0].mxu0
  %v841 = vadd.f32 0.0, %v840
  %v842 = vpop.f32.mrb[0].mxu0
  %v843 = vpop.f32.mrb[0].mxu0
  %v844 = vadd.f32 0.0, %v843
  %v845 = vpop.f32.mrb[0].mxu0
  %846 = vmatprep.mubr.bf16.mxu0 %v376
  %847 = vmatmul.mubr.bf16.gmra.mrb[0].mxu0 %v375
  %v848 = vpop.f32.mrb[0].mxu0
  %v849 = vadd.f32 0.0, %v848
  %v850 = vpop.f32.mrb[0].mxu0
  %v851 = vpop.f32.mrb[0].mxu0
  %v852 = vadd.f32 0.0, %v851
  %v853 = vpop.f32.mrb[0].mxu0
  %854 = vmatprep.mubr.bf16.mxu0 %v383
  %855 = vmatmul.mubr.bf16.gmra.mrb[0].mxu0 %v382
  %v856 = vpop.f32.mrb[0].mxu0
  %v857 = vadd.f32 0.0, %v856
  %v858 = vpop.f32.mrb[0].mxu0
  %v859 = vpop.f32.mrb[0].mxu0
  %v860 = vadd.f32 0.0, %v859
  %v861 = vpop.f32.mrb[0].mxu0
  %862 = vdwg.mxu0
  %863 = vmatprep.subr.bf16.mxu0 0
  %864 = vmatpush1.bf16.msra.mxu0 %v678
  %865 = vmatprep.subr.bf16.mxu0 0
  %866 = vmatpush1.bf16.msra.mxu0 %v679
  %867 = vmatprep.subr.bf16.mxu0 0
  %868 = vmatpush1.bf16.msra.mxu0 %v680
  %869 = vmatprep.subr.bf16.mxu0 0
  %870 = vmatpush1.bf16.msra.mxu0 %v681
  %871 = vmatprep.subr.bf16.mxu0 0
  %872 = vmatpush1.bf16.msra.mxu0 %v682
  %873 = vmatprep.subr.bf16.mxu0 0
  %874 = vmatpush1.bf16.msra.mxu0 %v683
  %875 = vmatprep.subr.bf16.mxu0 0
  %876 = vmatpush1.bf16.msra.mxu0 %v684
  %877 = vmatprep.subr.bf16.mxu0 0
  %878 = vmatpush1.bf16.msra.mxu0 %v685
  %879 = vmatprep.subr.bf16.mxu0 0
  %880 = vmatpush1.bf16.msra.mxu0 %v686
  %881 = vmatprep.subr.bf16.mxu0 0
  %882 = vmatpush1.bf16.msra.mxu0 %v687
  %883 = vmatprep.subr.bf16.mxu0 0
  %884 = vmatpush1.bf16.msra.mxu0 %v688
  %885 = vmatprep.subr.bf16.mxu0 0
  %886 = vmatpush1.bf16.msra.mxu0 %v689
  %887 = vmatprep.subr.bf16.mxu0 0
  %888 = vmatpush1.bf16.msra.mxu0 %v690
  %889 = vmatprep.subr.bf16.mxu0 0
  %890 = vmatpush1.bf16.msra.mxu0 %v691
  %891 = vmatprep.subr.bf16.mxu0 0
  %892 = vmatpush1.bf16.msra.mxu0 %v692
  %893 = vmatprep.subr.bf16.mxu0 0
  %894 = vmatpush1.bf16.msra.mxu0 %v693
  %895 = vmatprep.mubr.bf16.mxu0 %v343
  %896 = vmatmul.mubr.bf16.gmra.mrb[0].mxu0 %v342
  %v897 = vpop.f32.mrb[0].mxu0
  %v898 = vadd.f32 %v809, %v897
  %v899 = vpop.f32.mrb[0].mxu0
  %v900 = vpop.f32.mrb[0].mxu0
  %v901 = vadd.f32 %v812, %v900
  %v902 = vpop.f32.mrb[0].mxu0
  %903 = vmatprep.mubr.bf16.mxu0 %v350
  %904 = vmatmul.mubr.bf16.gmra.mrb[0].mxu0 %v349
  %v905 = vpop.f32.mrb[0].mxu0
  %v906 = vadd.f32 %v817, %v905
  %v907 = vpop.f32.mrb[0].mxu0
  %v908 = vpop.f32.mrb[0].mxu0
  %v909 = vadd.f32 %v820, %v908
  %v910 = vpop.f32.mrb[0].mxu0
  %911 = vmatprep.mubr.bf16.mxu0 %v357
  %912 = vmatmul.mubr.bf16.gmra.mrb[0].mxu0 %v356
  %v913 = vpop.f32.mrb[0].mxu0
  %v914 = vadd.f32 %v825, %v913
  %v915 = vpop.f32.mrb[0].mxu0
  %v916 = vpop.f32.mrb[0].mxu0
  %v917 = vadd.f32 %v828, %v916
  %v918 = vpop.f32.mrb[0].mxu0
  %919 = vmatprep.mubr.bf16.mxu0 %v364
  %920 = vmatmul.mubr.bf16.gmra.mrb[0].mxu0 %v363
  %v921 = vpop.f32.mrb[0].mxu0
  %v922 = vadd.f32 %v833, %v921
  %v923 = vpop.f32.mrb[0].mxu0
  %v924 = vpop.f32.mrb[0].mxu0
  %v925 = vadd.f32 %v836, %v924
  %v926 = vpop.f32.mrb[0].mxu0
  %927 = vmatprep.mubr.bf16.mxu0 %v371
  %928 = vmatmul.mubr.bf16.gmra.mrb[0].mxu0 %v370
  %v929 = vpop.f32.mrb[0].mxu0
  %v930 = vadd.f32 %v841, %v929
  %v931 = vpop.f32.mrb[0].mxu0
  %v932 = vpop.f32.mrb[0].mxu0
  %v933 = vadd.f32 %v844, %v932
  %v934 = vpop.f32.mrb[0].mxu0
  %935 = vmatprep.mubr.bf16.mxu0 %v378
  %936 = vmatmul.mubr.bf16.gmra.mrb[0].mxu0 %v377
  %v937 = vpop.f32.mrb[0].mxu0
  %v938 = vadd.f32 %v849, %v937
  %v939 = vpop.f32.mrb[0].mxu0
  %v940 = vpop.f32.mrb[0].mxu0
  %v941 = vadd.f32 %v852, %v940
  %v942 = vpop.f32.mrb[0].mxu0
  %943 = vmatprep.mubr.bf16.mxu0 %v385
  %944 = vmatmul.mubr.bf16.gmra.mrb[0].mxu0 %v384
  %v945 = vpop.f32.mrb[0].mxu0
  %v946 = vadd.f32 %v857, %v945
  %v947 = vpop.f32.mrb[0].mxu0
  %v948 = vpop.f32.mrb[0].mxu0
  %v949 = vadd.f32 %v860, %v948
  %v950 = vpop.f32.mrb[0].mxu0
  %951 = vdwg.mxu0
  %952 = vmatprep.subr.bf16.mxu0 0
  %953 = vmatpush1.bf16.msra.mxu0 %v694
  %954 = vmatprep.subr.bf16.mxu0 0
  %955 = vmatpush1.bf16.msra.mxu0 %v695
  %956 = vmatprep.subr.bf16.mxu0 0
  %957 = vmatpush1.bf16.msra.mxu0 %v696
  %958 = vmatprep.subr.bf16.mxu0 0
  %959 = vmatpush1.bf16.msra.mxu0 %v697
  %960 = vmatprep.subr.bf16.mxu0 0
  %961 = vmatpush1.bf16.msra.mxu0 %v698
  %962 = vmatprep.subr.bf16.mxu0 0
  %963 = vmatpush1.bf16.msra.mxu0 %v699
  %964 = vmatprep.subr.bf16.mxu0 0
  %965 = vmatpush1.bf16.msra.mxu0 %v700
  %966 = vmatprep.subr.bf16.mxu0 0
  %967 = vmatpush1.bf16.msra.mxu0 %v701
  %968 = vmatprep.subr.bf16.mxu0 0
  %969 = vmatpush1.bf16.msra.mxu0 %v702
  %970 = vmatprep.subr.bf16.mxu0 0
  %971 = vmatpush1.bf16.msra.mxu0 %v703
  %972 = vmatprep.subr.bf16.mxu0 0
  %973 = vmatpush1.bf16.msra.mxu0 %v704
  %974 = vmatprep.subr.bf16.mxu0 0
  %975 = vmatpush1.bf16.msra.mxu0 %v705
  %976 = vmatprep.subr.bf16.mxu0 0
  %977 = vmatpush1.bf16.msra.mxu0 %v706
  %978 = vmatprep.subr.bf16.mxu0 0
  %979 = vmatpush1.bf16.msra.mxu0 %v707
  %980 = vmatprep.subr.bf16.mxu0 0
  %981 = vmatpush1.bf16.msra.mxu0 %v708
  %982 = vmatprep.subr.bf16.mxu0 0
  %983 = vmatpush1.bf16.msra.mxu0 %v709
  %984 = vmatprep.mubr.bf16.mxu0 %v345
  %985 = vmatmul.mubr.bf16.gmra.mrb[0].mxu0 %v344
  %v986 = vpop.f32.mrb[0].mxu0
  %v987 = vadd.f32 %v898, %v986
  %v988 = vpop.f32.mrb[0].mxu0
  %v989 = vpop.f32.mrb[0].mxu0
  %v990 = vadd.f32 %v901, %v989
  %v991 = vpop.f32.mrb[0].mxu0
  %992 = vmatprep.mubr.bf16.mxu0 %v352
  %993 = vmatmul.mubr.bf16.gmra.mrb[0].mxu0 %v351
  %v994 = vpop.f32.mrb[0].mxu0
  %v995 = vadd.f32 %v906, %v994
  %v996 = vpop.f32.mrb[0].mxu0
  %v997 = vpop.f32.mrb[0].mxu0
  %v998 = vadd.f32 %v909, %v997
  %v999 = vpop.f32.mrb[0].mxu0
  %1000 = vmatprep.mubr.bf16.mxu0 %v359
  %1001 = vmatmul.mubr.bf16.gmra.mrb[0].mxu0 %v358
  %v1002 = vpop.f32.mrb[0].mxu0
  %v1003 = vadd.f32 %v914, %v1002
  %v1004 = vpop.f32.mrb[0].mxu0
  %v1005 = vpop.f32.mrb[0].mxu0
  %v1006 = vadd.f32 %v917, %v1005
  %v1007 = vpop.f32.mrb[0].mxu0
  %1008 = vmatprep.mubr.bf16.mxu0 %v366
  %1009 = vmatmul.mubr.bf16.gmra.mrb[0].mxu0 %v365
  %v1010 = vpop.f32.mrb[0].mxu0
  %v1011 = vadd.f32 %v922, %v1010
  %v1012 = vpop.f32.mrb[0].mxu0
  %v1013 = vpop.f32.mrb[0].mxu0
  %v1014 = vadd.f32 %v925, %v1013
  %v1015 = vpop.f32.mrb[0].mxu0
  %1016 = vmatprep.mubr.bf16.mxu0 %v373
  %1017 = vmatmul.mubr.bf16.gmra.mrb[0].mxu0 %v372
  %v1018 = vpop.f32.mrb[0].mxu0
  %v1019 = vadd.f32 %v930, %v1018
  %v1020 = vpop.f32.mrb[0].mxu0
  %v1021 = vpop.f32.mrb[0].mxu0
  %v1022 = vadd.f32 %v933, %v1021
  %v1023 = vpop.f32.mrb[0].mxu0
  %1024 = vmatprep.mubr.bf16.mxu0 %v380
  %1025 = vmatmul.mubr.bf16.gmra.mrb[0].mxu0 %v379
  %v1026 = vpop.f32.mrb[0].mxu0
  %v1027 = vadd.f32 %v938, %v1026
  %v1028 = vpop.f32.mrb[0].mxu0
  %v1029 = vpop.f32.mrb[0].mxu0
  %v1030 = vadd.f32 %v941, %v1029
  %v1031 = vpop.f32.mrb[0].mxu0
  %1032 = vmatprep.mubr.bf16.mxu0 %v387
  %1033 = vmatmul.mubr.bf16.gmra.mrb[0].mxu0 %v386
  %v1034 = vpop.f32.mrb[0].mxu0
  %v1035 = vadd.f32 %v946, %v1034
  %v1036 = vpop.f32.mrb[0].mxu0
  %v1037 = vpop.f32.mrb[0].mxu0
  %v1038 = vadd.f32 %v949, %v1037
  %v1039 = vpop.f32.mrb[0].mxu0
  %1040 = vdwg.mxu0
  %1041 = vmatprep.subr.bf16.mxu0 0
  %1042 = vmatpush1.bf16.msra.mxu0 %v710
  %1043 = vmatprep.subr.bf16.mxu0 0
  %1044 = vmatpush1.bf16.msra.mxu0 %v711
  %1045 = vmatprep.subr.bf16.mxu0 0
  %1046 = vmatpush1.bf16.msra.mxu0 %v712
  %1047 = vmatprep.subr.bf16.mxu0 0
  %1048 = vmatpush1.bf16.msra.mxu0 %v713
  %1049 = vmatprep.subr.bf16.mxu0 0
  %1050 = vmatpush1.bf16.msra.mxu0 %v714
  %1051 = vmatprep.subr.bf16.mxu0 0
  %1052 = vmatpush1.bf16.msra.mxu0 %v715
  %1053 = vmatprep.subr.bf16.mxu0 0
  %1054 = vmatpush1.bf16.msra.mxu0 %v716
  %1055 = vmatprep.subr.bf16.mxu0 0
  %1056 = vmatpush1.bf16.msra.mxu0 %v717
  %1057 = vmatprep.subr.bf16.mxu0 0
  %1058 = vmatpush1.bf16.msra.mxu0 0
  %1059 = vmatprep.subr.bf16.mxu0 0
  %1060 = vmatpush1.bf16.msra.mxu0 0
  %1061 = vmatprep.subr.bf16.mxu0 0
  %1062 = vmatpush1.bf16.msra.mxu0 0
  %1063 = vmatprep.subr.bf16.mxu0 0
  %1064 = vmatpush1.bf16.msra.mxu0 0
  %1065 = vmatprep.subr.bf16.mxu0 0
  %1066 = vmatpush1.bf16.msra.mxu0 0
  %1067 = vmatprep.subr.bf16.mxu0 0
  %1068 = vmatpush1.bf16.msra.mxu0 0
  %1069 = vmatprep.subr.bf16.mxu0 0
  %1070 = vmatpush1.bf16.msra.mxu0 0
  %1071 = vmatprep.subr.bf16.mxu0 0
  %1072 = vmatpush1.bf16.msra.mxu0 0
  %1073 = vmatprep.mubr.bf16.mxu0 0
  %1074 = vmatmul.mubr.bf16.gmra.mrb[0].mxu0 %v346
  %v1075 = vpop.f32.mrb[0].mxu0
  %v1076 = vadd.f32 %v987, %v1075
  %v1077 = vpop.f32.mrb[0].mxu0
  %v1078 = vpop.f32.mrb[0].mxu0
  %v1079 = vadd.f32 %v990, %v1078
  %v1080 = vpop.f32.mrb[0].mxu0
  %1081 = vmatprep.mubr.bf16.mxu0 0
  %1082 = vmatmul.mubr.bf16.gmra.mrb[0].mxu0 %v353
  %v1083 = vpop.f32.mrb[0].mxu0
  %v1084 = vadd.f32 %v995, %v1083
  %v1085 = vpop.f32.mrb[0].mxu0
  %v1086 = vpop.f32.mrb[0].mxu0
  %v1087 = vadd.f32 %v998, %v1086
  %v1088 = vpop.f32.mrb[0].mxu0
  %1089 = vmatprep.mubr.bf16.mxu0 0
  %1090 = vmatmul.mubr.bf16.gmra.mrb[0].mxu0 %v360
  %v1091 = vpop.f32.mrb[0].mxu0
  %v1092 = vadd.f32 %v1003, %v1091
  %v1093 = vpop.f32.mrb[0].mxu0
  %v1094 = vpop.f32.mrb[0].mxu0
  %v1095 = vadd.f32 %v1006, %v1094
  %v1096 = vpop.f32.mrb[0].mxu0
  %1097 = vmatprep.mubr.bf16.mxu0 0
  %1098 = vmatmul.mubr.bf16.gmra.mrb[0].mxu0 %v367
  %v1099 = vpop.f32.mrb[0].mxu0
  %v1100 = vadd.f32 %v1011, %v1099
  %v1101 = vpop.f32.mrb[0].mxu0
  %v1102 = vpop.f32.mrb[0].mxu0
  %v1103 = vadd.f32 %v1014, %v1102
  %v1104 = vpop.f32.mrb[0].mxu0
  %1105 = vmatprep.mubr.bf16.mxu0 0
  %1106 = vmatmul.mubr.bf16.gmra.mrb[0].mxu0 %v374
  %v1107 = vpop.f32.mrb[0].mxu0
  %v1108 = vadd.f32 %v1019, %v1107
  %v1109 = vpop.f32.mrb[0].mxu0
  %v1110 = vpop.f32.mrb[0].mxu0
  %v1111 = vadd.f32 %v1022, %v1110
  %v1112 = vpop.f32.mrb[0].mxu0
  %1113 = vmatprep.mubr.bf16.mxu0 0
  %1114 = vmatmul.mubr.bf16.gmra.mrb[0].mxu0 %v381
  %v1115 = vpop.f32.mrb[0].mxu0
  %v1116 = vadd.f32 %v1027, %v1115
  %v1117 = vpop.f32.mrb[0].mxu0
  %v1118 = vpop.f32.mrb[0].mxu0
  %v1119 = vadd.f32 %v1030, %v1118
  %v1120 = vpop.f32.mrb[0].mxu0
  %1121 = vmatprep.mubr.bf16.mxu0 0
  %1122 = vmatmul.mubr.bf16.gmra.mrb[0].mxu0 %v388
  %v1123 = vpop.f32.mrb[0].mxu0
  %v1124 = vadd.f32 %v1035, %v1123
  %v1125 = vpop.f32.mrb[0].mxu0
  %v1126 = vpop.f32.mrb[0].mxu0
  %v1127 = vadd.f32 %v1038, %v1126
  %v1128 = vpop.f32.mrb[0].mxu0
  %1129 = vdwg.mxu0
  %v1130 = vadd.f32 %v1076, %v1079
  %v1131 = vadd.f32 %v1130, %v1084
  %v1132 = vadd.f32 %v1131, %v1087
  %v1133 = vadd.f32 %v1132, %v1092
  %v1134 = vadd.f32 %v1133, %v1095
  %v1135 = vadd.f32 %v1134, %v1100
  %v1136 = vadd.f32 %v1135, %v1103
  %v1137 = vadd.f32 %v1136, %v1108
  %v1138 = vadd.f32 %v1137, %v1111
  %v1139 = vadd.f32 %v1138, %v1116
  %v1140 = vadd.f32 %v1139, %v1119
  %v1141 = vadd.f32 %v1140, %v1124
  %v1142 = vadd.f32 %v1141, %v1127
  %v1143 = vrot.slane %v1142, 4
  %v1144 = vadd.f32 %v1142, %v1143
  %v1145 = vrot.slane %v1144, 2
  %v1146 = vadd.f32 %v1144, %v1145
  %v1147 = vrot.slane %v1146, 1
  %v1148 = vadd.f32 %v1146, %v1147
  %v1149 = vmul.f32 %v1148, 0.010204081
  %v1150 = vmul.f32 %v1076, %v1076
  %v1151 = vmul.f32 %v1079, %v1079
  %v1152 = vmul.f32 %v1084, %v1084
  %v1153 = vmul.f32 %v1087, %v1087
  %v1154 = vmul.f32 %v1092, %v1092
  %v1155 = vmul.f32 %v1095, %v1095
  %v1156 = vmul.f32 %v1100, %v1100
  %v1157 = vmul.f32 %v1103, %v1103
  %v1158 = vmul.f32 %v1108, %v1108
  %v1159 = vmul.f32 %v1111, %v1111
  %v1160 = vmul.f32 %v1116, %v1116
  %v1161 = vmul.f32 %v1119, %v1119
  %v1162 = vmul.f32 %v1124, %v1124
  %v1163 = vmul.f32 %v1127, %v1127
  %v1164 = vadd.f32 %v1150, %v1151
  %v1165 = vadd.f32 %v1164, %v1152
  %v1166 = vadd.f32 %v1165, %v1153
  %v1167 = vadd.f32 %v1166, %v1154
  %v1168 = vadd.f32 %v1167, %v1155
  %v1169 = vadd.f32 %v1168, %v1156
  %v1170 = vadd.f32 %v1169, %v1157
  %v1171 = vadd.f32 %v1170, %v1158
  %v1172 = vadd.f32 %v1171, %v1159
  %v1173 = vadd.f32 %v1172, %v1160
  %v1174 = vadd.f32 %v1173, %v1161
  %v1175 = vadd.f32 %v1174, %v1162
  %v1176 = vadd.f32 %v1175, %v1163
  %v1177 = vrot.slane %v1176, 4
  %v1178 = vadd.f32 %v1176, %v1177
  %v1179 = vrot.slane %v1178, 2
  %v1180 = vadd.f32 %v1178, %v1179
  %v1181 = vrot.slane %v1180, 1
  %v1182 = vadd.f32 %v1180, %v1181
  %v1183 = vmul.f32 %v1182, 0.010204081
  %v1184 = vmul.f32 %v1149, %v1149
  %v1185 = vsub.f32 %v1183, %v1184
  %v1186 = vmax.f32 %v1185, 0.0
  %v1187 = vld [vmem:[%s2] sm:$0x1]
  %v1188 = vadd.f32 %v1186, 1e-05
  %v1189 = vrsqrt.pop %v1188
  %v1190 = vmul.f32 %v1187, %v1189
  %v1191 = vld [vmem:[%s3] sm:$0x1]
  %v1192 = vmul.f32 %v1149, %v1190
  %v1193 = vsub.f32 %v1191, %v1192
  %v1195 = vlaneseq
  %v1196 = vshrl.u32 %v1195, 7
  %v1197 = vsub.s32 0, %v1196
  %v1198 = vrot.slane %v1190, %v1197
  %v1200 = vmul.f32 %v1076, %v1198
  %v1201 = vmul.f32 %v1079, %v1198
  %v1202 = vmul.f32 %v1084, %v1198
  %v1203 = vmul.f32 %v1087, %v1198
  %v1204 = vmul.f32 %v1092, %v1198
  %v1205 = vmul.f32 %v1095, %v1198
  %v1206 = vmul.f32 %v1100, %v1198
  %v1207 = vmul.f32 %v1103, %v1198
  %v1208 = vmul.f32 %v1108, %v1198
  %v1209 = vmul.f32 %v1111, %v1198
  %v1210 = vmul.f32 %v1116, %v1198
  %v1211 = vmul.f32 %v1119, %v1198
  %v1212 = vmul.f32 %v1124, %v1198
  %v1213 = vmul.f32 %v1127, %v1198
  %v1215 = vlaneseq
  %v1216 = vshrl.u32 %v1215, 7
  %v1217 = vsub.s32 0, %v1216
  %v1218 = vrot.slane %v1193, %v1217
  %v1220 = vadd.f32 %v1200, %v1218
  %v1221 = vadd.f32 %v1201, %v1218
  %v1222 = vadd.f32 %v1202, %v1218
  %v1223 = vadd.f32 %v1203, %v1218
  %v1224 = vadd.f32 %v1204, %v1218
  %v1225 = vadd.f32 %v1205, %v1218
  %v1226 = vadd.f32 %v1206, %v1218
  %v1227 = vadd.f32 %v1207, %v1218
  %v1228 = vadd.f32 %v1208, %v1218
  %v1229 = vadd.f32 %v1209, %v1218
  %v1230 = vadd.f32 %v1210, %v1218
  %v1231 = vadd.f32 %v1211, %v1218
  %v1232 = vadd.f32 %v1212, %v1218
  %v1233 = vadd.f32 %v1213, %v1218
  %v1234 = vmax.f32 %v1220, 0.0
  %v1235 = vmax.f32 %v1221, 0.0
  %v1236 = vmax.f32 %v1222, 0.0
  %v1237 = vmax.f32 %v1223, 0.0
  %v1238 = vmax.f32 %v1224, 0.0
  %v1239 = vmax.f32 %v1225, 0.0
  %v1240 = vmax.f32 %v1226, 0.0
  %v1241 = vmax.f32 %v1227, 0.0
  %v1242 = vmax.f32 %v1228, 0.0
  %v1243 = vmax.f32 %v1229, 0.0
  %v1244 = vmax.f32 %v1230, 0.0
  %v1245 = vmax.f32 %v1231, 0.0
  %v1246 = vmax.f32 %v1232, 0.0
  %v1247 = vmax.f32 %v1233, 0.0
  %v1248 = vpack.c.bf16 %v1235, %v1234
  %v1249 = vpack.c.bf16 %v1237, %v1236
  %v1250 = vpack.c.bf16 %v1239, %v1238
  %v1251 = vpack.c.bf16 %v1241, %v1240
  %v1252 = vpack.c.bf16 %v1243, %v1242
  %v1253 = vpack.c.bf16 %v1245, %v1244
  %v1254 = vpack.c.bf16 %v1247, %v1246
  %v1262 = vunpack.c.l.b16 %v1248
  %v1263 = vunpack.c.h.b16 %v1248
  %v1264 = vunpack.c.l.b16 %v1249
  %v1265 = vunpack.c.h.b16 %v1249
  %v1266 = vunpack.c.l.b16 %v1250
  %v1267 = vunpack.c.h.b16 %v1250
  %v1268 = vunpack.c.l.b16 %v1251
  %v1269 = vunpack.c.h.b16 %v1251
  %v1270 = vunpack.c.l.b16 %v1252
  %v1271 = vunpack.c.h.b16 %v1252
  %v1272 = vunpack.c.l.b16 %v1253
  %v1273 = vunpack.c.h.b16 %v1253
  %v1274 = vunpack.c.l.b16 %v1254
  %v1275 = vunpack.c.h.b16 %v1254
  %v1276 = vpack.c.b16 %v1262, %v1262
  %v1277 = vpack.c.b16 %v1263, %v1263
  %v1278 = vpack.c.b16 %v1264, %v1264
  %v1279 = vpack.c.b16 %v1265, %v1265
  %v1280 = vpack.c.b16 %v1266, %v1266
  %v1281 = vpack.c.b16 %v1267, %v1267
  %v1282 = vpack.c.b16 %v1268, %v1268
  %v1283 = vpack.c.b16 %v1269, %v1269
  %v1284 = vpack.c.b16 %v1270, %v1270
  %v1285 = vpack.c.b16 %v1271, %v1271
  %v1286 = vpack.c.b16 %v1272, %v1272
  %v1287 = vpack.c.b16 %v1273, %v1273
  %v1288 = vpack.c.b16 %v1274, %v1274
  %v1289 = vpack.c.b16 %v1275, %v1275
  %1304 = vst [vmem:[%s4] sm:$0xf] %v1276
  %1305 = vst [vmem:[%s4 + $0x4] sm:$0xf] %v1277
  %1306 = vst [vmem:[%s4 + $0x8] sm:$0xf] %v1278
  %1307 = vst [vmem:[%s4 + $0xc] sm:$0xf] %v1279
  %1308 = vst [vmem:[%s4 + $0x10] sm:$0xf] %v1280
  %1309 = vst [vmem:[%s4 + $0x14] sm:$0xf] %v1281
  %1310 = vst [vmem:[%s4 + $0x18] sm:$0xf] %v1282
  %1311 = vst [vmem:[%s4 + $0x1c] sm:$0xf] %v1283
  %1312 = vst [vmem:[%s4 + $0x20] sm:$0xf] %v1284
  %1313 = vst [vmem:[%s4 + $0x24] sm:$0xf] %v1285
  %1314 = vst [vmem:[%s4 + $0x28] sm:$0xf] %v1286
  %1315 = vst [vmem:[%s4 + $0x2c] sm:$0xf] %v1287
  %1316 = vst [vmem:[%s4 + $0x30] sm:$0xf] %v1288
  %1317 = vst [vmem:[%s4 + $0x34] sm:$0xf] %v1289
  // Predicated region
  $region18: #{policy_forward.6} parent=0 // pred_check
    _
  $region19: #{policy_forward.6} parent=0 // pred_check_branch
    %1319 = sbr.rel (0) target = $region21
  $region20: #{policy_forward.6} parent=0 // pred_region
    _
  $region21: #{policy_forward.6} parent=0 // pred_fallthru
    _
  // Predicated region
  $region22: #{policy_forward.6} parent=0 // pred_check
    _
  $region23: #{policy_forward.6} parent=0 // pred_check_branch
    %1321 = sbr.rel (0) target = $region25
  $region24: #{policy_forward.6} parent=0 // pred_region
    _
  $region25: #{policy_forward.6} parent=0 // pred_fallthru
    _

// kernel: policy_forward.7
$region0: #{policy_forward.7}
  #allocation0 [shape = 'u32[]', space=smem, size = 0x4, offset = 0x4, fixed_abs, tag = 'smem constant byte address 0x4 - core index']
  #allocation1 [shape = 'u32[144,128]{1,0:T(1,128)}', space=vmem, size = 0x12000, scoped, tag = 'internal scratch']
  %s0 = inlined_call_operand.vmem [shape: bf16[16,1664], index: 0, kind: input, shape index: {}]
  %s1 = inlined_call_operand.vmem [shape: bf16[1664,256], index: 1, kind: input, shape index: {}]
  %s2 = inlined_call_operand.vmem [shape: f32[1,256], index: 2, kind: input, shape index: {}]
  %s3 = inlined_call_operand.vmem [shape: bf16[256,128], index: 3, kind: input, shape index: {}]
  %s4 = inlined_call_operand.vmem [shape: f32[1,128], index: 4, kind: input, shape index: {}]
  %s5 = inlined_call_operand.vmem [shape: f32[16,128], index: 5, kind: output, shape index: {}]
  %s6 = sld [smem:[#allocation0]]
  $region30: #{policy_forward.7} parent=0
    _
  %s8 = ssub.s32 1, %s6
  %s9 = scalar_select 0, %s8, %s6
  // Predicated region
  $region2: #{policy_forward.7} parent=0 // pred_check
    _
  $region3: #{policy_forward.7} parent=0 // pred_check_branch
    %11 = sbr.rel (0) target = $region5
  $region4: #{policy_forward.7} parent=0 // pred_region
    _
  $region5: #{policy_forward.7} parent=0 // pred_fallthru
    _
  // Predicated region
  $region6: #{policy_forward.7} parent=0 // pred_check
    _
  $region7: #{policy_forward.7} parent=0 // pred_check_branch
    %13 = sbr.rel (0) target = $region9
  $region8: #{policy_forward.7} parent=0 // pred_region
    _
  $region9: #{policy_forward.7} parent=0 // pred_fallthru
    _
  // Predicated region
  $region10: #{policy_forward.7} parent=0 // pred_check
    _
  $region11: #{policy_forward.7} parent=0 // pred_check_branch
    %15 = sbr.rel (0) target = $region13
  $region12: #{policy_forward.7} parent=0 // pred_region
    _
  $region13: #{policy_forward.7} parent=0 // pred_fallthru
    _
  // Predicated region
  $region14: #{policy_forward.7} parent=0 // pred_check
    _
  $region15: #{policy_forward.7} parent=0 // pred_check_branch
    %17 = sbr.rel (0) target = $region17
  $region16: #{policy_forward.7} parent=0 // pred_region
    _
  $region17: #{policy_forward.7} parent=0 // pred_fallthru
    _
  // Predicated region
  $region18: #{policy_forward.7} parent=0 // pred_check
    _
  $region19: #{policy_forward.7} parent=0 // pred_check_branch
    %19 = sbr.rel (0) target = $region21
  $region20: #{policy_forward.7} parent=0 // pred_region
    _
  $region21: #{policy_forward.7} parent=0 // pred_fallthru
    _
  %v21 = vld [vmem:[%s0] sm:$0xff]
  %v22 = vld [vmem:[%s0 + $0x8] sm:$0xff]
  %v23 = vld [vmem:[%s0 + $0x10] sm:$0xff]
  %v24 = vld [vmem:[%s0 + $0x18] sm:$0xff]
  %v25 = vld [vmem:[%s0 + $0x20] sm:$0xff]
  %v26 = vld [vmem:[%s0 + $0x28] sm:$0xff]
  %v27 = vld [vmem:[%s0 + $0x30] sm:$0xf]
  %v28 = vld [vmem:[%s0 + $0x34] sm:$0xff]
  %v29 = vld [vmem:[%s0 + $0x3c] sm:$0xff]
  %v30 = vld [vmem:[%s0 + $0x44] sm:$0xff]
  %v31 = vld [vmem:[%s0 + $0x4c] sm:$0xff]
  %v32 = vld [vmem:[%s0 + $0x54] sm:$0xff]
  %v33 = vld [vmem:[%s0 + $0x5c] sm:$0xff]
  %v34 = vld [vmem:[%s0 + $0x64] sm:$0xf]
  %v35 = vld [vmem:[%s1] sm:$0xff]
  %v36 = vld [vmem:[%s1 + $0x8] sm:$0xff]
  %v37 = vld [vmem:[%s1 + $0x10] sm:$0xff]
  %v38 = vld [vmem:[%s1 + $0x18] sm:$0xff]
  %v39 = vld [vmem:[%s1 + $0x20] sm:$0xff]
  %v40 = vld [vmem:[%s1 + $0x28] sm:$0xff]
  %v41 = vld [vmem:[%s1 + $0x30] sm:$0xff]
  %v42 = vld [vmem:[%s1 + $0x38] sm:$0xff]
  %v43 = vld [vmem:[%s1 + $0x40] sm:$0xff]
  %v44 = vld [vmem:[%s1 + $0x48] sm:$0xff]
  %v45 = vld [vmem:[%s1 + $0x50] sm:$0xff]
  %v46 = vld [vmem:[%s1 + $0x58] sm:$0xff]
  %v47 = vld [vmem:[%s1 + $0x60] sm:$0xff]
  %v48 = vld [vmem:[%s1 + $0x68] sm:$0xff]
  %v49 = vld [vmem:[%s1 + $0x70] sm:$0xff]
  %v50 = vld [vmem:[%s1 + $0x78] sm:$0xff]
  %v51 = vld [vmem:[%s1 + $0x80] sm:$0xff]
  %v52 = vld [vmem:[%s1 + $0x88] sm:$0xff]
  %v53 = vld [vmem:[%s1 + $0x90] sm:$0xff]
  %v54 = vld [vmem:[%s1 + $0x98] sm:$0xff]
  %v55 = vld [vmem:[%s1 + $0xa0] sm:$0xff]
  %v56 = vld [vmem:[%s1 + $0xa8] sm:$0xff]
  %v57 = vld [vmem:[%s1 + $0xb0] sm:$0xff]
  %v58 = vld [vmem:[%s1 + $0xb8] sm:$0xff]
  %v59 = vld [vmem:[%s1 + $0xc0] sm:$0xff]
  %v60 = vld [vmem:[%s1 + $0xc8] sm:$0xff]
  %v61 = vld [vmem:[%s1 + $0xd0] sm:$0xff]
  %v62 = vld [vmem:[%s1 + $0xd8] sm:$0xff]
  %v63 = vld [vmem:[%s1 + $0xe0] sm:$0xff]
  %v64 = vld [vmem:[%s1 + $0xe8] sm:$0xff]
  %v65 = vld [vmem:[%s1 + $0xf0] sm:$0xff]
  %v66 = vld [vmem:[%s1 + $0xf8] sm:$0xff]
  %v67 = vld [vmem:[%s1 + $0x100] sm:$0xff]
  %v68 = vld [vmem:[%s1 + $0x108] sm:$0xff]
  %v69 = vld [vmem:[%s1 + $0x110] sm:$0xff]
  %v70 = vld [vmem:[%s1 + $0x118] sm:$0xff]
  %v71 = vld [vmem:[%s1 + $0x120] sm:$0xff]
  %v72 = vld [vmem:[%s1 + $0x128] sm:$0xff]
  %v73 = vld [vmem:[%s1 + $0x130] sm:$0xff]
  %v74 = vld [vmem:[%s1 + $0x138] sm:$0xff]
  %v75 = vld [vmem:[%s1 + $0x140] sm:$0xff]
  %v76 = vld [vmem:[%s1 + $0x148] sm:$0xff]
  %v77 = vld [vmem:[%s1 + $0x150] sm:$0xff]
  %v78 = vld [vmem:[%s1 + $0x158] sm:$0xff]
  %v79 = vld [vmem:[%s1 + $0x160] sm:$0xff]
  %v80 = vld [vmem:[%s1 + $0x168] sm:$0xff]
  %v81 = vld [vmem:[%s1 + $0x170] sm:$0xff]
  %v82 = vld [vmem:[%s1 + $0x178] sm:$0xff]
  %v83 = vld [vmem:[%s1 + $0x180] sm:$0xff]
  %v84 = vld [vmem:[%s1 + $0x188] sm:$0xff]
  %v85 = vld [vmem:[%s1 + $0x190] sm:$0xff]
  %v86 = vld [vmem:[%s1 + $0x198] sm:$0xff]
  %v87 = vld [vmem:[%s1 + $0x1a0] sm:$0xff]
  %v88 = vld [vmem:[%s1 + $0x1a8] sm:$0xff]
  %v89 = vld [vmem:[%s1 + $0x1b0] sm:$0xff]
  %v90 = vld [vmem:[%s1 + $0x1b8] sm:$0xff]
  %v91 = vld [vmem:[%s1 + $0x1c0] sm:$0xff]
  %v92 = vld [vmem:[%s1 + $0x1c8] sm:$0xff]
  %v93 = vld [vmem:[%s1 + $0x1d0] sm:$0xff]
  %v94 = vld [vmem:[%s1 + $0x1d8] sm:$0xff]
  %v95 = vld [vmem:[%s1 + $0x1e0] sm:$0xff]
  %v96 = vld [vmem:[%s1 + $0x1e8] sm:$0xff]
  %v97 = vld [vmem:[%s1 + $0x1f0] sm:$0xff]
  %v98 = vld [vmem:[%s1 + $0x1f8] sm:$0xff]
  %v99 = vld [vmem:[%s1 + $0x200] sm:$0xff]
  %v100 = vld [vmem:[%s1 + $0x208] sm:$0xff]
  %v101 = vld [vmem:[%s1 + $0x210] sm:$0xff]
  %v102 = vld [vmem:[%s1 + $0x218] sm:$0xff]
  %v103 = vld [vmem:[%s1 + $0x220] sm:$0xff]
  %v104 = vld [vmem:[%s1 + $0x228] sm:$0xff]
  %v105 = vld [vmem:[%s1 + $0x230] sm:$0xff]
  %v106 = vld [vmem:[%s1 + $0x238] sm:$0xff]
  %v107 = vld [vmem:[%s1 + $0x240] sm:$0xff]
  %v108 = vld [vmem:[%s1 + $0x248] sm:$0xff]
  %v109 = vld [vmem:[%s1 + $0x250] sm:$0xff]
  %v110 = vld [vmem:[%s1 + $0x258] sm:$0xff]
  %v111 = vld [vmem:[%s1 + $0x260] sm:$0xff]
  %v112 = vld [vmem:[%s1 + $0x268] sm:$0xff]
  %v113 = vld [vmem:[%s1 + $0x270] sm:$0xff]
  %v114 = vld [vmem:[%s1 + $0x278] sm:$0xff]
  %v115 = vld [vmem:[%s1 + $0x280] sm:$0xff]
  %v116 = vld [vmem:[%s1 + $0x288] sm:$0xff]
  %v117 = vld [vmem:[%s1 + $0x290] sm:$0xff]
  %v118 = vld [vmem:[%s1 + $0x298] sm:$0xff]
  %v119 = vld [vmem:[%s1 + $0x2a0] sm:$0xff]
  %v120 = vld [vmem:[%s1 + $0x2a8] sm:$0xff]
  %v121 = vld [vmem:[%s1 + $0x2b0] sm:$0xff]
  %v122 = vld [vmem:[%s1 + $0x2b8] sm:$0xff]
  %v123 = vld [vmem:[%s1 + $0x2c0] sm:$0xff]
  %v124 = vld [vmem:[%s1 + $0x2c8] sm:$0xff]
  %v125 = vld [vmem:[%s1 + $0x2d0] sm:$0xff]
  %v126 = vld [vmem:[%s1 + $0x2d8] sm:$0xff]
  %v127 = vld [vmem:[%s1 + $0x2e0] sm:$0xff]
  %v128 = vld [vmem:[%s1 + $0x2e8] sm:$0xff]
  %v129 = vld [vmem:[%s1 + $0x2f0] sm:$0xff]
  %v130 = vld [vmem:[%s1 + $0x2f8] sm:$0xff]
  %v131 = vld [vmem:[%s1 + $0x300] sm:$0xff]
  %v132 = vld [vmem:[%s1 + $0x308] sm:$0xff]
  %v133 = vld [vmem:[%s1 + $0x310] sm:$0xff]
  %v134 = vld [vmem:[%s1 + $0x318] sm:$0xff]
  %v135 = vld [vmem:[%s1 + $0x320] sm:$0xff]
  %v136 = vld [vmem:[%s1 + $0x328] sm:$0xff]
  %v137 = vld [vmem:[%s1 + $0x330] sm:$0xff]
  %v138 = vld [vmem:[%s1 + $0x338] sm:$0xff]
  %v139 = vld [vmem:[%s1 + $0x340] sm:$0xff]
  %v140 = vld [vmem:[%s1 + $0x348] sm:$0xff]
  %v141 = vld [vmem:[%s1 + $0x350] sm:$0xff]
  %v142 = vld [vmem:[%s1 + $0x358] sm:$0xff]
  %v143 = vld [vmem:[%s1 + $0x360] sm:$0xff]
  %v144 = vld [vmem:[%s1 + $0x368] sm:$0xff]
  %v145 = vld [vmem:[%s1 + $0x370] sm:$0xff]
  %v146 = vld [vmem:[%s1 + $0x378] sm:$0xff]
  %v147 = vld [vmem:[%s1 + $0x380] sm:$0xff]
  %v148 = vld [vmem:[%s1 + $0x388] sm:$0xff]
  %v149 = vld [vmem:[%s1 + $0x390] sm:$0xff]
  %v150 = vld [vmem:[%s1 + $0x398] sm:$0xff]
  %v151 = vld [vmem:[%s1 + $0x3a0] sm:$0xff]
  %v152 = vld [vmem:[%s1 + $0x3a8] sm:$0xff]
  %v153 = vld [vmem:[%s1 + $0x3b0] sm:$0xff]
  %v154 = vld [vmem:[%s1 + $0x3b8] sm:$0xff]
  %v155 = vld [vmem:[%s1 + $0x3c0] sm:$0xff]
  %v156 = vld [vmem:[%s1 + $0x3c8] sm:$0xff]
  %v157 = vld [vmem:[%s1 + $0x3d0] sm:$0xff]
  %v158 = vld [vmem:[%s1 + $0x3d8] sm:$0xff]
  %v159 = vld [vmem:[%s1 + $0x3e0] sm:$0xff]
  %v160 = vld [vmem:[%s1 + $0x3e8] sm:$0xff]
  %v161 = vld [vmem:[%s1 + $0x3f0] sm:$0xff]
  %v162 = vld [vmem:[%s1 + $0x3f8] sm:$0xff]
  %v163 = vld [vmem:[%s1 + $0x400] sm:$0xff]
  %v164 = vld [vmem:[%s1 + $0x408] sm:$0xff]
  %v165 = vld [vmem:[%s1 + $0x410] sm:$0xff]
  %v166 = vld [vmem:[%s1 + $0x418] sm:$0xff]
  %v167 = vld [vmem:[%s1 + $0x420] sm:$0xff]
  %v168 = vld [vmem:[%s1 + $0x428] sm:$0xff]
  %v169 = vld [vmem:[%s1 + $0x430] sm:$0xff]
  %v170 = vld [vmem:[%s1 + $0x438] sm:$0xff]
  %v171 = vld [vmem:[%s1 + $0x440] sm:$0xff]
  %v172 = vld [vmem:[%s1 + $0x448] sm:$0xff]
  %v173 = vld [vmem:[%s1 + $0x450] sm:$0xff]
  %v174 = vld [vmem:[%s1 + $0x458] sm:$0xff]
  %v175 = vld [vmem:[%s1 + $0x460] sm:$0xff]
  %v176 = vld [vmem:[%s1 + $0x468] sm:$0xff]
  %v177 = vld [vmem:[%s1 + $0x470] sm:$0xff]
  %v178 = vld [vmem:[%s1 + $0x478] sm:$0xff]
  %v179 = vld [vmem:[%s1 + $0x480] sm:$0xff]
  %v180 = vld [vmem:[%s1 + $0x488] sm:$0xff]
  %v181 = vld [vmem:[%s1 + $0x490] sm:$0xff]
  %v182 = vld [vmem:[%s1 + $0x498] sm:$0xff]
  %v183 = vld [vmem:[%s1 + $0x4a0] sm:$0xff]
  %v184 = vld [vmem:[%s1 + $0x4a8] sm:$0xff]
  %v185 = vld [vmem:[%s1 + $0x4b0] sm:$0xff]
  %v186 = vld [vmem:[%s1 + $0x4b8] sm:$0xff]
  %v187 = vld [vmem:[%s1 + $0x4c0] sm:$0xff]
  %v188 = vld [vmem:[%s1 + $0x4c8] sm:$0xff]
  %v189 = vld [vmem:[%s1 + $0x4d0] sm:$0xff]
  %v190 = vld [vmem:[%s1 + $0x4d8] sm:$0xff]
  %v191 = vld [vmem:[%s1 + $0x4e0] sm:$0xff]
  %v192 = vld [vmem:[%s1 + $0x4e8] sm:$0xff]
  %v193 = vld [vmem:[%s1 + $0x4f0] sm:$0xff]
  %v194 = vld [vmem:[%s1 + $0x4f8] sm:$0xff]
  %v195 = vld [vmem:[%s1 + $0x500] sm:$0xff]
  %v196 = vld [vmem:[%s1 + $0x508] sm:$0xff]
  %v197 = vld [vmem:[%s1 + $0x510] sm:$0xff]
  %v198 = vld [vmem:[%s1 + $0x518] sm:$0xff]
  %v199 = vld [vmem:[%s1 + $0x520] sm:$0xff]
  %v200 = vld [vmem:[%s1 + $0x528] sm:$0xff]
  %v201 = vld [vmem:[%s1 + $0x530] sm:$0xff]
  %v202 = vld [vmem:[%s1 + $0x538] sm:$0xff]
  %v203 = vld [vmem:[%s1 + $0x540] sm:$0xff]
  %v204 = vld [vmem:[%s1 + $0x548] sm:$0xff]
  %v205 = vld [vmem:[%s1 + $0x550] sm:$0xff]
  %v206 = vld [vmem:[%s1 + $0x558] sm:$0xff]
  %v207 = vld [vmem:[%s1 + $0x560] sm:$0xff]
  %v208 = vld [vmem:[%s1 + $0x568] sm:$0xff]
  %v209 = vld [vmem:[%s1 + $0x570] sm:$0xff]
  %v210 = vld [vmem:[%s1 + $0x578] sm:$0xff]
  %v211 = vld [vmem:[%s1 + $0x580] sm:$0xff]
  %v212 = vld [vmem:[%s1 + $0x588] sm:$0xff]
  %v213 = vld [vmem:[%s1 + $0x590] sm:$0xff]
  %v214 = vld [vmem:[%s1 + $0x598] sm:$0xff]
  %v215 = vld [vmem:[%s1 + $0x5a0] sm:$0xff]
  %v216 = vld [vmem:[%s1 + $0x5a8] sm:$0xff]
  %v217 = vld [vmem:[%s1 + $0x5b0] sm:$0xff]
  %v218 = vld [vmem:[%s1 + $0x5b8] sm:$0xff]
  %v219 = vld [vmem:[%s1 + $0x5c0] sm:$0xff]
  %v220 = vld [vmem:[%s1 + $0x5c8] sm:$0xff]
  %v221 = vld [vmem:[%s1 + $0x5d0] sm:$0xff]
  %v222 = vld [vmem:[%s1 + $0x5d8] sm:$0xff]
  %v223 = vld [vmem:[%s1 + $0x5e0] sm:$0xff]
  %v224 = vld [vmem:[%s1 + $0x5e8] sm:$0xff]
  %v225 = vld [vmem:[%s1 + $0x5f0] sm:$0xff]
  %v226 = vld [vmem:[%s1 + $0x5f8] sm:$0xff]
  %v227 = vld [vmem:[%s1 + $0x600] sm:$0xff]
  %v228 = vld [vmem:[%s1 + $0x608] sm:$0xff]
  %v229 = vld [vmem:[%s1 + $0x610] sm:$0xff]
  %v230 = vld [vmem:[%s1 + $0x618] sm:$0xff]
  %v231 = vld [vmem:[%s1 + $0x620] sm:$0xff]
  %v232 = vld [vmem:[%s1 + $0x628] sm:$0xff]
  %v233 = vld [vmem:[%s1 + $0x630] sm:$0xff]
  %v234 = vld [vmem:[%s1 + $0x638] sm:$0xff]
  %v235 = vld [vmem:[%s1 + $0x640] sm:$0xff]
  %v236 = vld [vmem:[%s1 + $0x648] sm:$0xff]
  %v237 = vld [vmem:[%s1 + $0x650] sm:$0xff]
  %v238 = vld [vmem:[%s1 + $0x658] sm:$0xff]
  %v239 = vld [vmem:[%s1 + $0x660] sm:$0xff]
  %v240 = vld [vmem:[%s1 + $0x668] sm:$0xff]
  %v241 = vld [vmem:[%s1 + $0x670] sm:$0xff]
  %v242 = vld [vmem:[%s1 + $0x678] sm:$0xff]
  %v243 = vld [vmem:[%s2] sm:$0x3]
  %v245 = vlaneseq
  %v246 = vshrl.u32 %v245, 7
  %v247 = vsub.s32 0, %v246
  %v248 = vrot.slane %v243, %v247
  %v249 = vlaneseq
  %v250 = vshrl.u32 %v249, 7
  %v251 = vsub.s32 1, %v250
  %v252 = vrot.slane %v243, %v251
  %v269 = vunpack.c.l.b16 %v21
  %v270 = vunpack.c.h.b16 %v21
  %v271 = vunpack.c.l.b16 %v22
  %v272 = vunpack.c.h.b16 %v22
  %v273 = vunpack.c.l.b16 %v23
  %v274 = vunpack.c.h.b16 %v23
  %v275 = vunpack.c.l.b16 %v24
  %v276 = vunpack.c.h.b16 %v24
  %v277 = vunpack.c.l.b16 %v25
  %v278 = vunpack.c.h.b16 %v25
  %v279 = vunpack.c.l.b16 %v26
  %v280 = vunpack.c.h.b16 %v26
  %v281 = vunpack.c.l.b16 %v27
  %v282 = vunpack.c.l.b16 %v28
  %v283 = vunpack.c.h.b16 %v28
  %v284 = vunpack.c.l.b16 %v29
  %v285 = vunpack.c.h.b16 %v29
  %v286 = vunpack.c.l.b16 %v30
  %v287 = vunpack.c.h.b16 %v30
  %v288 = vunpack.c.l.b16 %v31
  %v289 = vunpack.c.h.b16 %v31
  %v290 = vunpack.c.l.b16 %v32
  %v291 = vunpack.c.h.b16 %v32
  %v292 = vunpack.c.l.b16 %v33
  %v293 = vunpack.c.h.b16 %v33
  %v294 = vunpack.c.l.b16 %v34
  %v295 = vpack.c.b16 %v282, %v269
  %v296 = vpack.c.b16 %v283, %v270
  %v297 = vpack.c.b16 %v284, %v271
  %v298 = vpack.c.b16 %v285, %v272
  %v299 = vpack.c.b16 %v286, %v273
  %v300 = vpack.c.b16 %v287, %v274
  %v301 = vpack.c.b16 %v288, %v275
  %v302 = vpack.c.b16 %v289, %v276
  %v303 = vpack.c.b16 %v290, %v277
  %v304 = vpack.c.b16 %v291, %v278
  %v305 = vpack.c.b16 %v292, %v279
  %v306 = vpack.c.b16 %v293, %v280
  %v307 = vpack.c.b16 %v294, %v281
  %v529 = vunpack.c.l.b16 %v35
  %v530 = vunpack.c.h.b16 %v35
  %v531 = vunpack.c.l.b16 %v36
  %v532 = vunpack.c.h.b16 %v36
  %v533 = vunpack.c.l.b16 %v37
  %v534 = vunpack.c.h.b16 %v37
  %v535 = vunpack.c.l.b16 %v38
  %v536 = vunpack.c.h.b16 %v38
  %v537 = vunpack.c.l.b16 %v39
  %v538 = vunpack.c.h.b16 %v39
  %v539 = vunpack.c.l.b16 %v40
  %v540 = vunpack.c.h.b16 %v40
  %v541 = vunpack.c.l.b16 %v41
  %v542 = vunpack.c.h.b16 %v41
  %v543 = vunpack.c.l.b16 %v42
  %v544 = vunpack.c.h.b16 %v42
  %v545 = vunpack.c.l.b16 %v43
  %v546 = vunpack.c.h.b16 %v43
  %v547 = vunpack.c.l.b16 %v44
  %v548 = vunpack.c.h.b16 %v44
  %v549 = vunpack.c.l.b16 %v45
  %v550 = vunpack.c.h.b16 %v45
  %v551 = vunpack.c.l.b16 %v46
  %v552 = vunpack.c.h.b16 %v46
  %v553 = vunpack.c.l.b16 %v47
  %v554 = vunpack.c.h.b16 %v47
  %v555 = vunpack.c.l.b16 %v48
  %v556 = vunpack.c.h.b16 %v48
  %v557 = vunpack.c.l.b16 %v49
  %v558 = vunpack.c.h.b16 %v49
  %v559 = vunpack.c.l.b16 %v50
  %v560 = vunpack.c.h.b16 %v50
  %v561 = vunpack.c.l.b16 %v51
  %v562 = vunpack.c.h.b16 %v51
  %v563 = vunpack.c.l.b16 %v52
  %v564 = vunpack.c.h.b16 %v52
  %v565 = vunpack.c.l.b16 %v53
  %v566 = vunpack.c.h.b16 %v53
  %v567 = vunpack.c.l.b16 %v54
  %v568 = vunpack.c.h.b16 %v54
  %v569 = vunpack.c.l.b16 %v55
  %v570 = vunpack.c.h.b16 %v55
  %v571 = vunpack.c.l.b16 %v56
  %v572 = vunpack.c.h.b16 %v56
  %v573 = vunpack.c.l.b16 %v57
  %v574 = vunpack.c.h.b16 %v57
  %v575 = vunpack.c.l.b16 %v58
  %v576 = vunpack.c.h.b16 %v58
  %v577 = vunpack.c.l.b16 %v59
  %v578 = vunpack.c.h.b16 %v59
  %v579 = vunpack.c.l.b16 %v60
  %v580 = vunpack.c.h.b16 %v60
  %v581 = vunpack.c.l.b16 %v61
  %v582 = vunpack.c.h.b16 %v61
  %v583 = vunpack.c.l.b16 %v62
  %v584 = vunpack.c.h.b16 %v62
  %v585 = vunpack.c.l.b16 %v63
  %v586 = vunpack.c.h.b16 %v63
  %v587 = vunpack.c.l.b16 %v64
  %v588 = vunpack.c.h.b16 %v64
  %v589 = vunpack.c.l.b16 %v65
  %v590 = vunpack.c.h.b16 %v65
  %v591 = vunpack.c.l.b16 %v66
  %v592 = vunpack.c.h.b16 %v66
  %v593 = vunpack.c.l.b16 %v67
  %v594 = vunpack.c.h.b16 %v67
  %v595 = vunpack.c.l.b16 %v68
  %v596 = vunpack.c.h.b16 %v68
  %v597 = vunpack.c.l.b16 %v69
  %v598 = vunpack.c.h.b16 %v69
  %v599 = vunpack.c.l.b16 %v70
  %v600 = vunpack.c.h.b16 %v70
  %v601 = vunpack.c.l.b16 %v71
  %v602 = vunpack.c.h.b16 %v71
  %v603 = vunpack.c.l.b16 %v72
  %v604 = vunpack.c.h.b16 %v72
  %v605 = vunpack.c.l.b16 %v73
  %v606 = vunpack.c.h.b16 %v73
  %v607 = vunpack.c.l.b16 %v74
  %v608 = vunpack.c.h.b16 %v74
  %v609 = vunpack.c.l.b16 %v75
  %v610 = vunpack.c.h.b16 %v75
  %v611 = vunpack.c.l.b16 %v76
  %v612 = vunpack.c.h.b16 %v76
  %v613 = vunpack.c.l.b16 %v77
  %v614 = vunpack.c.h.b16 %v77
  %v615 = vunpack.c.l.b16 %v78
  %v616 = vunpack.c.h.b16 %v78
  %v617 = vunpack.c.l.b16 %v79
  %v618 = vunpack.c.h.b16 %v79
  %v619 = vunpack.c.l.b16 %v80
  %v620 = vunpack.c.h.b16 %v80
  %v621 = vunpack.c.l.b16 %v81
  %v622 = vunpack.c.h.b16 %v81
  %v623 = vunpack.c.l.b16 %v82
  %v624 = vunpack.c.h.b16 %v82
  %v625 = vunpack.c.l.b16 %v83
  %v626 = vunpack.c.h.b16 %v83
  %v627 = vunpack.c.l.b16 %v84
  %v628 = vunpack.c.h.b16 %v84
  %v629 = vunpack.c.l.b16 %v85
  %v630 = vunpack.c.h.b16 %v85
  %v631 = vunpack.c.l.b16 %v86
  %v632 = vunpack.c.h.b16 %v86
  %v633 = vunpack.c.l.b16 %v87
  %v634 = vunpack.c.h.b16 %v87
  %v635 = vunpack.c.l.b16 %v88
  %v636 = vunpack.c.h.b16 %v88
  %v637 = vunpack.c.l.b16 %v89
  %v638 = vunpack.c.h.b16 %v89
  %v639 = vunpack.c.l.b16 %v90
  %v640 = vunpack.c.h.b16 %v90
  %v641 = vunpack.c.l.b16 %v91
  %v642 = vunpack.c.h.b16 %v91
  %v643 = vunpack.c.l.b16 %v92
  %v644 = vunpack.c.h.b16 %v92
  %v645 = vunpack.c.l.b16 %v93
  %v646 = vunpack.c.h.b16 %v93
  %v647 = vunpack.c.l.b16 %v94
  %v648 = vunpack.c.h.b16 %v94
  %v649 = vunpack.c.l.b16 %v95
  %v650 = vunpack.c.h.b16 %v95
  %v651 = vunpack.c.l.b16 %v96
  %v652 = vunpack.c.h.b16 %v96
  %v653 = vunpack.c.l.b16 %v97
  %v654 = vunpack.c.h.b16 %v97
  %v655 = vunpack.c.l.b16 %v98
  %v656 = vunpack.c.h.b16 %v98
  %v657 = vunpack.c.l.b16 %v99
  %v658 = vunpack.c.h.b16 %v99
  %v659 = vunpack.c.l.b16 %v100
  %v660 = vunpack.c.h.b16 %v100
  %v661 = vunpack.c.l.b16 %v101
  %v662 = vunpack.c.h.b16 %v101
  %v663 = vunpack.c.l.b16 %v102
  %v664 = vunpack.c.h.b16 %v102
  %v665 = vunpack.c.l.b16 %v103
  %v666 = vunpack.c.h.b16 %v103
  %v667 = vunpack.c.l.b16 %v104
  %v668 = vunpack.c.h.b16 %v104
  %v669 = vunpack.c.l.b16 %v105
  %v670 = vunpack.c.h.b16 %v105
  %v671 = vunpack.c.l.b16 %v106
  %v672 = vunpack.c.h.b16 %v106
  %v673 = vunpack.c.l.b16 %v107
  %v674 = vunpack.c.h.b16 %v107
  %v675 = vunpack.c.l.b16 %v108
  %v676 = vunpack.c.h.b16 %v108
  %v677 = vunpack.c.l.b16 %v109
  %v678 = vunpack.c.h.b16 %v109
  %v679 = vunpack.c.l.b16 %v110
  %v680 = vunpack.c.h.b16 %v110
  %v681 = vunpack.c.l.b16 %v111
  %v682 = vunpack.c.h.b16 %v111
  %v683 = vunpack.c.l.b16 %v112
  %v684 = vunpack.c.h.b16 %v112
  %v685 = vunpack.c.l.b16 %v113
  %v686 = vunpack.c.h.b16 %v113
  %v687 = vunpack.c.l.b16 %v114
  %v688 = vunpack.c.h.b16 %v114
  %v689 = vunpack.c.l.b16 %v115
  %v690 = vunpack.c.h.b16 %v115
  %v691 = vunpack.c.l.b16 %v116
  %v692 = vunpack.c.h.b16 %v116
  %v693 = vunpack.c.l.b16 %v117
  %v694 = vunpack.c.h.b16 %v117
  %v695 = vunpack.c.l.b16 %v118
  %v696 = vunpack.c.h.b16 %v118
  %v697 = vunpack.c.l.b16 %v119
  %v698 = vunpack.c.h.b16 %v119
  %v699 = vunpack.c.l.b16 %v120
  %v700 = vunpack.c.h.b16 %v120
  %v701 = vunpack.c.l.b16 %v121
  %v702 = vunpack.c.h.b16 %v121
  %v703 = vunpack.c.l.b16 %v122
  %v704 = vunpack.c.h.b16 %v122
  %v705 = vunpack.c.l.b16 %v123
  %v706 = vunpack.c.h.b16 %v123
  %v707 = vunpack.c.l.b16 %v124
  %v708 = vunpack.c.h.b16 %v124
  %v709 = vunpack.c.l.b16 %v125
  %v710 = vunpack.c.h.b16 %v125
  %v711 = vunpack.c.l.b16 %v126
  %v712 = vunpack.c.h.b16 %v126
  %v713 = vunpack.c.l.b16 %v127
  %v714 = vunpack.c.h.b16 %v127
  %v715 = vunpack.c.l.b16 %v128
  %v716 = vunpack.c.h.b16 %v128
  %v717 = vunpack.c.l.b16 %v129
  %v718 = vunpack.c.h.b16 %v129
  %v719 = vunpack.c.l.b16 %v130
  %v720 = vunpack.c.h.b16 %v130
  %v721 = vunpack.c.l.b16 %v131
  %v722 = vunpack.c.h.b16 %v131
  %v723 = vunpack.c.l.b16 %v132
  %v724 = vunpack.c.h.b16 %v132
  %v725 = vunpack.c.l.b16 %v133
  %v726 = vunpack.c.h.b16 %v133
  %v727 = vunpack.c.l.b16 %v134
  %v728 = vunpack.c.h.b16 %v134
  %v729 = vunpack.c.l.b16 %v135
  %v730 = vunpack.c.h.b16 %v135
  %v731 = vunpack.c.l.b16 %v136
  %v732 = vunpack.c.h.b16 %v136
  %v733 = vunpack.c.l.b16 %v137
  %v734 = vunpack.c.h.b16 %v137
  %v735 = vunpack.c.l.b16 %v138
  %v736 = vunpack.c.h.b16 %v138
  %v737 = vunpack.c.l.b16 %v139
  %v738 = vunpack.c.h.b16 %v139
  %v739 = vunpack.c.l.b16 %v140
  %v740 = vunpack.c.h.b16 %v140
  %v741 = vunpack.c.l.b16 %v141
  %v742 = vunpack.c.h.b16 %v141
  %v743 = vunpack.c.l.b16 %v142
  %v744 = vunpack.c.h.b16 %v142
  %v745 = vunpack.c.l.b16 %v143
  %v746 = vunpack.c.h.b16 %v143
  %v747 = vunpack.c.l.b16 %v144
  %v748 = vunpack.c.h.b16 %v144
  %v749 = vunpack.c.l.b16 %v145
  %v750 = vunpack.c.h.b16 %v145
  %v751 = vunpack.c.l.b16 %v146
  %v752 = vunpack.c.h.b16 %v146
  %v753 = vunpack.c.l.b16 %v147
  %v754 = vunpack.c.h.b16 %v147
  %v755 = vunpack.c.l.b16 %v148
  %v756 = vunpack.c.h.b16 %v148
  %v757 = vunpack.c.l.b16 %v149
  %v758 = vunpack.c.h.b16 %v149
  %v759 = vunpack.c.l.b16 %v150
  %v760 = vunpack.c.h.b16 %v150
  %v761 = vunpack.c.l.b16 %v151
  %v762 = vunpack.c.h.b16 %v151
  %v763 = vunpack.c.l.b16 %v152
  %v764 = vunpack.c.h.b16 %v152
  %v765 = vunpack.c.l.b16 %v153
  %v766 = vunpack.c.h.b16 %v153
  %v767 = vunpack.c.l.b16 %v154
  %v768 = vunpack.c.h.b16 %v154
  %v769 = vunpack.c.l.b16 %v155
  %v770 = vunpack.c.h.b16 %v155
  %v771 = vunpack.c.l.b16 %v156
  %v772 = vunpack.c.h.b16 %v156
  %v773 = vunpack.c.l.b16 %v157
  %v774 = vunpack.c.h.b16 %v157
  %v775 = vunpack.c.l.b16 %v158
  %v776 = vunpack.c.h.b16 %v158
  %v777 = vunpack.c.l.b16 %v159
  %v778 = vunpack.c.h.b16 %v159
  %v779 = vunpack.c.l.b16 %v160
  %v780 = vunpack.c.h.b16 %v160
  %v781 = vunpack.c.l.b16 %v161
  %v782 = vunpack.c.h.b16 %v161
  %v783 = vunpack.c.l.b16 %v162
  %v784 = vunpack.c.h.b16 %v162
  %v785 = vunpack.c.l.b16 %v163
  %v786 = vunpack.c.h.b16 %v163
  %v787 = vunpack.c.l.b16 %v164
  %v788 = vunpack.c.h.b16 %v164
  %v789 = vunpack.c.l.b16 %v165
  %v790 = vunpack.c.h.b16 %v165
  %v791 = vunpack.c.l.b16 %v166
  %v792 = vunpack.c.h.b16 %v166
  %v793 = vunpack.c.l.b16 %v167
  %v794 = vunpack.c.h.b16 %v167
  %v795 = vunpack.c.l.b16 %v168
  %v796 = vunpack.c.h.b16 %v168
  %v797 = vunpack.c.l.b16 %v169
  %v798 = vunpack.c.h.b16 %v169
  %v799 = vunpack.c.l.b16 %v170
  %v800 = vunpack.c.h.b16 %v170
  %v801 = vunpack.c.l.b16 %v171
  %v802 = vunpack.c.h.b16 %v171
  %v803 = vunpack.c.l.b16 %v172
  %v804 = vunpack.c.h.b16 %v172
  %v805 = vunpack.c.l.b16 %v173
  %v806 = vunpack.c.h.b16 %v173
  %v807 = vunpack.c.l.b16 %v174
  %v808 = vunpack.c.h.b16 %v174
  %v809 = vunpack.c.l.b16 %v175
  %v810 = vunpack.c.h.b16 %v175
  %v811 = vunpack.c.l.b16 %v176
  %v812 = vunpack.c.h.b16 %v176
  %v813 = vunpack.c.l.b16 %v177
  %v814 = vunpack.c.h.b16 %v177
  %v815 = vunpack.c.l.b16 %v178
  %v816 = vunpack.c.h.b16 %v178
  %v817 = vunpack.c.l.b16 %v179
  %v818 = vunpack.c.h.b16 %v179
  %v819 = vunpack.c.l.b16 %v180
  %v820 = vunpack.c.h.b16 %v180
  %v821 = vunpack.c.l.b16 %v181
  %v822 = vunpack.c.h.b16 %v181
  %v823 = vunpack.c.l.b16 %v182
  %v824 = vunpack.c.h.b16 %v182
  %v825 = vunpack.c.l.b16 %v183
  %v826 = vunpack.c.h.b16 %v183
  %v827 = vunpack.c.l.b16 %v184
  %v828 = vunpack.c.h.b16 %v184
  %v829 = vunpack.c.l.b16 %v185
  %v830 = vunpack.c.h.b16 %v185
  %v831 = vunpack.c.l.b16 %v186
  %v832 = vunpack.c.h.b16 %v186
  %v833 = vunpack.c.l.b16 %v187
  %v834 = vunpack.c.h.b16 %v187
  %v835 = vunpack.c.l.b16 %v188
  %v836 = vunpack.c.h.b16 %v188
  %v837 = vunpack.c.l.b16 %v189
  %v838 = vunpack.c.h.b16 %v189
  %v839 = vunpack.c.l.b16 %v190
  %v840 = vunpack.c.h.b16 %v190
  %v841 = vunpack.c.l.b16 %v191
  %v842 = vunpack.c.h.b16 %v191
  %v843 = vunpack.c.l.b16 %v192
  %v844 = vunpack.c.h.b16 %v192
  %v845 = vunpack.c.l.b16 %v193
  %v846 = vunpack.c.h.b16 %v193
  %v847 = vunpack.c.l.b16 %v194
  %v848 = vunpack.c.h.b16 %v194
  %v849 = vunpack.c.l.b16 %v195
  %v850 = vunpack.c.h.b16 %v195
  %v851 = vunpack.c.l.b16 %v196
  %v852 = vunpack.c.h.b16 %v196
  %v853 = vunpack.c.l.b16 %v197
  %v854 = vunpack.c.h.b16 %v197
  %v855 = vunpack.c.l.b16 %v198
  %v856 = vunpack.c.h.b16 %v198
  %v857 = vunpack.c.l.b16 %v199
  %v858 = vunpack.c.h.b16 %v199
  %v859 = vunpack.c.l.b16 %v200
  %v860 = vunpack.c.h.b16 %v200
  %v861 = vunpack.c.l.b16 %v201
  %v862 = vunpack.c.h.b16 %v201
  %v863 = vunpack.c.l.b16 %v202
  %v864 = vunpack.c.h.b16 %v202
  %v865 = vunpack.c.l.b16 %v203
  %v866 = vunpack.c.h.b16 %v203
  %v867 = vunpack.c.l.b16 %v204
  %v868 = vunpack.c.h.b16 %v204
  %v869 = vunpack.c.l.b16 %v205
  %v870 = vunpack.c.h.b16 %v205
  %v871 = vunpack.c.l.b16 %v206
  %v872 = vunpack.c.h.b16 %v206
  %v873 = vunpack.c.l.b16 %v207
  %v874 = vunpack.c.h.b16 %v207
  %v875 = vunpack.c.l.b16 %v208
  %v876 = vunpack.c.h.b16 %v208
  %v877 = vunpack.c.l.b16 %v209
  %v878 = vunpack.c.h.b16 %v209
  %v879 = vunpack.c.l.b16 %v210
  %v880 = vunpack.c.h.b16 %v210
  %v881 = vunpack.c.l.b16 %v211
  %v882 = vunpack.c.h.b16 %v211
  %v883 = vunpack.c.l.b16 %v212
  %v884 = vunpack.c.h.b16 %v212
  %v885 = vunpack.c.l.b16 %v213
  %v886 = vunpack.c.h.b16 %v213
  %v887 = vunpack.c.l.b16 %v214
  %v888 = vunpack.c.h.b16 %v214
  %v889 = vunpack.c.l.b16 %v215
  %v890 = vunpack.c.h.b16 %v215
  %v891 = vunpack.c.l.b16 %v216
  %v892 = vunpack.c.h.b16 %v216
  %v893 = vunpack.c.l.b16 %v217
  %v894 = vunpack.c.h.b16 %v217
  %v895 = vunpack.c.l.b16 %v218
  %v896 = vunpack.c.h.b16 %v218
  %v897 = vunpack.c.l.b16 %v219
  %v898 = vunpack.c.h.b16 %v219
  %v899 = vunpack.c.l.b16 %v220
  %v900 = vunpack.c.h.b16 %v220
  %v901 = vunpack.c.l.b16 %v221
  %v902 = vunpack.c.h.b16 %v221
  %v903 = vunpack.c.l.b16 %v222
  %v904 = vunpack.c.h.b16 %v222
  %v905 = vunpack.c.l.b16 %v223
  %v906 = vunpack.c.h.b16 %v223
  %v907 = vunpack.c.l.b16 %v224
  %v908 = vunpack.c.h.b16 %v224
  %v909 = vunpack.c.l.b16 %v225
  %v910 = vunpack.c.h.b16 %v225
  %v911 = vunpack.c.l.b16 %v226
  %v912 = vunpack.c.h.b16 %v226
  %v913 = vunpack.c.l.b16 %v227
  %v914 = vunpack.c.h.b16 %v227
  %v915 = vunpack.c.l.b16 %v228
  %v916 = vunpack.c.h.b16 %v228
  %v917 = vunpack.c.l.b16 %v229
  %v918 = vunpack.c.h.b16 %v229
  %v919 = vunpack.c.l.b16 %v230
  %v920 = vunpack.c.h.b16 %v230
  %v921 = vunpack.c.l.b16 %v231
  %v922 = vunpack.c.h.b16 %v231
  %v923 = vunpack.c.l.b16 %v232
  %v924 = vunpack.c.h.b16 %v232
  %v925 = vunpack.c.l.b16 %v233
  %v926 = vunpack.c.h.b16 %v233
  %v927 = vunpack.c.l.b16 %v234
  %v928 = vunpack.c.h.b16 %v234
  %v929 = vunpack.c.l.b16 %v235
  %v930 = vunpack.c.h.b16 %v235
  %v931 = vunpack.c.l.b16 %v236
  %v932 = vunpack.c.h.b16 %v236
  %v933 = vunpack.c.l.b16 %v237
  %v934 = vunpack.c.h.b16 %v237
  %v935 = vunpack.c.l.b16 %v238
  %v936 = vunpack.c.h.b16 %v238
  %v937 = vunpack.c.l.b16 %v239
  %v938 = vunpack.c.h.b16 %v239
  %v939 = vunpack.c.l.b16 %v240
  %v940 = vunpack.c.h.b16 %v240
  %v941 = vunpack.c.l.b16 %v241
  %v942 = vunpack.c.h.b16 %v241
  %v943 = vunpack.c.l.b16 %v242
  %v944 = vunpack.c.h.b16 %v242
  %v945 = vpack.c.b16 %v531, %v529
  %v946 = vpack.c.b16 %v532, %v530
  %v947 = vpack.c.b16 %v535, %v533
  %v948 = vpack.c.b16 %v536, %v534
  %v949 = vpack.c.b16 %v539, %v537
  %v950 = vpack.c.b16 %v540, %v538
  %v951 = vpack.c.b16 %v543, %v541
  %v952 = vpack.c.b16 %v544, %v542
  %v953 = vpack.c.b16 %v547, %v545
  %v954 = vpack.c.b16 %v548, %v546
  %v955 = vpack.c.b16 %v551, %v549
  %v956 = vpack.c.b16 %v552, %v550
  %v957 = vpack.c.b16 %v555, %v553
  %v958 = vpack.c.b16 %v556, %v554
  %v959 = vpack.c.b16 %v559, %v557
  %v960 = vpack.c.b16 %v560, %v558
  %v961 = vpack.c.b16 %v563, %v561
  %v962 = vpack.c.b16 %v564, %v562
  %v963 = vpack.c.b16 %v567, %v565
  %v964 = vpack.c.b16 %v568, %v566
  %v965 = vpack.c.b16 %v571, %v569
  %v966 = vpack.c.b16 %v572, %v570
  %v967 = vpack.c.b16 %v575, %v573
  %v968 = vpack.c.b16 %v576, %v574
  %v969 = vpack.c.b16 %v579, %v577
  %v970 = vpack.c.b16 %v580, %v578
  %v971 = vpack.c.b16 %v583, %v581
  %v972 = vpack.c.b16 %v584, %v582
  %v973 = vpack.c.b16 %v587, %v585
  %v974 = vpack.c.b16 %v588, %v586
  %v975 = vpack.c.b16 %v591, %v589
  %v976 = vpack.c.b16 %v592, %v590
  %v977 = vpack.c.b16 %v595, %v593
  %v978 = vpack.c.b16 %v596, %v594
  %v979 = vpack.c.b16 %v599, %v597
  %v980 = vpack.c.b16 %v600, %v598
  %v981 = vpack.c.b16 %v603, %v601
  %v982 = vpack.c.b16 %v604, %v602
  %v983 = vpack.c.b16 %v607, %v605
  %v984 = vpack.c.b16 %v608, %v606
  %v985 = vpack.c.b16 %v611, %v609
  %v986 = vpack.c.b16 %v612, %v610
  %v987 = vpack.c.b16 %v615, %v613
  %v988 = vpack.c.b16 %v616, %v614
  %v989 = vpack.c.b16 %v619, %v617
  %v990 = vpack.c.b16 %v620, %v618
  %v991 = vpack.c.b16 %v623, %v621
  %v992 = vpack.c.b16 %v624, %v622
  %v993 = vpack.c.b16 %v627, %v625
  %v994 = vpack.c.b16 %v628, %v626
  %v995 = vpack.c.b16 %v631, %v629
  %v996 = vpack.c.b16 %v632, %v630
  %v997 = vpack.c.b16 %v635, %v633
  %v998 = vpack.c.b16 %v636, %v634
  %v999 = vpack.c.b16 %v639, %v637
  %v1000 = vpack.c.b16 %v640, %v638
  %v1001 = vpack.c.b16 %v643, %v641
  %v1002 = vpack.c.b16 %v644, %v642
  %v1003 = vpack.c.b16 %v647, %v645
  %v1004 = vpack.c.b16 %v648, %v646
  %v1005 = vpack.c.b16 %v651, %v649
  %v1006 = vpack.c.b16 %v652, %v650
  %v1007 = vpack.c.b16 %v655, %v653
  %v1008 = vpack.c.b16 %v656, %v654
  %v1009 = vpack.c.b16 %v659, %v657
  %v1010 = vpack.c.b16 %v660, %v658
  %v1011 = vpack.c.b16 %v663, %v661
  %v1012 = vpack.c.b16 %v664, %v662
  %v1013 = vpack.c.b16 %v667, %v665
  %v1014 = vpack.c.b16 %v668, %v666
  %v1015 = vpack.c.b16 %v671, %v669
  %v1016 = vpack.c.b16 %v672, %v670
  %v1017 = vpack.c.b16 %v675, %v673
  %v1018 = vpack.c.b16 %v676, %v674
  %v1019 = vpack.c.b16 %v679, %v677
  %v1020 = vpack.c.b16 %v680, %v678
  %v1021 = vpack.c.b16 %v683, %v681
  %v1022 = vpack.c.b16 %v684, %v682
  %v1023 = vpack.c.b16 %v687, %v685
  %v1024 = vpack.c.b16 %v688, %v686
  %v1025 = vpack.c.b16 %v691, %v689
  %v1026 = vpack.c.b16 %v692, %v690
  %v1027 = vpack.c.b16 %v695, %v693
  %v1028 = vpack.c.b16 %v696, %v694
  %v1029 = vpack.c.b16 %v699, %v697
  %v1030 = vpack.c.b16 %v700, %v698
  %v1031 = vpack.c.b16 %v703, %v701
  %v1032 = vpack.c.b16 %v704, %v702
  %v1033 = vpack.c.b16 %v707, %v705
  %v1034 = vpack.c.b16 %v708, %v706
  %v1035 = vpack.c.b16 %v711, %v709
  %v1036 = vpack.c.b16 %v712, %v710
  %v1037 = vpack.c.b16 %v715, %v713
  %v1038 = vpack.c.b16 %v716, %v714
  %v1039 = vpack.c.b16 %v719, %v717
  %v1040 = vpack.c.b16 %v720, %v718
  %v1041 = vpack.c.b16 %v723, %v721
  %v1042 = vpack.c.b16 %v724, %v722
  %v1043 = vpack.c.b16 %v727, %v725
  %v1044 = vpack.c.b16 %v728, %v726
  %v1045 = vpack.c.b16 %v731, %v729
  %v1046 = vpack.c.b16 %v732, %v730
  %v1047 = vpack.c.b16 %v735, %v733
  %v1048 = vpack.c.b16 %v736, %v734
  %v1049 = vpack.c.b16 %v739, %v737
  %v1050 = vpack.c.b16 %v740, %v738
  %v1051 = vpack.c.b16 %v743, %v741
  %v1052 = vpack.c.b16 %v744, %v742
  %v1053 = vpack.c.b16 %v747, %v745
  %v1054 = vpack.c.b16 %v748, %v746
  %v1055 = vpack.c.b16 %v751, %v749
  %v1056 = vpack.c.b16 %v752, %v750
  %v1057 = vpack.c.b16 %v755, %v753
  %v1058 = vpack.c.b16 %v756, %v754
  %v1059 = vpack.c.b16 %v759, %v757
  %v1060 = vpack.c.b16 %v760, %v758
  %v1061 = vpack.c.b16 %v763, %v761
  %v1062 = vpack.c.b16 %v764, %v762
  %v1063 = vpack.c.b16 %v767, %v765
  %v1064 = vpack.c.b16 %v768, %v766
  %v1065 = vpack.c.b16 %v771, %v769
  %v1066 = vpack.c.b16 %v772, %v770
  %v1067 = vpack.c.b16 %v775, %v773
  %v1068 = vpack.c.b16 %v776, %v774
  %v1069 = vpack.c.b16 %v779, %v777
  %v1070 = vpack.c.b16 %v780, %v778
  %v1071 = vpack.c.b16 %v783, %v781
  %v1072 = vpack.c.b16 %v784, %v782
  %v1073 = vpack.c.b16 %v787, %v785
  %v1074 = vpack.c.b16 %v788, %v786
  %v1075 = vpack.c.b16 %v791, %v789
  %v1076 = vpack.c.b16 %v792, %v790
  %v1077 = vpack.c.b16 %v795, %v793
  %v1078 = vpack.c.b16 %v796, %v794
  %v1079 = vpack.c.b16 %v799, %v797
  %v1080 = vpack.c.b16 %v800, %v798
  %v1081 = vpack.c.b16 %v803, %v801
  %v1082 = vpack.c.b16 %v804, %v802
  %v1083 = vpack.c.b16 %v807, %v805
  %v1084 = vpack.c.b16 %v808, %v806
  %v1085 = vpack.c.b16 %v811, %v809
  %v1086 = vpack.c.b16 %v812, %v810
  %v1087 = vpack.c.b16 %v815, %v813
  %v1088 = vpack.c.b16 %v816, %v814
  %v1089 = vpack.c.b16 %v819, %v817
  %v1090 = vpack.c.b16 %v820, %v818
  %v1091 = vpack.c.b16 %v823, %v821
  %v1092 = vpack.c.b16 %v824, %v822
  %v1093 = vpack.c.b16 %v827, %v825
  %v1094 = vpack.c.b16 %v828, %v826
  %v1095 = vpack.c.b16 %v831, %v829
  %v1096 = vpack.c.b16 %v832, %v830
  %v1097 = vpack.c.b16 %v835, %v833
  %v1098 = vpack.c.b16 %v836, %v834
  %v1099 = vpack.c.b16 %v839, %v837
  %v1100 = vpack.c.b16 %v840, %v838
  %v1101 = vpack.c.b16 %v843, %v841
  %v1102 = vpack.c.b16 %v844, %v842
  %v1103 = vpack.c.b16 %v847, %v845
  %v1104 = vpack.c.b16 %v848, %v846
  %v1105 = vpack.c.b16 %v851, %v849
  %v1106 = vpack.c.b16 %v852, %v850
  %v1107 = vpack.c.b16 %v855, %v853
  %v1108 = vpack.c.b16 %v856, %v854
  %v1109 = vpack.c.b16 %v859, %v857
  %v1110 = vpack.c.b16 %v860, %v858
  %v1111 = vpack.c.b16 %v863, %v861
  %v1112 = vpack.c.b16 %v864, %v862
  %v1113 = vpack.c.b16 %v867, %v865
  %v1114 = vpack.c.b16 %v868, %v866
  %v1115 = vpack.c.b16 %v871, %v869
  %v1116 = vpack.c.b16 %v872, %v870
  %v1117 = vpack.c.b16 %v875, %v873
  %v1118 = vpack.c.b16 %v876, %v874
  %v1119 = vpack.c.b16 %v879, %v877
  %v1120 = vpack.c.b16 %v880, %v878
  %v1121 = vpack.c.b16 %v883, %v881
  %v1122 = vpack.c.b16 %v884, %v882
  %v1123 = vpack.c.b16 %v887, %v885
  %v1124 = vpack.c.b16 %v888, %v886
  %v1125 = vpack.c.b16 %v891, %v889
  %v1126 = vpack.c.b16 %v892, %v890
  %v1127 = vpack.c.b16 %v895, %v893
  %v1128 = vpack.c.b16 %v896, %v894
  %v1129 = vpack.c.b16 %v899, %v897
  %v1130 = vpack.c.b16 %v900, %v898
  %v1131 = vpack.c.b16 %v903, %v901
  %v1132 = vpack.c.b16 %v904, %v902
  %v1133 = vpack.c.b16 %v907, %v905
  %v1134 = vpack.c.b16 %v908, %v906
  %v1135 = vpack.c.b16 %v911, %v909
  %v1136 = vpack.c.b16 %v912, %v910
  %v1137 = vpack.c.b16 %v915, %v913
  %v1138 = vpack.c.b16 %v916, %v914
  %v1139 = vpack.c.b16 %v919, %v917
  %v1140 = vpack.c.b16 %v920, %v918
  %v1141 = vpack.c.b16 %v923, %v921
  %v1142 = vpack.c.b16 %v924, %v922
  %v1143 = vpack.c.b16 %v927, %v925
  %v1144 = vpack.c.b16 %v928, %v926
  %v1145 = vpack.c.b16 %v931, %v929
  %v1146 = vpack.c.b16 %v932, %v930
  %v1147 = vpack.c.b16 %v935, %v933
  %v1148 = vpack.c.b16 %v936, %v934
  %v1149 = vpack.c.b16 %v939, %v937
  %v1150 = vpack.c.b16 %v940, %v938
  %v1151 = vpack.c.b16 %v943, %v941
  %v1152 = vpack.c.b16 %v944, %v942
  %1361 = vmatprep.subr.bf16.mxu0 %v946
  %1362 = vmatpush1.bf16.msra.mxu0 %v945
  %1363 = vmatprep.subr.bf16.mxu0 %v948
  %1364 = vmatpush1.bf16.msra.mxu0 %v947
  %1365 = vmatprep.subr.bf16.mxu0 %v950
  %1366 = vmatpush1.bf16.msra.mxu0 %v949
  %1367 = vmatprep.subr.bf16.mxu0 %v952
  %1368 = vmatpush1.bf16.msra.mxu0 %v951
  %1369 = vmatprep.subr.bf16.mxu0 %v954
  %1370 = vmatpush1.bf16.msra.mxu0 %v953
  %1371 = vmatprep.subr.bf16.mxu0 %v956
  %1372 = vmatpush1.bf16.msra.mxu0 %v955
  %1373 = vmatprep.subr.bf16.mxu0 %v958
  %1374 = vmatpush1.bf16.msra.mxu0 %v957
  %1375 = vmatprep.subr.bf16.mxu0 %v960
  %1376 = vmatpush1.bf16.msra.mxu0 %v959
  %1377 = vmatprep.subr.bf16.mxu0 %v962
  %1378 = vmatpush1.bf16.msra.mxu0 %v961
  %1379 = vmatprep.subr.bf16.mxu0 %v964
  %1380 = vmatpush1.bf16.msra.mxu0 %v963
  %1381 = vmatprep.subr.bf16.mxu0 %v966
  %1382 = vmatpush1.bf16.msra.mxu0 %v965
  %1383 = vmatprep.subr.bf16.mxu0 %v968
  %1384 = vmatpush1.bf16.msra.mxu0 %v967
  %1385 = vmatprep.subr.bf16.mxu0 %v970
  %1386 = vmatpush1.bf16.msra.mxu0 %v969
  %1387 = vmatprep.subr.bf16.mxu0 %v972
  %1388 = vmatpush1.bf16.msra.mxu0 %v971
  %1389 = vmatprep.subr.bf16.mxu0 %v974
  %1390 = vmatpush1.bf16.msra.mxu0 %v973
  %1391 = vmatprep.subr.bf16.mxu0 %v976
  %1392 = vmatpush1.bf16.msra.mxu0 %v975
  %1393 = vmatprep.mubr.bf16.mxu0 %v296
  %1394 = vmatmul.mubr.bf16.gmra.mrb[0].mxu0 %v295
  %v1395 = vpop.f32.mrb[0].mxu0
  %v1396 = vadd.f32 %v248, %v1395
  %v1397 = vpop.f32.mrb[0].mxu0
  %v1398 = vadd.f32 %v252, %v1397
  %v1399 = vpop.f32.mrb[0].mxu0
  %v1400 = vadd.f32 %v248, %v1399
  %v1401 = vpop.f32.mrb[0].mxu0
  %v1402 = vadd.f32 %v252, %v1401
  %1403 = vdwg.mxu0
  %1404 = vmatprep.subr.bf16.mxu0 %v978
  %1405 = vmatpush1.bf16.msra.mxu0 %v977
  %1406 = vmatprep.subr.bf16.mxu0 %v980
  %1407 = vmatpush1.bf16.msra.mxu0 %v979
  %1408 = vmatprep.subr.bf16.mxu0 %v982
  %1409 = vmatpush1.bf16.msra.mxu0 %v981
  %1410 = vmatprep.subr.bf16.mxu0 %v984
  %1411 = vmatpush1.bf16.msra.mxu0 %v983
  %1412 = vmatprep.subr.bf16.mxu0 %v986
  %1413 = vmatpush1.bf16.msra.mxu0 %v985
  %1414 = vmatprep.subr.bf16.mxu0 %v988
  %1415 = vmatpush1.bf16.msra.mxu0 %v987
  %1416 = vmatprep.subr.bf16.mxu0 %v990
  %1417 = vmatpush1.bf16.msra.mxu0 %v989
  %1418 = vmatprep.subr.bf16.mxu0 %v992
  %1419 = vmatpush1.bf16.msra.mxu0 %v991
  %1420 = vmatprep.subr.bf16.mxu0 %v994
  %1421 = vmatpush1.bf16.msra.mxu0 %v993
  %1422 = vmatprep.subr.bf16.mxu0 %v996
  %1423 = vmatpush1.bf16.msra.mxu0 %v995
  %1424 = vmatprep.subr.bf16.mxu0 %v998
  %1425 = vmatpush1.bf16.msra.mxu0 %v997
  %1426 = vmatprep.subr.bf16.mxu0 %v1000
  %1427 = vmatpush1.bf16.msra.mxu0 %v999
  %1428 = vmatprep.subr.bf16.mxu0 %v1002
  %1429 = vmatpush1.bf16.msra.mxu0 %v1001
  %1430 = vmatprep.subr.bf16.mxu0 %v1004
  %1431 = vmatpush1.bf16.msra.mxu0 %v1003
  %1432 = vmatprep.subr.bf16.mxu0 %v1006
  %1433 = vmatpush1.bf16.msra.mxu0 %v1005
  %1434 = vmatprep.subr.bf16.mxu0 %v1008
  %1435 = vmatpush1.bf16.msra.mxu0 %v1007
  %1436 = vmatprep.mubr.bf16.mxu0 %v298
  %1437 = vmatmul.mubr.bf16.gmra.mrb[0].mxu0 %v297
  %v1438 = vpop.f32.mrb[0].mxu0
  %v1439 = vadd.f32 %v1396, %v1438
  %v1440 = vpop.f32.mrb[0].mxu0
  %v1441 = vadd.f32 %v1398, %v1440
  %v1442 = vpop.f32.mrb[0].mxu0
  %v1443 = vadd.f32 %v1400, %v1442
  %v1444 = vpop.f32.mrb[0].mxu0
  %v1445 = vadd.f32 %v1402, %v1444
  %1446 = vdwg.mxu0
  %1447 = vmatprep.subr.bf16.mxu0 %v1010
  %1448 = vmatpush1.bf16.msra.mxu0 %v1009
  %1449 = vmatprep.subr.bf16.mxu0 %v1012
  %1450 = vmatpush1.bf16.msra.mxu0 %v1011
  %1451 = vmatprep.subr.bf16.mxu0 %v1014
  %1452 = vmatpush1.bf16.msra.mxu0 %v1013
  %1453 = vmatprep.subr.bf16.mxu0 %v1016
  %1454 = vmatpush1.bf16.msra.mxu0 %v1015
  %1455 = vmatprep.subr.bf16.mxu0 %v1018
  %1456 = vmatpush1.bf16.msra.mxu0 %v1017
  %1457 = vmatprep.subr.bf16.mxu0 %v1020
  %1458 = vmatpush1.bf16.msra.mxu0 %v1019
  %1459 = vmatprep.subr.bf16.mxu0 %v1022
  %1460 = vmatpush1.bf16.msra.mxu0 %v1021
  %1461 = vmatprep.subr.bf16.mxu0 %v1024
  %1462 = vmatpush1.bf16.msra.mxu0 %v1023
  %1463 = vmatprep.subr.bf16.mxu0 %v1026
  %1464 = vmatpush1.bf16.msra.mxu0 %v1025
  %1465 = vmatprep.subr.bf16.mxu0 %v1028
  %1466 = vmatpush1.bf16.msra.mxu0 %v1027
  %1467 = vmatprep.subr.bf16.mxu0 %v1030
  %1468 = vmatpush1.bf16.msra.mxu0 %v1029
  %1469 = vmatprep.subr.bf16.mxu0 %v1032
  %1470 = vmatpush1.bf16.msra.mxu0 %v1031
  %1471 = vmatprep.subr.bf16.mxu0 %v1034
  %1472 = vmatpush1.bf16.msra.mxu0 %v1033
  %1473 = vmatprep.subr.bf16.mxu0 %v1036
  %1474 = vmatpush1.bf16.msra.mxu0 %v1035
  %1475 = vmatprep.subr.bf16.mxu0 %v1038
  %1476 = vmatpush1.bf16.msra.mxu0 %v1037
  %1477 = vmatprep.subr.bf16.mxu0 %v1040
  %1478 = vmatpush1.bf16.msra.mxu0 %v1039
  %1479 = vmatprep.mubr.bf16.mxu0 %v300
  %1480 = vmatmul.mubr.bf16.gmra.mrb[0].mxu0 %v299
  %v1481 = vpop.f32.mrb[0].mxu0
  %v1482 = vadd.f32 %v1439, %v1481
  %v1483 = vpop.f32.mrb[0].mxu0
  %v1484 = vadd.f32 %v1441, %v1483
  %v1485 = vpop.f32.mrb[0].mxu0
  %v1486 = vadd.f32 %v1443, %v1485
  %v1487 = vpop.f32.mrb[0].mxu0
  %v1488 = vadd.f32 %v1445, %v1487
  %1489 = vdwg.mxu0
  %1490 = vmatprep.subr.bf16.mxu0 %v1042
  %1491 = vmatpush1.bf16.msra.mxu0 %v1041
  %1492 = vmatprep.subr.bf16.mxu0 %v1044
  %1493 = vmatpush1.bf16.msra.mxu0 %v1043
  %1494 = vmatprep.subr.bf16.mxu0 %v1046
  %1495 = vmatpush1.bf16.msra.mxu0 %v1045
  %1496 = vmatprep.subr.bf16.mxu0 %v1048
  %1497 = vmatpush1.bf16.msra.mxu0 %v1047
  %1498 = vmatprep.subr.bf16.mxu0 %v1050
  %1499 = vmatpush1.bf16.msra.mxu0 %v1049
  %1500 = vmatprep.subr.bf16.mxu0 %v1052
  %1501 = vmatpush1.bf16.msra.mxu0 %v1051
  %1502 = vmatprep.subr.bf16.mxu0 %v1054
  %1503 = vmatpush1.bf16.msra.mxu0 %v1053
  %1504 = vmatprep.subr.bf16.mxu0 %v1056
  %1505 = vmatpush1.bf16.msra.mxu0 %v1055
  %1506 = vmatprep.subr.bf16.mxu0 %v1058
  %1507 = vmatpush1.bf16.msra.mxu0 %v1057
  %1508 = vmatprep.subr.bf16.mxu0 %v1060
  %1509 = vmatpush1.bf16.msra.mxu0 %v1059
  %1510 = vmatprep.subr.bf16.mxu0 %v1062
  %1511 = vmatpush1.bf16.msra.mxu0 %v1061
  %1512 = vmatprep.subr.bf16.mxu0 %v1064
  %1513 = vmatpush1.bf16.msra.mxu0 %v1063
  %1514 = vmatprep.subr.bf16.mxu0 %v1066
  %1515 = vmatpush1.bf16.msra.mxu0 %v1065
  %1516 = vmatprep.subr.bf16.mxu0 %v1068
  %1517 = vmatpush1.bf16.msra.mxu0 %v1067
  %1518 = vmatprep.subr.bf16.mxu0 %v1070
  %1519 = vmatpush1.bf16.msra.mxu0 %v1069
  %1520 = vmatprep.subr.bf16.mxu0 %v1072
  %1521 = vmatpush1.bf16.msra.mxu0 %v1071
  %1522 = vmatprep.mubr.bf16.mxu0 %v302
  %1523 = vmatmul.mubr.bf16.gmra.mrb[0].mxu0 %v301
  %v1524 = vpop.f32.mrb[0].mxu0
  %v1525 = vadd.f32 %v1482, %v1524
  %v1526 = vpop.f32.mrb[0].mxu0
  %v1527 = vadd.f32 %v1484, %v1526
  %v1528 = vpop.f32.mrb[0].mxu0
  %v1529 = vadd.f32 %v1486, %v1528
  %v1530 = vpop.f32.mrb[0].mxu0
  %v1531 = vadd.f32 %v1488, %v1530
  %1532 = vdwg.mxu0
  %1533 = vmatprep.subr.bf16.mxu0 %v1074
  %1534 = vmatpush1.bf16.msra.mxu0 %v1073
  %1535 = vmatprep.subr.bf16.mxu0 %v1076
  %1536 = vmatpush1.bf16.msra.mxu0 %v1075
  %1537 = vmatprep.subr.bf16.mxu0 %v1078
  %1538 = vmatpush1.bf16.msra.mxu0 %v1077
  %1539 = vmatprep.subr.bf16.mxu0 %v1080
  %1540 = vmatpush1.bf16.msra.mxu0 %v1079
  %1541 = vmatprep.subr.bf16.mxu0 %v1082
  %1542 = vmatpush1.bf16.msra.mxu0 %v1081
  %1543 = vmatprep.subr.bf16.mxu0 %v1084
  %1544 = vmatpush1.bf16.msra.mxu0 %v1083
  %1545 = vmatprep.subr.bf16.mxu0 %v1086
  %1546 = vmatpush1.bf16.msra.mxu0 %v1085
  %1547 = vmatprep.subr.bf16.mxu0 %v1088
  %1548 = vmatpush1.bf16.msra.mxu0 %v1087
  %1549 = vmatprep.subr.bf16.mxu0 %v1090
  %1550 = vmatpush1.bf16.msra.mxu0 %v1089
  %1551 = vmatprep.subr.bf16.mxu0 %v1092
  %1552 = vmatpush1.bf16.msra.mxu0 %v1091
  %1553 = vmatprep.subr.bf16.mxu0 %v1094
  %1554 = vmatpush1.bf16.msra.mxu0 %v1093
  %1555 = vmatprep.subr.bf16.mxu0 %v1096
  %1556 = vmatpush1.bf16.msra.mxu0 %v1095
  %1557 = vmatprep.subr.bf16.mxu0 %v1098
  %1558 = vmatpush1.bf16.msra.mxu0 %v1097
  %1559 = vmatprep.subr.bf16.mxu0 %v1100
  %1560 = vmatpush1.bf16.msra.mxu0 %v1099
  %1561 = vmatprep.subr.bf16.mxu0 %v1102
  %1562 = vmatpush1.bf16.msra.mxu0 %v1101
  %1563 = vmatprep.subr.bf16.mxu0 %v1104
  %1564 = vmatpush1.bf16.msra.mxu0 %v1103
  %1565 = vmatprep.mubr.bf16.mxu0 %v304
  %1566 = vmatmul.mubr.bf16.gmra.mrb[0].mxu0 %v303
  %v1567 = vpop.f32.mrb[0].mxu0
  %v1568 = vadd.f32 %v1525, %v1567
  %v1569 = vpop.f32.mrb[0].mxu0
  %v1570 = vadd.f32 %v1527, %v1569
  %v1571 = vpop.f32.mrb[0].mxu0
  %v1572 = vadd.f32 %v1529, %v1571
  %v1573 = vpop.f32.mrb[0].mxu0
  %v1574 = vadd.f32 %v1531, %v1573
  %1575 = vdwg.mxu0
  %1576 = vmatprep.subr.bf16.mxu0 %v1106
  %1577 = vmatpush1.bf16.msra.mxu0 %v1105
  %1578 = vmatprep.subr.bf16.mxu0 %v1108
  %1579 = vmatpush1.bf16.msra.mxu0 %v1107
  %1580 = vmatprep.subr.bf16.mxu0 %v1110
  %1581 = vmatpush1.bf16.msra.mxu0 %v1109
  %1582 = vmatprep.subr.bf16.mxu0 %v1112
  %1583 = vmatpush1.bf16.msra.mxu0 %v1111
  %1584 = vmatprep.subr.bf16.mxu0 %v1114
  %1585 = vmatpush1.bf16.msra.mxu0 %v1113
  %1586 = vmatprep.subr.bf16.mxu0 %v1116
  %1587 = vmatpush1.bf16.msra.mxu0 %v1115
  %1588 = vmatprep.subr.bf16.mxu0 %v1118
  %1589 = vmatpush1.bf16.msra.mxu0 %v1117
  %1590 = vmatprep.subr.bf16.mxu0 %v1120
  %1591 = vmatpush1.bf16.msra.mxu0 %v1119
  %1592 = vmatprep.subr.bf16.mxu0 %v1122
  %1593 = vmatpush1.bf16.msra.mxu0 %v1121
  %1594 = vmatprep.subr.bf16.mxu0 %v1124
  %1595 = vmatpush1.bf16.msra.mxu0 %v1123
  %1596 = vmatprep.subr.bf16.mxu0 %v1126
  %1597 = vmatpush1.bf16.msra.mxu0 %v1125
  %1598 = vmatprep.subr.bf16.mxu0 %v1128
  %1599 = vmatpush1.bf16.msra.mxu0 %v1127
  %1600 = vmatprep.subr.bf16.mxu0 %v1130
  %1601 = vmatpush1.bf16.msra.mxu0 %v1129
  %1602 = vmatprep.subr.bf16.mxu0 %v1132
  %1603 = vmatpush1.bf16.msra.mxu0 %v1131
  %1604 = vmatprep.subr.bf16.mxu0 %v1134
  %1605 = vmatpush1.bf16.msra.mxu0 %v1133
  %1606 = vmatprep.subr.bf16.mxu0 %v1136
  %1607 = vmatpush1.bf16.msra.mxu0 %v1135
  %1608 = vmatprep.mubr.bf16.mxu0 %v306
  %1609 = vmatmul.mubr.bf16.gmra.mrb[0].mxu0 %v305
  %v1610 = vpop.f32.mrb[0].mxu0
  %v1611 = vadd.f32 %v1568, %v1610
  %v1612 = vpop.f32.mrb[0].mxu0
  %v1613 = vadd.f32 %v1570, %v1612
  %v1614 = vpop.f32.mrb[0].mxu0
  %v1615 = vadd.f32 %v1572, %v1614
  %v1616 = vpop.f32.mrb[0].mxu0
  %v1617 = vadd.f32 %v1574, %v1616
  %1618 = vdwg.mxu0
  %1619 = vmatprep.subr.bf16.mxu0 %v1138
  %1620 = vmatpush1.bf16.msra.mxu0 %v1137
  %1621 = vmatprep.subr.bf16.mxu0 %v1140
  %1622 = vmatpush1.bf16.msra.mxu0 %v1139
  %1623 = vmatprep.subr.bf16.mxu0 %v1142
  %1624 = vmatpush1.bf16.msra.mxu0 %v1141
  %1625 = vmatprep.subr.bf16.mxu0 %v1144
  %1626 = vmatpush1.bf16.msra.mxu0 %v1143
  %1627 = vmatprep.subr.bf16.mxu0 %v1146
  %1628 = vmatpush1.bf16.msra.mxu0 %v1145
  %1629 = vmatprep.subr.bf16.mxu0 %v1148
  %1630 = vmatpush1.bf16.msra.mxu0 %v1147
  %1631 = vmatprep.subr.bf16.mxu0 %v1150
  %1632 = vmatpush1.bf16.msra.mxu0 %v1149
  %1633 = vmatprep.subr.bf16.mxu0 %v1152
  %1634 = vmatpush1.bf16.msra.mxu0 %v1151
  %1635 = vmatprep.subr.bf16.mxu0 0
  %1636 = vmatpush1.bf16.msra.mxu0 0
  %1637 = vmatprep.subr.bf16.mxu0 0
  %1638 = vmatpush1.bf16.msra.mxu0 0
  %1639 = vmatprep.subr.bf16.mxu0 0
  %1640 = vmatpush1.bf16.msra.mxu0 0
  %1641 = vmatprep.subr.bf16.mxu0 0
  %1642 = vmatpush1.bf16.msra.mxu0 0
  %1643 = vmatprep.subr.bf16.mxu0 0
  %1644 = vmatpush1.bf16.msra.mxu0 0
  %1645 = vmatprep.subr.bf16.mxu0 0
  %1646 = vmatpush1.bf16.msra.mxu0 0
  %1647 = vmatprep.subr.bf16.mxu0 0
  %1648 = vmatpush1.bf16.msra.mxu0 0
  %1649 = vmatprep.subr.bf16.mxu0 0
  %1650 = vmatpush1.bf16.msra.mxu0 0
  %1651 = vmatprep.mubr.bf16.mxu0 0
  %1652 = vmatmul.mubr.bf16.gmra.mrb[0].mxu0 %v307
  %v1653 = vpop.f32.mrb[0].mxu0
  %v1654 = vadd.f32 %v1611, %v1653
  %v1655 = vpop.f32.mrb[0].mxu0
  %v1656 = vadd.f32 %v1613, %v1655
  %v1657 = vpop.f32.mrb[0].mxu0
  %v1658 = vadd.f32 %v1615, %v1657
  %v1659 = vpop.f32.mrb[0].mxu0
  %v1660 = vadd.f32 %v1617, %v1659
  %1661 = vdwg.mxu0
  %v1662 = vmax.f32 %v1654, 0.0
  %v1663 = vmax.f32 %v1656, 0.0
  %v1664 = vmax.f32 %v1658, 0.0
  %v1665 = vmax.f32 %v1660, 0.0
  %v1666 = vpack.c.bf16 %v1664, %v1662
  %v1667 = vpack.c.bf16 %v1665, %v1663
  %v1668 = vld [vmem:[%s3] sm:$0xf]
  %v1669 = vld [vmem:[%s3 + $0x4] sm:$0xf]
  %v1670 = vld [vmem:[%s3 + $0x8] sm:$0xf]
  %v1671 = vld [vmem:[%s3 + $0xc] sm:$0xf]
  %v1672 = vld [vmem:[%s3 + $0x10] sm:$0xf]
  %v1673 = vld [vmem:[%s3 + $0x14] sm:$0xf]
  %v1674 = vld [vmem:[%s3 + $0x18] sm:$0xf]
  %v1675 = vld [vmem:[%s3 + $0x1c] sm:$0xf]
  %v1676 = vld [vmem:[%s3 + $0x20] sm:$0xf]
  %v1677 = vld [vmem:[%s3 + $0x24] sm:$0xf]
  %v1678 = vld [vmem:[%s3 + $0x28] sm:$0xf]
  %v1679 = vld [vmem:[%s3 + $0x2c] sm:$0xf]
  %v1680 = vld [vmem:[%s3 + $0x30] sm:$0xf]
  %v1681 = vld [vmem:[%s3 + $0x34] sm:$0xf]
  %v1682 = vld [vmem:[%s3 + $0x38] sm:$0xf]
  %v1683 = vld [vmem:[%s3 + $0x3c] sm:$0xf]
  %v1684 = vld [vmem:[%s3 + $0x40] sm:$0xf]
  %v1685 = vld [vmem:[%s3 + $0x44] sm:$0xf]
  %v1686 = vld [vmem:[%s3 + $0x48] sm:$0xf]
  %v1687 = vld [vmem:[%s3 + $0x4c] sm:$0xf]
  %v1688 = vld [vmem:[%s3 + $0x50] sm:$0xf]
  %v1689 = vld [vmem:[%s3 + $0x54] sm:$0xf]
  %v1690 = vld [vmem:[%s3 + $0x58] sm:$0xf]
  %v1691 = vld [vmem:[%s3 + $0x5c] sm:$0xf]
  %v1692 = vld [vmem:[%s3 + $0x60] sm:$0xf]
  %v1693 = vld [vmem:[%s3 + $0x64] sm:$0xf]
  %v1694 = vld [vmem:[%s3 + $0x68] sm:$0xf]
  %v1695 = vld [vmem:[%s3 + $0x6c] sm:$0xf]
  %v1696 = vld [vmem:[%s3 + $0x70] sm:$0xf]
  %v1697 = vld [vmem:[%s3 + $0x74] sm:$0xf]
  %v1698 = vld [vmem:[%s3 + $0x78] sm:$0xf]
  %v1699 = vld [vmem:[%s3 + $0x7c] sm:$0xf]
  %v1700 = vld [vmem:[%s4] sm:$0x1]
  %v1702 = vlaneseq
  %v1703 = vshrl.u32 %v1702, 7
  %v1704 = vsub.s32 0, %v1703
  %v1705 = vrot.slane %v1700, %v1704
  %v1739 = vunpack.c.l.b16 %v1668
  %v1740 = vunpack.c.l.b16 %v1669
  %v1741 = vunpack.c.l.b16 %v1670
  %v1742 = vunpack.c.l.b16 %v1671
  %v1743 = vunpack.c.l.b16 %v1672
  %v1744 = vunpack.c.l.b16 %v1673
  %v1745 = vunpack.c.l.b16 %v1674
  %v1746 = vunpack.c.l.b16 %v1675
  %v1747 = vunpack.c.l.b16 %v1676
  %v1748 = vunpack.c.l.b16 %v1677
  %v1749 = vunpack.c.l.b16 %v1678
  %v1750 = vunpack.c.l.b16 %v1679
  %v1751 = vunpack.c.l.b16 %v1680
  %v1752 = vunpack.c.l.b16 %v1681
  %v1753 = vunpack.c.l.b16 %v1682
  %v1754 = vunpack.c.l.b16 %v1683
  %v1755 = vunpack.c.l.b16 %v1684
  %v1756 = vunpack.c.l.b16 %v1685
  %v1757 = vunpack.c.l.b16 %v1686
  %v1758 = vunpack.c.l.b16 %v1687
  %v1759 = vunpack.c.l.b16 %v1688
  %v1760 = vunpack.c.l.b16 %v1689
  %v1761 = vunpack.c.l.b16 %v1690
  %v1762 = vunpack.c.l.b16 %v1691
  %v1763 = vunpack.c.l.b16 %v1692
  %v1764 = vunpack.c.l.b16 %v1693
  %v1765 = vunpack.c.l.b16 %v1694
  %v1766 = vunpack.c.l.b16 %v1695
  %v1767 = vunpack.c.l.b16 %v1696
  %v1768 = vunpack.c.l.b16 %v1697
  %v1769 = vunpack.c.l.b16 %v1698
  %v1770 = vunpack.c.l.b16 %v1699
  %v1771 = vpack.c.b16 %v1740, %v1739
  %v1772 = vpack.c.b16 %v1742, %v1741
  %v1773 = vpack.c.b16 %v1744, %v1743
  %v1774 = vpack.c.b16 %v1746, %v1745
  %v1775 = vpack.c.b16 %v1748, %v1747
  %v1776 = vpack.c.b16 %v1750, %v1749
  %v1777 = vpack.c.b16 %v1752, %v1751
  %v1778 = vpack.c.b16 %v1754, %v1753
  %v1779 = vpack.c.b16 %v1756, %v1755
  %v1780 = vpack.c.b16 %v1758, %v1757
  %v1781 = vpack.c.b16 %v1760, %v1759
  %v1782 = vpack.c.b16 %v1762, %v1761
  %v1783 = vpack.c.b16 %v1764, %v1763
  %v1784 = vpack.c.b16 %v1766, %v1765
  %v1785 = vpack.c.b16 %v1768, %v1767
  %v1786 = vpack.c.b16 %v1770, %v1769
  %1803 = vmatprep.subr.bf16.mxu0 0
  %1804 = vmatpush1.bf16.msra.mxu0 %v1771
  %1805 = vmatprep.subr.bf16.mxu0 0
  %1806 = vmatpush1.bf16.msra.mxu0 %v1772
  %1807 = vmatprep.subr.bf16.mxu0 0
  %1808 = vmatpush1.bf16.msra.mxu0 %v1773
  %1809 = vmatprep.subr.bf16.mxu0 0
  %1810 = vmatpush1.bf16.msra.mxu0 %v1774
  %1811 = vmatprep.subr.bf16.mxu0 0
  %1812 = vmatpush1.bf16.msra.mxu0 %v1775
  %1813 = vmatprep.subr.bf16.mxu0 0
  %1814 = vmatpush1.bf16.msra.mxu0 %v1776
  %1815 = vmatprep.subr.bf16.mxu0 0
  %1816 = vmatpush1.bf16.msra.mxu0 %v1777
  %1817 = vmatprep.subr.bf16.mxu0 0
  %1818 = vmatpush1.bf16.msra.mxu0 %v1778
  %1819 = vmatprep.subr.bf16.mxu0 0
  %1820 = vmatpush1.bf16.msra.mxu0 %v1779
  %1821 = vmatprep.subr.bf16.mxu0 0
  %1822 = vmatpush1.bf16.msra.mxu0 %v1780
  %1823 = vmatprep.subr.bf16.mxu0 0
  %1824 = vmatpush1.bf16.msra.mxu0 %v1781
  %1825 = vmatprep.subr.bf16.mxu0 0
  %1826 = vmatpush1.bf16.msra.mxu0 %v1782
  %1827 = vmatprep.subr.bf16.mxu0 0
  %1828 = vmatpush1.bf16.msra.mxu0 %v1783
  %1829 = vmatprep.subr.bf16.mxu0 0
  %1830 = vmatpush1.bf16.msra.mxu0 %v1784
  %1831 = vmatprep.subr.bf16.mxu0 0
  %1832 = vmatpush1.bf16.msra.mxu0 %v1785
  %1833 = vmatprep.subr.bf16.mxu0 0
  %1834 = vmatpush1.bf16.msra.mxu0 %v1786
  %1835 = vmatprep.mubr.bf16.mxu0 %v1667
  %1836 = vmatmul.mubr.bf16.gmra.mrb[0].mxu0 %v1666
  %v1837 = vpop.f32.mrb[0].mxu0
  %v1838 = vadd.f32 %v1705, %v1837
  %v1839 = vpop.f32.mrb[0].mxu0
  %v1840 = vpop.f32.mrb[0].mxu0
  %v1841 = vadd.f32 %v1705, %v1840
  %v1842 = vpop.f32.mrb[0].mxu0
  %1843 = vdwg.mxu0
  %v1844 = vlaneseq
  %v1845 = vand.u32 %v1844, 127
  %vm1846 = vcmp.lt.s32.totalorder %v1845, 2
  %v1847 = vsel %vm1846, %v1838, -1e+30
  %v1848 = vsel %vm1846, %v1841, -1e+30
  %1849 = vmax.xlane.f32.xlu0 %v1847
  %v1850 = vpop.xlane.xlu0 %1849
  %1851 = vmax.xlane.f32.xlu0 %v1848
  %v1852 = vpop.xlane.xlu0 %1851
  %v1853 = vsub.f32 %v1847, %v1850
  %v1854 = vsub.f32 %v1848, %v1852
  %v1855 = vmul.f32 %v1853, 1.442695
  %v1856 = vpow.pop %v1855
  %v1857 = vmul.f32 %v1854, 1.442695
  %v1858 = vpow.pop %v1857
  %1859 = vadd.xlane.f32.xlu0 %v1856
  %v1860 = vpop.xlane.xlu0 %1859
  %1861 = vadd.xlane.f32.xlu0 %v1858
  %v1862 = vpop.xlane.xlu0 %1861
  %v1863 = vrcp.pop %v1860
  %v1864 = vrcp.pop %v1862
  %v1865 = vmul.f32 %v1856, %v1863
  %v1866 = vmul.f32 %v1858, %v1864
  %v1867 = vsel %vm1846, %v1865, %v1838
  %v1868 = vsel %vm1846, %v1866, %v1841
  %1869 = vst [vmem:[%s5] sm:$0xff] %v1867
  %1870 = vst [vmem:[%s5 + $0x8] sm:$0xff] %v1868
  // Predicated region
  $region22: #{policy_forward.7} parent=0 // pred_check
    _
  $region23: #{policy_forward.7} parent=0 // pred_check_branch
    %1872 = sbr.rel (0) target = $region25
  $region24: #{policy_forward.7} parent=0 // pred_region
    _
  $region25: #{policy_forward.7} parent=0 // pred_fallthru
    _
  // Predicated region
  $region26: #{policy_forward.7} parent=0 // pred_check
    _
  $region27: #{policy_forward.7} parent=0 // pred_check_branch
    %1874 = sbr.rel (0) target = $region29
  $region28: #{policy_forward.7} parent=0 // pred_region
    _
  $region29: #{policy_forward.7} parent=0 // pred_fallthru
    _

</llo_original>
